<compile_context>
chip_gen: v7x
topology: tpu7x:2x2x1
jax: 0.10.0
libtpu: 0.0.40
codegen_flags: <defaults>
</compile_context>

<pallas_src>
import functools

import jax
import jax.numpy as jnp
from jax.experimental import pallas as pl
from jax.experimental.pallas import tpu as pltpu

LANE = 128


def _round_up(x, m):
    return (x + m - 1) // m * m


# ------------------- fused GEMM + BatchNorm + LeakyReLU kernel -------------------- #

def _fused_bn_lrelu_kernel(a_ref, w_ref, gamma_ref, beta_ref, o_ref,
                           y_ref, stats_ref, *, m_valid, slope, eps):
    i = pl.program_id(0)
    tm = a_ref.shape[0]

    @pl.when(i == 0)
    def _():
        stats_ref[...] = jnp.zeros_like(stats_ref)

    # GEMM for this row tile (bf16 x bf16 -> f32) + batch-stat accumulation.
    y = jnp.dot(a_ref[...], w_ref[...], preferred_element_type=jnp.float32)
    stats_ref[0:1, :] += jnp.sum(y, axis=0, keepdims=True)
    stats_ref[1:2, :] += jnp.sum(y * y, axis=0, keepdims=True)

    r0 = pl.multiple_of(i * tm, tm)
    y_ref[pl.ds(r0, tm), :] = y           # keep un-normalized Y resident in VMEM

    # Last row tile: finalize batch stats, normalize in place, single HBM write.
    @pl.when(i == pl.num_programs(0) - 1)
    def _():
        inv_m = 1.0 / m_valid             # divide by the *real* row count
        mean = stats_ref[0:1, :] * inv_m
        var = jnp.maximum(stats_ref[1:2, :] * inv_m - mean * mean, 0.0)
        # Padded (zero) columns: var = 0 -> inv = 1/sqrt(eps), but y == mean == 0
        # and beta_pad == 0, so padded columns stay exactly 0 (no NaN leakage).
        inv = jax.lax.rsqrt(var + eps)
        scale = inv * gamma_ref[...]
        shift = beta_ref[...] - mean * scale
        z = y_ref[...] * scale + shift
        o_ref[...] = jnp.where(z > 0, z, slope * z).astype(o_ref.dtype)


def fused_gemm_bn_lrelu(a, w_mat, gamma_p, beta_p, m_valid, *,
                        slope=0.2, eps=1e-5, max_tm=1024):
    """a: (M, K) bf16 im2col rows; w_mat: (K, Np) bf16; gamma_p/beta_p: (1, Np) f32.

    Returns (Mp, Np) bf16: training-mode BatchNorm (batch stats over the m_valid
    real rows, biased variance) + LeakyReLU(slope) applied per column.
    """
    M, K = a.shape
    K2, Np = w_mat.shape
    assert K == K2 and Np % LANE == 0
    if M <= max_tm:
        Mp = _round_up(M, 8)
        tm = Mp
    else:
        Mp = _round_up(M, max_tm)
        tm = max_tm
    if Mp != M:
        a = jnp.pad(a, ((0, Mp - M), (0, 0)))   # zero rows contribute 0 to stats

    kern = functools.partial(_fused_bn_lrelu_kernel, m_valid=float(m_valid),
                             slope=slope, eps=eps)
    return pl.pallas_call(
        kern,
        out_shape=jax.ShapeDtypeStruct((Mp, Np), jnp.bfloat16),
        grid_spec=pltpu.PrefetchScalarGridSpec(
            num_scalar_prefetch=0,
            grid=(Mp // tm,),
            in_specs=[pl.BlockSpec((tm, K), lambda i: (i, 0)),   # K collapsed
                      pl.BlockSpec((K, Np), lambda i: (0, 0)),
                      pl.BlockSpec((1, Np), lambda i: (0, 0)),
                      pl.BlockSpec((1, Np), lambda i: (0, 0))],
            # Constant output block index across the grid -> the full (Mp, Np)
            # output stays resident in VMEM and is written back exactly once.
            out_specs=pl.BlockSpec((Mp, Np), lambda i: (0, 0)),
            scratch_shapes=[pltpu.VMEM((Mp, Np), jnp.float32),   # resident Y (f32)
                            pltpu.VMEM((8, Np), jnp.float32)]),  # sum / sumsq
        compiler_params=pltpu.CompilerParams(
            dimension_semantics=("arbitrary",)),
    )(a, w_mat, gamma_p, beta_p)


# --------------------------- output projection: GEMM + tanh ----------------------- #

def _gemm_tanh_kernel(a_ref, w_ref, o_ref):
    y = jnp.dot(a_ref[...], w_ref[...], preferred_element_type=jnp.float32)
    o_ref[...] = jnp.tanh(y).astype(o_ref.dtype)


def gemm_tanh(a, w_mat, *, max_tm=2048):
    M, K = a.shape
    _, Np = w_mat.shape
    if M <= max_tm:
        Mp = _round_up(M, 8)
        tm = Mp
    else:
        Mp = _round_up(M, max_tm)
        tm = max_tm
    if Mp != M:
        a = jnp.pad(a, ((0, Mp - M), (0, 0)))
    return pl.pallas_call(
        _gemm_tanh_kernel,
        out_shape=jax.ShapeDtypeStruct((Mp, Np), jnp.float32),
        grid_spec=pltpu.PrefetchScalarGridSpec(
            num_scalar_prefetch=0,
            grid=(Mp // tm,),
            in_specs=[pl.BlockSpec((tm, K), lambda i: (i, 0)),
                      pl.BlockSpec((K, Np), lambda i: (0, 0))],
            out_specs=pl.BlockSpec((tm, Np), lambda i: (i, 0))),
        compiler_params=pltpu.CompilerParams(
            dimension_semantics=("parallel",)),   # M-parallel: feeds both v7x TCs
    )(a, w_mat)


# ----------------------------------- JAX glue -------------------------------------- #

def _dilate_pad_nhwc(x, stride, k, p):
    """ConvTranspose -> equivalent VALID-conv input (NHWC): zero-dilate, pad k-1-p."""
    B, H, W, C = x.shape
    if stride > 1:
        Hd, Wd = (H - 1) * stride + 1, (W - 1) * stride + 1
        x = jnp.zeros((B, Hd, Wd, C), x.dtype).at[:, ::stride, ::stride, :].set(x)
    pad = k - 1 - p
    return jnp.pad(x, ((0, 0), (pad, pad), (pad, pad), (0, 0)))


def _im2col_nhwc(x, k):
    """x: (B, Hp, Wp, C) -> (B*Ho*Wo, C*k*k), column order (c, dy, dx)."""
    B, Hp, Wp, C = x.shape
    Ho, Wo = Hp - k + 1, Wp - k + 1
    taps = [x[:, dy:dy + Ho, dx:dx + Wo, :] for dy in range(k) for dx in range(k)]
    p = jnp.stack(taps, axis=-1)                       # (B, Ho, Wo, C, k*k)
    return p.reshape(B * Ho * Wo, C * k * k), Ho, Wo


def _weight_matrix(w, n_pad):
    """PyTorch ConvTranspose2d weight (Cin, Cout, k, k) -> GEMM matrix (Cin*k*k, Np)."""
    Cin, Cout, k, _ = w.shape
    w_conv = jnp.flip(w, axis=(2, 3)).transpose(1, 0, 2, 3)   # equivalent conv weight
    w_mat = w_conv.reshape(Cout, Cin * k * k).T               # (K, Cout)
    return jnp.pad(w_mat, ((0, 0), (0, n_pad - Cout)))


def convT_layer(x_nhwc, w, stride, padding, gamma=None, beta=None, final_tanh=False):
    """One ConvTranspose2d (+BN+LeakyReLU | +Tanh) layer; NHWC in, NHWC out."""
    B = x_nhwc.shape[0]
    _, Cout, k, _ = w.shape
    xdp = _dilate_pad_nhwc(x_nhwc, stride, k, padding)
    A, Ho, Wo = _im2col_nhwc(xdp, k)
    # TODO(synk): im2col still materializes the k*k-expanded operand in XLA; an
    # in-kernel per-tap accumulation over the dilated input would remove it.
    M = A.shape[0]
    A = A.astype(jnp.bfloat16)
    Np = _round_up(Cout, LANE)                         # lane-dense (128-wide) output
    Wm = _weight_matrix(w, Np).astype(jnp.bfloat16)

    if final_tanh:
        Y = gemm_tanh(A, Wm)
    else:
        gamma_p = jnp.pad(gamma.astype(jnp.float32), (0, Np - Cout),
                          constant_values=1.0).reshape(1, Np)
        beta_p = jnp.pad(beta.astype(jnp.float32), (0, Np - Cout)).reshape(1, Np)
        Y = fused_gemm_bn_lrelu(A, Wm, gamma_p, beta_p, M)

    return Y[:M, :Cout].reshape(B, Ho, Wo, Cout)


# ----------------------------------- Generator ------------------------------------- #

def init_generator_params(key, nz, ngf, nc, num_layers=4):
    params = []
    in_ch = nz
    exp = 2 ** (num_layers - 1)
    keys = jax.random.split(key, num_layers * 3 + 1)
    ki = 0
    for _ in range(num_layers):
        out_ch = ngf * exp
        w = 0.05 * jax.random.normal(keys[ki], (in_ch, out_ch, 4, 4), jnp.float32); ki += 1
        gamma = 1.0 + 0.1 * jax.random.normal(keys[ki], (out_ch,), jnp.float32); ki += 1
        beta = 0.1 * jax.random.normal(keys[ki], (out_ch,), jnp.float32); ki += 1
        params.append((w, gamma, beta))
        in_ch = out_ch
        exp //= 2
    w_out = 0.05 * jax.random.normal(keys[ki], (ngf, nc, 4, 4), jnp.float32)
    return params, w_out


def generator_forward(x, params, w_out):
    """x: (B, nz, 1, 1) NCHW f32 -> (B, nc, 64, 64) NCHW f32."""
    h = jnp.transpose(x, (0, 2, 3, 1))                 # NHWC internally
    for i, (w, gamma, beta) in enumerate(params):
        s, p = (1, 0) if i == 0 else (2, 1)
        h = convT_layer(h, w, s, p, gamma, beta)
    y = convT_layer(h, w_out, 2, 1, final_tanh=True)
    return jnp.transpose(y, (0, 3, 1, 2))


# Pure-JAX f32 reference (lax conv on the dilated/padded input) for verification.
def generator_forward_ref(x, params, w_out, eps=1e-5):
    def convT(x, w, s, p):
        k = w.shape[2]
        B, C, H, W = x.shape
        if s > 1:
            Hd, Wd = (H - 1) * s + 1, (W - 1) * s + 1
            x = jnp.zeros((B, C, Hd, Wd), x.dtype).at[:, :, ::s, ::s].set(x)
        pad = k - 1 - p
        x = jnp.pad(x, ((0, 0), (0, 0), (pad, pad), (pad, pad)))
        w_conv = jnp.flip(w, axis=(2, 3)).transpose(1, 0, 2, 3)
        return jax.lax.conv_general_dilated(
            x, w_conv, window_strides=(1, 1), padding='VALID',
            dimension_numbers=('NCHW', 'OIHW', 'NCHW'))

    for i, (w, gamma, beta) in enumerate(params):
        s, p = (1, 0) if i == 0 else (2, 1)
        y = convT(x, w, s, p)
        mean = y.mean(axis=(0, 2, 3), keepdims=True)
        var = y.var(axis=(0, 2, 3), keepdims=True)
        y = (y - mean) * jax.lax.rsqrt(var + eps)
        y = y * gamma.reshape(1, -1, 1, 1) + beta.reshape(1, -1, 1, 1)
        x = jnp.where(y > 0, y, 0.2 * y)
    return jnp.tanh(convT(x, w_out, 2, 1))


if __name__ == "__main__":
    nz, ngf, nc, B = 16, 4, 3, 2                       # Generator(16, 4, 3)
    key = jax.random.PRNGKey(0)
    kx, kp = jax.random.split(key)
    x = jax.random.normal(kx, (B, nz, 1, 1), jnp.float32)   # latent, NCHW
    params, w_out = init_generator_params(kp, nz, ngf, nc, num_layers=4)

    fwd = jax.jit(generator_forward)
    y = fwd(x, params, w_out)
    jax.block_until_ready(y)

    assert y.shape == (B, nc, 64, 64), y.shape
    y_ref = generator_forward_ref(x, params, w_out)
    err = float(jnp.max(jnp.abs(y - y_ref)))
    assert err < 5e-2, f"max abs err {err}"
    print("KERNEL_OK")
</pallas_src>

<mosaic_0001>
module attributes {stable_mosaic.version = 11 : i64} {
  func.func @_fused_bn_lrelu_kernel(%arg0: i32, %arg1: memref<32x256xbf16, #tpu.memory_space<vmem>>, %arg2: memref<256x128xbf16, #tpu.memory_space<vmem>>, %arg3: memref<1x128xf32, #tpu.memory_space<vmem>>, %arg4: memref<1x128xf32, #tpu.memory_space<vmem>>, %arg5: memref<32x128xbf16, #tpu.memory_space<vmem>>, %arg6: memref<32x128xf32, #tpu.memory_space<vmem>>, %arg7: memref<8x128xf32, #tpu.memory_space<vmem>>) attributes {dimension_semantics = [#tpu.dimension_semantics<arbitrary>], iteration_bounds = array<i64: 1>, scalar_prefetch = 0 : i64, scratch_operands = 2 : i64, tpu.core_type = #tpu.core_type<tc>, window_params = [{transform_indices = @transform_0, window_bounds = array<i64: 32, 256>}, {pipeline_mode = #tpu.pipeline_mode<synchronous>, transform_indices = @transform_1, window_bounds = array<i64: 256, 128>}, {pipeline_mode = #tpu.pipeline_mode<synchronous>, transform_indices = @transform_2, window_bounds = array<i64: 1, 128>}, {pipeline_mode = #tpu.pipeline_mode<synchronous>, transform_indices = @transform_3, window_bounds = array<i64: 1, 128>}, {pipeline_mode = #tpu.pipeline_mode<synchronous>, transform_indices = @transform_4, window_bounds = array<i64: 32, 128>}]} {
    %c0_i32 = arith.constant 0 : i32
    %0 = arith.cmpi eq, %arg0, %c0_i32 : i32
    %1 = arith.extui %0 : i1 to i32
    %c0_i32_0 = arith.constant 0 : i32
    %2 = arith.cmpi ne, %1, %c0_i32_0 : i32
    scf.if %2 {
      %cst_16 = arith.constant 0.000000e+00 : f32
      %24 = vector.broadcast %cst_16 : f32 to vector<8x128xf32>
      %c0_17 = arith.constant 0 : index
      %c0_18 = arith.constant 0 : index
      %25 = vector.load %arg7[%c0_17, %c0_18] : memref<8x128xf32, #tpu.memory_space<vmem>>, vector<8x128xf32>
      tpu.vector_store %arg7[%c0_17, %c0_18], %24 {strides = array<i32>} : memref<8x128xf32, #tpu.memory_space<vmem>>, vector<8x128xf32>,
    } else {
    }
    %c0 = arith.constant 0 : index
    %c0_1 = arith.constant 0 : index
    %3 = vector.load %arg1[%c0, %c0_1] : memref<32x256xbf16, #tpu.memory_space<vmem>>, vector<32x256xbf16>
    %c0_2 = arith.constant 0 : index
    %c0_3 = arith.constant 0 : index
    %4 = vector.load %arg2[%c0_2, %c0_3] : memref<256x128xbf16, #tpu.memory_space<vmem>>, vector<256x128xbf16>
    %cst = arith.constant dense<0.000000e+00> : vector<32x128xf32>
    %5 = tpu.matmul %3, %4, %cst {dimension_numbers = #tpu.dot_dimension_numbers<[1], [0], [0], [1], [0, 0, 1, 1], [], []>} : vector<32x256xbf16>, vector<256x128xbf16>, vector<32x128xf32> -> vector<32x128xf32>
    %c0_4 = arith.constant 0 : index
    %c0_5 = arith.constant 0 : index
    %6 = vector.load %arg7[%c0_4, %c0_5] : memref<8x128xf32, #tpu.memory_space<vmem>>, vector<1x128xf32>
    %cst_6 = arith.constant dense<0.000000e+00> : vector<128xf32>
    %7 = vector.multi_reduction <add>, %5, %cst_6 [0] : vector<32x128xf32> to vector<128xf32>
    %8 = vector.shape_cast %7 : vector<128xf32> to vector<1x128xf32>
    %9 = arith.addf %6, %8 : vector<1x128xf32>
    %c0_7 = arith.constant 0 : index
    %c0_8 = arith.constant 0 : index
    %10 = vector.load %arg7[%c0_7, %c0_8] : memref<8x128xf32, #tpu.memory_space<vmem>>, vector<1x128xf32>
    tpu.vector_store %arg7[%c0_7, %c0_8], %9 {strides = array<i32>} : memref<8x128xf32, #tpu.memory_space<vmem>>, vector<1x128xf32>,
    %c1 = arith.constant 1 : index
    %c0_9 = arith.constant 0 : index
    %11 = vector.load %arg7[%c1, %c0_9] : memref<8x128xf32, #tpu.memory_space<vmem>>, vector<1x128xf32>
    %12 = arith.mulf %5, %5 : vector<32x128xf32>
    %cst_10 = arith.constant dense<0.000000e+00> : vector<128xf32>
    %13 = vector.multi_reduction <add>, %12, %cst_10 [0] : vector<32x128xf32> to vector<128xf32>
    %14 = vector.shape_cast %13 : vector<128xf32> to vector<1x128xf32>
    %15 = arith.addf %11, %14 : vector<1x128xf32>
    %c1_11 = arith.constant 1 : index
    %c0_12 = arith.constant 0 : index
    %16 = vector.load %arg7[%c1_11, %c0_12] : memref<8x128xf32, #tpu.memory_space<vmem>>, vector<1x128xf32>
    tpu.vector_store %arg7[%c1_11, %c0_12], %15 {strides = array<i32>} : memref<8x128xf32, #tpu.memory_space<vmem>>, vector<1x128xf32>,
    %c32_i32 = arith.constant 32 : i32
    %17 = arith.muli %arg0, %c32_i32 : i32
    %18 = tpu.assume_multiple %17, 32 : i32
    %19 = arith.index_cast %18 : i32 to index
    %c0_13 = arith.constant 0 : index
    %20 = vector.load %arg6[%19, %c0_13] : memref<32x128xf32, #tpu.memory_space<vmem>>, vector<32x128xf32>
    tpu.vector_store %arg6[%19, %c0_13], %5 {strides = array<i32>} : memref<32x128xf32, #tpu.memory_space<vmem>>, vector<32x128xf32>,
    %c0_i32_14 = arith.constant 0 : i32
    %21 = arith.cmpi eq, %arg0, %c0_i32_14 : i32
    %22 = arith.extui %21 : i1 to i32
    %c0_i32_15 = arith.constant 0 : i32
    %23 = arith.cmpi ne, %22, %c0_i32_15 : i32
    scf.if %23 {
      %c0_16 = arith.constant 0 : index
      %c0_17 = arith.constant 0 : index
      %24 = vector.load %arg7[%c0_16, %c0_17] : memref<8x128xf32, #tpu.memory_space<vmem>>, vector<1x128xf32>
      %cst_18 = arith.constant 3.125000e-02 : f32
      %25 = vector.broadcast %cst_18 : f32 to vector<1x128xf32>
      %26 = arith.mulf %24, %25 : vector<1x128xf32>
      %c1_19 = arith.constant 1 : index
      %c0_20 = arith.constant 0 : index
      %27 = vector.load %arg7[%c1_19, %c0_20] : memref<8x128xf32, #tpu.memory_space<vmem>>, vector<1x128xf32>
      %cst_21 = arith.constant 3.125000e-02 : f32
      %28 = vector.broadcast %cst_21 : f32 to vector<1x128xf32>
      %29 = arith.mulf %27, %28 : vector<1x128xf32>
      %30 = arith.mulf %26, %26 : vector<1x128xf32>
      %31 = arith.subf %29, %30 : vector<1x128xf32>
      %cst_22 = arith.constant 0.000000e+00 : f32
      %32 = vector.broadcast %cst_22 : f32 to vector<1x128xf32>
      %33 = arith.maximumf %31, %32 : vector<1x128xf32>
      %cst_23 = arith.constant 9.99999974E-6 : f32
      %34 = vector.broadcast %cst_23 : f32 to vector<1x128xf32>
      %35 = arith.addf %33, %34 : vector<1x128xf32>
      %36 = math.rsqrt %35 : vector<1x128xf32>
      %c0_24 = arith.constant 0 : index
      %c0_25 = arith.constant 0 : index
      %37 = vector.load %arg3[%c0_24, %c0_25] : memref<1x128xf32, #tpu.memory_space<vmem>>, vector<1x128xf32>
      %38 = arith.mulf %36, %37 : vector<1x128xf32>
      %c0_26 = arith.constant 0 : index
      %c0_27 = arith.constant 0 : index
      %39 = vector.load %arg4[%c0_26, %c0_27] : memref<1x128xf32, #tpu.memory_space<vmem>>, vector<1x128xf32>
      %40 = arith.mulf %26, %38 : vector<1x128xf32>
      %41 = arith.subf %39, %40 : vector<1x128xf32>
      %c0_28 = arith.constant 0 : index
      %c0_29 = arith.constant 0 : index
      %42 = vector.load %arg6[%c0_28, %c0_29] : memref<32x128xf32, #tpu.memory_space<vmem>>, vector<32x128xf32>
      %43 = vector.broadcast %38 : vector<1x128xf32> to vector<32x128xf32>
      %44 = arith.mulf %42, %43 : vector<32x128xf32>
      %45 = vector.broadcast %41 : vector<1x128xf32> to vector<32x128xf32>
      %46 = arith.addf %44, %45 : vector<32x128xf32>
      %cst_30 = arith.constant 0.000000e+00 : f32
      %47 = vector.broadcast %cst_30 : f32 to vector<32x128xf32>
      %48 = arith.cmpf ogt, %46, %47 : vector<32x128xf32>
      %cst_31 = arith.constant 2.000000e-01 : f32
      %49 = vector.broadcast %cst_31 : f32 to vector<32x128xf32>
      %50 = arith.mulf %49, %46 : vector<32x128xf32>
      %51 = arith.select %48, %46, %50 : vector<32x128xi1>, vector<32x128xf32>
      %52 = arith.truncf %51 : vector<32x128xf32> to vector<32x128xbf16>
      %c0_32 = arith.constant 0 : index
      %c0_33 = arith.constant 0 : index
      %53 = vector.load %arg5[%c0_32, %c0_33] : memref<32x128xbf16, #tpu.memory_space<vmem>>, vector<32x128xbf16>
      tpu.vector_store %arg5[%c0_32, %c0_33], %52 {strides = array<i32>} : memref<32x128xbf16, #tpu.memory_space<vmem>>, vector<32x128xbf16>,
    } else {
    }
    return
  }
  func.func @transform_0(%arg0: i32) -> (i32, i32) {
    %c0_i32 = arith.constant 0 : i32
    %c0_i32_0 = arith.constant 0 : i32
    return %arg0, %c0_i32 : i32, i32
  }
  func.func @transform_1(%arg0: i32) -> (i32, i32) {
    %c0_i32 = arith.constant 0 : i32
    %c0_i32_0 = arith.constant 0 : i32
    %c0_i32_1 = arith.constant 0 : i32
    return %c0_i32, %c0_i32_0 : i32, i32
  }
  func.func @transform_2(%arg0: i32) -> (i32, i32) {
    %c0_i32 = arith.constant 0 : i32
    %c0_i32_0 = arith.constant 0 : i32
    %c0_i32_1 = arith.constant 0 : i32
    return %c0_i32, %c0_i32_0 : i32, i32
  }
  func.func @transform_3(%arg0: i32) -> (i32, i32) {
    %c0_i32 = arith.constant 0 : i32
    %c0_i32_0 = arith.constant 0 : i32
    %c0_i32_1 = arith.constant 0 : i32
    return %c0_i32, %c0_i32_0 : i32, i32
  }
  func.func @transform_4(%arg0: i32) -> (i32, i32) {
    %c0_i32 = arith.constant 0 : i32
    %c0_i32_0 = arith.constant 0 : i32
    %c0_i32_1 = arith.constant 0 : i32
    return %c0_i32, %c0_i32_0 : i32, i32
  }
}

module attributes {stable_mosaic.version = 11 : i64} {
  func.func @_fused_bn_lrelu_kernel(%arg0: i32, %arg1: memref<128x512xbf16, #tpu.memory_space<vmem>>, %arg2: memref<512x128xbf16, #tpu.memory_space<vmem>>, %arg3: memref<1x128xf32, #tpu.memory_space<vmem>>, %arg4: memref<1x128xf32, #tpu.memory_space<vmem>>, %arg5: memref<128x128xbf16, #tpu.memory_space<vmem>>, %arg6: memref<128x128xf32, #tpu.memory_space<vmem>>, %arg7: memref<8x128xf32, #tpu.memory_space<vmem>>) attributes {dimension_semantics = [#tpu.dimension_semantics<arbitrary>], iteration_bounds = array<i64: 1>, scalar_prefetch = 0 : i64, scratch_operands = 2 : i64, tpu.core_type = #tpu.core_type<tc>, window_params = [{transform_indices = @transform_0, window_bounds = array<i64: 128, 512>}, {pipeline_mode = #tpu.pipeline_mode<synchronous>, transform_indices = @transform_1, window_bounds = array<i64: 512, 128>}, {pipeline_mode = #tpu.pipeline_mode<synchronous>, transform_indices = @transform_2, window_bounds = array<i64: 1, 128>}, {pipeline_mode = #tpu.pipeline_mode<synchronous>, transform_indices = @transform_3, window_bounds = array<i64: 1, 128>}, {pipeline_mode = #tpu.pipeline_mode<synchronous>, transform_indices = @transform_4, window_bounds = array<i64: 128, 128>}]} {
    %c0_i32 = arith.constant 0 : i32
    %0 = arith.cmpi eq, %arg0, %c0_i32 : i32
    %1 = arith.extui %0 : i1 to i32
    %c0_i32_0 = arith.constant 0 : i32
    %2 = arith.cmpi ne, %1, %c0_i32_0 : i32
    scf.if %2 {
      %cst_16 = arith.constant 0.000000e+00 : f32
      %24 = vector.broadcast %cst_16 : f32 to vector<8x128xf32>
      %c0_17 = arith.constant 0 : index
      %c0_18 = arith.constant 0 : index
      %25 = vector.load %arg7[%c0_17, %c0_18] : memref<8x128xf32, #tpu.memory_space<vmem>>, vector<8x128xf32>
      tpu.vector_store %arg7[%c0_17, %c0_18], %24 {strides = array<i32>} : memref<8x128xf32, #tpu.memory_space<vmem>>, vector<8x128xf32>,
    } else {
    }
    %c0 = arith.constant 0 : index
    %c0_1 = arith.constant 0 : index
    %3 = vector.load %arg1[%c0, %c0_1] : memref<128x512xbf16, #tpu.memory_space<vmem>>, vector<128x512xbf16>
    %c0_2 = arith.constant 0 : index
    %c0_3 = arith.constant 0 : index
    %4 = vector.load %arg2[%c0_2, %c0_3] : memref<512x128xbf16, #tpu.memory_space<vmem>>, vector<512x128xbf16>
    %cst = arith.constant dense<0.000000e+00> : vector<128x128xf32>
    %5 = tpu.matmul %3, %4, %cst {dimension_numbers = #tpu.dot_dimension_numbers<[1], [0], [0], [1], [0, 0, 1, 1], [], []>} : vector<128x512xbf16>, vector<512x128xbf16>, vector<128x128xf32> -> vector<128x128xf32>
    %c0_4 = arith.constant 0 : index
    %c0_5 = arith.constant 0 : index
    %6 = vector.load %arg7[%c0_4, %c0_5] : memref<8x128xf32, #tpu.memory_space<vmem>>, vector<1x128xf32>
    %cst_6 = arith.constant dense<0.000000e+00> : vector<128xf32>
    %7 = vector.multi_reduction <add>, %5, %cst_6 [0] : vector<128x128xf32> to vector<128xf32>
    %8 = vector.shape_cast %7 : vector<128xf32> to vector<1x128xf32>
    %9 = arith.addf %6, %8 : vector<1x128xf32>
    %c0_7 = arith.constant 0 : index
    %c0_8 = arith.constant 0 : index
    %10 = vector.load %arg7[%c0_7, %c0_8] : memref<8x128xf32, #tpu.memory_space<vmem>>, vector<1x128xf32>
    tpu.vector_store %arg7[%c0_7, %c0_8], %9 {strides = array<i32>} : memref<8x128xf32, #tpu.memory_space<vmem>>, vector<1x128xf32>,
    %c1 = arith.constant 1 : index
    %c0_9 = arith.constant 0 : index
    %11 = vector.load %arg7[%c1, %c0_9] : memref<8x128xf32, #tpu.memory_space<vmem>>, vector<1x128xf32>
    %12 = arith.mulf %5, %5 : vector<128x128xf32>
    %cst_10 = arith.constant dense<0.000000e+00> : vector<128xf32>
    %13 = vector.multi_reduction <add>, %12, %cst_10 [0] : vector<128x128xf32> to vector<128xf32>
    %14 = vector.shape_cast %13 : vector<128xf32> to vector<1x128xf32>
    %15 = arith.addf %11, %14 : vector<1x128xf32>
    %c1_11 = arith.constant 1 : index
    %c0_12 = arith.constant 0 : index
    %16 = vector.load %arg7[%c1_11, %c0_12] : memref<8x128xf32, #tpu.memory_space<vmem>>, vector<1x128xf32>
    tpu.vector_store %arg7[%c1_11, %c0_12], %15 {strides = array<i32>} : memref<8x128xf32, #tpu.memory_space<vmem>>, vector<1x128xf32>,
    %c128_i32 = arith.constant 128 : i32
    %17 = arith.muli %arg0, %c128_i32 : i32
    %18 = tpu.assume_multiple %17, 128 : i32
    %19 = arith.index_cast %18 : i32 to index
    %c0_13 = arith.constant 0 : index
    %20 = vector.load %arg6[%19, %c0_13] : memref<128x128xf32, #tpu.memory_space<vmem>>, vector<128x128xf32>
    tpu.vector_store %arg6[%19, %c0_13], %5 {strides = array<i32>} : memref<128x128xf32, #tpu.memory_space<vmem>>, vector<128x128xf32>,
    %c0_i32_14 = arith.constant 0 : i32
    %21 = arith.cmpi eq, %arg0, %c0_i32_14 : i32
    %22 = arith.extui %21 : i1 to i32
    %c0_i32_15 = arith.constant 0 : i32
    %23 = arith.cmpi ne, %22, %c0_i32_15 : i32
    scf.if %23 {
      %c0_16 = arith.constant 0 : index
      %c0_17 = arith.constant 0 : index
      %24 = vector.load %arg7[%c0_16, %c0_17] : memref<8x128xf32, #tpu.memory_space<vmem>>, vector<1x128xf32>
      %cst_18 = arith.constant 7.812500e-03 : f32
      %25 = vector.broadcast %cst_18 : f32 to vector<1x128xf32>
      %26 = arith.mulf %24, %25 : vector<1x128xf32>
      %c1_19 = arith.constant 1 : index
      %c0_20 = arith.constant 0 : index
      %27 = vector.load %arg7[%c1_19, %c0_20] : memref<8x128xf32, #tpu.memory_space<vmem>>, vector<1x128xf32>
      %cst_21 = arith.constant 7.812500e-03 : f32
      %28 = vector.broadcast %cst_21 : f32 to vector<1x128xf32>
      %29 = arith.mulf %27, %28 : vector<1x128xf32>
      %30 = arith.mulf %26, %26 : vector<1x128xf32>
      %31 = arith.subf %29, %30 : vector<1x128xf32>
      %cst_22 = arith.constant 0.000000e+00 : f32
      %32 = vector.broadcast %cst_22 : f32 to vector<1x128xf32>
      %33 = arith.maximumf %31, %32 : vector<1x128xf32>
      %cst_23 = arith.constant 9.99999974E-6 : f32
      %34 = vector.broadcast %cst_23 : f32 to vector<1x128xf32>
      %35 = arith.addf %33, %34 : vector<1x128xf32>
      %36 = math.rsqrt %35 : vector<1x128xf32>
      %c0_24 = arith.constant 0 : index
      %c0_25 = arith.constant 0 : index
      %37 = vector.load %arg3[%c0_24, %c0_25] : memref<1x128xf32, #tpu.memory_space<vmem>>, vector<1x128xf32>
      %38 = arith.mulf %36, %37 : vector<1x128xf32>
      %c0_26 = arith.constant 0 : index
      %c0_27 = arith.constant 0 : index
      %39 = vector.load %arg4[%c0_26, %c0_27] : memref<1x128xf32, #tpu.memory_space<vmem>>, vector<1x128xf32>
      %40 = arith.mulf %26, %38 : vector<1x128xf32>
      %41 = arith.subf %39, %40 : vector<1x128xf32>
      %c0_28 = arith.constant 0 : index
      %c0_29 = arith.constant 0 : index
      %42 = vector.load %arg6[%c0_28, %c0_29] : memref<128x128xf32, #tpu.memory_space<vmem>>, vector<128x128xf32>
      %43 = vector.broadcast %38 : vector<1x128xf32> to vector<128x128xf32>
      %44 = arith.mulf %42, %43 : vector<128x128xf32>
      %45 = vector.broadcast %41 : vector<1x128xf32> to vector<128x128xf32>
      %46 = arith.addf %44, %45 : vector<128x128xf32>
      %cst_30 = arith.constant 0.000000e+00 : f32
      %47 = vector.broadcast %cst_30 : f32 to vector<128x128xf32>
      %48 = arith.cmpf ogt, %46, %47 : vector<128x128xf32>
      %cst_31 = arith.constant 2.000000e-01 : f32
      %49 = vector.broadcast %cst_31 : f32 to vector<128x128xf32>
      %50 = arith.mulf %49, %46 : vector<128x128xf32>
      %51 = arith.select %48, %46, %50 : vector<128x128xi1>, vector<128x128xf32>
      %52 = arith.truncf %51 : vector<128x128xf32> to vector<128x128xbf16>
      %c0_32 = arith.constant 0 : index
      %c0_33 = arith.constant 0 : index
      %53 = vector.load %arg5[%c0_32, %c0_33] : memref<128x128xbf16, #tpu.memory_space<vmem>>, vector<128x128xbf16>
      tpu.vector_store %arg5[%c0_32, %c0_33], %52 {strides = array<i32>} : memref<128x128xbf16, #tpu.memory_space<vmem>>, vector<128x128xbf16>,
    } else {
    }
    return
  }
  func.func @transform_0(%arg0: i32) -> (i32, i32) {
    %c0_i32 = arith.constant 0 : i32
    %c0_i32_0 = arith.constant 0 : i32
    return %arg0, %c0_i32 : i32, i32
  }
  func.func @transform_1(%arg0: i32) -> (i32, i32) {
    %c0_i32 = arith.constant 0 : i32
    %c0_i32_0 = arith.constant 0 : i32
    %c0_i32_1 = arith.constant 0 : i32
    return %c0_i32, %c0_i32_0 : i32, i32
  }
  func.func @transform_2(%arg0: i32) -> (i32, i32) {
    %c0_i32 = arith.constant 0 : i32
    %c0_i32_0 = arith.constant 0 : i32
    %c0_i32_1 = arith.constant 0 : i32
    return %c0_i32, %c0_i32_0 : i32, i32
  }
  func.func @transform_3(%arg0: i32) -> (i32, i32) {
    %c0_i32 = arith.constant 0 : i32
    %c0_i32_0 = arith.constant 0 : i32
    %c0_i32_1 = arith.constant 0 : i32
    return %c0_i32, %c0_i32_0 : i32, i32
  }
  func.func @transform_4(%arg0: i32) -> (i32, i32) {
    %c0_i32 = arith.constant 0 : i32
    %c0_i32_0 = arith.constant 0 : i32
    %c0_i32_1 = arith.constant 0 : i32
    return %c0_i32, %c0_i32_0 : i32, i32
  }
}

module attributes {stable_mosaic.version = 11 : i64} {
  func.func @_fused_bn_lrelu_kernel(%arg0: i32, %arg1: memref<512x256xbf16, #tpu.memory_space<vmem>>, %arg2: memref<256x128xbf16, #tpu.memory_space<vmem>>, %arg3: memref<1x128xf32, #tpu.memory_space<vmem>>, %arg4: memref<1x128xf32, #tpu.memory_space<vmem>>, %arg5: memref<512x128xbf16, #tpu.memory_space<vmem>>, %arg6: memref<512x128xf32, #tpu.memory_space<vmem>>, %arg7: memref<8x128xf32, #tpu.memory_space<vmem>>) attributes {dimension_semantics = [#tpu.dimension_semantics<arbitrary>], iteration_bounds = array<i64: 1>, scalar_prefetch = 0 : i64, scratch_operands = 2 : i64, tpu.core_type = #tpu.core_type<tc>, window_params = [{transform_indices = @transform_0, window_bounds = array<i64: 512, 256>}, {pipeline_mode = #tpu.pipeline_mode<synchronous>, transform_indices = @transform_1, window_bounds = array<i64: 256, 128>}, {pipeline_mode = #tpu.pipeline_mode<synchronous>, transform_indices = @transform_2, window_bounds = array<i64: 1, 128>}, {pipeline_mode = #tpu.pipeline_mode<synchronous>, transform_indices = @transform_3, window_bounds = array<i64: 1, 128>}, {pipeline_mode = #tpu.pipeline_mode<synchronous>, transform_indices = @transform_4, window_bounds = array<i64: 512, 128>}]} {
    %c0_i32 = arith.constant 0 : i32
    %0 = arith.cmpi eq, %arg0, %c0_i32 : i32
    %1 = arith.extui %0 : i1 to i32
    %c0_i32_0 = arith.constant 0 : i32
    %2 = arith.cmpi ne, %1, %c0_i32_0 : i32
    scf.if %2 {
      %cst_16 = arith.constant 0.000000e+00 : f32
      %24 = vector.broadcast %cst_16 : f32 to vector<8x128xf32>
      %c0_17 = arith.constant 0 : index
      %c0_18 = arith.constant 0 : index
      %25 = vector.load %arg7[%c0_17, %c0_18] : memref<8x128xf32, #tpu.memory_space<vmem>>, vector<8x128xf32>
      tpu.vector_store %arg7[%c0_17, %c0_18], %24 {strides = array<i32>} : memref<8x128xf32, #tpu.memory_space<vmem>>, vector<8x128xf32>,
    } else {
    }
    %c0 = arith.constant 0 : index
    %c0_1 = arith.constant 0 : index
    %3 = vector.load %arg1[%c0, %c0_1] : memref<512x256xbf16, #tpu.memory_space<vmem>>, vector<512x256xbf16>
    %c0_2 = arith.constant 0 : index
    %c0_3 = arith.constant 0 : index
    %4 = vector.load %arg2[%c0_2, %c0_3] : memref<256x128xbf16, #tpu.memory_space<vmem>>, vector<256x128xbf16>
    %cst = arith.constant dense<0.000000e+00> : vector<512x128xf32>
    %5 = tpu.matmul %3, %4, %cst {dimension_numbers = #tpu.dot_dimension_numbers<[1], [0], [0], [1], [0, 0, 1, 1], [], []>} : vector<512x256xbf16>, vector<256x128xbf16>, vector<512x128xf32> -> vector<512x128xf32>
    %c0_4 = arith.constant 0 : index
    %c0_5 = arith.constant 0 : index
    %6 = vector.load %arg7[%c0_4, %c0_5] : memref<8x128xf32, #tpu.memory_space<vmem>>, vector<1x128xf32>
    %cst_6 = arith.constant dense<0.000000e+00> : vector<128xf32>
    %7 = vector.multi_reduction <add>, %5, %cst_6 [0] : vector<512x128xf32> to vector<128xf32>
    %8 = vector.shape_cast %7 : vector<128xf32> to vector<1x128xf32>
    %9 = arith.addf %6, %8 : vector<1x128xf32>
    %c0_7 = arith.constant 0 : index
    %c0_8 = arith.constant 0 : index
    %10 = vector.load %arg7[%c0_7, %c0_8] : memref<8x128xf32, #tpu.memory_space<vmem>>, vector<1x128xf32>
    tpu.vector_store %arg7[%c0_7, %c0_8], %9 {strides = array<i32>} : memref<8x128xf32, #tpu.memory_space<vmem>>, vector<1x128xf32>,
    %c1 = arith.constant 1 : index
    %c0_9 = arith.constant 0 : index
    %11 = vector.load %arg7[%c1, %c0_9] : memref<8x128xf32, #tpu.memory_space<vmem>>, vector<1x128xf32>
    %12 = arith.mulf %5, %5 : vector<512x128xf32>
    %cst_10 = arith.constant dense<0.000000e+00> : vector<128xf32>
    %13 = vector.multi_reduction <add>, %12, %cst_10 [0] : vector<512x128xf32> to vector<128xf32>
    %14 = vector.shape_cast %13 : vector<128xf32> to vector<1x128xf32>
    %15 = arith.addf %11, %14 : vector<1x128xf32>
    %c1_11 = arith.constant 1 : index
    %c0_12 = arith.constant 0 : index
    %16 = vector.load %arg7[%c1_11, %c0_12] : memref<8x128xf32, #tpu.memory_space<vmem>>, vector<1x128xf32>
    tpu.vector_store %arg7[%c1_11, %c0_12], %15 {strides = array<i32>} : memref<8x128xf32, #tpu.memory_space<vmem>>, vector<1x128xf32>,
    %c512_i32 = arith.constant 512 : i32
    %17 = arith.muli %arg0, %c512_i32 : i32
    %18 = tpu.assume_multiple %17, 512 : i32
    %19 = arith.index_cast %18 : i32 to index
    %c0_13 = arith.constant 0 : index
    %20 = vector.load %arg6[%19, %c0_13] : memref<512x128xf32, #tpu.memory_space<vmem>>, vector<512x128xf32>
    tpu.vector_store %arg6[%19, %c0_13], %5 {strides = array<i32>} : memref<512x128xf32, #tpu.memory_space<vmem>>, vector<512x128xf32>,
    %c0_i32_14 = arith.constant 0 : i32
    %21 = arith.cmpi eq, %arg0, %c0_i32_14 : i32
    %22 = arith.extui %21 : i1 to i32
    %c0_i32_15 = arith.constant 0 : i32
    %23 = arith.cmpi ne, %22, %c0_i32_15 : i32
    scf.if %23 {
      %c0_16 = arith.constant 0 : index
      %c0_17 = arith.constant 0 : index
      %24 = vector.load %arg7[%c0_16, %c0_17] : memref<8x128xf32, #tpu.memory_space<vmem>>, vector<1x128xf32>
      %cst_18 = arith.constant 0.001953125 : f32
      %25 = vector.broadcast %cst_18 : f32 to vector<1x128xf32>
      %26 = arith.mulf %24, %25 : vector<1x128xf32>
      %c1_19 = arith.constant 1 : index
      %c0_20 = arith.constant 0 : index
      %27 = vector.load %arg7[%c1_19, %c0_20] : memref<8x128xf32, #tpu.memory_space<vmem>>, vector<1x128xf32>
      %cst_21 = arith.constant 0.001953125 : f32
      %28 = vector.broadcast %cst_21 : f32 to vector<1x128xf32>
      %29 = arith.mulf %27, %28 : vector<1x128xf32>
      %30 = arith.mulf %26, %26 : vector<1x128xf32>
      %31 = arith.subf %29, %30 : vector<1x128xf32>
      %cst_22 = arith.constant 0.000000e+00 : f32
      %32 = vector.broadcast %cst_22 : f32 to vector<1x128xf32>
      %33 = arith.maximumf %31, %32 : vector<1x128xf32>
      %cst_23 = arith.constant 9.99999974E-6 : f32
      %34 = vector.broadcast %cst_23 : f32 to vector<1x128xf32>
      %35 = arith.addf %33, %34 : vector<1x128xf32>
      %36 = math.rsqrt %35 : vector<1x128xf32>
      %c0_24 = arith.constant 0 : index
      %c0_25 = arith.constant 0 : index
      %37 = vector.load %arg3[%c0_24, %c0_25] : memref<1x128xf32, #tpu.memory_space<vmem>>, vector<1x128xf32>
      %38 = arith.mulf %36, %37 : vector<1x128xf32>
      %c0_26 = arith.constant 0 : index
      %c0_27 = arith.constant 0 : index
      %39 = vector.load %arg4[%c0_26, %c0_27] : memref<1x128xf32, #tpu.memory_space<vmem>>, vector<1x128xf32>
      %40 = arith.mulf %26, %38 : vector<1x128xf32>
      %41 = arith.subf %39, %40 : vector<1x128xf32>
      %c0_28 = arith.constant 0 : index
      %c0_29 = arith.constant 0 : index
      %42 = vector.load %arg6[%c0_28, %c0_29] : memref<512x128xf32, #tpu.memory_space<vmem>>, vector<512x128xf32>
      %43 = vector.broadcast %38 : vector<1x128xf32> to vector<512x128xf32>
      %44 = arith.mulf %42, %43 : vector<512x128xf32>
      %45 = vector.broadcast %41 : vector<1x128xf32> to vector<512x128xf32>
      %46 = arith.addf %44, %45 : vector<512x128xf32>
      %cst_30 = arith.constant 0.000000e+00 : f32
      %47 = vector.broadcast %cst_30 : f32 to vector<512x128xf32>
      %48 = arith.cmpf ogt, %46, %47 : vector<512x128xf32>
      %cst_31 = arith.constant 2.000000e-01 : f32
      %49 = vector.broadcast %cst_31 : f32 to vector<512x128xf32>
      %50 = arith.mulf %49, %46 : vector<512x128xf32>
      %51 = arith.select %48, %46, %50 : vector<512x128xi1>, vector<512x128xf32>
      %52 = arith.truncf %51 : vector<512x128xf32> to vector<512x128xbf16>
      %c0_32 = arith.constant 0 : index
      %c0_33 = arith.constant 0 : index
      %53 = vector.load %arg5[%c0_32, %c0_33] : memref<512x128xbf16, #tpu.memory_space<vmem>>, vector<512x128xbf16>
      tpu.vector_store %arg5[%c0_32, %c0_33], %52 {strides = array<i32>} : memref<512x128xbf16, #tpu.memory_space<vmem>>, vector<512x128xbf16>,
    } else {
    }
    return
  }
  func.func @transform_0(%arg0: i32) -> (i32, i32) {
    %c0_i32 = arith.constant 0 : i32
    %c0_i32_0 = arith.constant 0 : i32
    return %arg0, %c0_i32 : i32, i32
  }
  func.func @transform_1(%arg0: i32) -> (i32, i32) {
    %c0_i32 = arith.constant 0 : i32
    %c0_i32_0 = arith.constant 0 : i32
    %c0_i32_1 = arith.constant 0 : i32
    return %c0_i32, %c0_i32_0 : i32, i32
  }
  func.func @transform_2(%arg0: i32) -> (i32, i32) {
    %c0_i32 = arith.constant 0 : i32
    %c0_i32_0 = arith.constant 0 : i32
    %c0_i32_1 = arith.constant 0 : i32
    return %c0_i32, %c0_i32_0 : i32, i32
  }
  func.func @transform_3(%arg0: i32) -> (i32, i32) {
    %c0_i32 = arith.constant 0 : i32
    %c0_i32_0 = arith.constant 0 : i32
    %c0_i32_1 = arith.constant 0 : i32
    return %c0_i32, %c0_i32_0 : i32, i32
  }
  func.func @transform_4(%arg0: i32) -> (i32, i32) {
    %c0_i32 = arith.constant 0 : i32
    %c0_i32_0 = arith.constant 0 : i32
    %c0_i32_1 = arith.constant 0 : i32
    return %c0_i32, %c0_i32_0 : i32, i32
  }
}

module attributes {stable_mosaic.version = 11 : i64} {
  func.func @_fused_bn_lrelu_kernel(%arg0: i32, %arg1: memref<1024x128xbf16, #tpu.memory_space<vmem>>, %arg2: memref<128x128xbf16, #tpu.memory_space<vmem>>, %arg3: memref<1x128xf32, #tpu.memory_space<vmem>>, %arg4: memref<1x128xf32, #tpu.memory_space<vmem>>, %arg5: memref<2048x128xbf16, #tpu.memory_space<vmem>>, %arg6: memref<2048x128xf32, #tpu.memory_space<vmem>>, %arg7: memref<8x128xf32, #tpu.memory_space<vmem>>) attributes {dimension_semantics = [#tpu.dimension_semantics<arbitrary>], iteration_bounds = array<i64: 2>, scalar_prefetch = 0 : i64, scratch_operands = 2 : i64, tpu.core_type = #tpu.core_type<tc>, window_params = [{transform_indices = @transform_0, window_bounds = array<i64: 1024, 128>}, {pipeline_mode = #tpu.pipeline_mode<synchronous>, transform_indices = @transform_1, window_bounds = array<i64: 128, 128>}, {pipeline_mode = #tpu.pipeline_mode<synchronous>, transform_indices = @transform_2, window_bounds = array<i64: 1, 128>}, {pipeline_mode = #tpu.pipeline_mode<synchronous>, transform_indices = @transform_3, window_bounds = array<i64: 1, 128>}, {pipeline_mode = #tpu.pipeline_mode<synchronous>, transform_indices = @transform_4, window_bounds = array<i64: 2048, 128>}]} {
    %c0_i32 = arith.constant 0 : i32
    %0 = arith.cmpi eq, %arg0, %c0_i32 : i32
    %1 = arith.extui %0 : i1 to i32
    %c0_i32_0 = arith.constant 0 : i32
    %2 = arith.cmpi ne, %1, %c0_i32_0 : i32
    scf.if %2 {
      %cst_15 = arith.constant 0.000000e+00 : f32
      %24 = vector.broadcast %cst_15 : f32 to vector<8x128xf32>
      %c0_16 = arith.constant 0 : index
      %c0_17 = arith.constant 0 : index
      %25 = vector.load %arg7[%c0_16, %c0_17] : memref<8x128xf32, #tpu.memory_space<vmem>>, vector<8x128xf32>
      tpu.vector_store %arg7[%c0_16, %c0_17], %24 {strides = array<i32>} : memref<8x128xf32, #tpu.memory_space<vmem>>, vector<8x128xf32>,
    } else {
    }
    %c0 = arith.constant 0 : index
    %c0_1 = arith.constant 0 : index
    %3 = vector.load %arg1[%c0, %c0_1] : memref<1024x128xbf16, #tpu.memory_space<vmem>>, vector<1024x128xbf16>
    %c0_2 = arith.constant 0 : index
    %c0_3 = arith.constant 0 : index
    %4 = vector.load %arg2[%c0_2, %c0_3] : memref<128x128xbf16, #tpu.memory_space<vmem>>, vector<128x128xbf16>
    %cst = arith.constant dense<0.000000e+00> : vector<1024x128xf32>
    %5 = tpu.matmul %3, %4, %cst {dimension_numbers = #tpu.dot_dimension_numbers<[1], [0], [0], [1], [0, 0, 1, 1], [], []>} : vector<1024x128xbf16>, vector<128x128xbf16>, vector<1024x128xf32> -> vector<1024x128xf32>
    %c0_4 = arith.constant 0 : index
    %c0_5 = arith.constant 0 : index
    %6 = vector.load %arg7[%c0_4, %c0_5] : memref<8x128xf32, #tpu.memory_space<vmem>>, vector<1x128xf32>
    %cst_6 = arith.constant dense<0.000000e+00> : vector<128xf32>
    %7 = vector.multi_reduction <add>, %5, %cst_6 [0] : vector<1024x128xf32> to vector<128xf32>
    %8 = vector.shape_cast %7 : vector<128xf32> to vector<1x128xf32>
    %9 = arith.addf %6, %8 : vector<1x128xf32>
    %c0_7 = arith.constant 0 : index
    %c0_8 = arith.constant 0 : index
    %10 = vector.load %arg7[%c0_7, %c0_8] : memref<8x128xf32, #tpu.memory_space<vmem>>, vector<1x128xf32>
    tpu.vector_store %arg7[%c0_7, %c0_8], %9 {strides = array<i32>} : memref<8x128xf32, #tpu.memory_space<vmem>>, vector<1x128xf32>,
    %c1 = arith.constant 1 : index
    %c0_9 = arith.constant 0 : index
    %11 = vector.load %arg7[%c1, %c0_9] : memref<8x128xf32, #tpu.memory_space<vmem>>, vector<1x128xf32>
    %12 = arith.mulf %5, %5 : vector<1024x128xf32>
    %cst_10 = arith.constant dense<0.000000e+00> : vector<128xf32>
    %13 = vector.multi_reduction <add>, %12, %cst_10 [0] : vector<1024x128xf32> to vector<128xf32>
    %14 = vector.shape_cast %13 : vector<128xf32> to vector<1x128xf32>
    %15 = arith.addf %11, %14 : vector<1x128xf32>
    %c1_11 = arith.constant 1 : index
    %c0_12 = arith.constant 0 : index
    %16 = vector.load %arg7[%c1_11, %c0_12] : memref<8x128xf32, #tpu.memory_space<vmem>>, vector<1x128xf32>
    tpu.vector_store %arg7[%c1_11, %c0_12], %15 {strides = array<i32>} : memref<8x128xf32, #tpu.memory_space<vmem>>, vector<1x128xf32>,
    %c1024_i32 = arith.constant 1024 : i32
    %17 = arith.muli %arg0, %c1024_i32 : i32
    %18 = tpu.assume_multiple %17, 1024 : i32
    %19 = arith.index_cast %18 : i32 to index
    %c0_13 = arith.constant 0 : index
    %20 = vector.load %arg6[%19, %c0_13] : memref<2048x128xf32, #tpu.memory_space<vmem>>, vector<1024x128xf32>
    tpu.vector_store %arg6[%19, %c0_13], %5 {strides = array<i32>} : memref<2048x128xf32, #tpu.memory_space<vmem>>, vector<1024x128xf32>,
    %c1_i32 = arith.constant 1 : i32
    %21 = arith.cmpi eq, %arg0, %c1_i32 : i32
    %22 = arith.extui %21 : i1 to i32
    %c0_i32_14 = arith.constant 0 : i32
    %23 = arith.cmpi ne, %22, %c0_i32_14 : i32
    scf.if %23 {
      %c0_15 = arith.constant 0 : index
      %c0_16 = arith.constant 0 : index
      %24 = vector.load %arg7[%c0_15, %c0_16] : memref<8x128xf32, #tpu.memory_space<vmem>>, vector<1x128xf32>
      %cst_17 = arith.constant 4.8828125E-4 : f32
      %25 = vector.broadcast %cst_17 : f32 to vector<1x128xf32>
      %26 = arith.mulf %24, %25 : vector<1x128xf32>
      %c1_18 = arith.constant 1 : index
      %c0_19 = arith.constant 0 : index
      %27 = vector.load %arg7[%c1_18, %c0_19] : memref<8x128xf32, #tpu.memory_space<vmem>>, vector<1x128xf32>
      %cst_20 = arith.constant 4.8828125E-4 : f32
      %28 = vector.broadcast %cst_20 : f32 to vector<1x128xf32>
      %29 = arith.mulf %27, %28 : vector<1x128xf32>
      %30 = arith.mulf %26, %26 : vector<1x128xf32>
      %31 = arith.subf %29, %30 : vector<1x128xf32>
      %cst_21 = arith.constant 0.000000e+00 : f32
      %32 = vector.broadcast %cst_21 : f32 to vector<1x128xf32>
      %33 = arith.maximumf %31, %32 : vector<1x128xf32>
      %cst_22 = arith.constant 9.99999974E-6 : f32
      %34 = vector.broadcast %cst_22 : f32 to vector<1x128xf32>
      %35 = arith.addf %33, %34 : vector<1x128xf32>
      %36 = math.rsqrt %35 : vector<1x128xf32>
      %c0_23 = arith.constant 0 : index
      %c0_24 = arith.constant 0 : index
      %37 = vector.load %arg3[%c0_23, %c0_24] : memref<1x128xf32, #tpu.memory_space<vmem>>, vector<1x128xf32>
      %38 = arith.mulf %36, %37 : vector<1x128xf32>
      %c0_25 = arith.constant 0 : index
      %c0_26 = arith.constant 0 : index
      %39 = vector.load %arg4[%c0_25, %c0_26] : memref<1x128xf32, #tpu.memory_space<vmem>>, vector<1x128xf32>
      %40 = arith.mulf %26, %38 : vector<1x128xf32>
      %41 = arith.subf %39, %40 : vector<1x128xf32>
      %c0_27 = arith.constant 0 : index
      %c0_28 = arith.constant 0 : index
      %42 = vector.load %arg6[%c0_27, %c0_28] : memref<2048x128xf32, #tpu.memory_space<vmem>>, vector<2048x128xf32>
      %43 = vector.broadcast %38 : vector<1x128xf32> to vector<2048x128xf32>
      %44 = arith.mulf %42, %43 : vector<2048x128xf32>
      %45 = vector.broadcast %41 : vector<1x128xf32> to vector<2048x128xf32>
      %46 = arith.addf %44, %45 : vector<2048x128xf32>
      %cst_29 = arith.constant 0.000000e+00 : f32
      %47 = vector.broadcast %cst_29 : f32 to vector<2048x128xf32>
      %48 = arith.cmpf ogt, %46, %47 : vector<2048x128xf32>
      %cst_30 = arith.constant 2.000000e-01 : f32
      %49 = vector.broadcast %cst_30 : f32 to vector<2048x128xf32>
      %50 = arith.mulf %49, %46 : vector<2048x128xf32>
      %51 = arith.select %48, %46, %50 : vector<2048x128xi1>, vector<2048x128xf32>
      %52 = arith.truncf %51 : vector<2048x128xf32> to vector<2048x128xbf16>
      %c0_31 = arith.constant 0 : index
      %c0_32 = arith.constant 0 : index
      %53 = vector.load %arg5[%c0_31, %c0_32] : memref<2048x128xbf16, #tpu.memory_space<vmem>>, vector<2048x128xbf16>
      tpu.vector_store %arg5[%c0_31, %c0_32], %52 {strides = array<i32>} : memref<2048x128xbf16, #tpu.memory_space<vmem>>, vector<2048x128xbf16>,
    } else {
    }
    return
  }
  func.func @transform_0(%arg0: i32) -> (i32, i32) {
    %c0_i32 = arith.constant 0 : i32
    %c0_i32_0 = arith.constant 0 : i32
    return %arg0, %c0_i32 : i32, i32
  }
  func.func @transform_1(%arg0: i32) -> (i32, i32) {
    %c0_i32 = arith.constant 0 : i32
    %c0_i32_0 = arith.constant 0 : i32
    %c0_i32_1 = arith.constant 0 : i32
    return %c0_i32, %c0_i32_0 : i32, i32
  }
  func.func @transform_2(%arg0: i32) -> (i32, i32) {
    %c0_i32 = arith.constant 0 : i32
    %c0_i32_0 = arith.constant 0 : i32
    %c0_i32_1 = arith.constant 0 : i32
    return %c0_i32, %c0_i32_0 : i32, i32
  }
  func.func @transform_3(%arg0: i32) -> (i32, i32) {
    %c0_i32 = arith.constant 0 : i32
    %c0_i32_0 = arith.constant 0 : i32
    %c0_i32_1 = arith.constant 0 : i32
    return %c0_i32, %c0_i32_0 : i32, i32
  }
  func.func @transform_4(%arg0: i32) -> (i32, i32) {
    %c0_i32 = arith.constant 0 : i32
    %c0_i32_0 = arith.constant 0 : i32
    %c0_i32_1 = arith.constant 0 : i32
    return %c0_i32, %c0_i32_0 : i32, i32
  }
}

module attributes {stable_mosaic.version = 11 : i64} {
  func.func @_gemm_tanh_kernel(%arg0: i32, %arg1: memref<2048x64xbf16, #tpu.memory_space<vmem>>, %arg2: memref<64x128xbf16, #tpu.memory_space<vmem>>, %arg3: memref<2048x128xf32, #tpu.memory_space<vmem>>) attributes {dimension_semantics = [#tpu.dimension_semantics<parallel>], iteration_bounds = array<i64: 4>, scalar_prefetch = 0 : i64, scratch_operands = 0 : i64, tpu.core_type = #tpu.core_type<tc>, window_params = [{transform_indices = @transform_0, window_bounds = array<i64: 2048, 64>}, {pipeline_mode = #tpu.pipeline_mode<synchronous>, transform_indices = @transform_1, window_bounds = array<i64: 64, 128>}, {transform_indices = @transform_2, window_bounds = array<i64: 2048, 128>}]} {
    %c0 = arith.constant 0 : index
    %c0_0 = arith.constant 0 : index
    %0 = vector.load %arg1[%c0, %c0_0] : memref<2048x64xbf16, #tpu.memory_space<vmem>>, vector<2048x64xbf16>
    %c0_1 = arith.constant 0 : index
    %c0_2 = arith.constant 0 : index
    %1 = vector.load %arg2[%c0_1, %c0_2] : memref<64x128xbf16, #tpu.memory_space<vmem>>, vector<64x128xbf16>
    %cst = arith.constant dense<0.000000e+00> : vector<2048x128xf32>
    %2 = tpu.matmul %0, %1, %cst {dimension_numbers = #tpu.dot_dimension_numbers<[1], [0], [0], [1], [0, 0, 1, 1], [], []>} : vector<2048x64xbf16>, vector<64x128xbf16>, vector<2048x128xf32> -> vector<2048x128xf32>
    %3 = math.tanh %2 : vector<2048x128xf32>
    %c0_3 = arith.constant 0 : index
    %c0_4 = arith.constant 0 : index
    %4 = vector.load %arg3[%c0_3, %c0_4] : memref<2048x128xf32, #tpu.memory_space<vmem>>, vector<2048x128xf32>
    tpu.vector_store %arg3[%c0_3, %c0_4], %3 {strides = array<i32>} : memref<2048x128xf32, #tpu.memory_space<vmem>>, vector<2048x128xf32>,
    return
  }
  func.func @transform_0(%arg0: i32) -> (i32, i32) {
    %c0_i32 = arith.constant 0 : i32
    %c0_i32_0 = arith.constant 0 : i32
    return %arg0, %c0_i32 : i32, i32
  }
  func.func @transform_1(%arg0: i32) -> (i32, i32) {
    %c0_i32 = arith.constant 0 : i32
    %c0_i32_0 = arith.constant 0 : i32
    %c0_i32_1 = arith.constant 0 : i32
    return %c0_i32, %c0_i32_0 : i32, i32
  }
  func.func @transform_2(%arg0: i32) -> (i32, i32) {
    %c0_i32 = arith.constant 0 : i32
    %c0_i32_0 = arith.constant 0 : i32
    return %arg0, %c0_i32 : i32, i32
  }
}

</mosaic_0001>

<llo_original>
// kernel: generator_forward.5
$region0: #{generator_forward.5}
  #allocation0 [shape = 'u32[]', space=smem, size = 0x4, offset = 0x4, fixed_abs, tag = 'smem constant byte address 0x4 - core index']
  #allocation1 [shape = 'u32[144,128]{1,0:T(1,128)}', space=vmem, size = 0x12000, scoped, tag = 'internal scratch']
  #allocation2 [shape = 'f32[32,128]{1,0:T(8,128)}', space=vmem, size = 0x4000, scoped, tag = 'scratch operand']
  #allocation3 [shape = 'f32[8,128]{1,0:T(8,128)}', space=vmem, size = 0x1000, scoped, tag = 'scratch operand']
  %s0 = inlined_call_operand.vmem [shape: bf16[32,256], index: 0, kind: input, shape index: {}]
  %s1 = inlined_call_operand.vmem [shape: bf16[256,128], index: 1, kind: input, shape index: {}]
  %s2 = inlined_call_operand.vmem [shape: f32[1,128], index: 2, kind: input, shape index: {}]
  %s3 = inlined_call_operand.vmem [shape: f32[1,128], index: 3, kind: input, shape index: {}]
  %s4 = inlined_call_operand.vmem [shape: bf16[32,128], index: 4, kind: output, shape index: {}]
  %s5 = sld [smem:[#allocation0]]
  $region34: #{generator_forward.5} parent=0
    _
  %s7 = ssub.s32 1, %s5
  %s8 = scalar_select 0, %s7, %s5
  // Predicated region
  $region2: #{generator_forward.5} parent=0 // pred_check
    _
  $region3: #{generator_forward.5} parent=0 // pred_check_branch
    %10 = sbr.rel (0) target = $region5
  $region4: #{generator_forward.5} parent=0 // pred_region
    _
  $region5: #{generator_forward.5} parent=0 // pred_fallthru
    _
  // Predicated region
  $region6: #{generator_forward.5} parent=0 // pred_check
    _
  $region7: #{generator_forward.5} parent=0 // pred_check_branch
    %12 = sbr.rel (0) target = $region9
  $region8: #{generator_forward.5} parent=0 // pred_region
    _
  $region9: #{generator_forward.5} parent=0 // pred_fallthru
    _
  // Predicated region
  $region10: #{generator_forward.5} parent=0 // pred_check
    _
  $region11: #{generator_forward.5} parent=0 // pred_check_branch
    %14 = sbr.rel (0) target = $region13
  $region12: #{generator_forward.5} parent=0 // pred_region
    _
  $region13: #{generator_forward.5} parent=0 // pred_fallthru
    _
  // Predicated region
  $region14: #{generator_forward.5} parent=0 // pred_check
    _
  $region15: #{generator_forward.5} parent=0 // pred_check_branch
    %16 = sbr.rel (0) target = $region17
  $region16: #{generator_forward.5} parent=0 // pred_region
    _
  $region17: #{generator_forward.5} parent=0 // pred_fallthru
    _
  %p18 = scmp.eq.s32.totalorder 0, 0
  // Predicated region
  $region18: #{generator_forward.5} parent=0 // pred_check
    %p19 = pneg %p18
  $region19: #{generator_forward.5} parent=0 // pred_check_branch
    %21 = sbr.rel (%p19) target = $region21
  $region20: #{generator_forward.5} parent=0 // pred_region
    %22 = vst [vmem:[#allocation3] sm:$0xff] 0.0
  $region21: #{generator_forward.5} parent=0 // pred_fallthru
    _
  %v23 = vld [vmem:[%s0] sm:$0xff]
  %v24 = vld [vmem:[%s0 + $0x8] sm:$0xff]
  %v25 = vld [vmem:[%s0 + $0x10] sm:$0xff]
  %v26 = vld [vmem:[%s0 + $0x18] sm:$0xff]
  %v27 = vld [vmem:[%s1] sm:$0xf]
  %v28 = vld [vmem:[%s1 + $0x4] sm:$0xf]
  %v29 = vld [vmem:[%s1 + $0x8] sm:$0xf]
  %v30 = vld [vmem:[%s1 + $0xc] sm:$0xf]
  %v31 = vld [vmem:[%s1 + $0x10] sm:$0xf]
  %v32 = vld [vmem:[%s1 + $0x14] sm:$0xf]
  %v33 = vld [vmem:[%s1 + $0x18] sm:$0xf]
  %v34 = vld [vmem:[%s1 + $0x1c] sm:$0xf]
  %v35 = vld [vmem:[%s1 + $0x20] sm:$0xf]
  %v36 = vld [vmem:[%s1 + $0x24] sm:$0xf]
  %v37 = vld [vmem:[%s1 + $0x28] sm:$0xf]
  %v38 = vld [vmem:[%s1 + $0x2c] sm:$0xf]
  %v39 = vld [vmem:[%s1 + $0x30] sm:$0xf]
  %v40 = vld [vmem:[%s1 + $0x34] sm:$0xf]
  %v41 = vld [vmem:[%s1 + $0x38] sm:$0xf]
  %v42 = vld [vmem:[%s1 + $0x3c] sm:$0xf]
  %v43 = vld [vmem:[%s1 + $0x40] sm:$0xf]
  %v44 = vld [vmem:[%s1 + $0x44] sm:$0xf]
  %v45 = vld [vmem:[%s1 + $0x48] sm:$0xf]
  %v46 = vld [vmem:[%s1 + $0x4c] sm:$0xf]
  %v47 = vld [vmem:[%s1 + $0x50] sm:$0xf]
  %v48 = vld [vmem:[%s1 + $0x54] sm:$0xf]
  %v49 = vld [vmem:[%s1 + $0x58] sm:$0xf]
  %v50 = vld [vmem:[%s1 + $0x5c] sm:$0xf]
  %v51 = vld [vmem:[%s1 + $0x60] sm:$0xf]
  %v52 = vld [vmem:[%s1 + $0x64] sm:$0xf]
  %v53 = vld [vmem:[%s1 + $0x68] sm:$0xf]
  %v54 = vld [vmem:[%s1 + $0x6c] sm:$0xf]
  %v55 = vld [vmem:[%s1 + $0x70] sm:$0xf]
  %v56 = vld [vmem:[%s1 + $0x74] sm:$0xf]
  %v57 = vld [vmem:[%s1 + $0x78] sm:$0xf]
  %v58 = vld [vmem:[%s1 + $0x7c] sm:$0xf]
  %v63 = vunpack.c.l.b16 %v23
  %v64 = vunpack.c.h.b16 %v23
  %v65 = vunpack.c.l.b16 %v24
  %v66 = vunpack.c.h.b16 %v24
  %v67 = vunpack.c.l.b16 %v25
  %v68 = vunpack.c.h.b16 %v25
  %v69 = vunpack.c.l.b16 %v26
  %v70 = vunpack.c.h.b16 %v26
  %v71 = vpack.c.b16 %v65, %v63
  %v72 = vpack.c.b16 %v66, %v64
  %v73 = vpack.c.b16 %v69, %v67
  %v74 = vpack.c.b16 %v70, %v68
  %v111 = vunpack.c.l.b16 %v27
  %v112 = vunpack.c.l.b16 %v28
  %v113 = vunpack.c.l.b16 %v29
  %v114 = vunpack.c.l.b16 %v30
  %v115 = vunpack.c.l.b16 %v31
  %v116 = vunpack.c.l.b16 %v32
  %v117 = vunpack.c.l.b16 %v33
  %v118 = vunpack.c.l.b16 %v34
  %v119 = vunpack.c.l.b16 %v35
  %v120 = vunpack.c.l.b16 %v36
  %v121 = vunpack.c.l.b16 %v37
  %v122 = vunpack.c.l.b16 %v38
  %v123 = vunpack.c.l.b16 %v39
  %v124 = vunpack.c.l.b16 %v40
  %v125 = vunpack.c.l.b16 %v41
  %v126 = vunpack.c.l.b16 %v42
  %v127 = vunpack.c.l.b16 %v43
  %v128 = vunpack.c.l.b16 %v44
  %v129 = vunpack.c.l.b16 %v45
  %v130 = vunpack.c.l.b16 %v46
  %v131 = vunpack.c.l.b16 %v47
  %v132 = vunpack.c.l.b16 %v48
  %v133 = vunpack.c.l.b16 %v49
  %v134 = vunpack.c.l.b16 %v50
  %v135 = vunpack.c.l.b16 %v51
  %v136 = vunpack.c.l.b16 %v52
  %v137 = vunpack.c.l.b16 %v53
  %v138 = vunpack.c.l.b16 %v54
  %v139 = vunpack.c.l.b16 %v55
  %v140 = vunpack.c.l.b16 %v56
  %v141 = vunpack.c.l.b16 %v57
  %v142 = vunpack.c.l.b16 %v58
  %v143 = vpack.c.b16 %v112, %v111
  %v144 = vpack.c.b16 %v114, %v113
  %v145 = vpack.c.b16 %v116, %v115
  %v146 = vpack.c.b16 %v118, %v117
  %v147 = vpack.c.b16 %v120, %v119
  %v148 = vpack.c.b16 %v122, %v121
  %v149 = vpack.c.b16 %v124, %v123
  %v150 = vpack.c.b16 %v126, %v125
  %v151 = vpack.c.b16 %v128, %v127
  %v152 = vpack.c.b16 %v130, %v129
  %v153 = vpack.c.b16 %v132, %v131
  %v154 = vpack.c.b16 %v134, %v133
  %v155 = vpack.c.b16 %v136, %v135
  %v156 = vpack.c.b16 %v138, %v137
  %v157 = vpack.c.b16 %v140, %v139
  %v158 = vpack.c.b16 %v142, %v141
  %175 = vmatprep.subr.bf16.mxu0 0
  %176 = vmatpush1.bf16.msra.mxu0 %v143
  %177 = vmatprep.subr.bf16.mxu0 0
  %178 = vmatpush1.bf16.msra.mxu0 %v144
  %179 = vmatprep.subr.bf16.mxu0 0
  %180 = vmatpush1.bf16.msra.mxu0 %v145
  %181 = vmatprep.subr.bf16.mxu0 0
  %182 = vmatpush1.bf16.msra.mxu0 %v146
  %183 = vmatprep.subr.bf16.mxu0 0
  %184 = vmatpush1.bf16.msra.mxu0 %v147
  %185 = vmatprep.subr.bf16.mxu0 0
  %186 = vmatpush1.bf16.msra.mxu0 %v148
  %187 = vmatprep.subr.bf16.mxu0 0
  %188 = vmatpush1.bf16.msra.mxu0 %v149
  %189 = vmatprep.subr.bf16.mxu0 0
  %190 = vmatpush1.bf16.msra.mxu0 %v150
  %191 = vmatprep.subr.bf16.mxu0 0
  %192 = vmatpush1.bf16.msra.mxu0 %v151
  %193 = vmatprep.subr.bf16.mxu0 0
  %194 = vmatpush1.bf16.msra.mxu0 %v152
  %195 = vmatprep.subr.bf16.mxu0 0
  %196 = vmatpush1.bf16.msra.mxu0 %v153
  %197 = vmatprep.subr.bf16.mxu0 0
  %198 = vmatpush1.bf16.msra.mxu0 %v154
  %199 = vmatprep.subr.bf16.mxu0 0
  %200 = vmatpush1.bf16.msra.mxu0 %v155
  %201 = vmatprep.subr.bf16.mxu0 0
  %202 = vmatpush1.bf16.msra.mxu0 %v156
  %203 = vmatprep.subr.bf16.mxu0 0
  %204 = vmatpush1.bf16.msra.mxu0 %v157
  %205 = vmatprep.subr.bf16.mxu0 0
  %206 = vmatpush1.bf16.msra.mxu0 %v158
  %207 = vmatprep.mubr.bf16.mxu0 %v72
  %208 = vmatmul.mubr.bf16.gmra.mrb[0].mxu0 %v71
  %v209 = vpop.f32.mrb[0].mxu0
  %v210 = vadd.f32 0.0, %v209
  %v211 = vpop.f32.mrb[0].mxu0
  %v212 = vpop.f32.mrb[0].mxu0
  %v213 = vadd.f32 0.0, %v212
  %v214 = vpop.f32.mrb[0].mxu0
  %215 = vmatprep.mubr.bf16.mxu0 %v74
  %216 = vmatmul.mubr.bf16.gmra.mrb[0].mxu0 %v73
  %v217 = vpop.f32.mrb[0].mxu0
  %v218 = vadd.f32 0.0, %v217
  %v219 = vpop.f32.mrb[0].mxu0
  %v220 = vpop.f32.mrb[0].mxu0
  %v221 = vadd.f32 0.0, %v220
  %v222 = vpop.f32.mrb[0].mxu0
  %223 = vdwg.mxu0
  %v224 = vld [vmem:[#allocation3] sm:$0x1]
  %v225 = vadd.f32 %v210, %v213
  %v226 = vadd.f32 %v225, %v218
  %v227 = vadd.f32 %v226, %v221
  %v228 = vrot.slane %v227, 4
  %v229 = vadd.f32 %v227, %v228
  %v230 = vrot.slane %v229, 2
  %v231 = vadd.f32 %v229, %v230
  %v232 = vrot.slane %v231, 1
  %v233 = vadd.f32 %v231, %v232
  %v234 = vadd.f32 %v224, %v233
  %235 = vst [vmem:[#allocation3] sm:$0x1] %v234
  %v236 = vld [vmem:[#allocation3 + $0x1] sm:$0x1]
  %v237 = vmul.f32 %v210, %v210
  %v238 = vmul.f32 %v213, %v213
  %v239 = vmul.f32 %v218, %v218
  %v240 = vmul.f32 %v221, %v221
  %v241 = vadd.f32 %v237, %v238
  %v242 = vadd.f32 %v241, %v239
  %v243 = vadd.f32 %v242, %v240
  %v244 = vrot.slane %v243, 4
  %v245 = vadd.f32 %v243, %v244
  %v246 = vrot.slane %v245, 2
  %v247 = vadd.f32 %v245, %v246
  %v248 = vrot.slane %v247, 1
  %v249 = vadd.f32 %v247, %v248
  %v250 = vadd.f32 %v236, %v249
  %251 = vst [vmem:[#allocation3 + $0x1] sm:$0x1] %v250
  %s252 = smul.u32 0, 32
  %s253 = scalar_lea.vmem [#allocation2], %s252
  %254 = vst [vmem:[%s253] sm:$0xff] %v210
  %255 = vst [vmem:[%s253 + $0x8] sm:$0xff] %v213
  %256 = vst [vmem:[%s253 + $0x10] sm:$0xff] %v218
  %257 = vst [vmem:[%s253 + $0x18] sm:$0xff] %v221
  // Predicated region
  $region22: #{generator_forward.5} parent=0 // pred_check
    %p258 = pneg %p18
  $region23: #{generator_forward.5} parent=0 // pred_check_branch
    %260 = sbr.rel (%p258) target = $region25
  $region24: #{generator_forward.5} parent=0 // pred_region
    %v261 = vld [vmem:[#allocation3] sm:$0x1]
    %v262 = vmul.f32 %v261, 0.03125
    %v263 = vld [vmem:[#allocation3 + $0x1] sm:$0x1]
    %v264 = vmul.f32 %v263, 0.03125
    %v265 = vmul.f32 %v262, %v262
    %v266 = vsub.f32 %v264, %v265
    %v267 = vmax.f32 %v266, 0.0
    %v268 = vadd.f32 %v267, 1e-05
    %v269 = vrsqrt.pop %v268
    %v270 = vld [vmem:[%s2] sm:$0x1]
    %v271 = vmul.f32 %v269, %v270
    %v272 = vld [vmem:[%s3] sm:$0x1]
    %v273 = vmul.f32 %v262, %v271
    %v274 = vsub.f32 %v272, %v273
    %v275 = vld [vmem:[#allocation2] sm:$0xff]
    %v276 = vld [vmem:[#allocation2 + $0x8] sm:$0xff]
    %v277 = vld [vmem:[#allocation2 + $0x10] sm:$0xff]
    %v278 = vld [vmem:[#allocation2 + $0x18] sm:$0xff]
    %v279 = vlaneseq
    %v280 = vshrl.u32 %v279, 7
    %v281 = vsub.s32 0, %v280
    %v282 = vrot.slane %v271, %v281
    %v283 = vmul.f32 %v275, %v282
    %v284 = vmul.f32 %v276, %v282
    %v285 = vmul.f32 %v277, %v282
    %v286 = vmul.f32 %v278, %v282
    %v288 = vlaneseq
    %v289 = vshrl.u32 %v288, 7
    %v290 = vsub.s32 0, %v289
    %v291 = vrot.slane %v274, %v290
    %v293 = vadd.f32 %v283, %v291
    %v294 = vadd.f32 %v284, %v291
    %v295 = vadd.f32 %v285, %v291
    %v296 = vadd.f32 %v286, %v291
    %vm297 = vcmp.gt.f32.partialorder %v293, 0.0
    %vm298 = vcmp.gt.f32.partialorder %v294, 0.0
    %vm299 = vcmp.gt.f32.partialorder %v295, 0.0
    %vm300 = vcmp.gt.f32.partialorder %v296, 0.0
    %v301 = vmul.f32 %v293, 0.2
    %v302 = vmul.f32 %v294, 0.2
    %v303 = vmul.f32 %v295, 0.2
    %v304 = vmul.f32 %v296, 0.2
    %v305 = vsel %vm297, %v293, %v301
    %v306 = vsel %vm298, %v294, %v302
    %v307 = vsel %vm299, %v295, %v303
    %v308 = vsel %vm300, %v296, %v304
    %v309 = vpack.c.bf16 %v306, %v305
    %v310 = vpack.c.bf16 %v308, %v307
    %v313 = vunpack.c.l.b16 %v309
    %v314 = vunpack.c.h.b16 %v309
    %v315 = vunpack.c.l.b16 %v310
    %v316 = vunpack.c.h.b16 %v310
    %v317 = vpack.c.b16 %v313, %v313
    %v318 = vpack.c.b16 %v314, %v314
    %v319 = vpack.c.b16 %v315, %v315
    %v320 = vpack.c.b16 %v316, %v316
    %325 = vst [vmem:[%s4] sm:$0xf] %v317
    %326 = vst [vmem:[%s4 + $0x4] sm:$0xf] %v318
    %327 = vst [vmem:[%s4 + $0x8] sm:$0xf] %v319
    %328 = vst [vmem:[%s4 + $0xc] sm:$0xf] %v320
  $region25: #{generator_forward.5} parent=0 // pred_fallthru
    _
  // Predicated region
  $region26: #{generator_forward.5} parent=0 // pred_check
    _
  $region27: #{generator_forward.5} parent=0 // pred_check_branch
    %330 = sbr.rel (0) target = $region29
  $region28: #{generator_forward.5} parent=0 // pred_region
    _
  $region29: #{generator_forward.5} parent=0 // pred_fallthru
    _
  // Predicated region
  $region30: #{generator_forward.5} parent=0 // pred_check
    _
  $region31: #{generator_forward.5} parent=0 // pred_check_branch
    %332 = sbr.rel (0) target = $region33
  $region32: #{generator_forward.5} parent=0 // pred_region
    _
  $region33: #{generator_forward.5} parent=0 // pred_fallthru
    _

// kernel: generator_forward.6
$region0: #{generator_forward.6}
  #allocation0 [shape = 'u32[]', space=smem, size = 0x4, offset = 0x4, fixed_abs, tag = 'smem constant byte address 0x4 - core index']
  #allocation1 [shape = 'u32[144,128]{1,0:T(1,128)}', space=vmem, size = 0x12000, scoped, tag = 'internal scratch']
  #allocation2 [shape = 'f32[128,128]{1,0:T(8,128)}', space=vmem, size = 0x10000, scoped, tag = 'scratch operand']
  #allocation3 [shape = 'f32[8,128]{1,0:T(8,128)}', space=vmem, size = 0x1000, scoped, tag = 'scratch operand']
  %s0 = inlined_call_operand.vmem [shape: bf16[128,512], index: 0, kind: input, shape index: {}]
  %s1 = inlined_call_operand.vmem [shape: bf16[512,128], index: 1, kind: input, shape index: {}]
  %s2 = inlined_call_operand.vmem [shape: f32[1,128], index: 2, kind: input, shape index: {}]
  %s3 = inlined_call_operand.vmem [shape: f32[1,128], index: 3, kind: input, shape index: {}]
  %s4 = inlined_call_operand.vmem [shape: bf16[128,128], index: 4, kind: output, shape index: {}]
  %s5 = sld [smem:[#allocation0]]
  $region34: #{generator_forward.6} parent=0
    _
  %s7 = ssub.s32 1, %s5
  %s8 = scalar_select 0, %s7, %s5
  // Predicated region
  $region2: #{generator_forward.6} parent=0 // pred_check
    _
  $region3: #{generator_forward.6} parent=0 // pred_check_branch
    %10 = sbr.rel (0) target = $region5
  $region4: #{generator_forward.6} parent=0 // pred_region
    _
  $region5: #{generator_forward.6} parent=0 // pred_fallthru
    _
  // Predicated region
  $region6: #{generator_forward.6} parent=0 // pred_check
    _
  $region7: #{generator_forward.6} parent=0 // pred_check_branch
    %12 = sbr.rel (0) target = $region9
  $region8: #{generator_forward.6} parent=0 // pred_region
    _
  $region9: #{generator_forward.6} parent=0 // pred_fallthru
    _
  // Predicated region
  $region10: #{generator_forward.6} parent=0 // pred_check
    _
  $region11: #{generator_forward.6} parent=0 // pred_check_branch
    %14 = sbr.rel (0) target = $region13
  $region12: #{generator_forward.6} parent=0 // pred_region
    _
  $region13: #{generator_forward.6} parent=0 // pred_fallthru
    _
  // Predicated region
  $region14: #{generator_forward.6} parent=0 // pred_check
    _
  $region15: #{generator_forward.6} parent=0 // pred_check_branch
    %16 = sbr.rel (0) target = $region17
  $region16: #{generator_forward.6} parent=0 // pred_region
    _
  $region17: #{generator_forward.6} parent=0 // pred_fallthru
    _
  %p18 = scmp.eq.s32.totalorder 0, 0
  // Predicated region
  $region18: #{generator_forward.6} parent=0 // pred_check
    %p19 = pneg %p18
  $region19: #{generator_forward.6} parent=0 // pred_check_branch
    %21 = sbr.rel (%p19) target = $region21
  $region20: #{generator_forward.6} parent=0 // pred_region
    %22 = vst [vmem:[#allocation3] sm:$0xff] 0.0
  $region21: #{generator_forward.6} parent=0 // pred_fallthru
    _
  %v23 = vld [vmem:[%s0] sm:$0xff]
  %v24 = vld [vmem:[%s0 + $0x8] sm:$0xff]
  %v25 = vld [vmem:[%s0 + $0x10] sm:$0xff]
  %v26 = vld [vmem:[%s0 + $0x18] sm:$0xff]
  %v27 = vld [vmem:[%s0 + $0x20] sm:$0xff]
  %v28 = vld [vmem:[%s0 + $0x28] sm:$0xff]
  %v29 = vld [vmem:[%s0 + $0x30] sm:$0xff]
  %v30 = vld [vmem:[%s0 + $0x38] sm:$0xff]
  %v31 = vld [vmem:[%s0 + $0x40] sm:$0xff]
  %v32 = vld [vmem:[%s0 + $0x48] sm:$0xff]
  %v33 = vld [vmem:[%s0 + $0x50] sm:$0xff]
  %v34 = vld [vmem:[%s0 + $0x58] sm:$0xff]
  %v35 = vld [vmem:[%s0 + $0x60] sm:$0xff]
  %v36 = vld [vmem:[%s0 + $0x68] sm:$0xff]
  %v37 = vld [vmem:[%s0 + $0x70] sm:$0xff]
  %v38 = vld [vmem:[%s0 + $0x78] sm:$0xff]
  %v39 = vld [vmem:[%s0 + $0x80] sm:$0xff]
  %v40 = vld [vmem:[%s0 + $0x88] sm:$0xff]
  %v41 = vld [vmem:[%s0 + $0x90] sm:$0xff]
  %v42 = vld [vmem:[%s0 + $0x98] sm:$0xff]
  %v43 = vld [vmem:[%s0 + $0xa0] sm:$0xff]
  %v44 = vld [vmem:[%s0 + $0xa8] sm:$0xff]
  %v45 = vld [vmem:[%s0 + $0xb0] sm:$0xff]
  %v46 = vld [vmem:[%s0 + $0xb8] sm:$0xff]
  %v47 = vld [vmem:[%s0 + $0xc0] sm:$0xff]
  %v48 = vld [vmem:[%s0 + $0xc8] sm:$0xff]
  %v49 = vld [vmem:[%s0 + $0xd0] sm:$0xff]
  %v50 = vld [vmem:[%s0 + $0xd8] sm:$0xff]
  %v51 = vld [vmem:[%s0 + $0xe0] sm:$0xff]
  %v52 = vld [vmem:[%s0 + $0xe8] sm:$0xff]
  %v53 = vld [vmem:[%s0 + $0xf0] sm:$0xff]
  %v54 = vld [vmem:[%s0 + $0xf8] sm:$0xff]
  %v55 = vld [vmem:[%s1] sm:$0xf]
  %v56 = vld [vmem:[%s1 + $0x4] sm:$0xf]
  %v57 = vld [vmem:[%s1 + $0x8] sm:$0xf]
  %v58 = vld [vmem:[%s1 + $0xc] sm:$0xf]
  %v59 = vld [vmem:[%s1 + $0x10] sm:$0xf]
  %v60 = vld [vmem:[%s1 + $0x14] sm:$0xf]
  %v61 = vld [vmem:[%s1 + $0x18] sm:$0xf]
  %v62 = vld [vmem:[%s1 + $0x1c] sm:$0xf]
  %v63 = vld [vmem:[%s1 + $0x20] sm:$0xf]
  %v64 = vld [vmem:[%s1 + $0x24] sm:$0xf]
  %v65 = vld [vmem:[%s1 + $0x28] sm:$0xf]
  %v66 = vld [vmem:[%s1 + $0x2c] sm:$0xf]
  %v67 = vld [vmem:[%s1 + $0x30] sm:$0xf]
  %v68 = vld [vmem:[%s1 + $0x34] sm:$0xf]
  %v69 = vld [vmem:[%s1 + $0x38] sm:$0xf]
  %v70 = vld [vmem:[%s1 + $0x3c] sm:$0xf]
  %v71 = vld [vmem:[%s1 + $0x40] sm:$0xf]
  %v72 = vld [vmem:[%s1 + $0x44] sm:$0xf]
  %v73 = vld [vmem:[%s1 + $0x48] sm:$0xf]
  %v74 = vld [vmem:[%s1 + $0x4c] sm:$0xf]
  %v75 = vld [vmem:[%s1 + $0x50] sm:$0xf]
  %v76 = vld [vmem:[%s1 + $0x54] sm:$0xf]
  %v77 = vld [vmem:[%s1 + $0x58] sm:$0xf]
  %v78 = vld [vmem:[%s1 + $0x5c] sm:$0xf]
  %v79 = vld [vmem:[%s1 + $0x60] sm:$0xf]
  %v80 = vld [vmem:[%s1 + $0x64] sm:$0xf]
  %v81 = vld [vmem:[%s1 + $0x68] sm:$0xf]
  %v82 = vld [vmem:[%s1 + $0x6c] sm:$0xf]
  %v83 = vld [vmem:[%s1 + $0x70] sm:$0xf]
  %v84 = vld [vmem:[%s1 + $0x74] sm:$0xf]
  %v85 = vld [vmem:[%s1 + $0x78] sm:$0xf]
  %v86 = vld [vmem:[%s1 + $0x7c] sm:$0xf]
  %v87 = vld [vmem:[%s1 + $0x80] sm:$0xf]
  %v88 = vld [vmem:[%s1 + $0x84] sm:$0xf]
  %v89 = vld [vmem:[%s1 + $0x88] sm:$0xf]
  %v90 = vld [vmem:[%s1 + $0x8c] sm:$0xf]
  %v91 = vld [vmem:[%s1 + $0x90] sm:$0xf]
  %v92 = vld [vmem:[%s1 + $0x94] sm:$0xf]
  %v93 = vld [vmem:[%s1 + $0x98] sm:$0xf]
  %v94 = vld [vmem:[%s1 + $0x9c] sm:$0xf]
  %v95 = vld [vmem:[%s1 + $0xa0] sm:$0xf]
  %v96 = vld [vmem:[%s1 + $0xa4] sm:$0xf]
  %v97 = vld [vmem:[%s1 + $0xa8] sm:$0xf]
  %v98 = vld [vmem:[%s1 + $0xac] sm:$0xf]
  %v99 = vld [vmem:[%s1 + $0xb0] sm:$0xf]
  %v100 = vld [vmem:[%s1 + $0xb4] sm:$0xf]
  %v101 = vld [vmem:[%s1 + $0xb8] sm:$0xf]
  %v102 = vld [vmem:[%s1 + $0xbc] sm:$0xf]
  %v103 = vld [vmem:[%s1 + $0xc0] sm:$0xf]
  %v104 = vld [vmem:[%s1 + $0xc4] sm:$0xf]
  %v105 = vld [vmem:[%s1 + $0xc8] sm:$0xf]
  %v106 = vld [vmem:[%s1 + $0xcc] sm:$0xf]
  %v107 = vld [vmem:[%s1 + $0xd0] sm:$0xf]
  %v108 = vld [vmem:[%s1 + $0xd4] sm:$0xf]
  %v109 = vld [vmem:[%s1 + $0xd8] sm:$0xf]
  %v110 = vld [vmem:[%s1 + $0xdc] sm:$0xf]
  %v111 = vld [vmem:[%s1 + $0xe0] sm:$0xf]
  %v112 = vld [vmem:[%s1 + $0xe4] sm:$0xf]
  %v113 = vld [vmem:[%s1 + $0xe8] sm:$0xf]
  %v114 = vld [vmem:[%s1 + $0xec] sm:$0xf]
  %v115 = vld [vmem:[%s1 + $0xf0] sm:$0xf]
  %v116 = vld [vmem:[%s1 + $0xf4] sm:$0xf]
  %v117 = vld [vmem:[%s1 + $0xf8] sm:$0xf]
  %v118 = vld [vmem:[%s1 + $0xfc] sm:$0xf]
  %v151 = vunpack.c.l.b16 %v23
  %v152 = vunpack.c.h.b16 %v23
  %v153 = vunpack.c.l.b16 %v24
  %v154 = vunpack.c.h.b16 %v24
  %v155 = vunpack.c.l.b16 %v25
  %v156 = vunpack.c.h.b16 %v25
  %v157 = vunpack.c.l.b16 %v26
  %v158 = vunpack.c.h.b16 %v26
  %v159 = vunpack.c.l.b16 %v27
  %v160 = vunpack.c.h.b16 %v27
  %v161 = vunpack.c.l.b16 %v28
  %v162 = vunpack.c.h.b16 %v28
  %v163 = vunpack.c.l.b16 %v29
  %v164 = vunpack.c.h.b16 %v29
  %v165 = vunpack.c.l.b16 %v30
  %v166 = vunpack.c.h.b16 %v30
  %v167 = vunpack.c.l.b16 %v31
  %v168 = vunpack.c.h.b16 %v31
  %v169 = vunpack.c.l.b16 %v32
  %v170 = vunpack.c.h.b16 %v32
  %v171 = vunpack.c.l.b16 %v33
  %v172 = vunpack.c.h.b16 %v33
  %v173 = vunpack.c.l.b16 %v34
  %v174 = vunpack.c.h.b16 %v34
  %v175 = vunpack.c.l.b16 %v35
  %v176 = vunpack.c.h.b16 %v35
  %v177 = vunpack.c.l.b16 %v36
  %v178 = vunpack.c.h.b16 %v36
  %v179 = vunpack.c.l.b16 %v37
  %v180 = vunpack.c.h.b16 %v37
  %v181 = vunpack.c.l.b16 %v38
  %v182 = vunpack.c.h.b16 %v38
  %v183 = vunpack.c.l.b16 %v39
  %v184 = vunpack.c.h.b16 %v39
  %v185 = vunpack.c.l.b16 %v40
  %v186 = vunpack.c.h.b16 %v40
  %v187 = vunpack.c.l.b16 %v41
  %v188 = vunpack.c.h.b16 %v41
  %v189 = vunpack.c.l.b16 %v42
  %v190 = vunpack.c.h.b16 %v42
  %v191 = vunpack.c.l.b16 %v43
  %v192 = vunpack.c.h.b16 %v43
  %v193 = vunpack.c.l.b16 %v44
  %v194 = vunpack.c.h.b16 %v44
  %v195 = vunpack.c.l.b16 %v45
  %v196 = vunpack.c.h.b16 %v45
  %v197 = vunpack.c.l.b16 %v46
  %v198 = vunpack.c.h.b16 %v46
  %v199 = vunpack.c.l.b16 %v47
  %v200 = vunpack.c.h.b16 %v47
  %v201 = vunpack.c.l.b16 %v48
  %v202 = vunpack.c.h.b16 %v48
  %v203 = vunpack.c.l.b16 %v49
  %v204 = vunpack.c.h.b16 %v49
  %v205 = vunpack.c.l.b16 %v50
  %v206 = vunpack.c.h.b16 %v50
  %v207 = vunpack.c.l.b16 %v51
  %v208 = vunpack.c.h.b16 %v51
  %v209 = vunpack.c.l.b16 %v52
  %v210 = vunpack.c.h.b16 %v52
  %v211 = vunpack.c.l.b16 %v53
  %v212 = vunpack.c.h.b16 %v53
  %v213 = vunpack.c.l.b16 %v54
  %v214 = vunpack.c.h.b16 %v54
  %v215 = vpack.c.b16 %v155, %v151
  %v216 = vpack.c.b16 %v156, %v152
  %v217 = vpack.c.b16 %v157, %v153
  %v218 = vpack.c.b16 %v158, %v154
  %v219 = vpack.c.b16 %v163, %v159
  %v220 = vpack.c.b16 %v164, %v160
  %v221 = vpack.c.b16 %v165, %v161
  %v222 = vpack.c.b16 %v166, %v162
  %v223 = vpack.c.b16 %v171, %v167
  %v224 = vpack.c.b16 %v172, %v168
  %v225 = vpack.c.b16 %v173, %v169
  %v226 = vpack.c.b16 %v174, %v170
  %v227 = vpack.c.b16 %v179, %v175
  %v228 = vpack.c.b16 %v180, %v176
  %v229 = vpack.c.b16 %v181, %v177
  %v230 = vpack.c.b16 %v182, %v178
  %v231 = vpack.c.b16 %v187, %v183
  %v232 = vpack.c.b16 %v188, %v184
  %v233 = vpack.c.b16 %v189, %v185
  %v234 = vpack.c.b16 %v190, %v186
  %v235 = vpack.c.b16 %v195, %v191
  %v236 = vpack.c.b16 %v196, %v192
  %v237 = vpack.c.b16 %v197, %v193
  %v238 = vpack.c.b16 %v198, %v194
  %v239 = vpack.c.b16 %v203, %v199
  %v240 = vpack.c.b16 %v204, %v200
  %v241 = vpack.c.b16 %v205, %v201
  %v242 = vpack.c.b16 %v206, %v202
  %v243 = vpack.c.b16 %v211, %v207
  %v244 = vpack.c.b16 %v212, %v208
  %v245 = vpack.c.b16 %v213, %v209
  %v246 = vpack.c.b16 %v214, %v210
  %v343 = vunpack.c.l.b16 %v55
  %v344 = vunpack.c.l.b16 %v56
  %v345 = vunpack.c.l.b16 %v57
  %v346 = vunpack.c.l.b16 %v58
  %v347 = vunpack.c.l.b16 %v59
  %v348 = vunpack.c.l.b16 %v60
  %v349 = vunpack.c.l.b16 %v61
  %v350 = vunpack.c.l.b16 %v62
  %v351 = vunpack.c.l.b16 %v63
  %v352 = vunpack.c.l.b16 %v64
  %v353 = vunpack.c.l.b16 %v65
  %v354 = vunpack.c.l.b16 %v66
  %v355 = vunpack.c.l.b16 %v67
  %v356 = vunpack.c.l.b16 %v68
  %v357 = vunpack.c.l.b16 %v69
  %v358 = vunpack.c.l.b16 %v70
  %v359 = vunpack.c.l.b16 %v71
  %v360 = vunpack.c.l.b16 %v72
  %v361 = vunpack.c.l.b16 %v73
  %v362 = vunpack.c.l.b16 %v74
  %v363 = vunpack.c.l.b16 %v75
  %v364 = vunpack.c.l.b16 %v76
  %v365 = vunpack.c.l.b16 %v77
  %v366 = vunpack.c.l.b16 %v78
  %v367 = vunpack.c.l.b16 %v79
  %v368 = vunpack.c.l.b16 %v80
  %v369 = vunpack.c.l.b16 %v81
  %v370 = vunpack.c.l.b16 %v82
  %v371 = vunpack.c.l.b16 %v83
  %v372 = vunpack.c.l.b16 %v84
  %v373 = vunpack.c.l.b16 %v85
  %v374 = vunpack.c.l.b16 %v86
  %v375 = vunpack.c.l.b16 %v87
  %v376 = vunpack.c.l.b16 %v88
  %v377 = vunpack.c.l.b16 %v89
  %v378 = vunpack.c.l.b16 %v90
  %v379 = vunpack.c.l.b16 %v91
  %v380 = vunpack.c.l.b16 %v92
  %v381 = vunpack.c.l.b16 %v93
  %v382 = vunpack.c.l.b16 %v94
  %v383 = vunpack.c.l.b16 %v95
  %v384 = vunpack.c.l.b16 %v96
  %v385 = vunpack.c.l.b16 %v97
  %v386 = vunpack.c.l.b16 %v98
  %v387 = vunpack.c.l.b16 %v99
  %v388 = vunpack.c.l.b16 %v100
  %v389 = vunpack.c.l.b16 %v101
  %v390 = vunpack.c.l.b16 %v102
  %v391 = vunpack.c.l.b16 %v103
  %v392 = vunpack.c.l.b16 %v104
  %v393 = vunpack.c.l.b16 %v105
  %v394 = vunpack.c.l.b16 %v106
  %v395 = vunpack.c.l.b16 %v107
  %v396 = vunpack.c.l.b16 %v108
  %v397 = vunpack.c.l.b16 %v109
  %v398 = vunpack.c.l.b16 %v110
  %v399 = vunpack.c.l.b16 %v111
  %v400 = vunpack.c.l.b16 %v112
  %v401 = vunpack.c.l.b16 %v113
  %v402 = vunpack.c.l.b16 %v114
  %v403 = vunpack.c.l.b16 %v115
  %v404 = vunpack.c.l.b16 %v116
  %v405 = vunpack.c.l.b16 %v117
  %v406 = vunpack.c.l.b16 %v118
  %v407 = vpack.c.b16 %v344, %v343
  %v408 = vpack.c.b16 %v346, %v345
  %v409 = vpack.c.b16 %v348, %v347
  %v410 = vpack.c.b16 %v350, %v349
  %v411 = vpack.c.b16 %v352, %v351
  %v412 = vpack.c.b16 %v354, %v353
  %v413 = vpack.c.b16 %v356, %v355
  %v414 = vpack.c.b16 %v358, %v357
  %v415 = vpack.c.b16 %v360, %v359
  %v416 = vpack.c.b16 %v362, %v361
  %v417 = vpack.c.b16 %v364, %v363
  %v418 = vpack.c.b16 %v366, %v365
  %v419 = vpack.c.b16 %v368, %v367
  %v420 = vpack.c.b16 %v370, %v369
  %v421 = vpack.c.b16 %v372, %v371
  %v422 = vpack.c.b16 %v374, %v373
  %v423 = vpack.c.b16 %v376, %v375
  %v424 = vpack.c.b16 %v378, %v377
  %v425 = vpack.c.b16 %v380, %v379
  %v426 = vpack.c.b16 %v382, %v381
  %v427 = vpack.c.b16 %v384, %v383
  %v428 = vpack.c.b16 %v386, %v385
  %v429 = vpack.c.b16 %v388, %v387
  %v430 = vpack.c.b16 %v390, %v389
  %v431 = vpack.c.b16 %v392, %v391
  %v432 = vpack.c.b16 %v394, %v393
  %v433 = vpack.c.b16 %v396, %v395
  %v434 = vpack.c.b16 %v398, %v397
  %v435 = vpack.c.b16 %v400, %v399
  %v436 = vpack.c.b16 %v402, %v401
  %v437 = vpack.c.b16 %v404, %v403
  %v438 = vpack.c.b16 %v406, %v405
  %471 = vmatprep.subr.bf16.mxu0 0
  %472 = vmatpush1.bf16.msra.mxu0 %v407
  %473 = vmatprep.subr.bf16.mxu0 0
  %474 = vmatpush1.bf16.msra.mxu0 %v408
  %475 = vmatprep.subr.bf16.mxu0 0
  %476 = vmatpush1.bf16.msra.mxu0 %v409
  %477 = vmatprep.subr.bf16.mxu0 0
  %478 = vmatpush1.bf16.msra.mxu0 %v410
  %479 = vmatprep.subr.bf16.mxu0 0
  %480 = vmatpush1.bf16.msra.mxu0 %v411
  %481 = vmatprep.subr.bf16.mxu0 0
  %482 = vmatpush1.bf16.msra.mxu0 %v412
  %483 = vmatprep.subr.bf16.mxu0 0
  %484 = vmatpush1.bf16.msra.mxu0 %v413
  %485 = vmatprep.subr.bf16.mxu0 0
  %486 = vmatpush1.bf16.msra.mxu0 %v414
  %487 = vmatprep.subr.bf16.mxu0 0
  %488 = vmatpush1.bf16.msra.mxu0 %v415
  %489 = vmatprep.subr.bf16.mxu0 0
  %490 = vmatpush1.bf16.msra.mxu0 %v416
  %491 = vmatprep.subr.bf16.mxu0 0
  %492 = vmatpush1.bf16.msra.mxu0 %v417
  %493 = vmatprep.subr.bf16.mxu0 0
  %494 = vmatpush1.bf16.msra.mxu0 %v418
  %495 = vmatprep.subr.bf16.mxu0 0
  %496 = vmatpush1.bf16.msra.mxu0 %v419
  %497 = vmatprep.subr.bf16.mxu0 0
  %498 = vmatpush1.bf16.msra.mxu0 %v420
  %499 = vmatprep.subr.bf16.mxu0 0
  %500 = vmatpush1.bf16.msra.mxu0 %v421
  %501 = vmatprep.subr.bf16.mxu0 0
  %502 = vmatpush1.bf16.msra.mxu0 %v422
  %503 = vmatprep.mubr.bf16.mxu0 %v216
  %504 = vmatmul.mubr.bf16.gmra.mrb[0].mxu0 %v215
  %v505 = vpop.f32.mrb[0].mxu0
  %v506 = vadd.f32 0.0, %v505
  %v507 = vpop.f32.mrb[0].mxu0
  %v508 = vpop.f32.mrb[0].mxu0
  %v509 = vadd.f32 0.0, %v508
  %v510 = vpop.f32.mrb[0].mxu0
  %511 = vmatprep.mubr.bf16.mxu0 %v220
  %512 = vmatmul.mubr.bf16.gmra.mrb[0].mxu0 %v219
  %v513 = vpop.f32.mrb[0].mxu0
  %v514 = vadd.f32 0.0, %v513
  %v515 = vpop.f32.mrb[0].mxu0
  %v516 = vpop.f32.mrb[0].mxu0
  %v517 = vadd.f32 0.0, %v516
  %v518 = vpop.f32.mrb[0].mxu0
  %519 = vmatprep.mubr.bf16.mxu0 %v224
  %520 = vmatmul.mubr.bf16.gmra.mrb[0].mxu0 %v223
  %v521 = vpop.f32.mrb[0].mxu0
  %v522 = vadd.f32 0.0, %v521
  %v523 = vpop.f32.mrb[0].mxu0
  %v524 = vpop.f32.mrb[0].mxu0
  %v525 = vadd.f32 0.0, %v524
  %v526 = vpop.f32.mrb[0].mxu0
  %527 = vmatprep.mubr.bf16.mxu0 %v228
  %528 = vmatmul.mubr.bf16.gmra.mrb[0].mxu0 %v227
  %v529 = vpop.f32.mrb[0].mxu0
  %v530 = vadd.f32 0.0, %v529
  %v531 = vpop.f32.mrb[0].mxu0
  %v532 = vpop.f32.mrb[0].mxu0
  %v533 = vadd.f32 0.0, %v532
  %v534 = vpop.f32.mrb[0].mxu0
  %535 = vmatprep.mubr.bf16.mxu0 %v232
  %536 = vmatmul.mubr.bf16.gmra.mrb[0].mxu0 %v231
  %v537 = vpop.f32.mrb[0].mxu0
  %v538 = vadd.f32 0.0, %v537
  %v539 = vpop.f32.mrb[0].mxu0
  %v540 = vpop.f32.mrb[0].mxu0
  %v541 = vadd.f32 0.0, %v540
  %v542 = vpop.f32.mrb[0].mxu0
  %543 = vmatprep.mubr.bf16.mxu0 %v236
  %544 = vmatmul.mubr.bf16.gmra.mrb[0].mxu0 %v235
  %v545 = vpop.f32.mrb[0].mxu0
  %v546 = vadd.f32 0.0, %v545
  %v547 = vpop.f32.mrb[0].mxu0
  %v548 = vpop.f32.mrb[0].mxu0
  %v549 = vadd.f32 0.0, %v548
  %v550 = vpop.f32.mrb[0].mxu0
  %551 = vmatprep.mubr.bf16.mxu0 %v240
  %552 = vmatmul.mubr.bf16.gmra.mrb[0].mxu0 %v239
  %v553 = vpop.f32.mrb[0].mxu0
  %v554 = vadd.f32 0.0, %v553
  %v555 = vpop.f32.mrb[0].mxu0
  %v556 = vpop.f32.mrb[0].mxu0
  %v557 = vadd.f32 0.0, %v556
  %v558 = vpop.f32.mrb[0].mxu0
  %559 = vmatprep.mubr.bf16.mxu0 %v244
  %560 = vmatmul.mubr.bf16.gmra.mrb[0].mxu0 %v243
  %v561 = vpop.f32.mrb[0].mxu0
  %v562 = vadd.f32 0.0, %v561
  %v563 = vpop.f32.mrb[0].mxu0
  %v564 = vpop.f32.mrb[0].mxu0
  %v565 = vadd.f32 0.0, %v564
  %v566 = vpop.f32.mrb[0].mxu0
  %567 = vdwg.mxu0
  %568 = vmatprep.subr.bf16.mxu0 0
  %569 = vmatpush1.bf16.msra.mxu0 %v423
  %570 = vmatprep.subr.bf16.mxu0 0
  %571 = vmatpush1.bf16.msra.mxu0 %v424
  %572 = vmatprep.subr.bf16.mxu0 0
  %573 = vmatpush1.bf16.msra.mxu0 %v425
  %574 = vmatprep.subr.bf16.mxu0 0
  %575 = vmatpush1.bf16.msra.mxu0 %v426
  %576 = vmatprep.subr.bf16.mxu0 0
  %577 = vmatpush1.bf16.msra.mxu0 %v427
  %578 = vmatprep.subr.bf16.mxu0 0
  %579 = vmatpush1.bf16.msra.mxu0 %v428
  %580 = vmatprep.subr.bf16.mxu0 0
  %581 = vmatpush1.bf16.msra.mxu0 %v429
  %582 = vmatprep.subr.bf16.mxu0 0
  %583 = vmatpush1.bf16.msra.mxu0 %v430
  %584 = vmatprep.subr.bf16.mxu0 0
  %585 = vmatpush1.bf16.msra.mxu0 %v431
  %586 = vmatprep.subr.bf16.mxu0 0
  %587 = vmatpush1.bf16.msra.mxu0 %v432
  %588 = vmatprep.subr.bf16.mxu0 0
  %589 = vmatpush1.bf16.msra.mxu0 %v433
  %590 = vmatprep.subr.bf16.mxu0 0
  %591 = vmatpush1.bf16.msra.mxu0 %v434
  %592 = vmatprep.subr.bf16.mxu0 0
  %593 = vmatpush1.bf16.msra.mxu0 %v435
  %594 = vmatprep.subr.bf16.mxu0 0
  %595 = vmatpush1.bf16.msra.mxu0 %v436
  %596 = vmatprep.subr.bf16.mxu0 0
  %597 = vmatpush1.bf16.msra.mxu0 %v437
  %598 = vmatprep.subr.bf16.mxu0 0
  %599 = vmatpush1.bf16.msra.mxu0 %v438
  %600 = vmatprep.mubr.bf16.mxu0 %v218
  %601 = vmatmul.mubr.bf16.gmra.mrb[0].mxu0 %v217
  %v602 = vpop.f32.mrb[0].mxu0
  %v603 = vadd.f32 %v506, %v602
  %v604 = vpop.f32.mrb[0].mxu0
  %v605 = vpop.f32.mrb[0].mxu0
  %v606 = vadd.f32 %v509, %v605
  %v607 = vpop.f32.mrb[0].mxu0
  %608 = vmatprep.mubr.bf16.mxu0 %v222
  %609 = vmatmul.mubr.bf16.gmra.mrb[0].mxu0 %v221
  %v610 = vpop.f32.mrb[0].mxu0
  %v611 = vadd.f32 %v514, %v610
  %v612 = vpop.f32.mrb[0].mxu0
  %v613 = vpop.f32.mrb[0].mxu0
  %v614 = vadd.f32 %v517, %v613
  %v615 = vpop.f32.mrb[0].mxu0
  %616 = vmatprep.mubr.bf16.mxu0 %v226
  %617 = vmatmul.mubr.bf16.gmra.mrb[0].mxu0 %v225
  %v618 = vpop.f32.mrb[0].mxu0
  %v619 = vadd.f32 %v522, %v618
  %v620 = vpop.f32.mrb[0].mxu0
  %v621 = vpop.f32.mrb[0].mxu0
  %v622 = vadd.f32 %v525, %v621
  %v623 = vpop.f32.mrb[0].mxu0
  %624 = vmatprep.mubr.bf16.mxu0 %v230
  %625 = vmatmul.mubr.bf16.gmra.mrb[0].mxu0 %v229
  %v626 = vpop.f32.mrb[0].mxu0
  %v627 = vadd.f32 %v530, %v626
  %v628 = vpop.f32.mrb[0].mxu0
  %v629 = vpop.f32.mrb[0].mxu0
  %v630 = vadd.f32 %v533, %v629
  %v631 = vpop.f32.mrb[0].mxu0
  %632 = vmatprep.mubr.bf16.mxu0 %v234
  %633 = vmatmul.mubr.bf16.gmra.mrb[0].mxu0 %v233
  %v634 = vpop.f32.mrb[0].mxu0
  %v635 = vadd.f32 %v538, %v634
  %v636 = vpop.f32.mrb[0].mxu0
  %v637 = vpop.f32.mrb[0].mxu0
  %v638 = vadd.f32 %v541, %v637
  %v639 = vpop.f32.mrb[0].mxu0
  %640 = vmatprep.mubr.bf16.mxu0 %v238
  %641 = vmatmul.mubr.bf16.gmra.mrb[0].mxu0 %v237
  %v642 = vpop.f32.mrb[0].mxu0
  %v643 = vadd.f32 %v546, %v642
  %v644 = vpop.f32.mrb[0].mxu0
  %v645 = vpop.f32.mrb[0].mxu0
  %v646 = vadd.f32 %v549, %v645
  %v647 = vpop.f32.mrb[0].mxu0
  %648 = vmatprep.mubr.bf16.mxu0 %v242
  %649 = vmatmul.mubr.bf16.gmra.mrb[0].mxu0 %v241
  %v650 = vpop.f32.mrb[0].mxu0
  %v651 = vadd.f32 %v554, %v650
  %v652 = vpop.f32.mrb[0].mxu0
  %v653 = vpop.f32.mrb[0].mxu0
  %v654 = vadd.f32 %v557, %v653
  %v655 = vpop.f32.mrb[0].mxu0
  %656 = vmatprep.mubr.bf16.mxu0 %v246
  %657 = vmatmul.mubr.bf16.gmra.mrb[0].mxu0 %v245
  %v658 = vpop.f32.mrb[0].mxu0
  %v659 = vadd.f32 %v562, %v658
  %v660 = vpop.f32.mrb[0].mxu0
  %v661 = vpop.f32.mrb[0].mxu0
  %v662 = vadd.f32 %v565, %v661
  %v663 = vpop.f32.mrb[0].mxu0
  %664 = vdwg.mxu0
  %v665 = vld [vmem:[#allocation3] sm:$0x1]
  %v666 = vadd.f32 %v603, %v606
  %v667 = vadd.f32 %v666, %v611
  %v668 = vadd.f32 %v667, %v614
  %v669 = vadd.f32 %v668, %v619
  %v670 = vadd.f32 %v669, %v622
  %v671 = vadd.f32 %v670, %v627
  %v672 = vadd.f32 %v671, %v630
  %v673 = vadd.f32 %v672, %v635
  %v674 = vadd.f32 %v673, %v638
  %v675 = vadd.f32 %v674, %v643
  %v676 = vadd.f32 %v675, %v646
  %v677 = vadd.f32 %v676, %v651
  %v678 = vadd.f32 %v677, %v654
  %v679 = vadd.f32 %v678, %v659
  %v680 = vadd.f32 %v679, %v662
  %v681 = vrot.slane %v680, 4
  %v682 = vadd.f32 %v680, %v681
  %v683 = vrot.slane %v682, 2
  %v684 = vadd.f32 %v682, %v683
  %v685 = vrot.slane %v684, 1
  %v686 = vadd.f32 %v684, %v685
  %v687 = vadd.f32 %v665, %v686
  %688 = vst [vmem:[#allocation3] sm:$0x1] %v687
  %v689 = vld [vmem:[#allocation3 + $0x1] sm:$0x1]
  %v690 = vmul.f32 %v603, %v603
  %v691 = vmul.f32 %v606, %v606
  %v692 = vmul.f32 %v611, %v611
  %v693 = vmul.f32 %v614, %v614
  %v694 = vmul.f32 %v619, %v619
  %v695 = vmul.f32 %v622, %v622
  %v696 = vmul.f32 %v627, %v627
  %v697 = vmul.f32 %v630, %v630
  %v698 = vmul.f32 %v635, %v635
  %v699 = vmul.f32 %v638, %v638
  %v700 = vmul.f32 %v643, %v643
  %v701 = vmul.f32 %v646, %v646
  %v702 = vmul.f32 %v651, %v651
  %v703 = vmul.f32 %v654, %v654
  %v704 = vmul.f32 %v659, %v659
  %v705 = vmul.f32 %v662, %v662
  %v706 = vadd.f32 %v690, %v691
  %v707 = vadd.f32 %v706, %v692
  %v708 = vadd.f32 %v707, %v693
  %v709 = vadd.f32 %v708, %v694
  %v710 = vadd.f32 %v709, %v695
  %v711 = vadd.f32 %v710, %v696
  %v712 = vadd.f32 %v711, %v697
  %v713 = vadd.f32 %v712, %v698
  %v714 = vadd.f32 %v713, %v699
  %v715 = vadd.f32 %v714, %v700
  %v716 = vadd.f32 %v715, %v701
  %v717 = vadd.f32 %v716, %v702
  %v718 = vadd.f32 %v717, %v703
  %v719 = vadd.f32 %v718, %v704
  %v720 = vadd.f32 %v719, %v705
  %v721 = vrot.slane %v720, 4
  %v722 = vadd.f32 %v720, %v721
  %v723 = vrot.slane %v722, 2
  %v724 = vadd.f32 %v722, %v723
  %v725 = vrot.slane %v724, 1
  %v726 = vadd.f32 %v724, %v725
  %v727 = vadd.f32 %v689, %v726
  %728 = vst [vmem:[#allocation3 + $0x1] sm:$0x1] %v727
  %s729 = smul.u32 0, 128
  %s730 = scalar_lea.vmem [#allocation2], %s729
  %731 = vst [vmem:[%s730] sm:$0xff] %v603
  %732 = vst [vmem:[%s730 + $0x8] sm:$0xff] %v606
  %733 = vst [vmem:[%s730 + $0x10] sm:$0xff] %v611
  %734 = vst [vmem:[%s730 + $0x18] sm:$0xff] %v614
  %735 = vst [vmem:[%s730 + $0x20] sm:$0xff] %v619
  %736 = vst [vmem:[%s730 + $0x28] sm:$0xff] %v622
  %737 = vst [vmem:[%s730 + $0x30] sm:$0xff] %v627
  %738 = vst [vmem:[%s730 + $0x38] sm:$0xff] %v630
  %739 = vst [vmem:[%s730 + $0x40] sm:$0xff] %v635
  %740 = vst [vmem:[%s730 + $0x48] sm:$0xff] %v638
  %741 = vst [vmem:[%s730 + $0x50] sm:$0xff] %v643
  %742 = vst [vmem:[%s730 + $0x58] sm:$0xff] %v646
  %743 = vst [vmem:[%s730 + $0x60] sm:$0xff] %v651
  %744 = vst [vmem:[%s730 + $0x68] sm:$0xff] %v654
  %745 = vst [vmem:[%s730 + $0x70] sm:$0xff] %v659
  %746 = vst [vmem:[%s730 + $0x78] sm:$0xff] %v662
  // Predicated region
  $region22: #{generator_forward.6} parent=0 // pred_check
    %p747 = pneg %p18
  $region23: #{generator_forward.6} parent=0 // pred_check_branch
    %749 = sbr.rel (%p747) target = $region25
  $region24: #{generator_forward.6} parent=0 // pred_region
    %v750 = vld [vmem:[#allocation3] sm:$0x1]
    %v751 = vmul.f32 %v750, 0.0078125
    %v752 = vld [vmem:[#allocation3 + $0x1] sm:$0x1]
    %v753 = vmul.f32 %v752, 0.0078125
    %v754 = vmul.f32 %v751, %v751
    %v755 = vsub.f32 %v753, %v754
    %v756 = vmax.f32 %v755, 0.0
    %v757 = vadd.f32 %v756, 1e-05
    %v758 = vrsqrt.pop %v757
    %v759 = vld [vmem:[%s2] sm:$0x1]
    %v760 = vmul.f32 %v758, %v759
    %v761 = vld [vmem:[%s3] sm:$0x1]
    %v762 = vmul.f32 %v751, %v760
    %v763 = vsub.f32 %v761, %v762
    %v764 = vld [vmem:[#allocation2] sm:$0xff]
    %v765 = vld [vmem:[#allocation2 + $0x8] sm:$0xff]
    %v766 = vld [vmem:[#allocation2 + $0x10] sm:$0xff]
    %v767 = vld [vmem:[#allocation2 + $0x18] sm:$0xff]
    %v768 = vld [vmem:[#allocation2 + $0x20] sm:$0xff]
    %v769 = vld [vmem:[#allocation2 + $0x28] sm:$0xff]
    %v770 = vld [vmem:[#allocation2 + $0x30] sm:$0xff]
    %v771 = vld [vmem:[#allocation2 + $0x38] sm:$0xff]
    %v772 = vld [vmem:[#allocation2 + $0x40] sm:$0xff]
    %v773 = vld [vmem:[#allocation2 + $0x48] sm:$0xff]
    %v774 = vld [vmem:[#allocation2 + $0x50] sm:$0xff]
    %v775 = vld [vmem:[#allocation2 + $0x58] sm:$0xff]
    %v776 = vld [vmem:[#allocation2 + $0x60] sm:$0xff]
    %v777 = vld [vmem:[#allocation2 + $0x68] sm:$0xff]
    %v778 = vld [vmem:[#allocation2 + $0x70] sm:$0xff]
    %v779 = vld [vmem:[#allocation2 + $0x78] sm:$0xff]
    %v780 = vlaneseq
    %v781 = vshrl.u32 %v780, 7
    %v782 = vsub.s32 0, %v781
    %v783 = vrot.slane %v760, %v782
    %v784 = vmul.f32 %v764, %v783
    %v785 = vmul.f32 %v765, %v783
    %v786 = vmul.f32 %v766, %v783
    %v787 = vmul.f32 %v767, %v783
    %v788 = vmul.f32 %v768, %v783
    %v789 = vmul.f32 %v769, %v783
    %v790 = vmul.f32 %v770, %v783
    %v791 = vmul.f32 %v771, %v783
    %v792 = vmul.f32 %v772, %v783
    %v793 = vmul.f32 %v773, %v783
    %v794 = vmul.f32 %v774, %v783
    %v795 = vmul.f32 %v775, %v783
    %v796 = vmul.f32 %v776, %v783
    %v797 = vmul.f32 %v777, %v783
    %v798 = vmul.f32 %v778, %v783
    %v799 = vmul.f32 %v779, %v783
    %v801 = vlaneseq
    %v802 = vshrl.u32 %v801, 7
    %v803 = vsub.s32 0, %v802
    %v804 = vrot.slane %v763, %v803
    %v806 = vadd.f32 %v784, %v804
    %v807 = vadd.f32 %v785, %v804
    %v808 = vadd.f32 %v786, %v804
    %v809 = vadd.f32 %v787, %v804
    %v810 = vadd.f32 %v788, %v804
    %v811 = vadd.f32 %v789, %v804
    %v812 = vadd.f32 %v790, %v804
    %v813 = vadd.f32 %v791, %v804
    %v814 = vadd.f32 %v792, %v804
    %v815 = vadd.f32 %v793, %v804
    %v816 = vadd.f32 %v794, %v804
    %v817 = vadd.f32 %v795, %v804
    %v818 = vadd.f32 %v796, %v804
    %v819 = vadd.f32 %v797, %v804
    %v820 = vadd.f32 %v798, %v804
    %v821 = vadd.f32 %v799, %v804
    %vm822 = vcmp.gt.f32.partialorder %v806, 0.0
    %vm823 = vcmp.gt.f32.partialorder %v807, 0.0
    %vm824 = vcmp.gt.f32.partialorder %v808, 0.0
    %vm825 = vcmp.gt.f32.partialorder %v809, 0.0
    %vm826 = vcmp.gt.f32.partialorder %v810, 0.0
    %vm827 = vcmp.gt.f32.partialorder %v811, 0.0
    %vm828 = vcmp.gt.f32.partialorder %v812, 0.0
    %vm829 = vcmp.gt.f32.partialorder %v813, 0.0
    %vm830 = vcmp.gt.f32.partialorder %v814, 0.0
    %vm831 = vcmp.gt.f32.partialorder %v815, 0.0
    %vm832 = vcmp.gt.f32.partialorder %v816, 0.0
    %vm833 = vcmp.gt.f32.partialorder %v817, 0.0
    %vm834 = vcmp.gt.f32.partialorder %v818, 0.0
    %vm835 = vcmp.gt.f32.partialorder %v819, 0.0
    %vm836 = vcmp.gt.f32.partialorder %v820, 0.0
    %vm837 = vcmp.gt.f32.partialorder %v821, 0.0
    %v838 = vmul.f32 %v806, 0.2
    %v839 = vmul.f32 %v807, 0.2
    %v840 = vmul.f32 %v808, 0.2
    %v841 = vmul.f32 %v809, 0.2
    %v842 = vmul.f32 %v810, 0.2
    %v843 = vmul.f32 %v811, 0.2
    %v844 = vmul.f32 %v812, 0.2
    %v845 = vmul.f32 %v813, 0.2
    %v846 = vmul.f32 %v814, 0.2
    %v847 = vmul.f32 %v815, 0.2
    %v848 = vmul.f32 %v816, 0.2
    %v849 = vmul.f32 %v817, 0.2
    %v850 = vmul.f32 %v818, 0.2
    %v851 = vmul.f32 %v819, 0.2
    %v852 = vmul.f32 %v820, 0.2
    %v853 = vmul.f32 %v821, 0.2
    %v854 = vsel %vm822, %v806, %v838
    %v855 = vsel %vm823, %v807, %v839
    %v856 = vsel %vm824, %v808, %v840
    %v857 = vsel %vm825, %v809, %v841
    %v858 = vsel %vm826, %v810, %v842
    %v859 = vsel %vm827, %v811, %v843
    %v860 = vsel %vm828, %v812, %v844
    %v861 = vsel %vm829, %v813, %v845
    %v862 = vsel %vm830, %v814, %v846
    %v863 = vsel %vm831, %v815, %v847
    %v864 = vsel %vm832, %v816, %v848
    %v865 = vsel %vm833, %v817, %v849
    %v866 = vsel %vm834, %v818, %v850
    %v867 = vsel %vm835, %v819, %v851
    %v868 = vsel %vm836, %v820, %v852
    %v869 = vsel %vm837, %v821, %v853
    %v870 = vpack.c.bf16 %v855, %v854
    %v871 = vpack.c.bf16 %v857, %v856
    %v872 = vpack.c.bf16 %v859, %v858
    %v873 = vpack.c.bf16 %v861, %v860
    %v874 = vpack.c.bf16 %v863, %v862
    %v875 = vpack.c.bf16 %v865, %v864
    %v876 = vpack.c.bf16 %v867, %v866
    %v877 = vpack.c.bf16 %v869, %v868
    %v886 = vunpack.c.l.b16 %v870
    %v887 = vunpack.c.h.b16 %v870
    %v888 = vunpack.c.l.b16 %v871
    %v889 = vunpack.c.h.b16 %v871
    %v890 = vunpack.c.l.b16 %v872
    %v891 = vunpack.c.h.b16 %v872
    %v892 = vunpack.c.l.b16 %v873
    %v893 = vunpack.c.h.b16 %v873
    %v894 = vunpack.c.l.b16 %v874
    %v895 = vunpack.c.h.b16 %v874
    %v896 = vunpack.c.l.b16 %v875
    %v897 = vunpack.c.h.b16 %v875
    %v898 = vunpack.c.l.b16 %v876
    %v899 = vunpack.c.h.b16 %v876
    %v900 = vunpack.c.l.b16 %v877
    %v901 = vunpack.c.h.b16 %v877
    %v902 = vpack.c.b16 %v886, %v886
    %v903 = vpack.c.b16 %v887, %v887
    %v904 = vpack.c.b16 %v888, %v888
    %v905 = vpack.c.b16 %v889, %v889
    %v906 = vpack.c.b16 %v890, %v890
    %v907 = vpack.c.b16 %v891, %v891
    %v908 = vpack.c.b16 %v892, %v892
    %v909 = vpack.c.b16 %v893, %v893
    %v910 = vpack.c.b16 %v894, %v894
    %v911 = vpack.c.b16 %v895, %v895
    %v912 = vpack.c.b16 %v896, %v896
    %v913 = vpack.c.b16 %v897, %v897
    %v914 = vpack.c.b16 %v898, %v898
    %v915 = vpack.c.b16 %v899, %v899
    %v916 = vpack.c.b16 %v900, %v900
    %v917 = vpack.c.b16 %v901, %v901
    %934 = vst [vmem:[%s4] sm:$0xf] %v902
    %935 = vst [vmem:[%s4 + $0x4] sm:$0xf] %v903
    %936 = vst [vmem:[%s4 + $0x8] sm:$0xf] %v904
    %937 = vst [vmem:[%s4 + $0xc] sm:$0xf] %v905
    %938 = vst [vmem:[%s4 + $0x10] sm:$0xf] %v906
    %939 = vst [vmem:[%s4 + $0x14] sm:$0xf] %v907
    %940 = vst [vmem:[%s4 + $0x18] sm:$0xf] %v908
    %941 = vst [vmem:[%s4 + $0x1c] sm:$0xf] %v909
    %942 = vst [vmem:[%s4 + $0x20] sm:$0xf] %v910
    %943 = vst [vmem:[%s4 + $0x24] sm:$0xf] %v911
    %944 = vst [vmem:[%s4 + $0x28] sm:$0xf] %v912
    %945 = vst [vmem:[%s4 + $0x2c] sm:$0xf] %v913
    %946 = vst [vmem:[%s4 + $0x30] sm:$0xf] %v914
    %947 = vst [vmem:[%s4 + $0x34] sm:$0xf] %v915
    %948 = vst [vmem:[%s4 + $0x38] sm:$0xf] %v916
    %949 = vst [vmem:[%s4 + $0x3c] sm:$0xf] %v917
  $region25: #{generator_forward.6} parent=0 // pred_fallthru
    _
  // Predicated region
  $region26: #{generator_forward.6} parent=0 // pred_check
    _
  $region27: #{generator_forward.6} parent=0 // pred_check_branch
    %951 = sbr.rel (0) target = $region29
  $region28: #{generator_forward.6} parent=0 // pred_region
    _
  $region29: #{generator_forward.6} parent=0 // pred_fallthru
    _
  // Predicated region
  $region30: #{generator_forward.6} parent=0 // pred_check
    _
  $region31: #{generator_forward.6} parent=0 // pred_check_branch
    %953 = sbr.rel (0) target = $region33
  $region32: #{generator_forward.6} parent=0 // pred_region
    _
  $region33: #{generator_forward.6} parent=0 // pred_fallthru
    _

// kernel: generator_forward.7
$region0: #{generator_forward.7}
  #allocation0 [shape = 'u32[]', space=smem, size = 0x4, offset = 0x4, fixed_abs, tag = 'smem constant byte address 0x4 - core index']
  #allocation1 [shape = 'u32[144,128]{1,0:T(1,128)}', space=vmem, size = 0x12000, scoped, tag = 'internal scratch']
  #allocation2 [shape = 'f32[512,128]{1,0:T(8,128)}', space=vmem, size = 0x40000, scoped, tag = 'scratch operand']
  #allocation3 [shape = 'f32[8,128]{1,0:T(8,128)}', space=vmem, size = 0x1000, scoped, tag = 'scratch operand']
  %s0 = inlined_call_operand.vmem [shape: bf16[512,256], index: 0, kind: input, shape index: {}]
  %s1 = inlined_call_operand.vmem [shape: bf16[256,128], index: 1, kind: input, shape index: {}]
  %s2 = inlined_call_operand.vmem [shape: f32[1,128], index: 2, kind: input, shape index: {}]
  %s3 = inlined_call_operand.vmem [shape: f32[1,128], index: 3, kind: input, shape index: {}]
  %s4 = inlined_call_operand.vmem [shape: bf16[512,128], index: 4, kind: output, shape index: {}]
  %s5 = sld [smem:[#allocation0]]
  $region34: #{generator_forward.7} parent=0
    _
  %s7 = ssub.s32 1, %s5
  %s8 = scalar_select 0, %s7, %s5
  // Predicated region
  $region2: #{generator_forward.7} parent=0 // pred_check
    _
  $region3: #{generator_forward.7} parent=0 // pred_check_branch
    %10 = sbr.rel (0) target = $region5
  $region4: #{generator_forward.7} parent=0 // pred_region
    _
  $region5: #{generator_forward.7} parent=0 // pred_fallthru
    _
  // Predicated region
  $region6: #{generator_forward.7} parent=0 // pred_check
    _
  $region7: #{generator_forward.7} parent=0 // pred_check_branch
    %12 = sbr.rel (0) target = $region9
  $region8: #{generator_forward.7} parent=0 // pred_region
    _
  $region9: #{generator_forward.7} parent=0 // pred_fallthru
    _
  // Predicated region
  $region10: #{generator_forward.7} parent=0 // pred_check
    _
  $region11: #{generator_forward.7} parent=0 // pred_check_branch
    %14 = sbr.rel (0) target = $region13
  $region12: #{generator_forward.7} parent=0 // pred_region
    _
  $region13: #{generator_forward.7} parent=0 // pred_fallthru
    _
  // Predicated region
  $region14: #{generator_forward.7} parent=0 // pred_check
    _
  $region15: #{generator_forward.7} parent=0 // pred_check_branch
    %16 = sbr.rel (0) target = $region17
  $region16: #{generator_forward.7} parent=0 // pred_region
    _
  $region17: #{generator_forward.7} parent=0 // pred_fallthru
    _
  %p18 = scmp.eq.s32.totalorder 0, 0
  // Predicated region
  $region18: #{generator_forward.7} parent=0 // pred_check
    %p19 = pneg %p18
  $region19: #{generator_forward.7} parent=0 // pred_check_branch
    %21 = sbr.rel (%p19) target = $region21
  $region20: #{generator_forward.7} parent=0 // pred_region
    %22 = vst [vmem:[#allocation3] sm:$0xff] 0.0
  $region21: #{generator_forward.7} parent=0 // pred_fallthru
    _
  %v23 = vld [vmem:[%s0] sm:$0xff]
  %v24 = vld [vmem:[%s0 + $0x8] sm:$0xff]
  %v25 = vld [vmem:[%s0 + $0x10] sm:$0xff]
  %v26 = vld [vmem:[%s0 + $0x18] sm:$0xff]
  %v27 = vld [vmem:[%s0 + $0x20] sm:$0xff]
  %v28 = vld [vmem:[%s0 + $0x28] sm:$0xff]
  %v29 = vld [vmem:[%s0 + $0x30] sm:$0xff]
  %v30 = vld [vmem:[%s0 + $0x38] sm:$0xff]
  %v31 = vld [vmem:[%s0 + $0x40] sm:$0xff]
  %v32 = vld [vmem:[%s0 + $0x48] sm:$0xff]
  %v33 = vld [vmem:[%s0 + $0x50] sm:$0xff]
  %v34 = vld [vmem:[%s0 + $0x58] sm:$0xff]
  %v35 = vld [vmem:[%s0 + $0x60] sm:$0xff]
  %v36 = vld [vmem:[%s0 + $0x68] sm:$0xff]
  %v37 = vld [vmem:[%s0 + $0x70] sm:$0xff]
  %v38 = vld [vmem:[%s0 + $0x78] sm:$0xff]
  %v39 = vld [vmem:[%s0 + $0x80] sm:$0xff]
  %v40 = vld [vmem:[%s0 + $0x88] sm:$0xff]
  %v41 = vld [vmem:[%s0 + $0x90] sm:$0xff]
  %v42 = vld [vmem:[%s0 + $0x98] sm:$0xff]
  %v43 = vld [vmem:[%s0 + $0xa0] sm:$0xff]
  %v44 = vld [vmem:[%s0 + $0xa8] sm:$0xff]
  %v45 = vld [vmem:[%s0 + $0xb0] sm:$0xff]
  %v46 = vld [vmem:[%s0 + $0xb8] sm:$0xff]
  %v47 = vld [vmem:[%s0 + $0xc0] sm:$0xff]
  %v48 = vld [vmem:[%s0 + $0xc8] sm:$0xff]
  %v49 = vld [vmem:[%s0 + $0xd0] sm:$0xff]
  %v50 = vld [vmem:[%s0 + $0xd8] sm:$0xff]
  %v51 = vld [vmem:[%s0 + $0xe0] sm:$0xff]
  %v52 = vld [vmem:[%s0 + $0xe8] sm:$0xff]
  %v53 = vld [vmem:[%s0 + $0xf0] sm:$0xff]
  %v54 = vld [vmem:[%s0 + $0xf8] sm:$0xff]
  %v55 = vld [vmem:[%s0 + $0x100] sm:$0xff]
  %v56 = vld [vmem:[%s0 + $0x108] sm:$0xff]
  %v57 = vld [vmem:[%s0 + $0x110] sm:$0xff]
  %v58 = vld [vmem:[%s0 + $0x118] sm:$0xff]
  %v59 = vld [vmem:[%s0 + $0x120] sm:$0xff]
  %v60 = vld [vmem:[%s0 + $0x128] sm:$0xff]
  %v61 = vld [vmem:[%s0 + $0x130] sm:$0xff]
  %v62 = vld [vmem:[%s0 + $0x138] sm:$0xff]
  %v63 = vld [vmem:[%s0 + $0x140] sm:$0xff]
  %v64 = vld [vmem:[%s0 + $0x148] sm:$0xff]
  %v65 = vld [vmem:[%s0 + $0x150] sm:$0xff]
  %v66 = vld [vmem:[%s0 + $0x158] sm:$0xff]
  %v67 = vld [vmem:[%s0 + $0x160] sm:$0xff]
  %v68 = vld [vmem:[%s0 + $0x168] sm:$0xff]
  %v69 = vld [vmem:[%s0 + $0x170] sm:$0xff]
  %v70 = vld [vmem:[%s0 + $0x178] sm:$0xff]
  %v71 = vld [vmem:[%s0 + $0x180] sm:$0xff]
  %v72 = vld [vmem:[%s0 + $0x188] sm:$0xff]
  %v73 = vld [vmem:[%s0 + $0x190] sm:$0xff]
  %v74 = vld [vmem:[%s0 + $0x198] sm:$0xff]
  %v75 = vld [vmem:[%s0 + $0x1a0] sm:$0xff]
  %v76 = vld [vmem:[%s0 + $0x1a8] sm:$0xff]
  %v77 = vld [vmem:[%s0 + $0x1b0] sm:$0xff]
  %v78 = vld [vmem:[%s0 + $0x1b8] sm:$0xff]
  %v79 = vld [vmem:[%s0 + $0x1c0] sm:$0xff]
  %v80 = vld [vmem:[%s0 + $0x1c8] sm:$0xff]
  %v81 = vld [vmem:[%s0 + $0x1d0] sm:$0xff]
  %v82 = vld [vmem:[%s0 + $0x1d8] sm:$0xff]
  %v83 = vld [vmem:[%s0 + $0x1e0] sm:$0xff]
  %v84 = vld [vmem:[%s0 + $0x1e8] sm:$0xff]
  %v85 = vld [vmem:[%s0 + $0x1f0] sm:$0xff]
  %v86 = vld [vmem:[%s0 + $0x1f8] sm:$0xff]
  %v87 = vld [vmem:[%s1] sm:$0xf]
  %v88 = vld [vmem:[%s1 + $0x4] sm:$0xf]
  %v89 = vld [vmem:[%s1 + $0x8] sm:$0xf]
  %v90 = vld [vmem:[%s1 + $0xc] sm:$0xf]
  %v91 = vld [vmem:[%s1 + $0x10] sm:$0xf]
  %v92 = vld [vmem:[%s1 + $0x14] sm:$0xf]
  %v93 = vld [vmem:[%s1 + $0x18] sm:$0xf]
  %v94 = vld [vmem:[%s1 + $0x1c] sm:$0xf]
  %v95 = vld [vmem:[%s1 + $0x20] sm:$0xf]
  %v96 = vld [vmem:[%s1 + $0x24] sm:$0xf]
  %v97 = vld [vmem:[%s1 + $0x28] sm:$0xf]
  %v98 = vld [vmem:[%s1 + $0x2c] sm:$0xf]
  %v99 = vld [vmem:[%s1 + $0x30] sm:$0xf]
  %v100 = vld [vmem:[%s1 + $0x34] sm:$0xf]
  %v101 = vld [vmem:[%s1 + $0x38] sm:$0xf]
  %v102 = vld [vmem:[%s1 + $0x3c] sm:$0xf]
  %v103 = vld [vmem:[%s1 + $0x40] sm:$0xf]
  %v104 = vld [vmem:[%s1 + $0x44] sm:$0xf]
  %v105 = vld [vmem:[%s1 + $0x48] sm:$0xf]
  %v106 = vld [vmem:[%s1 + $0x4c] sm:$0xf]
  %v107 = vld [vmem:[%s1 + $0x50] sm:$0xf]
  %v108 = vld [vmem:[%s1 + $0x54] sm:$0xf]
  %v109 = vld [vmem:[%s1 + $0x58] sm:$0xf]
  %v110 = vld [vmem:[%s1 + $0x5c] sm:$0xf]
  %v111 = vld [vmem:[%s1 + $0x60] sm:$0xf]
  %v112 = vld [vmem:[%s1 + $0x64] sm:$0xf]
  %v113 = vld [vmem:[%s1 + $0x68] sm:$0xf]
  %v114 = vld [vmem:[%s1 + $0x6c] sm:$0xf]
  %v115 = vld [vmem:[%s1 + $0x70] sm:$0xf]
  %v116 = vld [vmem:[%s1 + $0x74] sm:$0xf]
  %v117 = vld [vmem:[%s1 + $0x78] sm:$0xf]
  %v118 = vld [vmem:[%s1 + $0x7c] sm:$0xf]
  %v183 = vunpack.c.l.b16 %v23
  %v184 = vunpack.c.h.b16 %v23
  %v185 = vunpack.c.l.b16 %v24
  %v186 = vunpack.c.h.b16 %v24
  %v187 = vunpack.c.l.b16 %v25
  %v188 = vunpack.c.h.b16 %v25
  %v189 = vunpack.c.l.b16 %v26
  %v190 = vunpack.c.h.b16 %v26
  %v191 = vunpack.c.l.b16 %v27
  %v192 = vunpack.c.h.b16 %v27
  %v193 = vunpack.c.l.b16 %v28
  %v194 = vunpack.c.h.b16 %v28
  %v195 = vunpack.c.l.b16 %v29
  %v196 = vunpack.c.h.b16 %v29
  %v197 = vunpack.c.l.b16 %v30
  %v198 = vunpack.c.h.b16 %v30
  %v199 = vunpack.c.l.b16 %v31
  %v200 = vunpack.c.h.b16 %v31
  %v201 = vunpack.c.l.b16 %v32
  %v202 = vunpack.c.h.b16 %v32
  %v203 = vunpack.c.l.b16 %v33
  %v204 = vunpack.c.h.b16 %v33
  %v205 = vunpack.c.l.b16 %v34
  %v206 = vunpack.c.h.b16 %v34
  %v207 = vunpack.c.l.b16 %v35
  %v208 = vunpack.c.h.b16 %v35
  %v209 = vunpack.c.l.b16 %v36
  %v210 = vunpack.c.h.b16 %v36
  %v211 = vunpack.c.l.b16 %v37
  %v212 = vunpack.c.h.b16 %v37
  %v213 = vunpack.c.l.b16 %v38
  %v214 = vunpack.c.h.b16 %v38
  %v215 = vunpack.c.l.b16 %v39
  %v216 = vunpack.c.h.b16 %v39
  %v217 = vunpack.c.l.b16 %v40
  %v218 = vunpack.c.h.b16 %v40
  %v219 = vunpack.c.l.b16 %v41
  %v220 = vunpack.c.h.b16 %v41
  %v221 = vunpack.c.l.b16 %v42
  %v222 = vunpack.c.h.b16 %v42
  %v223 = vunpack.c.l.b16 %v43
  %v224 = vunpack.c.h.b16 %v43
  %v225 = vunpack.c.l.b16 %v44
  %v226 = vunpack.c.h.b16 %v44
  %v227 = vunpack.c.l.b16 %v45
  %v228 = vunpack.c.h.b16 %v45
  %v229 = vunpack.c.l.b16 %v46
  %v230 = vunpack.c.h.b16 %v46
  %v231 = vunpack.c.l.b16 %v47
  %v232 = vunpack.c.h.b16 %v47
  %v233 = vunpack.c.l.b16 %v48
  %v234 = vunpack.c.h.b16 %v48
  %v235 = vunpack.c.l.b16 %v49
  %v236 = vunpack.c.h.b16 %v49
  %v237 = vunpack.c.l.b16 %v50
  %v238 = vunpack.c.h.b16 %v50
  %v239 = vunpack.c.l.b16 %v51
  %v240 = vunpack.c.h.b16 %v51
  %v241 = vunpack.c.l.b16 %v52
  %v242 = vunpack.c.h.b16 %v52
  %v243 = vunpack.c.l.b16 %v53
  %v244 = vunpack.c.h.b16 %v53
  %v245 = vunpack.c.l.b16 %v54
  %v246 = vunpack.c.h.b16 %v54
  %v247 = vunpack.c.l.b16 %v55
  %v248 = vunpack.c.h.b16 %v55
  %v249 = vunpack.c.l.b16 %v56
  %v250 = vunpack.c.h.b16 %v56
  %v251 = vunpack.c.l.b16 %v57
  %v252 = vunpack.c.h.b16 %v57
  %v253 = vunpack.c.l.b16 %v58
  %v254 = vunpack.c.h.b16 %v58
  %v255 = vunpack.c.l.b16 %v59
  %v256 = vunpack.c.h.b16 %v59
  %v257 = vunpack.c.l.b16 %v60
  %v258 = vunpack.c.h.b16 %v60
  %v259 = vunpack.c.l.b16 %v61
  %v260 = vunpack.c.h.b16 %v61
  %v261 = vunpack.c.l.b16 %v62
  %v262 = vunpack.c.h.b16 %v62
  %v263 = vunpack.c.l.b16 %v63
  %v264 = vunpack.c.h.b16 %v63
  %v265 = vunpack.c.l.b16 %v64
  %v266 = vunpack.c.h.b16 %v64
  %v267 = vunpack.c.l.b16 %v65
  %v268 = vunpack.c.h.b16 %v65
  %v269 = vunpack.c.l.b16 %v66
  %v270 = vunpack.c.h.b16 %v66
  %v271 = vunpack.c.l.b16 %v67
  %v272 = vunpack.c.h.b16 %v67
  %v273 = vunpack.c.l.b16 %v68
  %v274 = vunpack.c.h.b16 %v68
  %v275 = vunpack.c.l.b16 %v69
  %v276 = vunpack.c.h.b16 %v69
  %v277 = vunpack.c.l.b16 %v70
  %v278 = vunpack.c.h.b16 %v70
  %v279 = vunpack.c.l.b16 %v71
  %v280 = vunpack.c.h.b16 %v71
  %v281 = vunpack.c.l.b16 %v72
  %v282 = vunpack.c.h.b16 %v72
  %v283 = vunpack.c.l.b16 %v73
  %v284 = vunpack.c.h.b16 %v73
  %v285 = vunpack.c.l.b16 %v74
  %v286 = vunpack.c.h.b16 %v74
  %v287 = vunpack.c.l.b16 %v75
  %v288 = vunpack.c.h.b16 %v75
  %v289 = vunpack.c.l.b16 %v76
  %v290 = vunpack.c.h.b16 %v76
  %v291 = vunpack.c.l.b16 %v77
  %v292 = vunpack.c.h.b16 %v77
  %v293 = vunpack.c.l.b16 %v78
  %v294 = vunpack.c.h.b16 %v78
  %v295 = vunpack.c.l.b16 %v79
  %v296 = vunpack.c.h.b16 %v79
  %v297 = vunpack.c.l.b16 %v80
  %v298 = vunpack.c.h.b16 %v80
  %v299 = vunpack.c.l.b16 %v81
  %v300 = vunpack.c.h.b16 %v81
  %v301 = vunpack.c.l.b16 %v82
  %v302 = vunpack.c.h.b16 %v82
  %v303 = vunpack.c.l.b16 %v83
  %v304 = vunpack.c.h.b16 %v83
  %v305 = vunpack.c.l.b16 %v84
  %v306 = vunpack.c.h.b16 %v84
  %v307 = vunpack.c.l.b16 %v85
  %v308 = vunpack.c.h.b16 %v85
  %v309 = vunpack.c.l.b16 %v86
  %v310 = vunpack.c.h.b16 %v86
  %v311 = vpack.c.b16 %v185, %v183
  %v312 = vpack.c.b16 %v186, %v184
  %v313 = vpack.c.b16 %v189, %v187
  %v314 = vpack.c.b16 %v190, %v188
  %v315 = vpack.c.b16 %v193, %v191
  %v316 = vpack.c.b16 %v194, %v192
  %v317 = vpack.c.b16 %v197, %v195
  %v318 = vpack.c.b16 %v198, %v196
  %v319 = vpack.c.b16 %v201, %v199
  %v320 = vpack.c.b16 %v202, %v200
  %v321 = vpack.c.b16 %v205, %v203
  %v322 = vpack.c.b16 %v206, %v204
  %v323 = vpack.c.b16 %v209, %v207
  %v324 = vpack.c.b16 %v210, %v208
  %v325 = vpack.c.b16 %v213, %v211
  %v326 = vpack.c.b16 %v214, %v212
  %v327 = vpack.c.b16 %v217, %v215
  %v328 = vpack.c.b16 %v218, %v216
  %v329 = vpack.c.b16 %v221, %v219
  %v330 = vpack.c.b16 %v222, %v220
  %v331 = vpack.c.b16 %v225, %v223
  %v332 = vpack.c.b16 %v226, %v224
  %v333 = vpack.c.b16 %v229, %v227
  %v334 = vpack.c.b16 %v230, %v228
  %v335 = vpack.c.b16 %v233, %v231
  %v336 = vpack.c.b16 %v234, %v232
  %v337 = vpack.c.b16 %v237, %v235
  %v338 = vpack.c.b16 %v238, %v236
  %v339 = vpack.c.b16 %v241, %v239
  %v340 = vpack.c.b16 %v242, %v240
  %v341 = vpack.c.b16 %v245, %v243
  %v342 = vpack.c.b16 %v246, %v244
  %v343 = vpack.c.b16 %v249, %v247
  %v344 = vpack.c.b16 %v250, %v248
  %v345 = vpack.c.b16 %v253, %v251
  %v346 = vpack.c.b16 %v254, %v252
  %v347 = vpack.c.b16 %v257, %v255
  %v348 = vpack.c.b16 %v258, %v256
  %v349 = vpack.c.b16 %v261, %v259
  %v350 = vpack.c.b16 %v262, %v260
  %v351 = vpack.c.b16 %v265, %v263
  %v352 = vpack.c.b16 %v266, %v264
  %v353 = vpack.c.b16 %v269, %v267
  %v354 = vpack.c.b16 %v270, %v268
  %v355 = vpack.c.b16 %v273, %v271
  %v356 = vpack.c.b16 %v274, %v272
  %v357 = vpack.c.b16 %v277, %v275
  %v358 = vpack.c.b16 %v278, %v276
  %v359 = vpack.c.b16 %v281, %v279
  %v360 = vpack.c.b16 %v282, %v280
  %v361 = vpack.c.b16 %v285, %v283
  %v362 = vpack.c.b16 %v286, %v284
  %v363 = vpack.c.b16 %v289, %v287
  %v364 = vpack.c.b16 %v290, %v288
  %v365 = vpack.c.b16 %v293, %v291
  %v366 = vpack.c.b16 %v294, %v292
  %v367 = vpack.c.b16 %v297, %v295
  %v368 = vpack.c.b16 %v298, %v296
  %v369 = vpack.c.b16 %v301, %v299
  %v370 = vpack.c.b16 %v302, %v300
  %v371 = vpack.c.b16 %v305, %v303
  %v372 = vpack.c.b16 %v306, %v304
  %v373 = vpack.c.b16 %v309, %v307
  %v374 = vpack.c.b16 %v310, %v308
  %v471 = vunpack.c.l.b16 %v87
  %v472 = vunpack.c.l.b16 %v88
  %v473 = vunpack.c.l.b16 %v89
  %v474 = vunpack.c.l.b16 %v90
  %v475 = vunpack.c.l.b16 %v91
  %v476 = vunpack.c.l.b16 %v92
  %v477 = vunpack.c.l.b16 %v93
  %v478 = vunpack.c.l.b16 %v94
  %v479 = vunpack.c.l.b16 %v95
  %v480 = vunpack.c.l.b16 %v96
  %v481 = vunpack.c.l.b16 %v97
  %v482 = vunpack.c.l.b16 %v98
  %v483 = vunpack.c.l.b16 %v99
  %v484 = vunpack.c.l.b16 %v100
  %v485 = vunpack.c.l.b16 %v101
  %v486 = vunpack.c.l.b16 %v102
  %v487 = vunpack.c.l.b16 %v103
  %v488 = vunpack.c.l.b16 %v104
  %v489 = vunpack.c.l.b16 %v105
  %v490 = vunpack.c.l.b16 %v106
  %v491 = vunpack.c.l.b16 %v107
  %v492 = vunpack.c.l.b16 %v108
  %v493 = vunpack.c.l.b16 %v109
  %v494 = vunpack.c.l.b16 %v110
  %v495 = vunpack.c.l.b16 %v111
  %v496 = vunpack.c.l.b16 %v112
  %v497 = vunpack.c.l.b16 %v113
  %v498 = vunpack.c.l.b16 %v114
  %v499 = vunpack.c.l.b16 %v115
  %v500 = vunpack.c.l.b16 %v116
  %v501 = vunpack.c.l.b16 %v117
  %v502 = vunpack.c.l.b16 %v118
  %v503 = vpack.c.b16 %v472, %v471
  %v504 = vpack.c.b16 %v474, %v473
  %v505 = vpack.c.b16 %v476, %v475
  %v506 = vpack.c.b16 %v478, %v477
  %v507 = vpack.c.b16 %v480, %v479
  %v508 = vpack.c.b16 %v482, %v481
  %v509 = vpack.c.b16 %v484, %v483
  %v510 = vpack.c.b16 %v486, %v485
  %v511 = vpack.c.b16 %v488, %v487
  %v512 = vpack.c.b16 %v490, %v489
  %v513 = vpack.c.b16 %v492, %v491
  %v514 = vpack.c.b16 %v494, %v493
  %v515 = vpack.c.b16 %v496, %v495
  %v516 = vpack.c.b16 %v498, %v497
  %v517 = vpack.c.b16 %v500, %v499
  %v518 = vpack.c.b16 %v502, %v501
  %535 = vmatprep.subr.bf16.mxu0 0
  %536 = vmatpush1.bf16.msra.mxu0 %v503
  %537 = vmatprep.subr.bf16.mxu0 0
  %538 = vmatpush1.bf16.msra.mxu0 %v504
  %539 = vmatprep.subr.bf16.mxu0 0
  %540 = vmatpush1.bf16.msra.mxu0 %v505
  %541 = vmatprep.subr.bf16.mxu0 0
  %542 = vmatpush1.bf16.msra.mxu0 %v506
  %543 = vmatprep.subr.bf16.mxu0 0
  %544 = vmatpush1.bf16.msra.mxu0 %v507
  %545 = vmatprep.subr.bf16.mxu0 0
  %546 = vmatpush1.bf16.msra.mxu0 %v508
  %547 = vmatprep.subr.bf16.mxu0 0
  %548 = vmatpush1.bf16.msra.mxu0 %v509
  %549 = vmatprep.subr.bf16.mxu0 0
  %550 = vmatpush1.bf16.msra.mxu0 %v510
  %551 = vmatprep.subr.bf16.mxu0 0
  %552 = vmatpush1.bf16.msra.mxu0 %v511
  %553 = vmatprep.subr.bf16.mxu0 0
  %554 = vmatpush1.bf16.msra.mxu0 %v512
  %555 = vmatprep.subr.bf16.mxu0 0
  %556 = vmatpush1.bf16.msra.mxu0 %v513
  %557 = vmatprep.subr.bf16.mxu0 0
  %558 = vmatpush1.bf16.msra.mxu0 %v514
  %559 = vmatprep.subr.bf16.mxu0 0
  %560 = vmatpush1.bf16.msra.mxu0 %v515
  %561 = vmatprep.subr.bf16.mxu0 0
  %562 = vmatpush1.bf16.msra.mxu0 %v516
  %563 = vmatprep.subr.bf16.mxu0 0
  %564 = vmatpush1.bf16.msra.mxu0 %v517
  %565 = vmatprep.subr.bf16.mxu0 0
  %566 = vmatpush1.bf16.msra.mxu0 %v518
  %567 = vmatprep.mubr.bf16.mxu0 %v312
  %568 = vmatmul.mubr.bf16.gmra.mrb[0].mxu0 %v311
  %v569 = vpop.f32.mrb[0].mxu0
  %v570 = vadd.f32 0.0, %v569
  %v571 = vpop.f32.mrb[0].mxu0
  %v572 = vpop.f32.mrb[0].mxu0
  %v573 = vadd.f32 0.0, %v572
  %v574 = vpop.f32.mrb[0].mxu0
  %575 = vmatprep.mubr.bf16.mxu0 %v314
  %576 = vmatmul.mubr.bf16.gmra.mrb[0].mxu0 %v313
  %v577 = vpop.f32.mrb[0].mxu0
  %v578 = vadd.f32 0.0, %v577
  %v579 = vpop.f32.mrb[0].mxu0
  %v580 = vpop.f32.mrb[0].mxu0
  %v581 = vadd.f32 0.0, %v580
  %v582 = vpop.f32.mrb[0].mxu0
  %583 = vmatprep.mubr.bf16.mxu0 %v316
  %584 = vmatmul.mubr.bf16.gmra.mrb[0].mxu0 %v315
  %v585 = vpop.f32.mrb[0].mxu0
  %v586 = vadd.f32 0.0, %v585
  %v587 = vpop.f32.mrb[0].mxu0
  %v588 = vpop.f32.mrb[0].mxu0
  %v589 = vadd.f32 0.0, %v588
  %v590 = vpop.f32.mrb[0].mxu0
  %591 = vmatprep.mubr.bf16.mxu0 %v318
  %592 = vmatmul.mubr.bf16.gmra.mrb[0].mxu0 %v317
  %v593 = vpop.f32.mrb[0].mxu0
  %v594 = vadd.f32 0.0, %v593
  %v595 = vpop.f32.mrb[0].mxu0
  %v596 = vpop.f32.mrb[0].mxu0
  %v597 = vadd.f32 0.0, %v596
  %v598 = vpop.f32.mrb[0].mxu0
  %599 = vmatprep.mubr.bf16.mxu0 %v320
  %600 = vmatmul.mubr.bf16.gmra.mrb[0].mxu0 %v319
  %v601 = vpop.f32.mrb[0].mxu0
  %v602 = vadd.f32 0.0, %v601
  %v603 = vpop.f32.mrb[0].mxu0
  %v604 = vpop.f32.mrb[0].mxu0
  %v605 = vadd.f32 0.0, %v604
  %v606 = vpop.f32.mrb[0].mxu0
  %607 = vmatprep.mubr.bf16.mxu0 %v322
  %608 = vmatmul.mubr.bf16.gmra.mrb[0].mxu0 %v321
  %v609 = vpop.f32.mrb[0].mxu0
  %v610 = vadd.f32 0.0, %v609
  %v611 = vpop.f32.mrb[0].mxu0
  %v612 = vpop.f32.mrb[0].mxu0
  %v613 = vadd.f32 0.0, %v612
  %v614 = vpop.f32.mrb[0].mxu0
  %615 = vmatprep.mubr.bf16.mxu0 %v324
  %616 = vmatmul.mubr.bf16.gmra.mrb[0].mxu0 %v323
  %v617 = vpop.f32.mrb[0].mxu0
  %v618 = vadd.f32 0.0, %v617
  %v619 = vpop.f32.mrb[0].mxu0
  %v620 = vpop.f32.mrb[0].mxu0
  %v621 = vadd.f32 0.0, %v620
  %v622 = vpop.f32.mrb[0].mxu0
  %623 = vmatprep.mubr.bf16.mxu0 %v326
  %624 = vmatmul.mubr.bf16.gmra.mrb[0].mxu0 %v325
  %v625 = vpop.f32.mrb[0].mxu0
  %v626 = vadd.f32 0.0, %v625
  %v627 = vpop.f32.mrb[0].mxu0
  %v628 = vpop.f32.mrb[0].mxu0
  %v629 = vadd.f32 0.0, %v628
  %v630 = vpop.f32.mrb[0].mxu0
  %631 = vmatprep.mubr.bf16.mxu0 %v328
  %632 = vmatmul.mubr.bf16.gmra.mrb[0].mxu0 %v327
  %v633 = vpop.f32.mrb[0].mxu0
  %v634 = vadd.f32 0.0, %v633
  %v635 = vpop.f32.mrb[0].mxu0
  %v636 = vpop.f32.mrb[0].mxu0
  %v637 = vadd.f32 0.0, %v636
  %v638 = vpop.f32.mrb[0].mxu0
  %639 = vmatprep.mubr.bf16.mxu0 %v330
  %640 = vmatmul.mubr.bf16.gmra.mrb[0].mxu0 %v329
  %v641 = vpop.f32.mrb[0].mxu0
  %v642 = vadd.f32 0.0, %v641
  %v643 = vpop.f32.mrb[0].mxu0
  %v644 = vpop.f32.mrb[0].mxu0
  %v645 = vadd.f32 0.0, %v644
  %v646 = vpop.f32.mrb[0].mxu0
  %647 = vmatprep.mubr.bf16.mxu0 %v332
  %648 = vmatmul.mubr.bf16.gmra.mrb[0].mxu0 %v331
  %v649 = vpop.f32.mrb[0].mxu0
  %v650 = vadd.f32 0.0, %v649
  %v651 = vpop.f32.mrb[0].mxu0
  %v652 = vpop.f32.mrb[0].mxu0
  %v653 = vadd.f32 0.0, %v652
  %v654 = vpop.f32.mrb[0].mxu0
  %655 = vmatprep.mubr.bf16.mxu0 %v334
  %656 = vmatmul.mubr.bf16.gmra.mrb[0].mxu0 %v333
  %v657 = vpop.f32.mrb[0].mxu0
  %v658 = vadd.f32 0.0, %v657
  %v659 = vpop.f32.mrb[0].mxu0
  %v660 = vpop.f32.mrb[0].mxu0
  %v661 = vadd.f32 0.0, %v660
  %v662 = vpop.f32.mrb[0].mxu0
  %663 = vmatprep.mubr.bf16.mxu0 %v336
  %664 = vmatmul.mubr.bf16.gmra.mrb[0].mxu0 %v335
  %v665 = vpop.f32.mrb[0].mxu0
  %v666 = vadd.f32 0.0, %v665
  %v667 = vpop.f32.mrb[0].mxu0
  %v668 = vpop.f32.mrb[0].mxu0
  %v669 = vadd.f32 0.0, %v668
  %v670 = vpop.f32.mrb[0].mxu0
  %671 = vmatprep.mubr.bf16.mxu0 %v338
  %672 = vmatmul.mubr.bf16.gmra.mrb[0].mxu0 %v337
  %v673 = vpop.f32.mrb[0].mxu0
  %v674 = vadd.f32 0.0, %v673
  %v675 = vpop.f32.mrb[0].mxu0
  %v676 = vpop.f32.mrb[0].mxu0
  %v677 = vadd.f32 0.0, %v676
  %v678 = vpop.f32.mrb[0].mxu0
  %679 = vmatprep.mubr.bf16.mxu0 %v340
  %680 = vmatmul.mubr.bf16.gmra.mrb[0].mxu0 %v339
  %v681 = vpop.f32.mrb[0].mxu0
  %v682 = vadd.f32 0.0, %v681
  %v683 = vpop.f32.mrb[0].mxu0
  %v684 = vpop.f32.mrb[0].mxu0
  %v685 = vadd.f32 0.0, %v684
  %v686 = vpop.f32.mrb[0].mxu0
  %687 = vmatprep.mubr.bf16.mxu0 %v342
  %688 = vmatmul.mubr.bf16.gmra.mrb[0].mxu0 %v341
  %v689 = vpop.f32.mrb[0].mxu0
  %v690 = vadd.f32 0.0, %v689
  %v691 = vpop.f32.mrb[0].mxu0
  %v692 = vpop.f32.mrb[0].mxu0
  %v693 = vadd.f32 0.0, %v692
  %v694 = vpop.f32.mrb[0].mxu0
  %695 = vmatprep.mubr.bf16.mxu0 %v344
  %696 = vmatmul.mubr.bf16.gmra.mrb[0].mxu0 %v343
  %v697 = vpop.f32.mrb[0].mxu0
  %v698 = vadd.f32 0.0, %v697
  %v699 = vpop.f32.mrb[0].mxu0
  %v700 = vpop.f32.mrb[0].mxu0
  %v701 = vadd.f32 0.0, %v700
  %v702 = vpop.f32.mrb[0].mxu0
  %703 = vmatprep.mubr.bf16.mxu0 %v346
  %704 = vmatmul.mubr.bf16.gmra.mrb[0].mxu0 %v345
  %v705 = vpop.f32.mrb[0].mxu0
  %v706 = vadd.f32 0.0, %v705
  %v707 = vpop.f32.mrb[0].mxu0
  %v708 = vpop.f32.mrb[0].mxu0
  %v709 = vadd.f32 0.0, %v708
  %v710 = vpop.f32.mrb[0].mxu0
  %711 = vmatprep.mubr.bf16.mxu0 %v348
  %712 = vmatmul.mubr.bf16.gmra.mrb[0].mxu0 %v347
  %v713 = vpop.f32.mrb[0].mxu0
  %v714 = vadd.f32 0.0, %v713
  %v715 = vpop.f32.mrb[0].mxu0
  %v716 = vpop.f32.mrb[0].mxu0
  %v717 = vadd.f32 0.0, %v716
  %v718 = vpop.f32.mrb[0].mxu0
  %719 = vmatprep.mubr.bf16.mxu0 %v350
  %720 = vmatmul.mubr.bf16.gmra.mrb[0].mxu0 %v349
  %v721 = vpop.f32.mrb[0].mxu0
  %v722 = vadd.f32 0.0, %v721
  %v723 = vpop.f32.mrb[0].mxu0
  %v724 = vpop.f32.mrb[0].mxu0
  %v725 = vadd.f32 0.0, %v724
  %v726 = vpop.f32.mrb[0].mxu0
  %727 = vmatprep.mubr.bf16.mxu0 %v352
  %728 = vmatmul.mubr.bf16.gmra.mrb[0].mxu0 %v351
  %v729 = vpop.f32.mrb[0].mxu0
  %v730 = vadd.f32 0.0, %v729
  %v731 = vpop.f32.mrb[0].mxu0
  %v732 = vpop.f32.mrb[0].mxu0
  %v733 = vadd.f32 0.0, %v732
  %v734 = vpop.f32.mrb[0].mxu0
  %735 = vmatprep.mubr.bf16.mxu0 %v354
  %736 = vmatmul.mubr.bf16.gmra.mrb[0].mxu0 %v353
  %v737 = vpop.f32.mrb[0].mxu0
  %v738 = vadd.f32 0.0, %v737
  %v739 = vpop.f32.mrb[0].mxu0
  %v740 = vpop.f32.mrb[0].mxu0
  %v741 = vadd.f32 0.0, %v740
  %v742 = vpop.f32.mrb[0].mxu0
  %743 = vmatprep.mubr.bf16.mxu0 %v356
  %744 = vmatmul.mubr.bf16.gmra.mrb[0].mxu0 %v355
  %v745 = vpop.f32.mrb[0].mxu0
  %v746 = vadd.f32 0.0, %v745
  %v747 = vpop.f32.mrb[0].mxu0
  %v748 = vpop.f32.mrb[0].mxu0
  %v749 = vadd.f32 0.0, %v748
  %v750 = vpop.f32.mrb[0].mxu0
  %751 = vmatprep.mubr.bf16.mxu0 %v358
  %752 = vmatmul.mubr.bf16.gmra.mrb[0].mxu0 %v357
  %v753 = vpop.f32.mrb[0].mxu0
  %v754 = vadd.f32 0.0, %v753
  %v755 = vpop.f32.mrb[0].mxu0
  %v756 = vpop.f32.mrb[0].mxu0
  %v757 = vadd.f32 0.0, %v756
  %v758 = vpop.f32.mrb[0].mxu0
  %759 = vmatprep.mubr.bf16.mxu0 %v360
  %760 = vmatmul.mubr.bf16.gmra.mrb[0].mxu0 %v359
  %v761 = vpop.f32.mrb[0].mxu0
  %v762 = vadd.f32 0.0, %v761
  %v763 = vpop.f32.mrb[0].mxu0
  %v764 = vpop.f32.mrb[0].mxu0
  %v765 = vadd.f32 0.0, %v764
  %v766 = vpop.f32.mrb[0].mxu0
  %767 = vmatprep.mubr.bf16.mxu0 %v362
  %768 = vmatmul.mubr.bf16.gmra.mrb[0].mxu0 %v361
  %v769 = vpop.f32.mrb[0].mxu0
  %v770 = vadd.f32 0.0, %v769
  %v771 = vpop.f32.mrb[0].mxu0
  %v772 = vpop.f32.mrb[0].mxu0
  %v773 = vadd.f32 0.0, %v772
  %v774 = vpop.f32.mrb[0].mxu0
  %775 = vmatprep.mubr.bf16.mxu0 %v364
  %776 = vmatmul.mubr.bf16.gmra.mrb[0].mxu0 %v363
  %v777 = vpop.f32.mrb[0].mxu0
  %v778 = vadd.f32 0.0, %v777
  %v779 = vpop.f32.mrb[0].mxu0
  %v780 = vpop.f32.mrb[0].mxu0
  %v781 = vadd.f32 0.0, %v780
  %v782 = vpop.f32.mrb[0].mxu0
  %783 = vmatprep.mubr.bf16.mxu0 %v366
  %784 = vmatmul.mubr.bf16.gmra.mrb[0].mxu0 %v365
  %v785 = vpop.f32.mrb[0].mxu0
  %v786 = vadd.f32 0.0, %v785
  %v787 = vpop.f32.mrb[0].mxu0
  %v788 = vpop.f32.mrb[0].mxu0
  %v789 = vadd.f32 0.0, %v788
  %v790 = vpop.f32.mrb[0].mxu0
  %791 = vmatprep.mubr.bf16.mxu0 %v368
  %792 = vmatmul.mubr.bf16.gmra.mrb[0].mxu0 %v367
  %v793 = vpop.f32.mrb[0].mxu0
  %v794 = vadd.f32 0.0, %v793
  %v795 = vpop.f32.mrb[0].mxu0
  %v796 = vpop.f32.mrb[0].mxu0
  %v797 = vadd.f32 0.0, %v796
  %v798 = vpop.f32.mrb[0].mxu0
  %799 = vmatprep.mubr.bf16.mxu0 %v370
  %800 = vmatmul.mubr.bf16.gmra.mrb[0].mxu0 %v369
  %v801 = vpop.f32.mrb[0].mxu0
  %v802 = vadd.f32 0.0, %v801
  %v803 = vpop.f32.mrb[0].mxu0
  %v804 = vpop.f32.mrb[0].mxu0
  %v805 = vadd.f32 0.0, %v804
  %v806 = vpop.f32.mrb[0].mxu0
  %807 = vmatprep.mubr.bf16.mxu0 %v372
  %808 = vmatmul.mubr.bf16.gmra.mrb[0].mxu0 %v371
  %v809 = vpop.f32.mrb[0].mxu0
  %v810 = vadd.f32 0.0, %v809
  %v811 = vpop.f32.mrb[0].mxu0
  %v812 = vpop.f32.mrb[0].mxu0
  %v813 = vadd.f32 0.0, %v812
  %v814 = vpop.f32.mrb[0].mxu0
  %815 = vmatprep.mubr.bf16.mxu0 %v374
  %816 = vmatmul.mubr.bf16.gmra.mrb[0].mxu0 %v373
  %v817 = vpop.f32.mrb[0].mxu0
  %v818 = vadd.f32 0.0, %v817
  %v819 = vpop.f32.mrb[0].mxu0
  %v820 = vpop.f32.mrb[0].mxu0
  %v821 = vadd.f32 0.0, %v820
  %v822 = vpop.f32.mrb[0].mxu0
  %823 = vdwg.mxu0
  %v824 = vld [vmem:[#allocation3] sm:$0x1]
  %v825 = vadd.f32 %v570, %v573
  %v826 = vadd.f32 %v825, %v578
  %v827 = vadd.f32 %v826, %v581
  %v828 = vadd.f32 %v827, %v586
  %v829 = vadd.f32 %v828, %v589
  %v830 = vadd.f32 %v829, %v594
  %v831 = vadd.f32 %v830, %v597
  %v832 = vadd.f32 %v831, %v602
  %v833 = vadd.f32 %v832, %v605
  %v834 = vadd.f32 %v833, %v610
  %v835 = vadd.f32 %v834, %v613
  %v836 = vadd.f32 %v835, %v618
  %v837 = vadd.f32 %v836, %v621
  %v838 = vadd.f32 %v837, %v626
  %v839 = vadd.f32 %v838, %v629
  %v840 = vadd.f32 %v839, %v634
  %v841 = vadd.f32 %v840, %v637
  %v842 = vadd.f32 %v841, %v642
  %v843 = vadd.f32 %v842, %v645
  %v844 = vadd.f32 %v843, %v650
  %v845 = vadd.f32 %v844, %v653
  %v846 = vadd.f32 %v845, %v658
  %v847 = vadd.f32 %v846, %v661
  %v848 = vadd.f32 %v847, %v666
  %v849 = vadd.f32 %v848, %v669
  %v850 = vadd.f32 %v849, %v674
  %v851 = vadd.f32 %v850, %v677
  %v852 = vadd.f32 %v851, %v682
  %v853 = vadd.f32 %v852, %v685
  %v854 = vadd.f32 %v853, %v690
  %v855 = vadd.f32 %v854, %v693
  %v856 = vadd.f32 %v855, %v698
  %v857 = vadd.f32 %v856, %v701
  %v858 = vadd.f32 %v857, %v706
  %v859 = vadd.f32 %v858, %v709
  %v860 = vadd.f32 %v859, %v714
  %v861 = vadd.f32 %v860, %v717
  %v862 = vadd.f32 %v861, %v722
  %v863 = vadd.f32 %v862, %v725
  %v864 = vadd.f32 %v863, %v730
  %v865 = vadd.f32 %v864, %v733
  %v866 = vadd.f32 %v865, %v738
  %v867 = vadd.f32 %v866, %v741
  %v868 = vadd.f32 %v867, %v746
  %v869 = vadd.f32 %v868, %v749
  %v870 = vadd.f32 %v869, %v754
  %v871 = vadd.f32 %v870, %v757
  %v872 = vadd.f32 %v871, %v762
  %v873 = vadd.f32 %v872, %v765
  %v874 = vadd.f32 %v873, %v770
  %v875 = vadd.f32 %v874, %v773
  %v876 = vadd.f32 %v875, %v778
  %v877 = vadd.f32 %v876, %v781
  %v878 = vadd.f32 %v877, %v786
  %v879 = vadd.f32 %v878, %v789
  %v880 = vadd.f32 %v879, %v794
  %v881 = vadd.f32 %v880, %v797
  %v882 = vadd.f32 %v881, %v802
  %v883 = vadd.f32 %v882, %v805
  %v884 = vadd.f32 %v883, %v810
  %v885 = vadd.f32 %v884, %v813
  %v886 = vadd.f32 %v885, %v818
  %v887 = vadd.f32 %v886, %v821
  %v888 = vrot.slane %v887, 4
  %v889 = vadd.f32 %v887, %v888
  %v890 = vrot.slane %v889, 2
  %v891 = vadd.f32 %v889, %v890
  %v892 = vrot.slane %v891, 1
  %v893 = vadd.f32 %v891, %v892
  %v894 = vadd.f32 %v824, %v893
  %895 = vst [vmem:[#allocation3] sm:$0x1] %v894
  %v896 = vld [vmem:[#allocation3 + $0x1] sm:$0x1]
  %v897 = vmul.f32 %v570, %v570
  %v898 = vmul.f32 %v573, %v573
  %v899 = vmul.f32 %v578, %v578
  %v900 = vmul.f32 %v581, %v581
  %v901 = vmul.f32 %v586, %v586
  %v902 = vmul.f32 %v589, %v589
  %v903 = vmul.f32 %v594, %v594
  %v904 = vmul.f32 %v597, %v597
  %v905 = vmul.f32 %v602, %v602
  %v906 = vmul.f32 %v605, %v605
  %v907 = vmul.f32 %v610, %v610
  %v908 = vmul.f32 %v613, %v613
  %v909 = vmul.f32 %v618, %v618
  %v910 = vmul.f32 %v621, %v621
  %v911 = vmul.f32 %v626, %v626
  %v912 = vmul.f32 %v629, %v629
  %v913 = vmul.f32 %v634, %v634
  %v914 = vmul.f32 %v637, %v637
  %v915 = vmul.f32 %v642, %v642
  %v916 = vmul.f32 %v645, %v645
  %v917 = vmul.f32 %v650, %v650
  %v918 = vmul.f32 %v653, %v653
  %v919 = vmul.f32 %v658, %v658
  %v920 = vmul.f32 %v661, %v661
  %v921 = vmul.f32 %v666, %v666
  %v922 = vmul.f32 %v669, %v669
  %v923 = vmul.f32 %v674, %v674
  %v924 = vmul.f32 %v677, %v677
  %v925 = vmul.f32 %v682, %v682
  %v926 = vmul.f32 %v685, %v685
  %v927 = vmul.f32 %v690, %v690
  %v928 = vmul.f32 %v693, %v693
  %v929 = vmul.f32 %v698, %v698
  %v930 = vmul.f32 %v701, %v701
  %v931 = vmul.f32 %v706, %v706
  %v932 = vmul.f32 %v709, %v709
  %v933 = vmul.f32 %v714, %v714
  %v934 = vmul.f32 %v717, %v717
  %v935 = vmul.f32 %v722, %v722
  %v936 = vmul.f32 %v725, %v725
  %v937 = vmul.f32 %v730, %v730
  %v938 = vmul.f32 %v733, %v733
  %v939 = vmul.f32 %v738, %v738
  %v940 = vmul.f32 %v741, %v741
  %v941 = vmul.f32 %v746, %v746
  %v942 = vmul.f32 %v749, %v749
  %v943 = vmul.f32 %v754, %v754
  %v944 = vmul.f32 %v757, %v757
  %v945 = vmul.f32 %v762, %v762
  %v946 = vmul.f32 %v765, %v765
  %v947 = vmul.f32 %v770, %v770
  %v948 = vmul.f32 %v773, %v773
  %v949 = vmul.f32 %v778, %v778
  %v950 = vmul.f32 %v781, %v781
  %v951 = vmul.f32 %v786, %v786
  %v952 = vmul.f32 %v789, %v789
  %v953 = vmul.f32 %v794, %v794
  %v954 = vmul.f32 %v797, %v797
  %v955 = vmul.f32 %v802, %v802
  %v956 = vmul.f32 %v805, %v805
  %v957 = vmul.f32 %v810, %v810
  %v958 = vmul.f32 %v813, %v813
  %v959 = vmul.f32 %v818, %v818
  %v960 = vmul.f32 %v821, %v821
  %v961 = vadd.f32 %v897, %v898
  %v962 = vadd.f32 %v961, %v899
  %v963 = vadd.f32 %v962, %v900
  %v964 = vadd.f32 %v963, %v901
  %v965 = vadd.f32 %v964, %v902
  %v966 = vadd.f32 %v965, %v903
  %v967 = vadd.f32 %v966, %v904
  %v968 = vadd.f32 %v967, %v905
  %v969 = vadd.f32 %v968, %v906
  %v970 = vadd.f32 %v969, %v907
  %v971 = vadd.f32 %v970, %v908
  %v972 = vadd.f32 %v971, %v909
  %v973 = vadd.f32 %v972, %v910
  %v974 = vadd.f32 %v973, %v911
  %v975 = vadd.f32 %v974, %v912
  %v976 = vadd.f32 %v975, %v913
  %v977 = vadd.f32 %v976, %v914
  %v978 = vadd.f32 %v977, %v915
  %v979 = vadd.f32 %v978, %v916
  %v980 = vadd.f32 %v979, %v917
  %v981 = vadd.f32 %v980, %v918
  %v982 = vadd.f32 %v981, %v919
  %v983 = vadd.f32 %v982, %v920
  %v984 = vadd.f32 %v983, %v921
  %v985 = vadd.f32 %v984, %v922
  %v986 = vadd.f32 %v985, %v923
  %v987 = vadd.f32 %v986, %v924
  %v988 = vadd.f32 %v987, %v925
  %v989 = vadd.f32 %v988, %v926
  %v990 = vadd.f32 %v989, %v927
  %v991 = vadd.f32 %v990, %v928
  %v992 = vadd.f32 %v991, %v929
  %v993 = vadd.f32 %v992, %v930
  %v994 = vadd.f32 %v993, %v931
  %v995 = vadd.f32 %v994, %v932
  %v996 = vadd.f32 %v995, %v933
  %v997 = vadd.f32 %v996, %v934
  %v998 = vadd.f32 %v997, %v935
  %v999 = vadd.f32 %v998, %v936
  %v1000 = vadd.f32 %v999, %v937
  %v1001 = vadd.f32 %v1000, %v938
  %v1002 = vadd.f32 %v1001, %v939
  %v1003 = vadd.f32 %v1002, %v940
  %v1004 = vadd.f32 %v1003, %v941
  %v1005 = vadd.f32 %v1004, %v942
  %v1006 = vadd.f32 %v1005, %v943
  %v1007 = vadd.f32 %v1006, %v944
  %v1008 = vadd.f32 %v1007, %v945
  %v1009 = vadd.f32 %v1008, %v946
  %v1010 = vadd.f32 %v1009, %v947
  %v1011 = vadd.f32 %v1010, %v948
  %v1012 = vadd.f32 %v1011, %v949
  %v1013 = vadd.f32 %v1012, %v950
  %v1014 = vadd.f32 %v1013, %v951
  %v1015 = vadd.f32 %v1014, %v952
  %v1016 = vadd.f32 %v1015, %v953
  %v1017 = vadd.f32 %v1016, %v954
  %v1018 = vadd.f32 %v1017, %v955
  %v1019 = vadd.f32 %v1018, %v956
  %v1020 = vadd.f32 %v1019, %v957
  %v1021 = vadd.f32 %v1020, %v958
  %v1022 = vadd.f32 %v1021, %v959
  %v1023 = vadd.f32 %v1022, %v960
  %v1024 = vrot.slane %v1023, 4
  %v1025 = vadd.f32 %v1023, %v1024
  %v1026 = vrot.slane %v1025, 2
  %v1027 = vadd.f32 %v1025, %v1026
  %v1028 = vrot.slane %v1027, 1
  %v1029 = vadd.f32 %v1027, %v1028
  %v1030 = vadd.f32 %v896, %v1029
  %1031 = vst [vmem:[#allocation3 + $0x1] sm:$0x1] %v1030
  %s1032 = smul.u32 0, 512
  %s1033 = scalar_lea.vmem [#allocation2], %s1032
  %1034 = vst [vmem:[%s1033] sm:$0xff] %v570
  %1035 = vst [vmem:[%s1033 + $0x8] sm:$0xff] %v573
  %1036 = vst [vmem:[%s1033 + $0x10] sm:$0xff] %v578
  %1037 = vst [vmem:[%s1033 + $0x18] sm:$0xff] %v581
  %1038 = vst [vmem:[%s1033 + $0x20] sm:$0xff] %v586
  %1039 = vst [vmem:[%s1033 + $0x28] sm:$0xff] %v589
  %1040 = vst [vmem:[%s1033 + $0x30] sm:$0xff] %v594
  %1041 = vst [vmem:[%s1033 + $0x38] sm:$0xff] %v597
  %1042 = vst [vmem:[%s1033 + $0x40] sm:$0xff] %v602
  %1043 = vst [vmem:[%s1033 + $0x48] sm:$0xff] %v605
  %1044 = vst [vmem:[%s1033 + $0x50] sm:$0xff] %v610
  %1045 = vst [vmem:[%s1033 + $0x58] sm:$0xff] %v613
  %1046 = vst [vmem:[%s1033 + $0x60] sm:$0xff] %v618
  %1047 = vst [vmem:[%s1033 + $0x68] sm:$0xff] %v621
  %1048 = vst [vmem:[%s1033 + $0x70] sm:$0xff] %v626
  %1049 = vst [vmem:[%s1033 + $0x78] sm:$0xff] %v629
  %1050 = vst [vmem:[%s1033 + $0x80] sm:$0xff] %v634
  %1051 = vst [vmem:[%s1033 + $0x88] sm:$0xff] %v637
  %1052 = vst [vmem:[%s1033 + $0x90] sm:$0xff] %v642
  %1053 = vst [vmem:[%s1033 + $0x98] sm:$0xff] %v645
  %1054 = vst [vmem:[%s1033 + $0xa0] sm:$0xff] %v650
  %1055 = vst [vmem:[%s1033 + $0xa8] sm:$0xff] %v653
  %1056 = vst [vmem:[%s1033 + $0xb0] sm:$0xff] %v658
  %1057 = vst [vmem:[%s1033 + $0xb8] sm:$0xff] %v661
  %1058 = vst [vmem:[%s1033 + $0xc0] sm:$0xff] %v666
  %1059 = vst [vmem:[%s1033 + $0xc8] sm:$0xff] %v669
  %1060 = vst [vmem:[%s1033 + $0xd0] sm:$0xff] %v674
  %1061 = vst [vmem:[%s1033 + $0xd8] sm:$0xff] %v677
  %1062 = vst [vmem:[%s1033 + $0xe0] sm:$0xff] %v682
  %1063 = vst [vmem:[%s1033 + $0xe8] sm:$0xff] %v685
  %1064 = vst [vmem:[%s1033 + $0xf0] sm:$0xff] %v690
  %1065 = vst [vmem:[%s1033 + $0xf8] sm:$0xff] %v693
  %1066 = vst [vmem:[%s1033 + $0x100] sm:$0xff] %v698
  %1067 = vst [vmem:[%s1033 + $0x108] sm:$0xff] %v701
  %1068 = vst [vmem:[%s1033 + $0x110] sm:$0xff] %v706
  %1069 = vst [vmem:[%s1033 + $0x118] sm:$0xff] %v709
  %1070 = vst [vmem:[%s1033 + $0x120] sm:$0xff] %v714
  %1071 = vst [vmem:[%s1033 + $0x128] sm:$0xff] %v717
  %1072 = vst [vmem:[%s1033 + $0x130] sm:$0xff] %v722
  %1073 = vst [vmem:[%s1033 + $0x138] sm:$0xff] %v725
  %1074 = vst [vmem:[%s1033 + $0x140] sm:$0xff] %v730
  %1075 = vst [vmem:[%s1033 + $0x148] sm:$0xff] %v733
  %1076 = vst [vmem:[%s1033 + $0x150] sm:$0xff] %v738
  %1077 = vst [vmem:[%s1033 + $0x158] sm:$0xff] %v741
  %1078 = vst [vmem:[%s1033 + $0x160] sm:$0xff] %v746
  %1079 = vst [vmem:[%s1033 + $0x168] sm:$0xff] %v749
  %1080 = vst [vmem:[%s1033 + $0x170] sm:$0xff] %v754
  %1081 = vst [vmem:[%s1033 + $0x178] sm:$0xff] %v757
  %1082 = vst [vmem:[%s1033 + $0x180] sm:$0xff] %v762
  %1083 = vst [vmem:[%s1033 + $0x188] sm:$0xff] %v765
  %1084 = vst [vmem:[%s1033 + $0x190] sm:$0xff] %v770
  %1085 = vst [vmem:[%s1033 + $0x198] sm:$0xff] %v773
  %1086 = vst [vmem:[%s1033 + $0x1a0] sm:$0xff] %v778
  %1087 = vst [vmem:[%s1033 + $0x1a8] sm:$0xff] %v781
  %1088 = vst [vmem:[%s1033 + $0x1b0] sm:$0xff] %v786
  %1089 = vst [vmem:[%s1033 + $0x1b8] sm:$0xff] %v789
  %1090 = vst [vmem:[%s1033 + $0x1c0] sm:$0xff] %v794
  %1091 = vst [vmem:[%s1033 + $0x1c8] sm:$0xff] %v797
  %1092 = vst [vmem:[%s1033 + $0x1d0] sm:$0xff] %v802
  %1093 = vst [vmem:[%s1033 + $0x1d8] sm:$0xff] %v805
  %1094 = vst [vmem:[%s1033 + $0x1e0] sm:$0xff] %v810
  %1095 = vst [vmem:[%s1033 + $0x1e8] sm:$0xff] %v813
  %1096 = vst [vmem:[%s1033 + $0x1f0] sm:$0xff] %v818
  %1097 = vst [vmem:[%s1033 + $0x1f8] sm:$0xff] %v821
  // Predicated region
  $region22: #{generator_forward.7} parent=0 // pred_check
    %p1098 = pneg %p18
  $region23: #{generator_forward.7} parent=0 // pred_check_branch
    %1100 = sbr.rel (%p1098) target = $region25
  $region24: #{generator_forward.7} parent=0 // pred_region
    %v1101 = vld [vmem:[#allocation3] sm:$0x1]
    %v1102 = vmul.f32 %v1101, 0.001953125
    %v1103 = vld [vmem:[#allocation3 + $0x1] sm:$0x1]
    %v1104 = vmul.f32 %v1103, 0.001953125
    %v1105 = vmul.f32 %v1102, %v1102
    %v1106 = vsub.f32 %v1104, %v1105
    %v1107 = vmax.f32 %v1106, 0.0
    %v1108 = vadd.f32 %v1107, 1e-05
    %v1109 = vrsqrt.pop %v1108
    %v1110 = vld [vmem:[%s2] sm:$0x1]
    %v1111 = vmul.f32 %v1109, %v1110
    %v1112 = vld [vmem:[%s3] sm:$0x1]
    %v1113 = vmul.f32 %v1102, %v1111
    %v1114 = vsub.f32 %v1112, %v1113
    %v1115 = vld [vmem:[#allocation2] sm:$0xff]
    %v1116 = vld [vmem:[#allocation2 + $0x8] sm:$0xff]
    %v1117 = vld [vmem:[#allocation2 + $0x10] sm:$0xff]
    %v1118 = vld [vmem:[#allocation2 + $0x18] sm:$0xff]
    %v1119 = vld [vmem:[#allocation2 + $0x20] sm:$0xff]
    %v1120 = vld [vmem:[#allocation2 + $0x28] sm:$0xff]
    %v1121 = vld [vmem:[#allocation2 + $0x30] sm:$0xff]
    %v1122 = vld [vmem:[#allocation2 + $0x38] sm:$0xff]
    %v1123 = vld [vmem:[#allocation2 + $0x40] sm:$0xff]
    %v1124 = vld [vmem:[#allocation2 + $0x48] sm:$0xff]
    %v1125 = vld [vmem:[#allocation2 + $0x50] sm:$0xff]
    %v1126 = vld [vmem:[#allocation2 + $0x58] sm:$0xff]
    %v1127 = vld [vmem:[#allocation2 + $0x60] sm:$0xff]
    %v1128 = vld [vmem:[#allocation2 + $0x68] sm:$0xff]
    %v1129 = vld [vmem:[#allocation2 + $0x70] sm:$0xff]
    %v1130 = vld [vmem:[#allocation2 + $0x78] sm:$0xff]
    %v1131 = vld [vmem:[#allocation2 + $0x80] sm:$0xff]
    %v1132 = vld [vmem:[#allocation2 + $0x88] sm:$0xff]
    %v1133 = vld [vmem:[#allocation2 + $0x90] sm:$0xff]
    %v1134 = vld [vmem:[#allocation2 + $0x98] sm:$0xff]
    %v1135 = vld [vmem:[#allocation2 + $0xa0] sm:$0xff]
    %v1136 = vld [vmem:[#allocation2 + $0xa8] sm:$0xff]
    %v1137 = vld [vmem:[#allocation2 + $0xb0] sm:$0xff]
    %v1138 = vld [vmem:[#allocation2 + $0xb8] sm:$0xff]
    %v1139 = vld [vmem:[#allocation2 + $0xc0] sm:$0xff]
    %v1140 = vld [vmem:[#allocation2 + $0xc8] sm:$0xff]
    %v1141 = vld [vmem:[#allocation2 + $0xd0] sm:$0xff]
    %v1142 = vld [vmem:[#allocation2 + $0xd8] sm:$0xff]
    %v1143 = vld [vmem:[#allocation2 + $0xe0] sm:$0xff]
    %v1144 = vld [vmem:[#allocation2 + $0xe8] sm:$0xff]
    %v1145 = vld [vmem:[#allocation2 + $0xf0] sm:$0xff]
    %v1146 = vld [vmem:[#allocation2 + $0xf8] sm:$0xff]
    %v1147 = vld [vmem:[#allocation2 + $0x100] sm:$0xff]
    %v1148 = vld [vmem:[#allocation2 + $0x108] sm:$0xff]
    %v1149 = vld [vmem:[#allocation2 + $0x110] sm:$0xff]
    %v1150 = vld [vmem:[#allocation2 + $0x118] sm:$0xff]
    %v1151 = vld [vmem:[#allocation2 + $0x120] sm:$0xff]
    %v1152 = vld [vmem:[#allocation2 + $0x128] sm:$0xff]
    %v1153 = vld [vmem:[#allocation2 + $0x130] sm:$0xff]
    %v1154 = vld [vmem:[#allocation2 + $0x138] sm:$0xff]
    %v1155 = vld [vmem:[#allocation2 + $0x140] sm:$0xff]
    %v1156 = vld [vmem:[#allocation2 + $0x148] sm:$0xff]
    %v1157 = vld [vmem:[#allocation2 + $0x150] sm:$0xff]
    %v1158 = vld [vmem:[#allocation2 + $0x158] sm:$0xff]
    %v1159 = vld [vmem:[#allocation2 + $0x160] sm:$0xff]
    %v1160 = vld [vmem:[#allocation2 + $0x168] sm:$0xff]
    %v1161 = vld [vmem:[#allocation2 + $0x170] sm:$0xff]
    %v1162 = vld [vmem:[#allocation2 + $0x178] sm:$0xff]
    %v1163 = vld [vmem:[#allocation2 + $0x180] sm:$0xff]
    %v1164 = vld [vmem:[#allocation2 + $0x188] sm:$0xff]
    %v1165 = vld [vmem:[#allocation2 + $0x190] sm:$0xff]
    %v1166 = vld [vmem:[#allocation2 + $0x198] sm:$0xff]
    %v1167 = vld [vmem:[#allocation2 + $0x1a0] sm:$0xff]
    %v1168 = vld [vmem:[#allocation2 + $0x1a8] sm:$0xff]
    %v1169 = vld [vmem:[#allocation2 + $0x1b0] sm:$0xff]
    %v1170 = vld [vmem:[#allocation2 + $0x1b8] sm:$0xff]
    %v1171 = vld [vmem:[#allocation2 + $0x1c0] sm:$0xff]
    %v1172 = vld [vmem:[#allocation2 + $0x1c8] sm:$0xff]
    %v1173 = vld [vmem:[#allocation2 + $0x1d0] sm:$0xff]
    %v1174 = vld [vmem:[#allocation2 + $0x1d8] sm:$0xff]
    %v1175 = vld [vmem:[#allocation2 + $0x1e0] sm:$0xff]
    %v1176 = vld [vmem:[#allocation2 + $0x1e8] sm:$0xff]
    %v1177 = vld [vmem:[#allocation2 + $0x1f0] sm:$0xff]
    %v1178 = vld [vmem:[#allocation2 + $0x1f8] sm:$0xff]
    %v1179 = vlaneseq
    %v1180 = vshrl.u32 %v1179, 7
    %v1181 = vsub.s32 0, %v1180
    %v1182 = vrot.slane %v1111, %v1181
    %v1183 = vmul.f32 %v1115, %v1182
    %v1184 = vmul.f32 %v1116, %v1182
    %v1185 = vmul.f32 %v1117, %v1182
    %v1186 = vmul.f32 %v1118, %v1182
    %v1187 = vmul.f32 %v1119, %v1182
    %v1188 = vmul.f32 %v1120, %v1182
    %v1189 = vmul.f32 %v1121, %v1182
    %v1190 = vmul.f32 %v1122, %v1182
    %v1191 = vmul.f32 %v1123, %v1182
    %v1192 = vmul.f32 %v1124, %v1182
    %v1193 = vmul.f32 %v1125, %v1182
    %v1194 = vmul.f32 %v1126, %v1182
    %v1195 = vmul.f32 %v1127, %v1182
    %v1196 = vmul.f32 %v1128, %v1182
    %v1197 = vmul.f32 %v1129, %v1182
    %v1198 = vmul.f32 %v1130, %v1182
    %v1199 = vmul.f32 %v1131, %v1182
    %v1200 = vmul.f32 %v1132, %v1182
    %v1201 = vmul.f32 %v1133, %v1182
    %v1202 = vmul.f32 %v1134, %v1182
    %v1203 = vmul.f32 %v1135, %v1182
    %v1204 = vmul.f32 %v1136, %v1182
    %v1205 = vmul.f32 %v1137, %v1182
    %v1206 = vmul.f32 %v1138, %v1182
    %v1207 = vmul.f32 %v1139, %v1182
    %v1208 = vmul.f32 %v1140, %v1182
    %v1209 = vmul.f32 %v1141, %v1182
    %v1210 = vmul.f32 %v1142, %v1182
    %v1211 = vmul.f32 %v1143, %v1182
    %v1212 = vmul.f32 %v1144, %v1182
    %v1213 = vmul.f32 %v1145, %v1182
    %v1214 = vmul.f32 %v1146, %v1182
    %v1215 = vmul.f32 %v1147, %v1182
    %v1216 = vmul.f32 %v1148, %v1182
    %v1217 = vmul.f32 %v1149, %v1182
    %v1218 = vmul.f32 %v1150, %v1182
    %v1219 = vmul.f32 %v1151, %v1182
    %v1220 = vmul.f32 %v1152, %v1182
    %v1221 = vmul.f32 %v1153, %v1182
    %v1222 = vmul.f32 %v1154, %v1182
    %v1223 = vmul.f32 %v1155, %v1182
    %v1224 = vmul.f32 %v1156, %v1182
    %v1225 = vmul.f32 %v1157, %v1182
    %v1226 = vmul.f32 %v1158, %v1182
    %v1227 = vmul.f32 %v1159, %v1182
    %v1228 = vmul.f32 %v1160, %v1182
    %v1229 = vmul.f32 %v1161, %v1182
    %v1230 = vmul.f32 %v1162, %v1182
    %v1231 = vmul.f32 %v1163, %v1182
    %v1232 = vmul.f32 %v1164, %v1182
    %v1233 = vmul.f32 %v1165, %v1182
    %v1234 = vmul.f32 %v1166, %v1182
    %v1235 = vmul.f32 %v1167, %v1182
    %v1236 = vmul.f32 %v1168, %v1182
    %v1237 = vmul.f32 %v1169, %v1182
    %v1238 = vmul.f32 %v1170, %v1182
    %v1239 = vmul.f32 %v1171, %v1182
    %v1240 = vmul.f32 %v1172, %v1182
    %v1241 = vmul.f32 %v1173, %v1182
    %v1242 = vmul.f32 %v1174, %v1182
    %v1243 = vmul.f32 %v1175, %v1182
    %v1244 = vmul.f32 %v1176, %v1182
    %v1245 = vmul.f32 %v1177, %v1182
    %v1246 = vmul.f32 %v1178, %v1182
    %v1248 = vlaneseq
    %v1249 = vshrl.u32 %v1248, 7
    %v1250 = vsub.s32 0, %v1249
    %v1251 = vrot.slane %v1114, %v1250
    %v1253 = vadd.f32 %v1183, %v1251
    %v1254 = vadd.f32 %v1184, %v1251
    %v1255 = vadd.f32 %v1185, %v1251
    %v1256 = vadd.f32 %v1186, %v1251
    %v1257 = vadd.f32 %v1187, %v1251
    %v1258 = vadd.f32 %v1188, %v1251
    %v1259 = vadd.f32 %v1189, %v1251
    %v1260 = vadd.f32 %v1190, %v1251
    %v1261 = vadd.f32 %v1191, %v1251
    %v1262 = vadd.f32 %v1192, %v1251
    %v1263 = vadd.f32 %v1193, %v1251
    %v1264 = vadd.f32 %v1194, %v1251
    %v1265 = vadd.f32 %v1195, %v1251
    %v1266 = vadd.f32 %v1196, %v1251
    %v1267 = vadd.f32 %v1197, %v1251
    %v1268 = vadd.f32 %v1198, %v1251
    %v1269 = vadd.f32 %v1199, %v1251
    %v1270 = vadd.f32 %v1200, %v1251
    %v1271 = vadd.f32 %v1201, %v1251
    %v1272 = vadd.f32 %v1202, %v1251
    %v1273 = vadd.f32 %v1203, %v1251
    %v1274 = vadd.f32 %v1204, %v1251
    %v1275 = vadd.f32 %v1205, %v1251
    %v1276 = vadd.f32 %v1206, %v1251
    %v1277 = vadd.f32 %v1207, %v1251
    %v1278 = vadd.f32 %v1208, %v1251
    %v1279 = vadd.f32 %v1209, %v1251
    %v1280 = vadd.f32 %v1210, %v1251
    %v1281 = vadd.f32 %v1211, %v1251
    %v1282 = vadd.f32 %v1212, %v1251
    %v1283 = vadd.f32 %v1213, %v1251
    %v1284 = vadd.f32 %v1214, %v1251
    %v1285 = vadd.f32 %v1215, %v1251
    %v1286 = vadd.f32 %v1216, %v1251
    %v1287 = vadd.f32 %v1217, %v1251
    %v1288 = vadd.f32 %v1218, %v1251
    %v1289 = vadd.f32 %v1219, %v1251
    %v1290 = vadd.f32 %v1220, %v1251
    %v1291 = vadd.f32 %v1221, %v1251
    %v1292 = vadd.f32 %v1222, %v1251
    %v1293 = vadd.f32 %v1223, %v1251
    %v1294 = vadd.f32 %v1224, %v1251
    %v1295 = vadd.f32 %v1225, %v1251
    %v1296 = vadd.f32 %v1226, %v1251
    %v1297 = vadd.f32 %v1227, %v1251
    %v1298 = vadd.f32 %v1228, %v1251
    %v1299 = vadd.f32 %v1229, %v1251
    %v1300 = vadd.f32 %v1230, %v1251
    %v1301 = vadd.f32 %v1231, %v1251
    %v1302 = vadd.f32 %v1232, %v1251
    %v1303 = vadd.f32 %v1233, %v1251
    %v1304 = vadd.f32 %v1234, %v1251
    %v1305 = vadd.f32 %v1235, %v1251
    %v1306 = vadd.f32 %v1236, %v1251
    %v1307 = vadd.f32 %v1237, %v1251
    %v1308 = vadd.f32 %v1238, %v1251
    %v1309 = vadd.f32 %v1239, %v1251
    %v1310 = vadd.f32 %v1240, %v1251
    %v1311 = vadd.f32 %v1241, %v1251
    %v1312 = vadd.f32 %v1242, %v1251
    %v1313 = vadd.f32 %v1243, %v1251
    %v1314 = vadd.f32 %v1244, %v1251
    %v1315 = vadd.f32 %v1245, %v1251
    %v1316 = vadd.f32 %v1246, %v1251
    %vm1317 = vcmp.gt.f32.partialorder %v1253, 0.0
    %vm1318 = vcmp.gt.f32.partialorder %v1254, 0.0
    %vm1319 = vcmp.gt.f32.partialorder %v1255, 0.0
    %vm1320 = vcmp.gt.f32.partialorder %v1256, 0.0
    %vm1321 = vcmp.gt.f32.partialorder %v1257, 0.0
    %vm1322 = vcmp.gt.f32.partialorder %v1258, 0.0
    %vm1323 = vcmp.gt.f32.partialorder %v1259, 0.0
    %vm1324 = vcmp.gt.f32.partialorder %v1260, 0.0
    %vm1325 = vcmp.gt.f32.partialorder %v1261, 0.0
    %vm1326 = vcmp.gt.f32.partialorder %v1262, 0.0
    %vm1327 = vcmp.gt.f32.partialorder %v1263, 0.0
    %vm1328 = vcmp.gt.f32.partialorder %v1264, 0.0
    %vm1329 = vcmp.gt.f32.partialorder %v1265, 0.0
    %vm1330 = vcmp.gt.f32.partialorder %v1266, 0.0
    %vm1331 = vcmp.gt.f32.partialorder %v1267, 0.0
    %vm1332 = vcmp.gt.f32.partialorder %v1268, 0.0
    %vm1333 = vcmp.gt.f32.partialorder %v1269, 0.0
    %vm1334 = vcmp.gt.f32.partialorder %v1270, 0.0
    %vm1335 = vcmp.gt.f32.partialorder %v1271, 0.0
    %vm1336 = vcmp.gt.f32.partialorder %v1272, 0.0
    %vm1337 = vcmp.gt.f32.partialorder %v1273, 0.0
    %vm1338 = vcmp.gt.f32.partialorder %v1274, 0.0
    %vm1339 = vcmp.gt.f32.partialorder %v1275, 0.0
    %vm1340 = vcmp.gt.f32.partialorder %v1276, 0.0
    %vm1341 = vcmp.gt.f32.partialorder %v1277, 0.0
    %vm1342 = vcmp.gt.f32.partialorder %v1278, 0.0
    %vm1343 = vcmp.gt.f32.partialorder %v1279, 0.0
    %vm1344 = vcmp.gt.f32.partialorder %v1280, 0.0
    %vm1345 = vcmp.gt.f32.partialorder %v1281, 0.0
    %vm1346 = vcmp.gt.f32.partialorder %v1282, 0.0
    %vm1347 = vcmp.gt.f32.partialorder %v1283, 0.0
    %vm1348 = vcmp.gt.f32.partialorder %v1284, 0.0
    %vm1349 = vcmp.gt.f32.partialorder %v1285, 0.0
    %vm1350 = vcmp.gt.f32.partialorder %v1286, 0.0
    %vm1351 = vcmp.gt.f32.partialorder %v1287, 0.0
    %vm1352 = vcmp.gt.f32.partialorder %v1288, 0.0
    %vm1353 = vcmp.gt.f32.partialorder %v1289, 0.0
    %vm1354 = vcmp.gt.f32.partialorder %v1290, 0.0
    %vm1355 = vcmp.gt.f32.partialorder %v1291, 0.0
    %vm1356 = vcmp.gt.f32.partialorder %v1292, 0.0
    %vm1357 = vcmp.gt.f32.partialorder %v1293, 0.0
    %vm1358 = vcmp.gt.f32.partialorder %v1294, 0.0
    %vm1359 = vcmp.gt.f32.partialorder %v1295, 0.0
    %vm1360 = vcmp.gt.f32.partialorder %v1296, 0.0
    %vm1361 = vcmp.gt.f32.partialorder %v1297, 0.0
    %vm1362 = vcmp.gt.f32.partialorder %v1298, 0.0
    %vm1363 = vcmp.gt.f32.partialorder %v1299, 0.0
    %vm1364 = vcmp.gt.f32.partialorder %v1300, 0.0
    %vm1365 = vcmp.gt.f32.partialorder %v1301, 0.0
    %vm1366 = vcmp.gt.f32.partialorder %v1302, 0.0
    %vm1367 = vcmp.gt.f32.partialorder %v1303, 0.0
    %vm1368 = vcmp.gt.f32.partialorder %v1304, 0.0
    %vm1369 = vcmp.gt.f32.partialorder %v1305, 0.0
    %vm1370 = vcmp.gt.f32.partialorder %v1306, 0.0
    %vm1371 = vcmp.gt.f32.partialorder %v1307, 0.0
    %vm1372 = vcmp.gt.f32.partialorder %v1308, 0.0
    %vm1373 = vcmp.gt.f32.partialorder %v1309, 0.0
    %vm1374 = vcmp.gt.f32.partialorder %v1310, 0.0
    %vm1375 = vcmp.gt.f32.partialorder %v1311, 0.0
    %vm1376 = vcmp.gt.f32.partialorder %v1312, 0.0
    %vm1377 = vcmp.gt.f32.partialorder %v1313, 0.0
    %vm1378 = vcmp.gt.f32.partialorder %v1314, 0.0
    %vm1379 = vcmp.gt.f32.partialorder %v1315, 0.0
    %vm1380 = vcmp.gt.f32.partialorder %v1316, 0.0
    %v1381 = vmul.f32 %v1253, 0.2
    %v1382 = vmul.f32 %v1254, 0.2
    %v1383 = vmul.f32 %v1255, 0.2
    %v1384 = vmul.f32 %v1256, 0.2
    %v1385 = vmul.f32 %v1257, 0.2
    %v1386 = vmul.f32 %v1258, 0.2
    %v1387 = vmul.f32 %v1259, 0.2
    %v1388 = vmul.f32 %v1260, 0.2
    %v1389 = vmul.f32 %v1261, 0.2
    %v1390 = vmul.f32 %v1262, 0.2
    %v1391 = vmul.f32 %v1263, 0.2
    %v1392 = vmul.f32 %v1264, 0.2
    %v1393 = vmul.f32 %v1265, 0.2
    %v1394 = vmul.f32 %v1266, 0.2
    %v1395 = vmul.f32 %v1267, 0.2
    %v1396 = vmul.f32 %v1268, 0.2
    %v1397 = vmul.f32 %v1269, 0.2
    %v1398 = vmul.f32 %v1270, 0.2
    %v1399 = vmul.f32 %v1271, 0.2
    %v1400 = vmul.f32 %v1272, 0.2
    %v1401 = vmul.f32 %v1273, 0.2
    %v1402 = vmul.f32 %v1274, 0.2
    %v1403 = vmul.f32 %v1275, 0.2
    %v1404 = vmul.f32 %v1276, 0.2
    %v1405 = vmul.f32 %v1277, 0.2
    %v1406 = vmul.f32 %v1278, 0.2
    %v1407 = vmul.f32 %v1279, 0.2
    %v1408 = vmul.f32 %v1280, 0.2
    %v1409 = vmul.f32 %v1281, 0.2
    %v1410 = vmul.f32 %v1282, 0.2
    %v1411 = vmul.f32 %v1283, 0.2
    %v1412 = vmul.f32 %v1284, 0.2
    %v1413 = vmul.f32 %v1285, 0.2
    %v1414 = vmul.f32 %v1286, 0.2
    %v1415 = vmul.f32 %v1287, 0.2
    %v1416 = vmul.f32 %v1288, 0.2
    %v1417 = vmul.f32 %v1289, 0.2
    %v1418 = vmul.f32 %v1290, 0.2
    %v1419 = vmul.f32 %v1291, 0.2
    %v1420 = vmul.f32 %v1292, 0.2
    %v1421 = vmul.f32 %v1293, 0.2
    %v1422 = vmul.f32 %v1294, 0.2
    %v1423 = vmul.f32 %v1295, 0.2
    %v1424 = vmul.f32 %v1296, 0.2
    %v1425 = vmul.f32 %v1297, 0.2
    %v1426 = vmul.f32 %v1298, 0.2
    %v1427 = vmul.f32 %v1299, 0.2
    %v1428 = vmul.f32 %v1300, 0.2
    %v1429 = vmul.f32 %v1301, 0.2
    %v1430 = vmul.f32 %v1302, 0.2
    %v1431 = vmul.f32 %v1303, 0.2
    %v1432 = vmul.f32 %v1304, 0.2
    %v1433 = vmul.f32 %v1305, 0.2
    %v1434 = vmul.f32 %v1306, 0.2
    %v1435 = vmul.f32 %v1307, 0.2
    %v1436 = vmul.f32 %v1308, 0.2
    %v1437 = vmul.f32 %v1309, 0.2
    %v1438 = vmul.f32 %v1310, 0.2
    %v1439 = vmul.f32 %v1311, 0.2
    %v1440 = vmul.f32 %v1312, 0.2
    %v1441 = vmul.f32 %v1313, 0.2
    %v1442 = vmul.f32 %v1314, 0.2
    %v1443 = vmul.f32 %v1315, 0.2
    %v1444 = vmul.f32 %v1316, 0.2
    %v1445 = vsel %vm1317, %v1253, %v1381
    %v1446 = vsel %vm1318, %v1254, %v1382
    %v1447 = vsel %vm1319, %v1255, %v1383
    %v1448 = vsel %vm1320, %v1256, %v1384
    %v1449 = vsel %vm1321, %v1257, %v1385
    %v1450 = vsel %vm1322, %v1258, %v1386
    %v1451 = vsel %vm1323, %v1259, %v1387
    %v1452 = vsel %vm1324, %v1260, %v1388
    %v1453 = vsel %vm1325, %v1261, %v1389
    %v1454 = vsel %vm1326, %v1262, %v1390
    %v1455 = vsel %vm1327, %v1263, %v1391
    %v1456 = vsel %vm1328, %v1264, %v1392
    %v1457 = vsel %vm1329, %v1265, %v1393
    %v1458 = vsel %vm1330, %v1266, %v1394
    %v1459 = vsel %vm1331, %v1267, %v1395
    %v1460 = vsel %vm1332, %v1268, %v1396
    %v1461 = vsel %vm1333, %v1269, %v1397
    %v1462 = vsel %vm1334, %v1270, %v1398
    %v1463 = vsel %vm1335, %v1271, %v1399
    %v1464 = vsel %vm1336, %v1272, %v1400
    %v1465 = vsel %vm1337, %v1273, %v1401
    %v1466 = vsel %vm1338, %v1274, %v1402
    %v1467 = vsel %vm1339, %v1275, %v1403
    %v1468 = vsel %vm1340, %v1276, %v1404
    %v1469 = vsel %vm1341, %v1277, %v1405
    %v1470 = vsel %vm1342, %v1278, %v1406
    %v1471 = vsel %vm1343, %v1279, %v1407
    %v1472 = vsel %vm1344, %v1280, %v1408
    %v1473 = vsel %vm1345, %v1281, %v1409
    %v1474 = vsel %vm1346, %v1282, %v1410
    %v1475 = vsel %vm1347, %v1283, %v1411
    %v1476 = vsel %vm1348, %v1284, %v1412
    %v1477 = vsel %vm1349, %v1285, %v1413
    %v1478 = vsel %vm1350, %v1286, %v1414
    %v1479 = vsel %vm1351, %v1287, %v1415
    %v1480 = vsel %vm1352, %v1288, %v1416
    %v1481 = vsel %vm1353, %v1289, %v1417
    %v1482 = vsel %vm1354, %v1290, %v1418
    %v1483 = vsel %vm1355, %v1291, %v1419
    %v1484 = vsel %vm1356, %v1292, %v1420
    %v1485 = vsel %vm1357, %v1293, %v1421
    %v1486 = vsel %vm1358, %v1294, %v1422
    %v1487 = vsel %vm1359, %v1295, %v1423
    %v1488 = vsel %vm1360, %v1296, %v1424
    %v1489 = vsel %vm1361, %v1297, %v1425
    %v1490 = vsel %vm1362, %v1298, %v1426
    %v1491 = vsel %vm1363, %v1299, %v1427
    %v1492 = vsel %vm1364, %v1300, %v1428
    %v1493 = vsel %vm1365, %v1301, %v1429
    %v1494 = vsel %vm1366, %v1302, %v1430
    %v1495 = vsel %vm1367, %v1303, %v1431
    %v1496 = vsel %vm1368, %v1304, %v1432
    %v1497 = vsel %vm1369, %v1305, %v1433
    %v1498 = vsel %vm1370, %v1306, %v1434
    %v1499 = vsel %vm1371, %v1307, %v1435
    %v1500 = vsel %vm1372, %v1308, %v1436
    %v1501 = vsel %vm1373, %v1309, %v1437
    %v1502 = vsel %vm1374, %v1310, %v1438
    %v1503 = vsel %vm1375, %v1311, %v1439
    %v1504 = vsel %vm1376, %v1312, %v1440
    %v1505 = vsel %vm1377, %v1313, %v1441
    %v1506 = vsel %vm1378, %v1314, %v1442
    %v1507 = vsel %vm1379, %v1315, %v1443
    %v1508 = vsel %vm1380, %v1316, %v1444
    %v1509 = vpack.c.bf16 %v1446, %v1445
    %v1510 = vpack.c.bf16 %v1448, %v1447
    %v1511 = vpack.c.bf16 %v1450, %v1449
    %v1512 = vpack.c.bf16 %v1452, %v1451
    %v1513 = vpack.c.bf16 %v1454, %v1453
    %v1514 = vpack.c.bf16 %v1456, %v1455
    %v1515 = vpack.c.bf16 %v1458, %v1457
    %v1516 = vpack.c.bf16 %v1460, %v1459
    %v1517 = vpack.c.bf16 %v1462, %v1461
    %v1518 = vpack.c.bf16 %v1464, %v1463
    %v1519 = vpack.c.bf16 %v1466, %v1465
    %v1520 = vpack.c.bf16 %v1468, %v1467
    %v1521 = vpack.c.bf16 %v1470, %v1469
    %v1522 = vpack.c.bf16 %v1472, %v1471
    %v1523 = vpack.c.bf16 %v1474, %v1473
    %v1524 = vpack.c.bf16 %v1476, %v1475
    %v1525 = vpack.c.bf16 %v1478, %v1477
    %v1526 = vpack.c.bf16 %v1480, %v1479
    %v1527 = vpack.c.bf16 %v1482, %v1481
    %v1528 = vpack.c.bf16 %v1484, %v1483
    %v1529 = vpack.c.bf16 %v1486, %v1485
    %v1530 = vpack.c.bf16 %v1488, %v1487
    %v1531 = vpack.c.bf16 %v1490, %v1489
    %v1532 = vpack.c.bf16 %v1492, %v1491
    %v1533 = vpack.c.bf16 %v1494, %v1493
    %v1534 = vpack.c.bf16 %v1496, %v1495
    %v1535 = vpack.c.bf16 %v1498, %v1497
    %v1536 = vpack.c.bf16 %v1500, %v1499
    %v1537 = vpack.c.bf16 %v1502, %v1501
    %v1538 = vpack.c.bf16 %v1504, %v1503
    %v1539 = vpack.c.bf16 %v1506, %v1505
    %v1540 = vpack.c.bf16 %v1508, %v1507
    %v1573 = vunpack.c.l.b16 %v1509
    %v1574 = vunpack.c.h.b16 %v1509
    %v1575 = vunpack.c.l.b16 %v1510
    %v1576 = vunpack.c.h.b16 %v1510
    %v1577 = vunpack.c.l.b16 %v1511
    %v1578 = vunpack.c.h.b16 %v1511
    %v1579 = vunpack.c.l.b16 %v1512
    %v1580 = vunpack.c.h.b16 %v1512
    %v1581 = vunpack.c.l.b16 %v1513
    %v1582 = vunpack.c.h.b16 %v1513
    %v1583 = vunpack.c.l.b16 %v1514
    %v1584 = vunpack.c.h.b16 %v1514
    %v1585 = vunpack.c.l.b16 %v1515
    %v1586 = vunpack.c.h.b16 %v1515
    %v1587 = vunpack.c.l.b16 %v1516
    %v1588 = vunpack.c.h.b16 %v1516
    %v1589 = vunpack.c.l.b16 %v1517
    %v1590 = vunpack.c.h.b16 %v1517
    %v1591 = vunpack.c.l.b16 %v1518
    %v1592 = vunpack.c.h.b16 %v1518
    %v1593 = vunpack.c.l.b16 %v1519
    %v1594 = vunpack.c.h.b16 %v1519
    %v1595 = vunpack.c.l.b16 %v1520
    %v1596 = vunpack.c.h.b16 %v1520
    %v1597 = vunpack.c.l.b16 %v1521
    %v1598 = vunpack.c.h.b16 %v1521
    %v1599 = vunpack.c.l.b16 %v1522
    %v1600 = vunpack.c.h.b16 %v1522
    %v1601 = vunpack.c.l.b16 %v1523
    %v1602 = vunpack.c.h.b16 %v1523
    %v1603 = vunpack.c.l.b16 %v1524
    %v1604 = vunpack.c.h.b16 %v1524
    %v1605 = vunpack.c.l.b16 %v1525
    %v1606 = vunpack.c.h.b16 %v1525
    %v1607 = vunpack.c.l.b16 %v1526
    %v1608 = vunpack.c.h.b16 %v1526
    %v1609 = vunpack.c.l.b16 %v1527
    %v1610 = vunpack.c.h.b16 %v1527
    %v1611 = vunpack.c.l.b16 %v1528
    %v1612 = vunpack.c.h.b16 %v1528
    %v1613 = vunpack.c.l.b16 %v1529
    %v1614 = vunpack.c.h.b16 %v1529
    %v1615 = vunpack.c.l.b16 %v1530
    %v1616 = vunpack.c.h.b16 %v1530
    %v1617 = vunpack.c.l.b16 %v1531
    %v1618 = vunpack.c.h.b16 %v1531
    %v1619 = vunpack.c.l.b16 %v1532
    %v1620 = vunpack.c.h.b16 %v1532
    %v1621 = vunpack.c.l.b16 %v1533
    %v1622 = vunpack.c.h.b16 %v1533
    %v1623 = vunpack.c.l.b16 %v1534
    %v1624 = vunpack.c.h.b16 %v1534
    %v1625 = vunpack.c.l.b16 %v1535
    %v1626 = vunpack.c.h.b16 %v1535
    %v1627 = vunpack.c.l.b16 %v1536
    %v1628 = vunpack.c.h.b16 %v1536
    %v1629 = vunpack.c.l.b16 %v1537
    %v1630 = vunpack.c.h.b16 %v1537
    %v1631 = vunpack.c.l.b16 %v1538
    %v1632 = vunpack.c.h.b16 %v1538
    %v1633 = vunpack.c.l.b16 %v1539
    %v1634 = vunpack.c.h.b16 %v1539
    %v1635 = vunpack.c.l.b16 %v1540
    %v1636 = vunpack.c.h.b16 %v1540
    %v1637 = vpack.c.b16 %v1573, %v1573
    %v1638 = vpack.c.b16 %v1574, %v1574
    %v1639 = vpack.c.b16 %v1575, %v1575
    %v1640 = vpack.c.b16 %v1576, %v1576
    %v1641 = vpack.c.b16 %v1577, %v1577
    %v1642 = vpack.c.b16 %v1578, %v1578
    %v1643 = vpack.c.b16 %v1579, %v1579
    %v1644 = vpack.c.b16 %v1580, %v1580
    %v1645 = vpack.c.b16 %v1581, %v1581
    %v1646 = vpack.c.b16 %v1582, %v1582
    %v1647 = vpack.c.b16 %v1583, %v1583
    %v1648 = vpack.c.b16 %v1584, %v1584
    %v1649 = vpack.c.b16 %v1585, %v1585
    %v1650 = vpack.c.b16 %v1586, %v1586
    %v1651 = vpack.c.b16 %v1587, %v1587
    %v1652 = vpack.c.b16 %v1588, %v1588
    %v1653 = vpack.c.b16 %v1589, %v1589
    %v1654 = vpack.c.b16 %v1590, %v1590
    %v1655 = vpack.c.b16 %v1591, %v1591
    %v1656 = vpack.c.b16 %v1592, %v1592
    %v1657 = vpack.c.b16 %v1593, %v1593
    %v1658 = vpack.c.b16 %v1594, %v1594
    %v1659 = vpack.c.b16 %v1595, %v1595
    %v1660 = vpack.c.b16 %v1596, %v1596
    %v1661 = vpack.c.b16 %v1597, %v1597
    %v1662 = vpack.c.b16 %v1598, %v1598
    %v1663 = vpack.c.b16 %v1599, %v1599
    %v1664 = vpack.c.b16 %v1600, %v1600
    %v1665 = vpack.c.b16 %v1601, %v1601
    %v1666 = vpack.c.b16 %v1602, %v1602
    %v1667 = vpack.c.b16 %v1603, %v1603
    %v1668 = vpack.c.b16 %v1604, %v1604
    %v1669 = vpack.c.b16 %v1605, %v1605
    %v1670 = vpack.c.b16 %v1606, %v1606
    %v1671 = vpack.c.b16 %v1607, %v1607
    %v1672 = vpack.c.b16 %v1608, %v1608
    %v1673 = vpack.c.b16 %v1609, %v1609
    %v1674 = vpack.c.b16 %v1610, %v1610
    %v1675 = vpack.c.b16 %v1611, %v1611
    %v1676 = vpack.c.b16 %v1612, %v1612
    %v1677 = vpack.c.b16 %v1613, %v1613
    %v1678 = vpack.c.b16 %v1614, %v1614
    %v1679 = vpack.c.b16 %v1615, %v1615
    %v1680 = vpack.c.b16 %v1616, %v1616
    %v1681 = vpack.c.b16 %v1617, %v1617
    %v1682 = vpack.c.b16 %v1618, %v1618
    %v1683 = vpack.c.b16 %v1619, %v1619
    %v1684 = vpack.c.b16 %v1620, %v1620
    %v1685 = vpack.c.b16 %v1621, %v1621
    %v1686 = vpack.c.b16 %v1622, %v1622
    %v1687 = vpack.c.b16 %v1623, %v1623
    %v1688 = vpack.c.b16 %v1624, %v1624
    %v1689 = vpack.c.b16 %v1625, %v1625
    %v1690 = vpack.c.b16 %v1626, %v1626
    %v1691 = vpack.c.b16 %v1627, %v1627
    %v1692 = vpack.c.b16 %v1628, %v1628
    %v1693 = vpack.c.b16 %v1629, %v1629
    %v1694 = vpack.c.b16 %v1630, %v1630
    %v1695 = vpack.c.b16 %v1631, %v1631
    %v1696 = vpack.c.b16 %v1632, %v1632
    %v1697 = vpack.c.b16 %v1633, %v1633
    %v1698 = vpack.c.b16 %v1634, %v1634
    %v1699 = vpack.c.b16 %v1635, %v1635
    %v1700 = vpack.c.b16 %v1636, %v1636
    %1765 = vst [vmem:[%s4] sm:$0xf] %v1637
    %1766 = vst [vmem:[%s4 + $0x4] sm:$0xf] %v1638
    %1767 = vst [vmem:[%s4 + $0x8] sm:$0xf] %v1639
    %1768 = vst [vmem:[%s4 + $0xc] sm:$0xf] %v1640
    %1769 = vst [vmem:[%s4 + $0x10] sm:$0xf] %v1641
    %1770 = vst [vmem:[%s4 + $0x14] sm:$0xf] %v1642
    %1771 = vst [vmem:[%s4 + $0x18] sm:$0xf] %v1643
    %1772 = vst [vmem:[%s4 + $0x1c] sm:$0xf] %v1644
    %1773 = vst [vmem:[%s4 + $0x20] sm:$0xf] %v1645
    %1774 = vst [vmem:[%s4 + $0x24] sm:$0xf] %v1646
    %1775 = vst [vmem:[%s4 + $0x28] sm:$0xf] %v1647
    %1776 = vst [vmem:[%s4 + $0x2c] sm:$0xf] %v1648
    %1777 = vst [vmem:[%s4 + $0x30] sm:$0xf] %v1649
    %1778 = vst [vmem:[%s4 + $0x34] sm:$0xf] %v1650
    %1779 = vst [vmem:[%s4 + $0x38] sm:$0xf] %v1651
    %1780 = vst [vmem:[%s4 + $0x3c] sm:$0xf] %v1652
    %1781 = vst [vmem:[%s4 + $0x40] sm:$0xf] %v1653
    %1782 = vst [vmem:[%s4 + $0x44] sm:$0xf] %v1654
    %1783 = vst [vmem:[%s4 + $0x48] sm:$0xf] %v1655
    %1784 = vst [vmem:[%s4 + $0x4c] sm:$0xf] %v1656
    %1785 = vst [vmem:[%s4 + $0x50] sm:$0xf] %v1657
    %1786 = vst [vmem:[%s4 + $0x54] sm:$0xf] %v1658
    %1787 = vst [vmem:[%s4 + $0x58] sm:$0xf] %v1659
    %1788 = vst [vmem:[%s4 + $0x5c] sm:$0xf] %v1660
    %1789 = vst [vmem:[%s4 + $0x60] sm:$0xf] %v1661
    %1790 = vst [vmem:[%s4 + $0x64] sm:$0xf] %v1662
    %1791 = vst [vmem:[%s4 + $0x68] sm:$0xf] %v1663
    %1792 = vst [vmem:[%s4 + $0x6c] sm:$0xf] %v1664
    %1793 = vst [vmem:[%s4 + $0x70] sm:$0xf] %v1665
    %1794 = vst [vmem:[%s4 + $0x74] sm:$0xf] %v1666
    %1795 = vst [vmem:[%s4 + $0x78] sm:$0xf] %v1667
    %1796 = vst [vmem:[%s4 + $0x7c] sm:$0xf] %v1668
    %1797 = vst [vmem:[%s4 + $0x80] sm:$0xf] %v1669
    %1798 = vst [vmem:[%s4 + $0x84] sm:$0xf] %v1670
    %1799 = vst [vmem:[%s4 + $0x88] sm:$0xf] %v1671
    %1800 = vst [vmem:[%s4 + $0x8c] sm:$0xf] %v1672
    %1801 = vst [vmem:[%s4 + $0x90] sm:$0xf] %v1673
    %1802 = vst [vmem:[%s4 + $0x94] sm:$0xf] %v1674
    %1803 = vst [vmem:[%s4 + $0x98] sm:$0xf] %v1675
    %1804 = vst [vmem:[%s4 + $0x9c] sm:$0xf] %v1676
    %1805 = vst [vmem:[%s4 + $0xa0] sm:$0xf] %v1677
    %1806 = vst [vmem:[%s4 + $0xa4] sm:$0xf] %v1678
    %1807 = vst [vmem:[%s4 + $0xa8] sm:$0xf] %v1679
    %1808 = vst [vmem:[%s4 + $0xac] sm:$0xf] %v1680
    %1809 = vst [vmem:[%s4 + $0xb0] sm:$0xf] %v1681
    %1810 = vst [vmem:[%s4 + $0xb4] sm:$0xf] %v1682
    %1811 = vst [vmem:[%s4 + $0xb8] sm:$0xf] %v1683
    %1812 = vst [vmem:[%s4 + $0xbc] sm:$0xf] %v1684
    %1813 = vst [vmem:[%s4 + $0xc0] sm:$0xf] %v1685
    %1814 = vst [vmem:[%s4 + $0xc4] sm:$0xf] %v1686
    %1815 = vst [vmem:[%s4 + $0xc8] sm:$0xf] %v1687
    %1816 = vst [vmem:[%s4 + $0xcc] sm:$0xf] %v1688
    %1817 = vst [vmem:[%s4 + $0xd0] sm:$0xf] %v1689
    %1818 = vst [vmem:[%s4 + $0xd4] sm:$0xf] %v1690
    %1819 = vst [vmem:[%s4 + $0xd8] sm:$0xf] %v1691
    %1820 = vst [vmem:[%s4 + $0xdc] sm:$0xf] %v1692
    %1821 = vst [vmem:[%s4 + $0xe0] sm:$0xf] %v1693
    %1822 = vst [vmem:[%s4 + $0xe4] sm:$0xf] %v1694
    %1823 = vst [vmem:[%s4 + $0xe8] sm:$0xf] %v1695
    %1824 = vst [vmem:[%s4 + $0xec] sm:$0xf] %v1696
    %1825 = vst [vmem:[%s4 + $0xf0] sm:$0xf] %v1697
    %1826 = vst [vmem:[%s4 + $0xf4] sm:$0xf] %v1698
    %1827 = vst [vmem:[%s4 + $0xf8] sm:$0xf] %v1699
    %1828 = vst [vmem:[%s4 + $0xfc] sm:$0xf] %v1700
  $region25: #{generator_forward.7} parent=0 // pred_fallthru
    _
  // Predicated region
  $region26: #{generator_forward.7} parent=0 // pred_check
    _
  $region27: #{generator_forward.7} parent=0 // pred_check_branch
    %1830 = sbr.rel (0) target = $region29
  $region28: #{generator_forward.7} parent=0 // pred_region
    _
  $region29: #{generator_forward.7} parent=0 // pred_fallthru
    _
  // Predicated region
  $region30: #{generator_forward.7} parent=0 // pred_check
    _
  $region31: #{generator_forward.7} parent=0 // pred_check_branch
    %1832 = sbr.rel (0) target = $region33
  $region32: #{generator_forward.7} parent=0 // pred_region
    _
  $region33: #{generator_forward.7} parent=0 // pred_fallthru
    _

// kernel: generator_forward.8
$region0: #{generator_forward.8}
  #allocation0 [shape = 'u32[]', space=smem, size = 0x4, offset = 0x4, fixed_abs, tag = 'smem constant byte address 0x4 - core index']
  #allocation1 [shape = 'u32[144,128]{1,0:T(1,128)}', space=vmem, size = 0x12000, scoped, tag = 'internal scratch']
  #allocation2 [shape = 'f32[2048,128]{1,0:T(8,128)}', space=vmem, size = 0x100000, scoped, tag = 'scratch operand']
  #allocation3 [shape = 'f32[8,128]{1,0:T(8,128)}', space=vmem, size = 0x1000, scoped, tag = 'scratch operand']
  %s0 = inlined_call_operand.vmem [shape: bf16[2048,128], index: 0, kind: input, shape index: {}]
  %s1 = inlined_call_operand.vmem [shape: bf16[128,128], index: 1, kind: input, shape index: {}]
  %s2 = inlined_call_operand.vmem [shape: f32[1,128], index: 2, kind: input, shape index: {}]
  %s3 = inlined_call_operand.vmem [shape: f32[1,128], index: 3, kind: input, shape index: {}]
  %s4 = inlined_call_operand.vmem [shape: bf16[2048,128], index: 4, kind: output, shape index: {}]
  %s5 = sld [smem:[#allocation0]]
  $region57: #{generator_forward.8} parent=0
    _
  %s7 = ssub.s32 1, %s5
  %s8 = scalar_select 0, %s7, %s5
  loop: start=0, step=1, limit=4
  $region2: #{generator_forward.8} parent=0 // loop_pre_header
    _
  $region3: #{generator_forward.8} parent=0 // loop_header
    %s10 = sphi 0, %s14
    %p11 = scmp.ge.s32.totalorder %s10, 4
    %s20 = sphi 0, %s22
    %s23 = sphi 0, %s20
    %s24 = sphi 0, %s23
    %s40 = sphi 0, %s24
    %s44 = sphi 0, %s44
    %s46 = sphi 0, %s44
    %s47 = sphi 0, %s46
    %s61 = sphi 0, %s47
    %s65 = sphi 0, %s65
    %s67 = sphi 0, %s65
    %s68 = sphi 0, %s67
    %s82 = sphi 0, %s68
    %s86 = sphi 0, %s86
    %s88 = sphi 0, %s86
    %s89 = sphi 0, %s88
    %s103 = sphi 0, %s89
    %s107 = sphi 0, %s107
    %s109 = sphi 0, %s107
    %s110 = sphi 0, %s109
    %s124 = sphi 0, %s110
  $region4: #{generator_forward.8} parent=0 // loop_header_branch
    %13 = sbr.rel (%p11) target = $region8
  $region5: #{generator_forward.8} parent=0 // loop_body
    %s15 = ssub.s32 %s10, 1
    %s16 = ssub.s32 %s10, 2
    %s17 = sadd.s32 %s10, 1
    %s18 = ssub.s32 %s10, %s17
    %p19 = scmp.eq.s32.totalorder %s18, 0
    %s21 = sadd.s32 %s20, 1
    %s22 = scalar_select %p19, %s20, %s21
    %p25 = pneg %p19
    %p26 = scmp.eq.s32.totalorder %s10, 1
    %p27 = por %p25, %p26
    %p28 = scmp.ne.s32.totalorder %s20, %s23
    %p29 = scmp.eq.s32.totalorder %s10, 0
    %p30 = por %p28, %p29
    %p31 = scmp.ne.s32.totalorder %s20, %s23
    %p32 = scmp.eq.s32.totalorder %s15, 1
    %p33 = por %p31, %p32
    %p34 = scmp.ne.s32.totalorder %s23, %s24
    %p35 = scmp.eq.s32.totalorder %s15, 0
    %p36 = por %p34, %p35
    %p37 = scmp.ne.s32.totalorder %s23, %s24
    %p38 = scmp.eq.s32.totalorder %s16, 1
    %p39 = por %p37, %p38
    %p41 = scmp.ne.s32.totalorder %s24, %s40
    %p42 = scmp.eq.s32.totalorder %s16, 0
    %p43 = por %p41, %p42
    %s45 = sadd.s32 %s44, 1
    %p48 = scmp.eq.s32.totalorder %s10, 1
    %p49 = scmp.ne.s32.totalorder %s44, %s46
    %p50 = scmp.eq.s32.totalorder %s10, 0
    %p51 = por %p49, %p50
    %p52 = scmp.ne.s32.totalorder %s44, %s46
    %p53 = scmp.eq.s32.totalorder %s15, 1
    %p54 = por %p52, %p53
    %p55 = scmp.ne.s32.totalorder %s46, %s47
    %p56 = scmp.eq.s32.totalorder %s15, 0
    %p57 = por %p55, %p56
    %p58 = scmp.ne.s32.totalorder %s46, %s47
    %p59 = scmp.eq.s32.totalorder %s16, 1
    %p60 = por %p58, %p59
    %p62 = scmp.ne.s32.totalorder %s47, %s61
    %p63 = scmp.eq.s32.totalorder %s16, 0
    %p64 = por %p62, %p63
    %s66 = sadd.s32 %s65, 1
    %p69 = scmp.eq.s32.totalorder %s10, 1
    %p70 = scmp.ne.s32.totalorder %s65, %s67
    %p71 = scmp.eq.s32.totalorder %s10, 0
    %p72 = por %p70, %p71
    %p73 = scmp.ne.s32.totalorder %s65, %s67
    %p74 = scmp.eq.s32.totalorder %s15, 1
    %p75 = por %p73, %p74
    %p76 = scmp.ne.s32.totalorder %s67, %s68
    %p77 = scmp.eq.s32.totalorder %s15, 0
    %p78 = por %p76, %p77
    %p79 = scmp.ne.s32.totalorder %s67, %s68
    %p80 = scmp.eq.s32.totalorder %s16, 1
    %p81 = por %p79, %p80
    %p83 = scmp.ne.s32.totalorder %s68, %s82
    %p84 = scmp.eq.s32.totalorder %s16, 0
    %p85 = por %p83, %p84
    %s87 = sadd.s32 %s86, 1
    %p90 = scmp.eq.s32.totalorder %s10, 1
    %p91 = scmp.ne.s32.totalorder %s86, %s88
    %p92 = scmp.eq.s32.totalorder %s10, 0
    %p93 = por %p91, %p92
    %p94 = scmp.ne.s32.totalorder %s86, %s88
    %p95 = scmp.eq.s32.totalorder %s15, 1
    %p96 = por %p94, %p95
    %p97 = scmp.ne.s32.totalorder %s88, %s89
    %p98 = scmp.eq.s32.totalorder %s15, 0
    %p99 = por %p97, %p98
    %p100 = scmp.ne.s32.totalorder %s88, %s89
    %p101 = scmp.eq.s32.totalorder %s16, 1
    %p102 = por %p100, %p101
    %p104 = scmp.ne.s32.totalorder %s89, %s103
    %p105 = scmp.eq.s32.totalorder %s16, 0
    %p106 = por %p104, %p105
    %s108 = sadd.s32 %s107, 1
    %p111 = scmp.eq.s32.totalorder %s10, 1
    %p112 = scmp.ne.s32.totalorder %s107, %s109
    %p113 = scmp.eq.s32.totalorder %s10, 0
    %p114 = por %p112, %p113
    %p115 = scmp.ne.s32.totalorder %s107, %s109
    %p116 = scmp.eq.s32.totalorder %s15, 1
    %p117 = por %p115, %p116
    %p118 = scmp.ne.s32.totalorder %s109, %s110
    %p119 = scmp.eq.s32.totalorder %s15, 0
    %p120 = por %p118, %p119
    %p121 = scmp.ne.s32.totalorder %s109, %s110
    %p122 = scmp.eq.s32.totalorder %s16, 1
    %p123 = por %p121, %p122
    %p125 = scmp.ne.s32.totalorder %s110, %s124
    %p126 = scmp.eq.s32.totalorder %s16, 0
    %p127 = por %p125, %p126
    %p128 = scmp.le.s32.totalorder 1, %s10
    %p129 = scmp.lt.s32.totalorder %s10, 3
    %p130 = pnand %p128, %p129
    %p131 = pneg %p130
    // Predicated region
    $region9: #{generator_forward.8} parent=5 // pred_check
      _
    $region10: #{generator_forward.8} parent=5 // pred_check_branch
      %133 = sbr.rel (%p130) target = $region12
    $region11: #{generator_forward.8} parent=5 // pred_region
      %s134 = ssub.s32 %s10, 1
      // Predicated region
      $region13: #{generator_forward.8} parent=11 // pred_check
        %p135 = pneg %p57
      $region14: #{generator_forward.8} parent=11 // pred_check_branch
        %137 = sbr.rel (%p135) target = $region16
      $region15: #{generator_forward.8} parent=11 // pred_region
        _
      $region16: #{generator_forward.8} parent=11 // pred_fallthru
        _
      // Predicated region
      $region17: #{generator_forward.8} parent=11 // pred_check
        %p138 = pneg %p78
      $region18: #{generator_forward.8} parent=11 // pred_check_branch
        %140 = sbr.rel (%p138) target = $region20
      $region19: #{generator_forward.8} parent=11 // pred_region
        _
      $region20: #{generator_forward.8} parent=11 // pred_fallthru
        _
      // Predicated region
      $region21: #{generator_forward.8} parent=11 // pred_check
        %p141 = pneg %p99
      $region22: #{generator_forward.8} parent=11 // pred_check_branch
        %143 = sbr.rel (%p141) target = $region24
      $region23: #{generator_forward.8} parent=11 // pred_region
        _
      $region24: #{generator_forward.8} parent=11 // pred_fallthru
        _
    $region12: #{generator_forward.8} parent=5 // pred_fallthru
      _
    %p144 = scmp.lt.s32.totalorder %s10, 2
    // Predicated region
    $region25: #{generator_forward.8} parent=5 // pred_check
      %p145 = pneg %p144
    $region26: #{generator_forward.8} parent=5 // pred_check_branch
      %147 = sbr.rel (%p145) target = $region28
    $region27: #{generator_forward.8} parent=5 // pred_region
      // Predicated region
      $region29: #{generator_forward.8} parent=27 // pred_check
        %p148 = pneg %p30
      $region30: #{generator_forward.8} parent=27 // pred_check_branch
        %150 = sbr.rel (%p148) target = $region32
      $region31: #{generator_forward.8} parent=27 // pred_region
        %s151 = smul.u32 128, %s10
        %p152 = scmp.lt.s32.totalorder %s151, 255
        %s153 = scalar_select %p152, %s151, 255
        %s154 = smul.addr %s153, 4
        %s155 = scalar_lea.vmem %s0, %s154
        %s156 = smul.u32 128, %s10
      $region32: #{generator_forward.8} parent=27 // pred_fallthru
        _
    $region28: #{generator_forward.8} parent=5 // pred_fallthru
      _
    %p157 = scmp.le.s32.totalorder 1, %s10
    %p158 = scmp.lt.s32.totalorder %s10, 3
    %p159 = pnand %p157, %p158
    %p160 = pneg %p159
    // Predicated region
    $region33: #{generator_forward.8} parent=5 // pred_check
      _
    $region34: #{generator_forward.8} parent=5 // pred_check_branch
      %162 = sbr.rel (%p159) target = $region36
    $region35: #{generator_forward.8} parent=5 // pred_region
      %s163 = ssub.s32 %s10, 1
      %s164 = smul.u32 128, %s15
      %p165 = scmp.lt.s32.totalorder %s164, 255
      %s166 = scalar_select %p165, %s164, 255
      %s167 = smul.addr %s166, 4
      %s168 = scalar_lea.vmem %s0, %s167
      %p169 = pneg %p36
      %p170 = pneg %p33
      %p171 = pneg %p57
      %p172 = pneg %p54
      %p173 = pneg %p78
      %p174 = pneg %p75
      %p175 = pneg %p99
      %p176 = pneg %p96
      %p177 = pneg %p120
      %p178 = pneg %p117
      %s179 = smul.u32 128, %s15
      %p180 = scmp.lt.s32.totalorder %s179, 255
      %s181 = scalar_select %p180, %s179, 255
      %s182 = smul.addr %s181, 4
      %s183 = scalar_lea.vmem %s0, %s182
      %s184 = smul.u32 128, %s15
      %p186 = scmp.eq.s32.totalorder %s15, 0
      // Predicated region
      $region37: #{generator_forward.8} parent=35 // pred_check
        %p187 = pneg %p186
      $region38: #{generator_forward.8} parent=35 // pred_check_branch
        %189 = sbr.rel (%p187) target = $region40
      $region39: #{generator_forward.8} parent=35 // pred_region
        %190 = vst [vmem:[#allocation3] sm:$0xff] 0.0
      $region40: #{generator_forward.8} parent=35 // pred_fallthru
        _
      %v191 = vld [vmem:[%s183] sm:$0xf]
      %v192 = vld [vmem:[%s183 + $0x4] sm:$0xf]
      %v193 = vld [vmem:[%s183 + $0x8] sm:$0xf]
      %v194 = vld [vmem:[%s183 + $0xc] sm:$0xf]
      %v195 = vld [vmem:[%s183 + $0x10] sm:$0xf]
      %v196 = vld [vmem:[%s183 + $0x14] sm:$0xf]
      %v197 = vld [vmem:[%s183 + $0x18] sm:$0xf]
      %v198 = vld [vmem:[%s183 + $0x1c] sm:$0xf]
      %v199 = vld [vmem:[%s183 + $0x20] sm:$0xf]
      %v200 = vld [vmem:[%s183 + $0x24] sm:$0xf]
      %v201 = vld [vmem:[%s183 + $0x28] sm:$0xf]
      %v202 = vld [vmem:[%s183 + $0x2c] sm:$0xf]
      %v203 = vld [vmem:[%s183 + $0x30] sm:$0xf]
      %v204 = vld [vmem:[%s183 + $0x34] sm:$0xf]
      %v205 = vld [vmem:[%s183 + $0x38] sm:$0xf]
      %v206 = vld [vmem:[%s183 + $0x3c] sm:$0xf]
      %v207 = vld [vmem:[%s183 + $0x40] sm:$0xf]
      %v208 = vld [vmem:[%s183 + $0x44] sm:$0xf]
      %v209 = vld [vmem:[%s183 + $0x48] sm:$0xf]
      %v210 = vld [vmem:[%s183 + $0x4c] sm:$0xf]
      %v211 = vld [vmem:[%s183 + $0x50] sm:$0xf]
      %v212 = vld [vmem:[%s183 + $0x54] sm:$0xf]
      %v213 = vld [vmem:[%s183 + $0x58] sm:$0xf]
      %v214 = vld [vmem:[%s183 + $0x5c] sm:$0xf]
      %v215 = vld [vmem:[%s183 + $0x60] sm:$0xf]
      %v216 = vld [vmem:[%s183 + $0x64] sm:$0xf]
      %v217 = vld [vmem:[%s183 + $0x68] sm:$0xf]
      %v218 = vld [vmem:[%s183 + $0x6c] sm:$0xf]
      %v219 = vld [vmem:[%s183 + $0x70] sm:$0xf]
      %v220 = vld [vmem:[%s183 + $0x74] sm:$0xf]
      %v221 = vld [vmem:[%s183 + $0x78] sm:$0xf]
      %v222 = vld [vmem:[%s183 + $0x7c] sm:$0xf]
      %v223 = vld [vmem:[%s183 + $0x80] sm:$0xf]
      %v224 = vld [vmem:[%s183 + $0x84] sm:$0xf]
      %v225 = vld [vmem:[%s183 + $0x88] sm:$0xf]
      %v226 = vld [vmem:[%s183 + $0x8c] sm:$0xf]
      %v227 = vld [vmem:[%s183 + $0x90] sm:$0xf]
      %v228 = vld [vmem:[%s183 + $0x94] sm:$0xf]
      %v229 = vld [vmem:[%s183 + $0x98] sm:$0xf]
      %v230 = vld [vmem:[%s183 + $0x9c] sm:$0xf]
      %v231 = vld [vmem:[%s183 + $0xa0] sm:$0xf]
      %v232 = vld [vmem:[%s183 + $0xa4] sm:$0xf]
      %v233 = vld [vmem:[%s183 + $0xa8] sm:$0xf]
      %v234 = vld [vmem:[%s183 + $0xac] sm:$0xf]
      %v235 = vld [vmem:[%s183 + $0xb0] sm:$0xf]
      %v236 = vld [vmem:[%s183 + $0xb4] sm:$0xf]
      %v237 = vld [vmem:[%s183 + $0xb8] sm:$0xf]
      %v238 = vld [vmem:[%s183 + $0xbc] sm:$0xf]
      %v239 = vld [vmem:[%s183 + $0xc0] sm:$0xf]
      %v240 = vld [vmem:[%s183 + $0xc4] sm:$0xf]
      %v241 = vld [vmem:[%s183 + $0xc8] sm:$0xf]
      %v242 = vld [vmem:[%s183 + $0xcc] sm:$0xf]
      %v243 = vld [vmem:[%s183 + $0xd0] sm:$0xf]
      %v244 = vld [vmem:[%s183 + $0xd4] sm:$0xf]
      %v245 = vld [vmem:[%s183 + $0xd8] sm:$0xf]
      %v246 = vld [vmem:[%s183 + $0xdc] sm:$0xf]
      %v247 = vld [vmem:[%s183 + $0xe0] sm:$0xf]
      %v248 = vld [vmem:[%s183 + $0xe4] sm:$0xf]
      %v249 = vld [vmem:[%s183 + $0xe8] sm:$0xf]
      %v250 = vld [vmem:[%s183 + $0xec] sm:$0xf]
      %v251 = vld [vmem:[%s183 + $0xf0] sm:$0xf]
      %v252 = vld [vmem:[%s183 + $0xf4] sm:$0xf]
      %v253 = vld [vmem:[%s183 + $0xf8] sm:$0xf]
      %v254 = vld [vmem:[%s183 + $0xfc] sm:$0xf]
      %v255 = vld [vmem:[%s183 + $0x100] sm:$0xf]
      %v256 = vld [vmem:[%s183 + $0x104] sm:$0xf]
      %v257 = vld [vmem:[%s183 + $0x108] sm:$0xf]
      %v258 = vld [vmem:[%s183 + $0x10c] sm:$0xf]
      %v259 = vld [vmem:[%s183 + $0x110] sm:$0xf]
      %v260 = vld [vmem:[%s183 + $0x114] sm:$0xf]
      %v261 = vld [vmem:[%s183 + $0x118] sm:$0xf]
      %v262 = vld [vmem:[%s183 + $0x11c] sm:$0xf]
      %v263 = vld [vmem:[%s183 + $0x120] sm:$0xf]
      %v264 = vld [vmem:[%s183 + $0x124] sm:$0xf]
      %v265 = vld [vmem:[%s183 + $0x128] sm:$0xf]
      %v266 = vld [vmem:[%s183 + $0x12c] sm:$0xf]
      %v267 = vld [vmem:[%s183 + $0x130] sm:$0xf]
      %v268 = vld [vmem:[%s183 + $0x134] sm:$0xf]
      %v269 = vld [vmem:[%s183 + $0x138] sm:$0xf]
      %v270 = vld [vmem:[%s183 + $0x13c] sm:$0xf]
      %v271 = vld [vmem:[%s183 + $0x140] sm:$0xf]
      %v272 = vld [vmem:[%s183 + $0x144] sm:$0xf]
      %v273 = vld [vmem:[%s183 + $0x148] sm:$0xf]
      %v274 = vld [vmem:[%s183 + $0x14c] sm:$0xf]
      %v275 = vld [vmem:[%s183 + $0x150] sm:$0xf]
      %v276 = vld [vmem:[%s183 + $0x154] sm:$0xf]
      %v277 = vld [vmem:[%s183 + $0x158] sm:$0xf]
      %v278 = vld [vmem:[%s183 + $0x15c] sm:$0xf]
      %v279 = vld [vmem:[%s183 + $0x160] sm:$0xf]
      %v280 = vld [vmem:[%s183 + $0x164] sm:$0xf]
      %v281 = vld [vmem:[%s183 + $0x168] sm:$0xf]
      %v282 = vld [vmem:[%s183 + $0x16c] sm:$0xf]
      %v283 = vld [vmem:[%s183 + $0x170] sm:$0xf]
      %v284 = vld [vmem:[%s183 + $0x174] sm:$0xf]
      %v285 = vld [vmem:[%s183 + $0x178] sm:$0xf]
      %v286 = vld [vmem:[%s183 + $0x17c] sm:$0xf]
      %v287 = vld [vmem:[%s183 + $0x180] sm:$0xf]
      %v288 = vld [vmem:[%s183 + $0x184] sm:$0xf]
      %v289 = vld [vmem:[%s183 + $0x188] sm:$0xf]
      %v290 = vld [vmem:[%s183 + $0x18c] sm:$0xf]
      %v291 = vld [vmem:[%s183 + $0x190] sm:$0xf]
      %v292 = vld [vmem:[%s183 + $0x194] sm:$0xf]
      %v293 = vld [vmem:[%s183 + $0x198] sm:$0xf]
      %v294 = vld [vmem:[%s183 + $0x19c] sm:$0xf]
      %v295 = vld [vmem:[%s183 + $0x1a0] sm:$0xf]
      %v296 = vld [vmem:[%s183 + $0x1a4] sm:$0xf]
      %v297 = vld [vmem:[%s183 + $0x1a8] sm:$0xf]
      %v298 = vld [vmem:[%s183 + $0x1ac] sm:$0xf]
      %v299 = vld [vmem:[%s183 + $0x1b0] sm:$0xf]
      %v300 = vld [vmem:[%s183 + $0x1b4] sm:$0xf]
      %v301 = vld [vmem:[%s183 + $0x1b8] sm:$0xf]
      %v302 = vld [vmem:[%s183 + $0x1bc] sm:$0xf]
      %v303 = vld [vmem:[%s183 + $0x1c0] sm:$0xf]
      %v304 = vld [vmem:[%s183 + $0x1c4] sm:$0xf]
      %v305 = vld [vmem:[%s183 + $0x1c8] sm:$0xf]
      %v306 = vld [vmem:[%s183 + $0x1cc] sm:$0xf]
      %v307 = vld [vmem:[%s183 + $0x1d0] sm:$0xf]
      %v308 = vld [vmem:[%s183 + $0x1d4] sm:$0xf]
      %v309 = vld [vmem:[%s183 + $0x1d8] sm:$0xf]
      %v310 = vld [vmem:[%s183 + $0x1dc] sm:$0xf]
      %v311 = vld [vmem:[%s183 + $0x1e0] sm:$0xf]
      %v312 = vld [vmem:[%s183 + $0x1e4] sm:$0xf]
      %v313 = vld [vmem:[%s183 + $0x1e8] sm:$0xf]
      %v314 = vld [vmem:[%s183 + $0x1ec] sm:$0xf]
      %v315 = vld [vmem:[%s183 + $0x1f0] sm:$0xf]
      %v316 = vld [vmem:[%s183 + $0x1f4] sm:$0xf]
      %v317 = vld [vmem:[%s183 + $0x1f8] sm:$0xf]
      %v318 = vld [vmem:[%s183 + $0x1fc] sm:$0xf]
      %v319 = vld [vmem:[%s1] sm:$0xf]
      %v320 = vld [vmem:[%s1 + $0x4] sm:$0xf]
      %v321 = vld [vmem:[%s1 + $0x8] sm:$0xf]
      %v322 = vld [vmem:[%s1 + $0xc] sm:$0xf]
      %v323 = vld [vmem:[%s1 + $0x10] sm:$0xf]
      %v324 = vld [vmem:[%s1 + $0x14] sm:$0xf]
      %v325 = vld [vmem:[%s1 + $0x18] sm:$0xf]
      %v326 = vld [vmem:[%s1 + $0x1c] sm:$0xf]
      %v327 = vld [vmem:[%s1 + $0x20] sm:$0xf]
      %v328 = vld [vmem:[%s1 + $0x24] sm:$0xf]
      %v329 = vld [vmem:[%s1 + $0x28] sm:$0xf]
      %v330 = vld [vmem:[%s1 + $0x2c] sm:$0xf]
      %v331 = vld [vmem:[%s1 + $0x30] sm:$0xf]
      %v332 = vld [vmem:[%s1 + $0x34] sm:$0xf]
      %v333 = vld [vmem:[%s1 + $0x38] sm:$0xf]
      %v334 = vld [vmem:[%s1 + $0x3c] sm:$0xf]
      %v463 = vunpack.c.l.b16 %v191
      %v464 = vunpack.c.l.b16 %v192
      %v465 = vunpack.c.l.b16 %v193
      %v466 = vunpack.c.l.b16 %v194
      %v467 = vunpack.c.l.b16 %v195
      %v468 = vunpack.c.l.b16 %v196
      %v469 = vunpack.c.l.b16 %v197
      %v470 = vunpack.c.l.b16 %v198
      %v471 = vunpack.c.l.b16 %v199
      %v472 = vunpack.c.l.b16 %v200
      %v473 = vunpack.c.l.b16 %v201
      %v474 = vunpack.c.l.b16 %v202
      %v475 = vunpack.c.l.b16 %v203
      %v476 = vunpack.c.l.b16 %v204
      %v477 = vunpack.c.l.b16 %v205
      %v478 = vunpack.c.l.b16 %v206
      %v479 = vunpack.c.l.b16 %v207
      %v480 = vunpack.c.l.b16 %v208
      %v481 = vunpack.c.l.b16 %v209
      %v482 = vunpack.c.l.b16 %v210
      %v483 = vunpack.c.l.b16 %v211
      %v484 = vunpack.c.l.b16 %v212
      %v485 = vunpack.c.l.b16 %v213
      %v486 = vunpack.c.l.b16 %v214
      %v487 = vunpack.c.l.b16 %v215
      %v488 = vunpack.c.l.b16 %v216
      %v489 = vunpack.c.l.b16 %v217
      %v490 = vunpack.c.l.b16 %v218
      %v491 = vunpack.c.l.b16 %v219
      %v492 = vunpack.c.l.b16 %v220
      %v493 = vunpack.c.l.b16 %v221
      %v494 = vunpack.c.l.b16 %v222
      %v495 = vunpack.c.l.b16 %v223
      %v496 = vunpack.c.l.b16 %v224
      %v497 = vunpack.c.l.b16 %v225
      %v498 = vunpack.c.l.b16 %v226
      %v499 = vunpack.c.l.b16 %v227
      %v500 = vunpack.c.l.b16 %v228
      %v501 = vunpack.c.l.b16 %v229
      %v502 = vunpack.c.l.b16 %v230
      %v503 = vunpack.c.l.b16 %v231
      %v504 = vunpack.c.l.b16 %v232
      %v505 = vunpack.c.l.b16 %v233
      %v506 = vunpack.c.l.b16 %v234
      %v507 = vunpack.c.l.b16 %v235
      %v508 = vunpack.c.l.b16 %v236
      %v509 = vunpack.c.l.b16 %v237
      %v510 = vunpack.c.l.b16 %v238
      %v511 = vunpack.c.l.b16 %v239
      %v512 = vunpack.c.l.b16 %v240
      %v513 = vunpack.c.l.b16 %v241
      %v514 = vunpack.c.l.b16 %v242
      %v515 = vunpack.c.l.b16 %v243
      %v516 = vunpack.c.l.b16 %v244
      %v517 = vunpack.c.l.b16 %v245
      %v518 = vunpack.c.l.b16 %v246
      %v519 = vunpack.c.l.b16 %v247
      %v520 = vunpack.c.l.b16 %v248
      %v521 = vunpack.c.l.b16 %v249
      %v522 = vunpack.c.l.b16 %v250
      %v523 = vunpack.c.l.b16 %v251
      %v524 = vunpack.c.l.b16 %v252
      %v525 = vunpack.c.l.b16 %v253
      %v526 = vunpack.c.l.b16 %v254
      %v527 = vunpack.c.l.b16 %v255
      %v528 = vunpack.c.l.b16 %v256
      %v529 = vunpack.c.l.b16 %v257
      %v530 = vunpack.c.l.b16 %v258
      %v531 = vunpack.c.l.b16 %v259
      %v532 = vunpack.c.l.b16 %v260
      %v533 = vunpack.c.l.b16 %v261
      %v534 = vunpack.c.l.b16 %v262
      %v535 = vunpack.c.l.b16 %v263
      %v536 = vunpack.c.l.b16 %v264
      %v537 = vunpack.c.l.b16 %v265
      %v538 = vunpack.c.l.b16 %v266
      %v539 = vunpack.c.l.b16 %v267
      %v540 = vunpack.c.l.b16 %v268
      %v541 = vunpack.c.l.b16 %v269
      %v542 = vunpack.c.l.b16 %v270
      %v543 = vunpack.c.l.b16 %v271
      %v544 = vunpack.c.l.b16 %v272
      %v545 = vunpack.c.l.b16 %v273
      %v546 = vunpack.c.l.b16 %v274
      %v547 = vunpack.c.l.b16 %v275
      %v548 = vunpack.c.l.b16 %v276
      %v549 = vunpack.c.l.b16 %v277
      %v550 = vunpack.c.l.b16 %v278
      %v551 = vunpack.c.l.b16 %v279
      %v552 = vunpack.c.l.b16 %v280
      %v553 = vunpack.c.l.b16 %v281
      %v554 = vunpack.c.l.b16 %v282
      %v555 = vunpack.c.l.b16 %v283
      %v556 = vunpack.c.l.b16 %v284
      %v557 = vunpack.c.l.b16 %v285
      %v558 = vunpack.c.l.b16 %v286
      %v559 = vunpack.c.l.b16 %v287
      %v560 = vunpack.c.l.b16 %v288
      %v561 = vunpack.c.l.b16 %v289
      %v562 = vunpack.c.l.b16 %v290
      %v563 = vunpack.c.l.b16 %v291
      %v564 = vunpack.c.l.b16 %v292
      %v565 = vunpack.c.l.b16 %v293
      %v566 = vunpack.c.l.b16 %v294
      %v567 = vunpack.c.l.b16 %v295
      %v568 = vunpack.c.l.b16 %v296
      %v569 = vunpack.c.l.b16 %v297
      %v570 = vunpack.c.l.b16 %v298
      %v571 = vunpack.c.l.b16 %v299
      %v572 = vunpack.c.l.b16 %v300
      %v573 = vunpack.c.l.b16 %v301
      %v574 = vunpack.c.l.b16 %v302
      %v575 = vunpack.c.l.b16 %v303
      %v576 = vunpack.c.l.b16 %v304
      %v577 = vunpack.c.l.b16 %v305
      %v578 = vunpack.c.l.b16 %v306
      %v579 = vunpack.c.l.b16 %v307
      %v580 = vunpack.c.l.b16 %v308
      %v581 = vunpack.c.l.b16 %v309
      %v582 = vunpack.c.l.b16 %v310
      %v583 = vunpack.c.l.b16 %v311
      %v584 = vunpack.c.l.b16 %v312
      %v585 = vunpack.c.l.b16 %v313
      %v586 = vunpack.c.l.b16 %v314
      %v587 = vunpack.c.l.b16 %v315
      %v588 = vunpack.c.l.b16 %v316
      %v589 = vunpack.c.l.b16 %v317
      %v590 = vunpack.c.l.b16 %v318
      %v591 = vpack.c.b16 %v464, %v463
      %v592 = vpack.c.b16 %v466, %v465
      %v593 = vpack.c.b16 %v468, %v467
      %v594 = vpack.c.b16 %v470, %v469
      %v595 = vpack.c.b16 %v472, %v471
      %v596 = vpack.c.b16 %v474, %v473
      %v597 = vpack.c.b16 %v476, %v475
      %v598 = vpack.c.b16 %v478, %v477
      %v599 = vpack.c.b16 %v480, %v479
      %v600 = vpack.c.b16 %v482, %v481
      %v601 = vpack.c.b16 %v484, %v483
      %v602 = vpack.c.b16 %v486, %v485
      %v603 = vpack.c.b16 %v488, %v487
      %v604 = vpack.c.b16 %v490, %v489
      %v605 = vpack.c.b16 %v492, %v491
      %v606 = vpack.c.b16 %v494, %v493
      %v607 = vpack.c.b16 %v496, %v495
      %v608 = vpack.c.b16 %v498, %v497
      %v609 = vpack.c.b16 %v500, %v499
      %v610 = vpack.c.b16 %v502, %v501
      %v611 = vpack.c.b16 %v504, %v503
      %v612 = vpack.c.b16 %v506, %v505
      %v613 = vpack.c.b16 %v508, %v507
      %v614 = vpack.c.b16 %v510, %v509
      %v615 = vpack.c.b16 %v512, %v511
      %v616 = vpack.c.b16 %v514, %v513
      %v617 = vpack.c.b16 %v516, %v515
      %v618 = vpack.c.b16 %v518, %v517
      %v619 = vpack.c.b16 %v520, %v519
      %v620 = vpack.c.b16 %v522, %v521
      %v621 = vpack.c.b16 %v524, %v523
      %v622 = vpack.c.b16 %v526, %v525
      %v623 = vpack.c.b16 %v528, %v527
      %v624 = vpack.c.b16 %v530, %v529
      %v625 = vpack.c.b16 %v532, %v531
      %v626 = vpack.c.b16 %v534, %v533
      %v627 = vpack.c.b16 %v536, %v535
      %v628 = vpack.c.b16 %v538, %v537
      %v629 = vpack.c.b16 %v540, %v539
      %v630 = vpack.c.b16 %v542, %v541
      %v631 = vpack.c.b16 %v544, %v543
      %v632 = vpack.c.b16 %v546, %v545
      %v633 = vpack.c.b16 %v548, %v547
      %v634 = vpack.c.b16 %v550, %v549
      %v635 = vpack.c.b16 %v552, %v551
      %v636 = vpack.c.b16 %v554, %v553
      %v637 = vpack.c.b16 %v556, %v555
      %v638 = vpack.c.b16 %v558, %v557
      %v639 = vpack.c.b16 %v560, %v559
      %v640 = vpack.c.b16 %v562, %v561
      %v641 = vpack.c.b16 %v564, %v563
      %v642 = vpack.c.b16 %v566, %v565
      %v643 = vpack.c.b16 %v568, %v567
      %v644 = vpack.c.b16 %v570, %v569
      %v645 = vpack.c.b16 %v572, %v571
      %v646 = vpack.c.b16 %v574, %v573
      %v647 = vpack.c.b16 %v576, %v575
      %v648 = vpack.c.b16 %v578, %v577
      %v649 = vpack.c.b16 %v580, %v579
      %v650 = vpack.c.b16 %v582, %v581
      %v651 = vpack.c.b16 %v584, %v583
      %v652 = vpack.c.b16 %v586, %v585
      %v653 = vpack.c.b16 %v588, %v587
      %v654 = vpack.c.b16 %v590, %v589
      %v735 = vunpack.c.l.b16 %v319
      %v736 = vunpack.c.l.b16 %v320
      %v737 = vunpack.c.l.b16 %v321
      %v738 = vunpack.c.l.b16 %v322
      %v739 = vunpack.c.l.b16 %v323
      %v740 = vunpack.c.l.b16 %v324
      %v741 = vunpack.c.l.b16 %v325
      %v742 = vunpack.c.l.b16 %v326
      %v743 = vunpack.c.l.b16 %v327
      %v744 = vunpack.c.l.b16 %v328
      %v745 = vunpack.c.l.b16 %v329
      %v746 = vunpack.c.l.b16 %v330
      %v747 = vunpack.c.l.b16 %v331
      %v748 = vunpack.c.l.b16 %v332
      %v749 = vunpack.c.l.b16 %v333
      %v750 = vunpack.c.l.b16 %v334
      %v751 = vpack.c.b16 %v736, %v735
      %v752 = vpack.c.b16 %v738, %v737
      %v753 = vpack.c.b16 %v740, %v739
      %v754 = vpack.c.b16 %v742, %v741
      %v755 = vpack.c.b16 %v744, %v743
      %v756 = vpack.c.b16 %v746, %v745
      %v757 = vpack.c.b16 %v748, %v747
      %v758 = vpack.c.b16 %v750, %v749
      %767 = vmatprep.subr.bf16.mxu0 0
      %768 = vmatpush1.bf16.msra.mxu0 %v751
      %769 = vmatprep.subr.bf16.mxu0 0
      %770 = vmatpush1.bf16.msra.mxu0 %v752
      %771 = vmatprep.subr.bf16.mxu0 0
      %772 = vmatpush1.bf16.msra.mxu0 %v753
      %773 = vmatprep.subr.bf16.mxu0 0
      %774 = vmatpush1.bf16.msra.mxu0 %v754
      %775 = vmatprep.subr.bf16.mxu0 0
      %776 = vmatpush1.bf16.msra.mxu0 %v755
      %777 = vmatprep.subr.bf16.mxu0 0
      %778 = vmatpush1.bf16.msra.mxu0 %v756
      %779 = vmatprep.subr.bf16.mxu0 0
      %780 = vmatpush1.bf16.msra.mxu0 %v757
      %781 = vmatprep.subr.bf16.mxu0 0
      %782 = vmatpush1.bf16.msra.mxu0 %v758
      %783 = vmatprep.subr.bf16.mxu0 0
      %784 = vmatpush1.bf16.msra.mxu0 0
      %785 = vmatprep.subr.bf16.mxu0 0
      %786 = vmatpush1.bf16.msra.mxu0 0
      %787 = vmatprep.subr.bf16.mxu0 0
      %788 = vmatpush1.bf16.msra.mxu0 0
      %789 = vmatprep.subr.bf16.mxu0 0
      %790 = vmatpush1.bf16.msra.mxu0 0
      %791 = vmatprep.subr.bf16.mxu0 0
      %792 = vmatpush1.bf16.msra.mxu0 0
      %793 = vmatprep.subr.bf16.mxu0 0
      %794 = vmatpush1.bf16.msra.mxu0 0
      %795 = vmatprep.subr.bf16.mxu0 0
      %796 = vmatpush1.bf16.msra.mxu0 0
      %797 = vmatprep.subr.bf16.mxu0 0
      %798 = vmatpush1.bf16.msra.mxu0 0
      %799 = vmatprep.mubr.bf16.mxu0 0
      %800 = vmatmul.mubr.bf16.gmra.mrb[0].mxu0 %v591
      %v801 = vpop.f32.mrb[0].mxu0
      %v802 = vadd.f32 0.0, %v801
      %v803 = vpop.f32.mrb[0].mxu0
      %v804 = vpop.f32.mrb[0].mxu0
      %v805 = vadd.f32 0.0, %v804
      %v806 = vpop.f32.mrb[0].mxu0
      %807 = vmatprep.mubr.bf16.mxu0 0
      %808 = vmatmul.mubr.bf16.gmra.mrb[0].mxu0 %v592
      %v809 = vpop.f32.mrb[0].mxu0
      %v810 = vadd.f32 0.0, %v809
      %v811 = vpop.f32.mrb[0].mxu0
      %v812 = vpop.f32.mrb[0].mxu0
      %v813 = vadd.f32 0.0, %v812
      %v814 = vpop.f32.mrb[0].mxu0
      %815 = vmatprep.mubr.bf16.mxu0 0
      %816 = vmatmul.mubr.bf16.gmra.mrb[0].mxu0 %v593
      %v817 = vpop.f32.mrb[0].mxu0
      %v818 = vadd.f32 0.0, %v817
      %v819 = vpop.f32.mrb[0].mxu0
      %v820 = vpop.f32.mrb[0].mxu0
      %v821 = vadd.f32 0.0, %v820
      %v822 = vpop.f32.mrb[0].mxu0
      %823 = vmatprep.mubr.bf16.mxu0 0
      %824 = vmatmul.mubr.bf16.gmra.mrb[0].mxu0 %v594
      %v825 = vpop.f32.mrb[0].mxu0
      %v826 = vadd.f32 0.0, %v825
      %v827 = vpop.f32.mrb[0].mxu0
      %v828 = vpop.f32.mrb[0].mxu0
      %v829 = vadd.f32 0.0, %v828
      %v830 = vpop.f32.mrb[0].mxu0
      %831 = vmatprep.mubr.bf16.mxu0 0
      %832 = vmatmul.mubr.bf16.gmra.mrb[0].mxu0 %v595
      %v833 = vpop.f32.mrb[0].mxu0
      %v834 = vadd.f32 0.0, %v833
      %v835 = vpop.f32.mrb[0].mxu0
      %v836 = vpop.f32.mrb[0].mxu0
      %v837 = vadd.f32 0.0, %v836
      %v838 = vpop.f32.mrb[0].mxu0
      %839 = vmatprep.mubr.bf16.mxu0 0
      %840 = vmatmul.mubr.bf16.gmra.mrb[0].mxu0 %v596
      %v841 = vpop.f32.mrb[0].mxu0
      %v842 = vadd.f32 0.0, %v841
      %v843 = vpop.f32.mrb[0].mxu0
      %v844 = vpop.f32.mrb[0].mxu0
      %v845 = vadd.f32 0.0, %v844
      %v846 = vpop.f32.mrb[0].mxu0
      %847 = vmatprep.mubr.bf16.mxu0 0
      %848 = vmatmul.mubr.bf16.gmra.mrb[0].mxu0 %v597
      %v849 = vpop.f32.mrb[0].mxu0
      %v850 = vadd.f32 0.0, %v849
      %v851 = vpop.f32.mrb[0].mxu0
      %v852 = vpop.f32.mrb[0].mxu0
      %v853 = vadd.f32 0.0, %v852
      %v854 = vpop.f32.mrb[0].mxu0
      %855 = vmatprep.mubr.bf16.mxu0 0
      %856 = vmatmul.mubr.bf16.gmra.mrb[0].mxu0 %v598
      %v857 = vpop.f32.mrb[0].mxu0
      %v858 = vadd.f32 0.0, %v857
      %v859 = vpop.f32.mrb[0].mxu0
      %v860 = vpop.f32.mrb[0].mxu0
      %v861 = vadd.f32 0.0, %v860
      %v862 = vpop.f32.mrb[0].mxu0
      %863 = vmatprep.mubr.bf16.mxu0 0
      %864 = vmatmul.mubr.bf16.gmra.mrb[0].mxu0 %v599
      %v865 = vpop.f32.mrb[0].mxu0
      %v866 = vadd.f32 0.0, %v865
      %v867 = vpop.f32.mrb[0].mxu0
      %v868 = vpop.f32.mrb[0].mxu0
      %v869 = vadd.f32 0.0, %v868
      %v870 = vpop.f32.mrb[0].mxu0
      %871 = vmatprep.mubr.bf16.mxu0 0
      %872 = vmatmul.mubr.bf16.gmra.mrb[0].mxu0 %v600
      %v873 = vpop.f32.mrb[0].mxu0
      %v874 = vadd.f32 0.0, %v873
      %v875 = vpop.f32.mrb[0].mxu0
      %v876 = vpop.f32.mrb[0].mxu0
      %v877 = vadd.f32 0.0, %v876
      %v878 = vpop.f32.mrb[0].mxu0
      %879 = vmatprep.mubr.bf16.mxu0 0
      %880 = vmatmul.mubr.bf16.gmra.mrb[0].mxu0 %v601
      %v881 = vpop.f32.mrb[0].mxu0
      %v882 = vadd.f32 0.0, %v881
      %v883 = vpop.f32.mrb[0].mxu0
      %v884 = vpop.f32.mrb[0].mxu0
      %v885 = vadd.f32 0.0, %v884
      %v886 = vpop.f32.mrb[0].mxu0
      %887 = vmatprep.mubr.bf16.mxu0 0
      %888 = vmatmul.mubr.bf16.gmra.mrb[0].mxu0 %v602
      %v889 = vpop.f32.mrb[0].mxu0
      %v890 = vadd.f32 0.0, %v889
      %v891 = vpop.f32.mrb[0].mxu0
      %v892 = vpop.f32.mrb[0].mxu0
      %v893 = vadd.f32 0.0, %v892
      %v894 = vpop.f32.mrb[0].mxu0
      %895 = vmatprep.mubr.bf16.mxu0 0
      %896 = vmatmul.mubr.bf16.gmra.mrb[0].mxu0 %v603
      %v897 = vpop.f32.mrb[0].mxu0
      %v898 = vadd.f32 0.0, %v897
      %v899 = vpop.f32.mrb[0].mxu0
      %v900 = vpop.f32.mrb[0].mxu0
      %v901 = vadd.f32 0.0, %v900
      %v902 = vpop.f32.mrb[0].mxu0
      %903 = vmatprep.mubr.bf16.mxu0 0
      %904 = vmatmul.mubr.bf16.gmra.mrb[0].mxu0 %v604
      %v905 = vpop.f32.mrb[0].mxu0
      %v906 = vadd.f32 0.0, %v905
      %v907 = vpop.f32.mrb[0].mxu0
      %v908 = vpop.f32.mrb[0].mxu0
      %v909 = vadd.f32 0.0, %v908
      %v910 = vpop.f32.mrb[0].mxu0
      %911 = vmatprep.mubr.bf16.mxu0 0
      %912 = vmatmul.mubr.bf16.gmra.mrb[0].mxu0 %v605
      %v913 = vpop.f32.mrb[0].mxu0
      %v914 = vadd.f32 0.0, %v913
      %v915 = vpop.f32.mrb[0].mxu0
      %v916 = vpop.f32.mrb[0].mxu0
      %v917 = vadd.f32 0.0, %v916
      %v918 = vpop.f32.mrb[0].mxu0
      %919 = vmatprep.mubr.bf16.mxu0 0
      %920 = vmatmul.mubr.bf16.gmra.mrb[0].mxu0 %v606
      %v921 = vpop.f32.mrb[0].mxu0
      %v922 = vadd.f32 0.0, %v921
      %v923 = vpop.f32.mrb[0].mxu0
      %v924 = vpop.f32.mrb[0].mxu0
      %v925 = vadd.f32 0.0, %v924
      %v926 = vpop.f32.mrb[0].mxu0
      %927 = vmatprep.mubr.bf16.mxu0 0
      %928 = vmatmul.mubr.bf16.gmra.mrb[0].mxu0 %v607
      %v929 = vpop.f32.mrb[0].mxu0
      %v930 = vadd.f32 0.0, %v929
      %v931 = vpop.f32.mrb[0].mxu0
      %v932 = vpop.f32.mrb[0].mxu0
      %v933 = vadd.f32 0.0, %v932
      %v934 = vpop.f32.mrb[0].mxu0
      %935 = vmatprep.mubr.bf16.mxu0 0
      %936 = vmatmul.mubr.bf16.gmra.mrb[0].mxu0 %v608
      %v937 = vpop.f32.mrb[0].mxu0
      %v938 = vadd.f32 0.0, %v937
      %v939 = vpop.f32.mrb[0].mxu0
      %v940 = vpop.f32.mrb[0].mxu0
      %v941 = vadd.f32 0.0, %v940
      %v942 = vpop.f32.mrb[0].mxu0
      %943 = vmatprep.mubr.bf16.mxu0 0
      %944 = vmatmul.mubr.bf16.gmra.mrb[0].mxu0 %v609
      %v945 = vpop.f32.mrb[0].mxu0
      %v946 = vadd.f32 0.0, %v945
      %v947 = vpop.f32.mrb[0].mxu0
      %v948 = vpop.f32.mrb[0].mxu0
      %v949 = vadd.f32 0.0, %v948
      %v950 = vpop.f32.mrb[0].mxu0
      %951 = vmatprep.mubr.bf16.mxu0 0
      %952 = vmatmul.mubr.bf16.gmra.mrb[0].mxu0 %v610
      %v953 = vpop.f32.mrb[0].mxu0
      %v954 = vadd.f32 0.0, %v953
      %v955 = vpop.f32.mrb[0].mxu0
      %v956 = vpop.f32.mrb[0].mxu0
      %v957 = vadd.f32 0.0, %v956
      %v958 = vpop.f32.mrb[0].mxu0
      %959 = vmatprep.mubr.bf16.mxu0 0
      %960 = vmatmul.mubr.bf16.gmra.mrb[0].mxu0 %v611
      %v961 = vpop.f32.mrb[0].mxu0
      %v962 = vadd.f32 0.0, %v961
      %v963 = vpop.f32.mrb[0].mxu0
      %v964 = vpop.f32.mrb[0].mxu0
      %v965 = vadd.f32 0.0, %v964
      %v966 = vpop.f32.mrb[0].mxu0
      %967 = vmatprep.mubr.bf16.mxu0 0
      %968 = vmatmul.mubr.bf16.gmra.mrb[0].mxu0 %v612
      %v969 = vpop.f32.mrb[0].mxu0
      %v970 = vadd.f32 0.0, %v969
      %v971 = vpop.f32.mrb[0].mxu0
      %v972 = vpop.f32.mrb[0].mxu0
      %v973 = vadd.f32 0.0, %v972
      %v974 = vpop.f32.mrb[0].mxu0
      %975 = vmatprep.mubr.bf16.mxu0 0
      %976 = vmatmul.mubr.bf16.gmra.mrb[0].mxu0 %v613
      %v977 = vpop.f32.mrb[0].mxu0
      %v978 = vadd.f32 0.0, %v977
      %v979 = vpop.f32.mrb[0].mxu0
      %v980 = vpop.f32.mrb[0].mxu0
      %v981 = vadd.f32 0.0, %v980
      %v982 = vpop.f32.mrb[0].mxu0
      %983 = vmatprep.mubr.bf16.mxu0 0
      %984 = vmatmul.mubr.bf16.gmra.mrb[0].mxu0 %v614
      %v985 = vpop.f32.mrb[0].mxu0
      %v986 = vadd.f32 0.0, %v985
      %v987 = vpop.f32.mrb[0].mxu0
      %v988 = vpop.f32.mrb[0].mxu0
      %v989 = vadd.f32 0.0, %v988
      %v990 = vpop.f32.mrb[0].mxu0
      %991 = vmatprep.mubr.bf16.mxu0 0
      %992 = vmatmul.mubr.bf16.gmra.mrb[0].mxu0 %v615
      %v993 = vpop.f32.mrb[0].mxu0
      %v994 = vadd.f32 0.0, %v993
      %v995 = vpop.f32.mrb[0].mxu0
      %v996 = vpop.f32.mrb[0].mxu0
      %v997 = vadd.f32 0.0, %v996
      %v998 = vpop.f32.mrb[0].mxu0
      %999 = vmatprep.mubr.bf16.mxu0 0
      %1000 = vmatmul.mubr.bf16.gmra.mrb[0].mxu0 %v616
      %v1001 = vpop.f32.mrb[0].mxu0
      %v1002 = vadd.f32 0.0, %v1001
      %v1003 = vpop.f32.mrb[0].mxu0
      %v1004 = vpop.f32.mrb[0].mxu0
      %v1005 = vadd.f32 0.0, %v1004
      %v1006 = vpop.f32.mrb[0].mxu0
      %1007 = vmatprep.mubr.bf16.mxu0 0
      %1008 = vmatmul.mubr.bf16.gmra.mrb[0].mxu0 %v617
      %v1009 = vpop.f32.mrb[0].mxu0
      %v1010 = vadd.f32 0.0, %v1009
      %v1011 = vpop.f32.mrb[0].mxu0
      %v1012 = vpop.f32.mrb[0].mxu0
      %v1013 = vadd.f32 0.0, %v1012
      %v1014 = vpop.f32.mrb[0].mxu0
      %1015 = vmatprep.mubr.bf16.mxu0 0
      %1016 = vmatmul.mubr.bf16.gmra.mrb[0].mxu0 %v618
      %v1017 = vpop.f32.mrb[0].mxu0
      %v1018 = vadd.f32 0.0, %v1017
      %v1019 = vpop.f32.mrb[0].mxu0
      %v1020 = vpop.f32.mrb[0].mxu0
      %v1021 = vadd.f32 0.0, %v1020
      %v1022 = vpop.f32.mrb[0].mxu0
      %1023 = vmatprep.mubr.bf16.mxu0 0
      %1024 = vmatmul.mubr.bf16.gmra.mrb[0].mxu0 %v619
      %v1025 = vpop.f32.mrb[0].mxu0
      %v1026 = vadd.f32 0.0, %v1025
      %v1027 = vpop.f32.mrb[0].mxu0
      %v1028 = vpop.f32.mrb[0].mxu0
      %v1029 = vadd.f32 0.0, %v1028
      %v1030 = vpop.f32.mrb[0].mxu0
      %1031 = vmatprep.mubr.bf16.mxu0 0
      %1032 = vmatmul.mubr.bf16.gmra.mrb[0].mxu0 %v620
      %v1033 = vpop.f32.mrb[0].mxu0
      %v1034 = vadd.f32 0.0, %v1033
      %v1035 = vpop.f32.mrb[0].mxu0
      %v1036 = vpop.f32.mrb[0].mxu0
      %v1037 = vadd.f32 0.0, %v1036
      %v1038 = vpop.f32.mrb[0].mxu0
      %1039 = vmatprep.mubr.bf16.mxu0 0
      %1040 = vmatmul.mubr.bf16.gmra.mrb[0].mxu0 %v621
      %v1041 = vpop.f32.mrb[0].mxu0
      %v1042 = vadd.f32 0.0, %v1041
      %v1043 = vpop.f32.mrb[0].mxu0
      %v1044 = vpop.f32.mrb[0].mxu0
      %v1045 = vadd.f32 0.0, %v1044
      %v1046 = vpop.f32.mrb[0].mxu0
      %1047 = vmatprep.mubr.bf16.mxu0 0
      %1048 = vmatmul.mubr.bf16.gmra.mrb[0].mxu0 %v622
      %v1049 = vpop.f32.mrb[0].mxu0
      %v1050 = vadd.f32 0.0, %v1049
      %v1051 = vpop.f32.mrb[0].mxu0
      %v1052 = vpop.f32.mrb[0].mxu0
      %v1053 = vadd.f32 0.0, %v1052
      %v1054 = vpop.f32.mrb[0].mxu0
      %1055 = vmatprep.mubr.bf16.mxu0 0
      %1056 = vmatmul.mubr.bf16.gmra.mrb[0].mxu0 %v623
      %v1057 = vpop.f32.mrb[0].mxu0
      %v1058 = vadd.f32 0.0, %v1057
      %v1059 = vpop.f32.mrb[0].mxu0
      %v1060 = vpop.f32.mrb[0].mxu0
      %v1061 = vadd.f32 0.0, %v1060
      %v1062 = vpop.f32.mrb[0].mxu0
      %1063 = vmatprep.mubr.bf16.mxu0 0
      %1064 = vmatmul.mubr.bf16.gmra.mrb[0].mxu0 %v624
      %v1065 = vpop.f32.mrb[0].mxu0
      %v1066 = vadd.f32 0.0, %v1065
      %v1067 = vpop.f32.mrb[0].mxu0
      %v1068 = vpop.f32.mrb[0].mxu0
      %v1069 = vadd.f32 0.0, %v1068
      %v1070 = vpop.f32.mrb[0].mxu0
      %1071 = vmatprep.mubr.bf16.mxu0 0
      %1072 = vmatmul.mubr.bf16.gmra.mrb[0].mxu0 %v625
      %v1073 = vpop.f32.mrb[0].mxu0
      %v1074 = vadd.f32 0.0, %v1073
      %v1075 = vpop.f32.mrb[0].mxu0
      %v1076 = vpop.f32.mrb[0].mxu0
      %v1077 = vadd.f32 0.0, %v1076
      %v1078 = vpop.f32.mrb[0].mxu0
      %1079 = vmatprep.mubr.bf16.mxu0 0
      %1080 = vmatmul.mubr.bf16.gmra.mrb[0].mxu0 %v626
      %v1081 = vpop.f32.mrb[0].mxu0
      %v1082 = vadd.f32 0.0, %v1081
      %v1083 = vpop.f32.mrb[0].mxu0
      %v1084 = vpop.f32.mrb[0].mxu0
      %v1085 = vadd.f32 0.0, %v1084
      %v1086 = vpop.f32.mrb[0].mxu0
      %1087 = vmatprep.mubr.bf16.mxu0 0
      %1088 = vmatmul.mubr.bf16.gmra.mrb[0].mxu0 %v627
      %v1089 = vpop.f32.mrb[0].mxu0
      %v1090 = vadd.f32 0.0, %v1089
      %v1091 = vpop.f32.mrb[0].mxu0
      %v1092 = vpop.f32.mrb[0].mxu0
      %v1093 = vadd.f32 0.0, %v1092
      %v1094 = vpop.f32.mrb[0].mxu0
      %1095 = vmatprep.mubr.bf16.mxu0 0
      %1096 = vmatmul.mubr.bf16.gmra.mrb[0].mxu0 %v628
      %v1097 = vpop.f32.mrb[0].mxu0
      %v1098 = vadd.f32 0.0, %v1097
      %v1099 = vpop.f32.mrb[0].mxu0
      %v1100 = vpop.f32.mrb[0].mxu0
      %v1101 = vadd.f32 0.0, %v1100
      %v1102 = vpop.f32.mrb[0].mxu0
      %1103 = vmatprep.mubr.bf16.mxu0 0
      %1104 = vmatmul.mubr.bf16.gmra.mrb[0].mxu0 %v629
      %v1105 = vpop.f32.mrb[0].mxu0
      %v1106 = vadd.f32 0.0, %v1105
      %v1107 = vpop.f32.mrb[0].mxu0
      %v1108 = vpop.f32.mrb[0].mxu0
      %v1109 = vadd.f32 0.0, %v1108
      %v1110 = vpop.f32.mrb[0].mxu0
      %1111 = vmatprep.mubr.bf16.mxu0 0
      %1112 = vmatmul.mubr.bf16.gmra.mrb[0].mxu0 %v630
      %v1113 = vpop.f32.mrb[0].mxu0
      %v1114 = vadd.f32 0.0, %v1113
      %v1115 = vpop.f32.mrb[0].mxu0
      %v1116 = vpop.f32.mrb[0].mxu0
      %v1117 = vadd.f32 0.0, %v1116
      %v1118 = vpop.f32.mrb[0].mxu0
      %1119 = vmatprep.mubr.bf16.mxu0 0
      %1120 = vmatmul.mubr.bf16.gmra.mrb[0].mxu0 %v631
      %v1121 = vpop.f32.mrb[0].mxu0
      %v1122 = vadd.f32 0.0, %v1121
      %v1123 = vpop.f32.mrb[0].mxu0
      %v1124 = vpop.f32.mrb[0].mxu0
      %v1125 = vadd.f32 0.0, %v1124
      %v1126 = vpop.f32.mrb[0].mxu0
      %1127 = vmatprep.mubr.bf16.mxu0 0
      %1128 = vmatmul.mubr.bf16.gmra.mrb[0].mxu0 %v632
      %v1129 = vpop.f32.mrb[0].mxu0
      %v1130 = vadd.f32 0.0, %v1129
      %v1131 = vpop.f32.mrb[0].mxu0
      %v1132 = vpop.f32.mrb[0].mxu0
      %v1133 = vadd.f32 0.0, %v1132
      %v1134 = vpop.f32.mrb[0].mxu0
      %1135 = vmatprep.mubr.bf16.mxu0 0
      %1136 = vmatmul.mubr.bf16.gmra.mrb[0].mxu0 %v633
      %v1137 = vpop.f32.mrb[0].mxu0
      %v1138 = vadd.f32 0.0, %v1137
      %v1139 = vpop.f32.mrb[0].mxu0
      %v1140 = vpop.f32.mrb[0].mxu0
      %v1141 = vadd.f32 0.0, %v1140
      %v1142 = vpop.f32.mrb[0].mxu0
      %1143 = vmatprep.mubr.bf16.mxu0 0
      %1144 = vmatmul.mubr.bf16.gmra.mrb[0].mxu0 %v634
      %v1145 = vpop.f32.mrb[0].mxu0
      %v1146 = vadd.f32 0.0, %v1145
      %v1147 = vpop.f32.mrb[0].mxu0
      %v1148 = vpop.f32.mrb[0].mxu0
      %v1149 = vadd.f32 0.0, %v1148
      %v1150 = vpop.f32.mrb[0].mxu0
      %1151 = vmatprep.mubr.bf16.mxu0 0
      %1152 = vmatmul.mubr.bf16.gmra.mrb[0].mxu0 %v635
      %v1153 = vpop.f32.mrb[0].mxu0
      %v1154 = vadd.f32 0.0, %v1153
      %v1155 = vpop.f32.mrb[0].mxu0
      %v1156 = vpop.f32.mrb[0].mxu0
      %v1157 = vadd.f32 0.0, %v1156
      %v1158 = vpop.f32.mrb[0].mxu0
      %1159 = vmatprep.mubr.bf16.mxu0 0
      %1160 = vmatmul.mubr.bf16.gmra.mrb[0].mxu0 %v636
      %v1161 = vpop.f32.mrb[0].mxu0
      %v1162 = vadd.f32 0.0, %v1161
      %v1163 = vpop.f32.mrb[0].mxu0
      %v1164 = vpop.f32.mrb[0].mxu0
      %v1165 = vadd.f32 0.0, %v1164
      %v1166 = vpop.f32.mrb[0].mxu0
      %1167 = vmatprep.mubr.bf16.mxu0 0
      %1168 = vmatmul.mubr.bf16.gmra.mrb[0].mxu0 %v637
      %v1169 = vpop.f32.mrb[0].mxu0
      %v1170 = vadd.f32 0.0, %v1169
      %v1171 = vpop.f32.mrb[0].mxu0
      %v1172 = vpop.f32.mrb[0].mxu0
      %v1173 = vadd.f32 0.0, %v1172
      %v1174 = vpop.f32.mrb[0].mxu0
      %1175 = vmatprep.mubr.bf16.mxu0 0
      %1176 = vmatmul.mubr.bf16.gmra.mrb[0].mxu0 %v638
      %v1177 = vpop.f32.mrb[0].mxu0
      %v1178 = vadd.f32 0.0, %v1177
      %v1179 = vpop.f32.mrb[0].mxu0
      %v1180 = vpop.f32.mrb[0].mxu0
      %v1181 = vadd.f32 0.0, %v1180
      %v1182 = vpop.f32.mrb[0].mxu0
      %1183 = vmatprep.mubr.bf16.mxu0 0
      %1184 = vmatmul.mubr.bf16.gmra.mrb[0].mxu0 %v639
      %v1185 = vpop.f32.mrb[0].mxu0
      %v1186 = vadd.f32 0.0, %v1185
      %v1187 = vpop.f32.mrb[0].mxu0
      %v1188 = vpop.f32.mrb[0].mxu0
      %v1189 = vadd.f32 0.0, %v1188
      %v1190 = vpop.f32.mrb[0].mxu0
      %1191 = vmatprep.mubr.bf16.mxu0 0
      %1192 = vmatmul.mubr.bf16.gmra.mrb[0].mxu0 %v640
      %v1193 = vpop.f32.mrb[0].mxu0
      %v1194 = vadd.f32 0.0, %v1193
      %v1195 = vpop.f32.mrb[0].mxu0
      %v1196 = vpop.f32.mrb[0].mxu0
      %v1197 = vadd.f32 0.0, %v1196
      %v1198 = vpop.f32.mrb[0].mxu0
      %1199 = vmatprep.mubr.bf16.mxu0 0
      %1200 = vmatmul.mubr.bf16.gmra.mrb[0].mxu0 %v641
      %v1201 = vpop.f32.mrb[0].mxu0
      %v1202 = vadd.f32 0.0, %v1201
      %v1203 = vpop.f32.mrb[0].mxu0
      %v1204 = vpop.f32.mrb[0].mxu0
      %v1205 = vadd.f32 0.0, %v1204
      %v1206 = vpop.f32.mrb[0].mxu0
      %1207 = vmatprep.mubr.bf16.mxu0 0
      %1208 = vmatmul.mubr.bf16.gmra.mrb[0].mxu0 %v642
      %v1209 = vpop.f32.mrb[0].mxu0
      %v1210 = vadd.f32 0.0, %v1209
      %v1211 = vpop.f32.mrb[0].mxu0
      %v1212 = vpop.f32.mrb[0].mxu0
      %v1213 = vadd.f32 0.0, %v1212
      %v1214 = vpop.f32.mrb[0].mxu0
      %1215 = vmatprep.mubr.bf16.mxu0 0
      %1216 = vmatmul.mubr.bf16.gmra.mrb[0].mxu0 %v643
      %v1217 = vpop.f32.mrb[0].mxu0
      %v1218 = vadd.f32 0.0, %v1217
      %v1219 = vpop.f32.mrb[0].mxu0
      %v1220 = vpop.f32.mrb[0].mxu0
      %v1221 = vadd.f32 0.0, %v1220
      %v1222 = vpop.f32.mrb[0].mxu0
      %1223 = vmatprep.mubr.bf16.mxu0 0
      %1224 = vmatmul.mubr.bf16.gmra.mrb[0].mxu0 %v644
      %v1225 = vpop.f32.mrb[0].mxu0
      %v1226 = vadd.f32 0.0, %v1225
      %v1227 = vpop.f32.mrb[0].mxu0
      %v1228 = vpop.f32.mrb[0].mxu0
      %v1229 = vadd.f32 0.0, %v1228
      %v1230 = vpop.f32.mrb[0].mxu0
      %1231 = vmatprep.mubr.bf16.mxu0 0
      %1232 = vmatmul.mubr.bf16.gmra.mrb[0].mxu0 %v645
      %v1233 = vpop.f32.mrb[0].mxu0
      %v1234 = vadd.f32 0.0, %v1233
      %v1235 = vpop.f32.mrb[0].mxu0
      %v1236 = vpop.f32.mrb[0].mxu0
      %v1237 = vadd.f32 0.0, %v1236
      %v1238 = vpop.f32.mrb[0].mxu0
      %1239 = vmatprep.mubr.bf16.mxu0 0
      %1240 = vmatmul.mubr.bf16.gmra.mrb[0].mxu0 %v646
      %v1241 = vpop.f32.mrb[0].mxu0
      %v1242 = vadd.f32 0.0, %v1241
      %v1243 = vpop.f32.mrb[0].mxu0
      %v1244 = vpop.f32.mrb[0].mxu0
      %v1245 = vadd.f32 0.0, %v1244
      %v1246 = vpop.f32.mrb[0].mxu0
      %1247 = vmatprep.mubr.bf16.mxu0 0
      %1248 = vmatmul.mubr.bf16.gmra.mrb[0].mxu0 %v647
      %v1249 = vpop.f32.mrb[0].mxu0
      %v1250 = vadd.f32 0.0, %v1249
      %v1251 = vpop.f32.mrb[0].mxu0
      %v1252 = vpop.f32.mrb[0].mxu0
      %v1253 = vadd.f32 0.0, %v1252
      %v1254 = vpop.f32.mrb[0].mxu0
      %1255 = vmatprep.mubr.bf16.mxu0 0
      %1256 = vmatmul.mubr.bf16.gmra.mrb[0].mxu0 %v648
      %v1257 = vpop.f32.mrb[0].mxu0
      %v1258 = vadd.f32 0.0, %v1257
      %v1259 = vpop.f32.mrb[0].mxu0
      %v1260 = vpop.f32.mrb[0].mxu0
      %v1261 = vadd.f32 0.0, %v1260
      %v1262 = vpop.f32.mrb[0].mxu0
      %1263 = vmatprep.mubr.bf16.mxu0 0
      %1264 = vmatmul.mubr.bf16.gmra.mrb[0].mxu0 %v649
      %v1265 = vpop.f32.mrb[0].mxu0
      %v1266 = vadd.f32 0.0, %v1265
      %v1267 = vpop.f32.mrb[0].mxu0
      %v1268 = vpop.f32.mrb[0].mxu0
      %v1269 = vadd.f32 0.0, %v1268
      %v1270 = vpop.f32.mrb[0].mxu0
      %1271 = vmatprep.mubr.bf16.mxu0 0
      %1272 = vmatmul.mubr.bf16.gmra.mrb[0].mxu0 %v650
      %v1273 = vpop.f32.mrb[0].mxu0
      %v1274 = vadd.f32 0.0, %v1273
      %v1275 = vpop.f32.mrb[0].mxu0
      %v1276 = vpop.f32.mrb[0].mxu0
      %v1277 = vadd.f32 0.0, %v1276
      %v1278 = vpop.f32.mrb[0].mxu0
      %1279 = vmatprep.mubr.bf16.mxu0 0
      %1280 = vmatmul.mubr.bf16.gmra.mrb[0].mxu0 %v651
      %v1281 = vpop.f32.mrb[0].mxu0
      %v1282 = vadd.f32 0.0, %v1281
      %v1283 = vpop.f32.mrb[0].mxu0
      %v1284 = vpop.f32.mrb[0].mxu0
      %v1285 = vadd.f32 0.0, %v1284
      %v1286 = vpop.f32.mrb[0].mxu0
      %1287 = vmatprep.mubr.bf16.mxu0 0
      %1288 = vmatmul.mubr.bf16.gmra.mrb[0].mxu0 %v652
      %v1289 = vpop.f32.mrb[0].mxu0
      %v1290 = vadd.f32 0.0, %v1289
      %v1291 = vpop.f32.mrb[0].mxu0
      %v1292 = vpop.f32.mrb[0].mxu0
      %v1293 = vadd.f32 0.0, %v1292
      %v1294 = vpop.f32.mrb[0].mxu0
      %1295 = vmatprep.mubr.bf16.mxu0 0
      %1296 = vmatmul.mubr.bf16.gmra.mrb[0].mxu0 %v653
      %v1297 = vpop.f32.mrb[0].mxu0
      %v1298 = vadd.f32 0.0, %v1297
      %v1299 = vpop.f32.mrb[0].mxu0
      %v1300 = vpop.f32.mrb[0].mxu0
      %v1301 = vadd.f32 0.0, %v1300
      %v1302 = vpop.f32.mrb[0].mxu0
      %1303 = vmatprep.mubr.bf16.mxu0 0
      %1304 = vmatmul.mubr.bf16.gmra.mrb[0].mxu0 %v654
      %v1305 = vpop.f32.mrb[0].mxu0
      %v1306 = vadd.f32 0.0, %v1305
      %v1307 = vpop.f32.mrb[0].mxu0
      %v1308 = vpop.f32.mrb[0].mxu0
      %v1309 = vadd.f32 0.0, %v1308
      %v1310 = vpop.f32.mrb[0].mxu0
      %1311 = vdwg.mxu0
      %v1312 = vld [vmem:[#allocation3] sm:$0x1]
      %v1313 = vadd.f32 %v802, %v805
      %v1314 = vadd.f32 %v1313, %v810
      %v1315 = vadd.f32 %v1314, %v813
      %v1316 = vadd.f32 %v1315, %v818
      %v1317 = vadd.f32 %v1316, %v821
      %v1318 = vadd.f32 %v1317, %v826
      %v1319 = vadd.f32 %v1318, %v829
      %v1320 = vadd.f32 %v1319, %v834
      %v1321 = vadd.f32 %v1320, %v837
      %v1322 = vadd.f32 %v1321, %v842
      %v1323 = vadd.f32 %v1322, %v845
      %v1324 = vadd.f32 %v1323, %v850
      %v1325 = vadd.f32 %v1324, %v853
      %v1326 = vadd.f32 %v1325, %v858
      %v1327 = vadd.f32 %v1326, %v861
      %v1328 = vadd.f32 %v1327, %v866
      %v1329 = vadd.f32 %v1328, %v869
      %v1330 = vadd.f32 %v1329, %v874
      %v1331 = vadd.f32 %v1330, %v877
      %v1332 = vadd.f32 %v1331, %v882
      %v1333 = vadd.f32 %v1332, %v885
      %v1334 = vadd.f32 %v1333, %v890
      %v1335 = vadd.f32 %v1334, %v893
      %v1336 = vadd.f32 %v1335, %v898
      %v1337 = vadd.f32 %v1336, %v901
      %v1338 = vadd.f32 %v1337, %v906
      %v1339 = vadd.f32 %v1338, %v909
      %v1340 = vadd.f32 %v1339, %v914
      %v1341 = vadd.f32 %v1340, %v917
      %v1342 = vadd.f32 %v1341, %v922
      %v1343 = vadd.f32 %v1342, %v925
      %v1344 = vadd.f32 %v1343, %v930
      %v1345 = vadd.f32 %v1344, %v933
      %v1346 = vadd.f32 %v1345, %v938
      %v1347 = vadd.f32 %v1346, %v941
      %v1348 = vadd.f32 %v1347, %v946
      %v1349 = vadd.f32 %v1348, %v949
      %v1350 = vadd.f32 %v1349, %v954
      %v1351 = vadd.f32 %v1350, %v957
      %v1352 = vadd.f32 %v1351, %v962
      %v1353 = vadd.f32 %v1352, %v965
      %v1354 = vadd.f32 %v1353, %v970
      %v1355 = vadd.f32 %v1354, %v973
      %v1356 = vadd.f32 %v1355, %v978
      %v1357 = vadd.f32 %v1356, %v981
      %v1358 = vadd.f32 %v1357, %v986
      %v1359 = vadd.f32 %v1358, %v989
      %v1360 = vadd.f32 %v1359, %v994
      %v1361 = vadd.f32 %v1360, %v997
      %v1362 = vadd.f32 %v1361, %v1002
      %v1363 = vadd.f32 %v1362, %v1005
      %v1364 = vadd.f32 %v1363, %v1010
      %v1365 = vadd.f32 %v1364, %v1013
      %v1366 = vadd.f32 %v1365, %v1018
      %v1367 = vadd.f32 %v1366, %v1021
      %v1368 = vadd.f32 %v1367, %v1026
      %v1369 = vadd.f32 %v1368, %v1029
      %v1370 = vadd.f32 %v1369, %v1034
      %v1371 = vadd.f32 %v1370, %v1037
      %v1372 = vadd.f32 %v1371, %v1042
      %v1373 = vadd.f32 %v1372, %v1045
      %v1374 = vadd.f32 %v1373, %v1050
      %v1375 = vadd.f32 %v1374, %v1053
      %v1376 = vadd.f32 %v1375, %v1058
      %v1377 = vadd.f32 %v1376, %v1061
      %v1378 = vadd.f32 %v1377, %v1066
      %v1379 = vadd.f32 %v1378, %v1069
      %v1380 = vadd.f32 %v1379, %v1074
      %v1381 = vadd.f32 %v1380, %v1077
      %v1382 = vadd.f32 %v1381, %v1082
      %v1383 = vadd.f32 %v1382, %v1085
      %v1384 = vadd.f32 %v1383, %v1090
      %v1385 = vadd.f32 %v1384, %v1093
      %v1386 = vadd.f32 %v1385, %v1098
      %v1387 = vadd.f32 %v1386, %v1101
      %v1388 = vadd.f32 %v1387, %v1106
      %v1389 = vadd.f32 %v1388, %v1109
      %v1390 = vadd.f32 %v1389, %v1114
      %v1391 = vadd.f32 %v1390, %v1117
      %v1392 = vadd.f32 %v1391, %v1122
      %v1393 = vadd.f32 %v1392, %v1125
      %v1394 = vadd.f32 %v1393, %v1130
      %v1395 = vadd.f32 %v1394, %v1133
      %v1396 = vadd.f32 %v1395, %v1138
      %v1397 = vadd.f32 %v1396, %v1141
      %v1398 = vadd.f32 %v1397, %v1146
      %v1399 = vadd.f32 %v1398, %v1149
      %v1400 = vadd.f32 %v1399, %v1154
      %v1401 = vadd.f32 %v1400, %v1157
      %v1402 = vadd.f32 %v1401, %v1162
      %v1403 = vadd.f32 %v1402, %v1165
      %v1404 = vadd.f32 %v1403, %v1170
      %v1405 = vadd.f32 %v1404, %v1173
      %v1406 = vadd.f32 %v1405, %v1178
      %v1407 = vadd.f32 %v1406, %v1181
      %v1408 = vadd.f32 %v1407, %v1186
      %v1409 = vadd.f32 %v1408, %v1189
      %v1410 = vadd.f32 %v1409, %v1194
      %v1411 = vadd.f32 %v1410, %v1197
      %v1412 = vadd.f32 %v1411, %v1202
      %v1413 = vadd.f32 %v1412, %v1205
      %v1414 = vadd.f32 %v1413, %v1210
      %v1415 = vadd.f32 %v1414, %v1213
      %v1416 = vadd.f32 %v1415, %v1218
      %v1417 = vadd.f32 %v1416, %v1221
      %v1418 = vadd.f32 %v1417, %v1226
      %v1419 = vadd.f32 %v1418, %v1229
      %v1420 = vadd.f32 %v1419, %v1234
      %v1421 = vadd.f32 %v1420, %v1237
      %v1422 = vadd.f32 %v1421, %v1242
      %v1423 = vadd.f32 %v1422, %v1245
      %v1424 = vadd.f32 %v1423, %v1250
      %v1425 = vadd.f32 %v1424, %v1253
      %v1426 = vadd.f32 %v1425, %v1258
      %v1427 = vadd.f32 %v1426, %v1261
      %v1428 = vadd.f32 %v1427, %v1266
      %v1429 = vadd.f32 %v1428, %v1269
      %v1430 = vadd.f32 %v1429, %v1274
      %v1431 = vadd.f32 %v1430, %v1277
      %v1432 = vadd.f32 %v1431, %v1282
      %v1433 = vadd.f32 %v1432, %v1285
      %v1434 = vadd.f32 %v1433, %v1290
      %v1435 = vadd.f32 %v1434, %v1293
      %v1436 = vadd.f32 %v1435, %v1298
      %v1437 = vadd.f32 %v1436, %v1301
      %v1438 = vadd.f32 %v1437, %v1306
      %v1439 = vadd.f32 %v1438, %v1309
      %v1440 = vrot.slane %v1439, 4
      %v1441 = vadd.f32 %v1439, %v1440
      %v1442 = vrot.slane %v1441, 2
      %v1443 = vadd.f32 %v1441, %v1442
      %v1444 = vrot.slane %v1443, 1
      %v1445 = vadd.f32 %v1443, %v1444
      %v1446 = vadd.f32 %v1312, %v1445
      %1447 = vst [vmem:[#allocation3] sm:$0x1] %v1446
      %v1448 = vld [vmem:[#allocation3 + $0x1] sm:$0x1]
      %v1449 = vmul.f32 %v802, %v802
      %v1450 = vmul.f32 %v805, %v805
      %v1451 = vmul.f32 %v810, %v810
      %v1452 = vmul.f32 %v813, %v813
      %v1453 = vmul.f32 %v818, %v818
      %v1454 = vmul.f32 %v821, %v821
      %v1455 = vmul.f32 %v826, %v826
      %v1456 = vmul.f32 %v829, %v829
      %v1457 = vmul.f32 %v834, %v834
      %v1458 = vmul.f32 %v837, %v837
      %v1459 = vmul.f32 %v842, %v842
      %v1460 = vmul.f32 %v845, %v845
      %v1461 = vmul.f32 %v850, %v850
      %v1462 = vmul.f32 %v853, %v853
      %v1463 = vmul.f32 %v858, %v858
      %v1464 = vmul.f32 %v861, %v861
      %v1465 = vmul.f32 %v866, %v866
      %v1466 = vmul.f32 %v869, %v869
      %v1467 = vmul.f32 %v874, %v874
      %v1468 = vmul.f32 %v877, %v877
      %v1469 = vmul.f32 %v882, %v882
      %v1470 = vmul.f32 %v885, %v885
      %v1471 = vmul.f32 %v890, %v890
      %v1472 = vmul.f32 %v893, %v893
      %v1473 = vmul.f32 %v898, %v898
      %v1474 = vmul.f32 %v901, %v901
      %v1475 = vmul.f32 %v906, %v906
      %v1476 = vmul.f32 %v909, %v909
      %v1477 = vmul.f32 %v914, %v914
      %v1478 = vmul.f32 %v917, %v917
      %v1479 = vmul.f32 %v922, %v922
      %v1480 = vmul.f32 %v925, %v925
      %v1481 = vmul.f32 %v930, %v930
      %v1482 = vmul.f32 %v933, %v933
      %v1483 = vmul.f32 %v938, %v938
      %v1484 = vmul.f32 %v941, %v941
      %v1485 = vmul.f32 %v946, %v946
      %v1486 = vmul.f32 %v949, %v949
      %v1487 = vmul.f32 %v954, %v954
      %v1488 = vmul.f32 %v957, %v957
      %v1489 = vmul.f32 %v962, %v962
      %v1490 = vmul.f32 %v965, %v965
      %v1491 = vmul.f32 %v970, %v970
      %v1492 = vmul.f32 %v973, %v973
      %v1493 = vmul.f32 %v978, %v978
      %v1494 = vmul.f32 %v981, %v981
      %v1495 = vmul.f32 %v986, %v986
      %v1496 = vmul.f32 %v989, %v989
      %v1497 = vmul.f32 %v994, %v994
      %v1498 = vmul.f32 %v997, %v997
      %v1499 = vmul.f32 %v1002, %v1002
      %v1500 = vmul.f32 %v1005, %v1005
      %v1501 = vmul.f32 %v1010, %v1010
      %v1502 = vmul.f32 %v1013, %v1013
      %v1503 = vmul.f32 %v1018, %v1018
      %v1504 = vmul.f32 %v1021, %v1021
      %v1505 = vmul.f32 %v1026, %v1026
      %v1506 = vmul.f32 %v1029, %v1029
      %v1507 = vmul.f32 %v1034, %v1034
      %v1508 = vmul.f32 %v1037, %v1037
      %v1509 = vmul.f32 %v1042, %v1042
      %v1510 = vmul.f32 %v1045, %v1045
      %v1511 = vmul.f32 %v1050, %v1050
      %v1512 = vmul.f32 %v1053, %v1053
      %v1513 = vmul.f32 %v1058, %v1058
      %v1514 = vmul.f32 %v1061, %v1061
      %v1515 = vmul.f32 %v1066, %v1066
      %v1516 = vmul.f32 %v1069, %v1069
      %v1517 = vmul.f32 %v1074, %v1074
      %v1518 = vmul.f32 %v1077, %v1077
      %v1519 = vmul.f32 %v1082, %v1082
      %v1520 = vmul.f32 %v1085, %v1085
      %v1521 = vmul.f32 %v1090, %v1090
      %v1522 = vmul.f32 %v1093, %v1093
      %v1523 = vmul.f32 %v1098, %v1098
      %v1524 = vmul.f32 %v1101, %v1101
      %v1525 = vmul.f32 %v1106, %v1106
      %v1526 = vmul.f32 %v1109, %v1109
      %v1527 = vmul.f32 %v1114, %v1114
      %v1528 = vmul.f32 %v1117, %v1117
      %v1529 = vmul.f32 %v1122, %v1122
      %v1530 = vmul.f32 %v1125, %v1125
      %v1531 = vmul.f32 %v1130, %v1130
      %v1532 = vmul.f32 %v1133, %v1133
      %v1533 = vmul.f32 %v1138, %v1138
      %v1534 = vmul.f32 %v1141, %v1141
      %v1535 = vmul.f32 %v1146, %v1146
      %v1536 = vmul.f32 %v1149, %v1149
      %v1537 = vmul.f32 %v1154, %v1154
      %v1538 = vmul.f32 %v1157, %v1157
      %v1539 = vmul.f32 %v1162, %v1162
      %v1540 = vmul.f32 %v1165, %v1165
      %v1541 = vmul.f32 %v1170, %v1170
      %v1542 = vmul.f32 %v1173, %v1173
      %v1543 = vmul.f32 %v1178, %v1178
      %v1544 = vmul.f32 %v1181, %v1181
      %v1545 = vmul.f32 %v1186, %v1186
      %v1546 = vmul.f32 %v1189, %v1189
      %v1547 = vmul.f32 %v1194, %v1194
      %v1548 = vmul.f32 %v1197, %v1197
      %v1549 = vmul.f32 %v1202, %v1202
      %v1550 = vmul.f32 %v1205, %v1205
      %v1551 = vmul.f32 %v1210, %v1210
      %v1552 = vmul.f32 %v1213, %v1213
      %v1553 = vmul.f32 %v1218, %v1218
      %v1554 = vmul.f32 %v1221, %v1221
      %v1555 = vmul.f32 %v1226, %v1226
      %v1556 = vmul.f32 %v1229, %v1229
      %v1557 = vmul.f32 %v1234, %v1234
      %v1558 = vmul.f32 %v1237, %v1237
      %v1559 = vmul.f32 %v1242, %v1242
      %v1560 = vmul.f32 %v1245, %v1245
      %v1561 = vmul.f32 %v1250, %v1250
      %v1562 = vmul.f32 %v1253, %v1253
      %v1563 = vmul.f32 %v1258, %v1258
      %v1564 = vmul.f32 %v1261, %v1261
      %v1565 = vmul.f32 %v1266, %v1266
      %v1566 = vmul.f32 %v1269, %v1269
      %v1567 = vmul.f32 %v1274, %v1274
      %v1568 = vmul.f32 %v1277, %v1277
      %v1569 = vmul.f32 %v1282, %v1282
      %v1570 = vmul.f32 %v1285, %v1285
      %v1571 = vmul.f32 %v1290, %v1290
      %v1572 = vmul.f32 %v1293, %v1293
      %v1573 = vmul.f32 %v1298, %v1298
      %v1574 = vmul.f32 %v1301, %v1301
      %v1575 = vmul.f32 %v1306, %v1306
      %v1576 = vmul.f32 %v1309, %v1309
      %v1577 = vadd.f32 %v1449, %v1450
      %v1578 = vadd.f32 %v1577, %v1451
      %v1579 = vadd.f32 %v1578, %v1452
      %v1580 = vadd.f32 %v1579, %v1453
      %v1581 = vadd.f32 %v1580, %v1454
      %v1582 = vadd.f32 %v1581, %v1455
      %v1583 = vadd.f32 %v1582, %v1456
      %v1584 = vadd.f32 %v1583, %v1457
      %v1585 = vadd.f32 %v1584, %v1458
      %v1586 = vadd.f32 %v1585, %v1459
      %v1587 = vadd.f32 %v1586, %v1460
      %v1588 = vadd.f32 %v1587, %v1461
      %v1589 = vadd.f32 %v1588, %v1462
      %v1590 = vadd.f32 %v1589, %v1463
      %v1591 = vadd.f32 %v1590, %v1464
      %v1592 = vadd.f32 %v1591, %v1465
      %v1593 = vadd.f32 %v1592, %v1466
      %v1594 = vadd.f32 %v1593, %v1467
      %v1595 = vadd.f32 %v1594, %v1468
      %v1596 = vadd.f32 %v1595, %v1469
      %v1597 = vadd.f32 %v1596, %v1470
      %v1598 = vadd.f32 %v1597, %v1471
      %v1599 = vadd.f32 %v1598, %v1472
      %v1600 = vadd.f32 %v1599, %v1473
      %v1601 = vadd.f32 %v1600, %v1474
      %v1602 = vadd.f32 %v1601, %v1475
      %v1603 = vadd.f32 %v1602, %v1476
      %v1604 = vadd.f32 %v1603, %v1477
      %v1605 = vadd.f32 %v1604, %v1478
      %v1606 = vadd.f32 %v1605, %v1479
      %v1607 = vadd.f32 %v1606, %v1480
      %v1608 = vadd.f32 %v1607, %v1481
      %v1609 = vadd.f32 %v1608, %v1482
      %v1610 = vadd.f32 %v1609, %v1483
      %v1611 = vadd.f32 %v1610, %v1484
      %v1612 = vadd.f32 %v1611, %v1485
      %v1613 = vadd.f32 %v1612, %v1486
      %v1614 = vadd.f32 %v1613, %v1487
      %v1615 = vadd.f32 %v1614, %v1488
      %v1616 = vadd.f32 %v1615, %v1489
      %v1617 = vadd.f32 %v1616, %v1490
      %v1618 = vadd.f32 %v1617, %v1491
      %v1619 = vadd.f32 %v1618, %v1492
      %v1620 = vadd.f32 %v1619, %v1493
      %v1621 = vadd.f32 %v1620, %v1494
      %v1622 = vadd.f32 %v1621, %v1495
      %v1623 = vadd.f32 %v1622, %v1496
      %v1624 = vadd.f32 %v1623, %v1497
      %v1625 = vadd.f32 %v1624, %v1498
      %v1626 = vadd.f32 %v1625, %v1499
      %v1627 = vadd.f32 %v1626, %v1500
      %v1628 = vadd.f32 %v1627, %v1501
      %v1629 = vadd.f32 %v1628, %v1502
      %v1630 = vadd.f32 %v1629, %v1503
      %v1631 = vadd.f32 %v1630, %v1504
      %v1632 = vadd.f32 %v1631, %v1505
      %v1633 = vadd.f32 %v1632, %v1506
      %v1634 = vadd.f32 %v1633, %v1507
      %v1635 = vadd.f32 %v1634, %v1508
      %v1636 = vadd.f32 %v1635, %v1509
      %v1637 = vadd.f32 %v1636, %v1510
      %v1638 = vadd.f32 %v1637, %v1511
      %v1639 = vadd.f32 %v1638, %v1512
      %v1640 = vadd.f32 %v1639, %v1513
      %v1641 = vadd.f32 %v1640, %v1514
      %v1642 = vadd.f32 %v1641, %v1515
      %v1643 = vadd.f32 %v1642, %v1516
      %v1644 = vadd.f32 %v1643, %v1517
      %v1645 = vadd.f32 %v1644, %v1518
      %v1646 = vadd.f32 %v1645, %v1519
      %v1647 = vadd.f32 %v1646, %v1520
      %v1648 = vadd.f32 %v1647, %v1521
      %v1649 = vadd.f32 %v1648, %v1522
      %v1650 = vadd.f32 %v1649, %v1523
      %v1651 = vadd.f32 %v1650, %v1524
      %v1652 = vadd.f32 %v1651, %v1525
      %v1653 = vadd.f32 %v1652, %v1526
      %v1654 = vadd.f32 %v1653, %v1527
      %v1655 = vadd.f32 %v1654, %v1528
      %v1656 = vadd.f32 %v1655, %v1529
      %v1657 = vadd.f32 %v1656, %v1530
      %v1658 = vadd.f32 %v1657, %v1531
      %v1659 = vadd.f32 %v1658, %v1532
      %v1660 = vadd.f32 %v1659, %v1533
      %v1661 = vadd.f32 %v1660, %v1534
      %v1662 = vadd.f32 %v1661, %v1535
      %v1663 = vadd.f32 %v1662, %v1536
      %v1664 = vadd.f32 %v1663, %v1537
      %v1665 = vadd.f32 %v1664, %v1538
      %v1666 = vadd.f32 %v1665, %v1539
      %v1667 = vadd.f32 %v1666, %v1540
      %v1668 = vadd.f32 %v1667, %v1541
      %v1669 = vadd.f32 %v1668, %v1542
      %v1670 = vadd.f32 %v1669, %v1543
      %v1671 = vadd.f32 %v1670, %v1544
      %v1672 = vadd.f32 %v1671, %v1545
      %v1673 = vadd.f32 %v1672, %v1546
      %v1674 = vadd.f32 %v1673, %v1547
      %v1675 = vadd.f32 %v1674, %v1548
      %v1676 = vadd.f32 %v1675, %v1549
      %v1677 = vadd.f32 %v1676, %v1550
      %v1678 = vadd.f32 %v1677, %v1551
      %v1679 = vadd.f32 %v1678, %v1552
      %v1680 = vadd.f32 %v1679, %v1553
      %v1681 = vadd.f32 %v1680, %v1554
      %v1682 = vadd.f32 %v1681, %v1555
      %v1683 = vadd.f32 %v1682, %v1556
      %v1684 = vadd.f32 %v1683, %v1557
      %v1685 = vadd.f32 %v1684, %v1558
      %v1686 = vadd.f32 %v1685, %v1559
      %v1687 = vadd.f32 %v1686, %v1560
      %v1688 = vadd.f32 %v1687, %v1561
      %v1689 = vadd.f32 %v1688, %v1562
      %v1690 = vadd.f32 %v1689, %v1563
      %v1691 = vadd.f32 %v1690, %v1564
      %v1692 = vadd.f32 %v1691, %v1565
      %v1693 = vadd.f32 %v1692, %v1566
      %v1694 = vadd.f32 %v1693, %v1567
      %v1695 = vadd.f32 %v1694, %v1568
      %v1696 = vadd.f32 %v1695, %v1569
      %v1697 = vadd.f32 %v1696, %v1570
      %v1698 = vadd.f32 %v1697, %v1571
      %v1699 = vadd.f32 %v1698, %v1572
      %v1700 = vadd.f32 %v1699, %v1573
      %v1701 = vadd.f32 %v1700, %v1574
      %v1702 = vadd.f32 %v1701, %v1575
      %v1703 = vadd.f32 %v1702, %v1576
      %v1704 = vrot.slane %v1703, 4
      %v1705 = vadd.f32 %v1703, %v1704
      %v1706 = vrot.slane %v1705, 2
      %v1707 = vadd.f32 %v1705, %v1706
      %v1708 = vrot.slane %v1707, 1
      %v1709 = vadd.f32 %v1707, %v1708
      %v1710 = vadd.f32 %v1448, %v1709
      %1711 = vst [vmem:[#allocation3 + $0x1] sm:$0x1] %v1710
      %s1712 = smul.u32 %s15, 1024
      %s1713 = scalar_lea.vmem [#allocation2], %s1712
      %1714 = vst [vmem:[%s1713] sm:$0xff] %v802
      %1715 = vst [vmem:[%s1713 + $0x8] sm:$0xff] %v805
      %1716 = vst [vmem:[%s1713 + $0x10] sm:$0xff] %v810
      %1717 = vst [vmem:[%s1713 + $0x18] sm:$0xff] %v813
      %1718 = vst [vmem:[%s1713 + $0x20] sm:$0xff] %v818
      %1719 = vst [vmem:[%s1713 + $0x28] sm:$0xff] %v821
      %1720 = vst [vmem:[%s1713 + $0x30] sm:$0xff] %v826
      %1721 = vst [vmem:[%s1713 + $0x38] sm:$0xff] %v829
      %1722 = vst [vmem:[%s1713 + $0x40] sm:$0xff] %v834
      %1723 = vst [vmem:[%s1713 + $0x48] sm:$0xff] %v837
      %1724 = vst [vmem:[%s1713 + $0x50] sm:$0xff] %v842
      %1725 = vst [vmem:[%s1713 + $0x58] sm:$0xff] %v845
      %1726 = vst [vmem:[%s1713 + $0x60] sm:$0xff] %v850
      %1727 = vst [vmem:[%s1713 + $0x68] sm:$0xff] %v853
      %1728 = vst [vmem:[%s1713 + $0x70] sm:$0xff] %v858
      %1729 = vst [vmem:[%s1713 + $0x78] sm:$0xff] %v861
      %1730 = vst [vmem:[%s1713 + $0x80] sm:$0xff] %v866
      %1731 = vst [vmem:[%s1713 + $0x88] sm:$0xff] %v869
      %1732 = vst [vmem:[%s1713 + $0x90] sm:$0xff] %v874
      %1733 = vst [vmem:[%s1713 + $0x98] sm:$0xff] %v877
      %1734 = vst [vmem:[%s1713 + $0xa0] sm:$0xff] %v882
      %1735 = vst [vmem:[%s1713 + $0xa8] sm:$0xff] %v885
      %1736 = vst [vmem:[%s1713 + $0xb0] sm:$0xff] %v890
      %1737 = vst [vmem:[%s1713 + $0xb8] sm:$0xff] %v893
      %1738 = vst [vmem:[%s1713 + $0xc0] sm:$0xff] %v898
      %1739 = vst [vmem:[%s1713 + $0xc8] sm:$0xff] %v901
      %1740 = vst [vmem:[%s1713 + $0xd0] sm:$0xff] %v906
      %1741 = vst [vmem:[%s1713 + $0xd8] sm:$0xff] %v909
      %1742 = vst [vmem:[%s1713 + $0xe0] sm:$0xff] %v914
      %1743 = vst [vmem:[%s1713 + $0xe8] sm:$0xff] %v917
      %1744 = vst [vmem:[%s1713 + $0xf0] sm:$0xff] %v922
      %1745 = vst [vmem:[%s1713 + $0xf8] sm:$0xff] %v925
      %1746 = vst [vmem:[%s1713 + $0x100] sm:$0xff] %v930
      %1747 = vst [vmem:[%s1713 + $0x108] sm:$0xff] %v933
      %1748 = vst [vmem:[%s1713 + $0x110] sm:$0xff] %v938
      %1749 = vst [vmem:[%s1713 + $0x118] sm:$0xff] %v941
      %1750 = vst [vmem:[%s1713 + $0x120] sm:$0xff] %v946
      %1751 = vst [vmem:[%s1713 + $0x128] sm:$0xff] %v949
      %1752 = vst [vmem:[%s1713 + $0x130] sm:$0xff] %v954
      %1753 = vst [vmem:[%s1713 + $0x138] sm:$0xff] %v957
      %1754 = vst [vmem:[%s1713 + $0x140] sm:$0xff] %v962
      %1755 = vst [vmem:[%s1713 + $0x148] sm:$0xff] %v965
      %1756 = vst [vmem:[%s1713 + $0x150] sm:$0xff] %v970
      %1757 = vst [vmem:[%s1713 + $0x158] sm:$0xff] %v973
      %1758 = vst [vmem:[%s1713 + $0x160] sm:$0xff] %v978
      %1759 = vst [vmem:[%s1713 + $0x168] sm:$0xff] %v981
      %1760 = vst [vmem:[%s1713 + $0x170] sm:$0xff] %v986
      %1761 = vst [vmem:[%s1713 + $0x178] sm:$0xff] %v989
      %1762 = vst [vmem:[%s1713 + $0x180] sm:$0xff] %v994
      %1763 = vst [vmem:[%s1713 + $0x188] sm:$0xff] %v997
      %1764 = vst [vmem:[%s1713 + $0x190] sm:$0xff] %v1002
      %1765 = vst [vmem:[%s1713 + $0x198] sm:$0xff] %v1005
      %1766 = vst [vmem:[%s1713 + $0x1a0] sm:$0xff] %v1010
      %1767 = vst [vmem:[%s1713 + $0x1a8] sm:$0xff] %v1013
      %1768 = vst [vmem:[%s1713 + $0x1b0] sm:$0xff] %v1018
      %1769 = vst [vmem:[%s1713 + $0x1b8] sm:$0xff] %v1021
      %1770 = vst [vmem:[%s1713 + $0x1c0] sm:$0xff] %v1026
      %1771 = vst [vmem:[%s1713 + $0x1c8] sm:$0xff] %v1029
      %1772 = vst [vmem:[%s1713 + $0x1d0] sm:$0xff] %v1034
      %1773 = vst [vmem:[%s1713 + $0x1d8] sm:$0xff] %v1037
      %1774 = vst [vmem:[%s1713 + $0x1e0] sm:$0xff] %v1042
      %1775 = vst [vmem:[%s1713 + $0x1e8] sm:$0xff] %v1045
      %1776 = vst [vmem:[%s1713 + $0x1f0] sm:$0xff] %v1050
      %1777 = vst [vmem:[%s1713 + $0x1f8] sm:$0xff] %v1053
      %1778 = vst [vmem:[%s1713 + $0x200] sm:$0xff] %v1058
      %1779 = vst [vmem:[%s1713 + $0x208] sm:$0xff] %v1061
      %1780 = vst [vmem:[%s1713 + $0x210] sm:$0xff] %v1066
      %1781 = vst [vmem:[%s1713 + $0x218] sm:$0xff] %v1069
      %1782 = vst [vmem:[%s1713 + $0x220] sm:$0xff] %v1074
      %1783 = vst [vmem:[%s1713 + $0x228] sm:$0xff] %v1077
      %1784 = vst [vmem:[%s1713 + $0x230] sm:$0xff] %v1082
      %1785 = vst [vmem:[%s1713 + $0x238] sm:$0xff] %v1085
      %1786 = vst [vmem:[%s1713 + $0x240] sm:$0xff] %v1090
      %1787 = vst [vmem:[%s1713 + $0x248] sm:$0xff] %v1093
      %1788 = vst [vmem:[%s1713 + $0x250] sm:$0xff] %v1098
      %1789 = vst [vmem:[%s1713 + $0x258] sm:$0xff] %v1101
      %1790 = vst [vmem:[%s1713 + $0x260] sm:$0xff] %v1106
      %1791 = vst [vmem:[%s1713 + $0x268] sm:$0xff] %v1109
      %1792 = vst [vmem:[%s1713 + $0x270] sm:$0xff] %v1114
      %1793 = vst [vmem:[%s1713 + $0x278] sm:$0xff] %v1117
      %1794 = vst [vmem:[%s1713 + $0x280] sm:$0xff] %v1122
      %1795 = vst [vmem:[%s1713 + $0x288] sm:$0xff] %v1125
      %1796 = vst [vmem:[%s1713 + $0x290] sm:$0xff] %v1130
      %1797 = vst [vmem:[%s1713 + $0x298] sm:$0xff] %v1133
      %1798 = vst [vmem:[%s1713 + $0x2a0] sm:$0xff] %v1138
      %1799 = vst [vmem:[%s1713 + $0x2a8] sm:$0xff] %v1141
      %1800 = vst [vmem:[%s1713 + $0x2b0] sm:$0xff] %v1146
      %1801 = vst [vmem:[%s1713 + $0x2b8] sm:$0xff] %v1149
      %1802 = vst [vmem:[%s1713 + $0x2c0] sm:$0xff] %v1154
      %1803 = vst [vmem:[%s1713 + $0x2c8] sm:$0xff] %v1157
      %1804 = vst [vmem:[%s1713 + $0x2d0] sm:$0xff] %v1162
      %1805 = vst [vmem:[%s1713 + $0x2d8] sm:$0xff] %v1165
      %1806 = vst [vmem:[%s1713 + $0x2e0] sm:$0xff] %v1170
      %1807 = vst [vmem:[%s1713 + $0x2e8] sm:$0xff] %v1173
      %1808 = vst [vmem:[%s1713 + $0x2f0] sm:$0xff] %v1178
      %1809 = vst [vmem:[%s1713 + $0x2f8] sm:$0xff] %v1181
      %1810 = vst [vmem:[%s1713 + $0x300] sm:$0xff] %v1186
      %1811 = vst [vmem:[%s1713 + $0x308] sm:$0xff] %v1189
      %1812 = vst [vmem:[%s1713 + $0x310] sm:$0xff] %v1194
      %1813 = vst [vmem:[%s1713 + $0x318] sm:$0xff] %v1197
      %1814 = vst [vmem:[%s1713 + $0x320] sm:$0xff] %v1202
      %1815 = vst [vmem:[%s1713 + $0x328] sm:$0xff] %v1205
      %1816 = vst [vmem:[%s1713 + $0x330] sm:$0xff] %v1210
      %1817 = vst [vmem:[%s1713 + $0x338] sm:$0xff] %v1213
      %1818 = vst [vmem:[%s1713 + $0x340] sm:$0xff] %v1218
      %1819 = vst [vmem:[%s1713 + $0x348] sm:$0xff] %v1221
      %1820 = vst [vmem:[%s1713 + $0x350] sm:$0xff] %v1226
      %1821 = vst [vmem:[%s1713 + $0x358] sm:$0xff] %v1229
      %1822 = vst [vmem:[%s1713 + $0x360] sm:$0xff] %v1234
      %1823 = vst [vmem:[%s1713 + $0x368] sm:$0xff] %v1237
      %1824 = vst [vmem:[%s1713 + $0x370] sm:$0xff] %v1242
      %1825 = vst [vmem:[%s1713 + $0x378] sm:$0xff] %v1245
      %1826 = vst [vmem:[%s1713 + $0x380] sm:$0xff] %v1250
      %1827 = vst [vmem:[%s1713 + $0x388] sm:$0xff] %v1253
      %1828 = vst [vmem:[%s1713 + $0x390] sm:$0xff] %v1258
      %1829 = vst [vmem:[%s1713 + $0x398] sm:$0xff] %v1261
      %1830 = vst [vmem:[%s1713 + $0x3a0] sm:$0xff] %v1266
      %1831 = vst [vmem:[%s1713 + $0x3a8] sm:$0xff] %v1269
      %1832 = vst [vmem:[%s1713 + $0x3b0] sm:$0xff] %v1274
      %1833 = vst [vmem:[%s1713 + $0x3b8] sm:$0xff] %v1277
      %1834 = vst [vmem:[%s1713 + $0x3c0] sm:$0xff] %v1282
      %1835 = vst [vmem:[%s1713 + $0x3c8] sm:$0xff] %v1285
      %1836 = vst [vmem:[%s1713 + $0x3d0] sm:$0xff] %v1290
      %1837 = vst [vmem:[%s1713 + $0x3d8] sm:$0xff] %v1293
      %1838 = vst [vmem:[%s1713 + $0x3e0] sm:$0xff] %v1298
      %1839 = vst [vmem:[%s1713 + $0x3e8] sm:$0xff] %v1301
      %1840 = vst [vmem:[%s1713 + $0x3f0] sm:$0xff] %v1306
      %1841 = vst [vmem:[%s1713 + $0x3f8] sm:$0xff] %v1309
      %p1842 = scmp.eq.s32.totalorder %s15, 1
      // Predicated region
      $region41: #{generator_forward.8} parent=35 // pred_check
        %p1843 = pneg %p1842
      $region42: #{generator_forward.8} parent=35 // pred_check_branch
        %1845 = sbr.rel (%p1843) target = $region44
      $region43: #{generator_forward.8} parent=35 // pred_region
        %v1846 = vld [vmem:[#allocation3] sm:$0x1]
        %v1847 = vmul.f32 %v1846, 0.00048828125
        %v1848 = vld [vmem:[#allocation3 + $0x1] sm:$0x1]
        %v1849 = vmul.f32 %v1848, 0.00048828125
        %v1850 = vmul.f32 %v1847, %v1847
        %v1851 = vsub.f32 %v1849, %v1850
        %v1852 = vmax.f32 %v1851, 0.0
        %v1853 = vadd.f32 %v1852, 1e-05
        %v1854 = vrsqrt.pop %v1853
        %v1855 = vld [vmem:[%s2] sm:$0x1]
        %v1856 = vmul.f32 %v1854, %v1855
        %v1857 = vld [vmem:[%s3] sm:$0x1]
        %v1858 = vmul.f32 %v1847, %v1856
        %v1859 = vsub.f32 %v1857, %v1858
        %v1860 = vld [vmem:[#allocation2] sm:$0xff]
        %v1861 = vld [vmem:[#allocation2 + $0x8] sm:$0xff]
        %v1862 = vld [vmem:[#allocation2 + $0x10] sm:$0xff]
        %v1863 = vld [vmem:[#allocation2 + $0x18] sm:$0xff]
        %v1864 = vld [vmem:[#allocation2 + $0x20] sm:$0xff]
        %v1865 = vld [vmem:[#allocation2 + $0x28] sm:$0xff]
        %v1866 = vld [vmem:[#allocation2 + $0x30] sm:$0xff]
        %v1867 = vld [vmem:[#allocation2 + $0x38] sm:$0xff]
        %v1868 = vld [vmem:[#allocation2 + $0x40] sm:$0xff]
        %v1869 = vld [vmem:[#allocation2 + $0x48] sm:$0xff]
        %v1870 = vld [vmem:[#allocation2 + $0x50] sm:$0xff]
        %v1871 = vld [vmem:[#allocation2 + $0x58] sm:$0xff]
        %v1872 = vld [vmem:[#allocation2 + $0x60] sm:$0xff]
        %v1873 = vld [vmem:[#allocation2 + $0x68] sm:$0xff]
        %v1874 = vld [vmem:[#allocation2 + $0x70] sm:$0xff]
        %v1875 = vld [vmem:[#allocation2 + $0x78] sm:$0xff]
        %v1876 = vld [vmem:[#allocation2 + $0x80] sm:$0xff]
        %v1877 = vld [vmem:[#allocation2 + $0x88] sm:$0xff]
        %v1878 = vld [vmem:[#allocation2 + $0x90] sm:$0xff]
        %v1879 = vld [vmem:[#allocation2 + $0x98] sm:$0xff]
        %v1880 = vld [vmem:[#allocation2 + $0xa0] sm:$0xff]
        %v1881 = vld [vmem:[#allocation2 + $0xa8] sm:$0xff]
        %v1882 = vld [vmem:[#allocation2 + $0xb0] sm:$0xff]
        %v1883 = vld [vmem:[#allocation2 + $0xb8] sm:$0xff]
        %v1884 = vld [vmem:[#allocation2 + $0xc0] sm:$0xff]
        %v1885 = vld [vmem:[#allocation2 + $0xc8] sm:$0xff]
        %v1886 = vld [vmem:[#allocation2 + $0xd0] sm:$0xff]
        %v1887 = vld [vmem:[#allocation2 + $0xd8] sm:$0xff]
        %v1888 = vld [vmem:[#allocation2 + $0xe0] sm:$0xff]
        %v1889 = vld [vmem:[#allocation2 + $0xe8] sm:$0xff]
        %v1890 = vld [vmem:[#allocation2 + $0xf0] sm:$0xff]
        %v1891 = vld [vmem:[#allocation2 + $0xf8] sm:$0xff]
        %v1892 = vld [vmem:[#allocation2 + $0x100] sm:$0xff]
        %v1893 = vld [vmem:[#allocation2 + $0x108] sm:$0xff]
        %v1894 = vld [vmem:[#allocation2 + $0x110] sm:$0xff]
        %v1895 = vld [vmem:[#allocation2 + $0x118] sm:$0xff]
        %v1896 = vld [vmem:[#allocation2 + $0x120] sm:$0xff]
        %v1897 = vld [vmem:[#allocation2 + $0x128] sm:$0xff]
        %v1898 = vld [vmem:[#allocation2 + $0x130] sm:$0xff]
        %v1899 = vld [vmem:[#allocation2 + $0x138] sm:$0xff]
        %v1900 = vld [vmem:[#allocation2 + $0x140] sm:$0xff]
        %v1901 = vld [vmem:[#allocation2 + $0x148] sm:$0xff]
        %v1902 = vld [vmem:[#allocation2 + $0x150] sm:$0xff]
        %v1903 = vld [vmem:[#allocation2 + $0x158] sm:$0xff]
        %v1904 = vld [vmem:[#allocation2 + $0x160] sm:$0xff]
        %v1905 = vld [vmem:[#allocation2 + $0x168] sm:$0xff]
        %v1906 = vld [vmem:[#allocation2 + $0x170] sm:$0xff]
        %v1907 = vld [vmem:[#allocation2 + $0x178] sm:$0xff]
        %v1908 = vld [vmem:[#allocation2 + $0x180] sm:$0xff]
        %v1909 = vld [vmem:[#allocation2 + $0x188] sm:$0xff]
        %v1910 = vld [vmem:[#allocation2 + $0x190] sm:$0xff]
        %v1911 = vld [vmem:[#allocation2 + $0x198] sm:$0xff]
        %v1912 = vld [vmem:[#allocation2 + $0x1a0] sm:$0xff]
        %v1913 = vld [vmem:[#allocation2 + $0x1a8] sm:$0xff]
        %v1914 = vld [vmem:[#allocation2 + $0x1b0] sm:$0xff]
        %v1915 = vld [vmem:[#allocation2 + $0x1b8] sm:$0xff]
        %v1916 = vld [vmem:[#allocation2 + $0x1c0] sm:$0xff]
        %v1917 = vld [vmem:[#allocation2 + $0x1c8] sm:$0xff]
        %v1918 = vld [vmem:[#allocation2 + $0x1d0] sm:$0xff]
        %v1919 = vld [vmem:[#allocation2 + $0x1d8] sm:$0xff]
        %v1920 = vld [vmem:[#allocation2 + $0x1e0] sm:$0xff]
        %v1921 = vld [vmem:[#allocation2 + $0x1e8] sm:$0xff]
        %v1922 = vld [vmem:[#allocation2 + $0x1f0] sm:$0xff]
        %v1923 = vld [vmem:[#allocation2 + $0x1f8] sm:$0xff]
        %v1924 = vld [vmem:[#allocation2 + $0x200] sm:$0xff]
        %v1925 = vld [vmem:[#allocation2 + $0x208] sm:$0xff]
        %v1926 = vld [vmem:[#allocation2 + $0x210] sm:$0xff]
        %v1927 = vld [vmem:[#allocation2 + $0x218] sm:$0xff]
        %v1928 = vld [vmem:[#allocation2 + $0x220] sm:$0xff]
        %v1929 = vld [vmem:[#allocation2 + $0x228] sm:$0xff]
        %v1930 = vld [vmem:[#allocation2 + $0x230] sm:$0xff]
        %v1931 = vld [vmem:[#allocation2 + $0x238] sm:$0xff]
        %v1932 = vld [vmem:[#allocation2 + $0x240] sm:$0xff]
        %v1933 = vld [vmem:[#allocation2 + $0x248] sm:$0xff]
        %v1934 = vld [vmem:[#allocation2 + $0x250] sm:$0xff]
        %v1935 = vld [vmem:[#allocation2 + $0x258] sm:$0xff]
        %v1936 = vld [vmem:[#allocation2 + $0x260] sm:$0xff]
        %v1937 = vld [vmem:[#allocation2 + $0x268] sm:$0xff]
        %v1938 = vld [vmem:[#allocation2 + $0x270] sm:$0xff]
        %v1939 = vld [vmem:[#allocation2 + $0x278] sm:$0xff]
        %v1940 = vld [vmem:[#allocation2 + $0x280] sm:$0xff]
        %v1941 = vld [vmem:[#allocation2 + $0x288] sm:$0xff]
        %v1942 = vld [vmem:[#allocation2 + $0x290] sm:$0xff]
        %v1943 = vld [vmem:[#allocation2 + $0x298] sm:$0xff]
        %v1944 = vld [vmem:[#allocation2 + $0x2a0] sm:$0xff]
        %v1945 = vld [vmem:[#allocation2 + $0x2a8] sm:$0xff]
        %v1946 = vld [vmem:[#allocation2 + $0x2b0] sm:$0xff]
        %v1947 = vld [vmem:[#allocation2 + $0x2b8] sm:$0xff]
        %v1948 = vld [vmem:[#allocation2 + $0x2c0] sm:$0xff]
        %v1949 = vld [vmem:[#allocation2 + $0x2c8] sm:$0xff]
        %v1950 = vld [vmem:[#allocation2 + $0x2d0] sm:$0xff]
        %v1951 = vld [vmem:[#allocation2 + $0x2d8] sm:$0xff]
        %v1952 = vld [vmem:[#allocation2 + $0x2e0] sm:$0xff]
        %v1953 = vld [vmem:[#allocation2 + $0x2e8] sm:$0xff]
        %v1954 = vld [vmem:[#allocation2 + $0x2f0] sm:$0xff]
        %v1955 = vld [vmem:[#allocation2 + $0x2f8] sm:$0xff]
        %v1956 = vld [vmem:[#allocation2 + $0x300] sm:$0xff]
        %v1957 = vld [vmem:[#allocation2 + $0x308] sm:$0xff]
        %v1958 = vld [vmem:[#allocation2 + $0x310] sm:$0xff]
        %v1959 = vld [vmem:[#allocation2 + $0x318] sm:$0xff]
        %v1960 = vld [vmem:[#allocation2 + $0x320] sm:$0xff]
        %v1961 = vld [vmem:[#allocation2 + $0x328] sm:$0xff]
        %v1962 = vld [vmem:[#allocation2 + $0x330] sm:$0xff]
        %v1963 = vld [vmem:[#allocation2 + $0x338] sm:$0xff]
        %v1964 = vld [vmem:[#allocation2 + $0x340] sm:$0xff]
        %v1965 = vld [vmem:[#allocation2 + $0x348] sm:$0xff]
        %v1966 = vld [vmem:[#allocation2 + $0x350] sm:$0xff]
        %v1967 = vld [vmem:[#allocation2 + $0x358] sm:$0xff]
        %v1968 = vld [vmem:[#allocation2 + $0x360] sm:$0xff]
        %v1969 = vld [vmem:[#allocation2 + $0x368] sm:$0xff]
        %v1970 = vld [vmem:[#allocation2 + $0x370] sm:$0xff]
        %v1971 = vld [vmem:[#allocation2 + $0x378] sm:$0xff]
        %v1972 = vld [vmem:[#allocation2 + $0x380] sm:$0xff]
        %v1973 = vld [vmem:[#allocation2 + $0x388] sm:$0xff]
        %v1974 = vld [vmem:[#allocation2 + $0x390] sm:$0xff]
        %v1975 = vld [vmem:[#allocation2 + $0x398] sm:$0xff]
        %v1976 = vld [vmem:[#allocation2 + $0x3a0] sm:$0xff]
        %v1977 = vld [vmem:[#allocation2 + $0x3a8] sm:$0xff]
        %v1978 = vld [vmem:[#allocation2 + $0x3b0] sm:$0xff]
        %v1979 = vld [vmem:[#allocation2 + $0x3b8] sm:$0xff]
        %v1980 = vld [vmem:[#allocation2 + $0x3c0] sm:$0xff]
        %v1981 = vld [vmem:[#allocation2 + $0x3c8] sm:$0xff]
        %v1982 = vld [vmem:[#allocation2 + $0x3d0] sm:$0xff]
        %v1983 = vld [vmem:[#allocation2 + $0x3d8] sm:$0xff]
        %v1984 = vld [vmem:[#allocation2 + $0x3e0] sm:$0xff]
        %v1985 = vld [vmem:[#allocation2 + $0x3e8] sm:$0xff]
        %v1986 = vld [vmem:[#allocation2 + $0x3f0] sm:$0xff]
        %v1987 = vld [vmem:[#allocation2 + $0x3f8] sm:$0xff]
        %v1988 = vld [vmem:[#allocation2 + $0x400] sm:$0xff]
        %v1989 = vld [vmem:[#allocation2 + $0x408] sm:$0xff]
        %v1990 = vld [vmem:[#allocation2 + $0x410] sm:$0xff]
        %v1991 = vld [vmem:[#allocation2 + $0x418] sm:$0xff]
        %v1992 = vld [vmem:[#allocation2 + $0x420] sm:$0xff]
        %v1993 = vld [vmem:[#allocation2 + $0x428] sm:$0xff]
        %v1994 = vld [vmem:[#allocation2 + $0x430] sm:$0xff]
        %v1995 = vld [vmem:[#allocation2 + $0x438] sm:$0xff]
        %v1996 = vld [vmem:[#allocation2 + $0x440] sm:$0xff]
        %v1997 = vld [vmem:[#allocation2 + $0x448] sm:$0xff]
        %v1998 = vld [vmem:[#allocation2 + $0x450] sm:$0xff]
        %v1999 = vld [vmem:[#allocation2 + $0x458] sm:$0xff]
        %v2000 = vld [vmem:[#allocation2 + $0x460] sm:$0xff]
        %v2001 = vld [vmem:[#allocation2 + $0x468] sm:$0xff]
        %v2002 = vld [vmem:[#allocation2 + $0x470] sm:$0xff]
        %v2003 = vld [vmem:[#allocation2 + $0x478] sm:$0xff]
        %v2004 = vld [vmem:[#allocation2 + $0x480] sm:$0xff]
        %v2005 = vld [vmem:[#allocation2 + $0x488] sm:$0xff]
        %v2006 = vld [vmem:[#allocation2 + $0x490] sm:$0xff]
        %v2007 = vld [vmem:[#allocation2 + $0x498] sm:$0xff]
        %v2008 = vld [vmem:[#allocation2 + $0x4a0] sm:$0xff]
        %v2009 = vld [vmem:[#allocation2 + $0x4a8] sm:$0xff]
        %v2010 = vld [vmem:[#allocation2 + $0x4b0] sm:$0xff]
        %v2011 = vld [vmem:[#allocation2 + $0x4b8] sm:$0xff]
        %v2012 = vld [vmem:[#allocation2 + $0x4c0] sm:$0xff]
        %v2013 = vld [vmem:[#allocation2 + $0x4c8] sm:$0xff]
        %v2014 = vld [vmem:[#allocation2 + $0x4d0] sm:$0xff]
        %v2015 = vld [vmem:[#allocation2 + $0x4d8] sm:$0xff]
        %v2016 = vld [vmem:[#allocation2 + $0x4e0] sm:$0xff]
        %v2017 = vld [vmem:[#allocation2 + $0x4e8] sm:$0xff]
        %v2018 = vld [vmem:[#allocation2 + $0x4f0] sm:$0xff]
        %v2019 = vld [vmem:[#allocation2 + $0x4f8] sm:$0xff]
        %v2020 = vld [vmem:[#allocation2 + $0x500] sm:$0xff]
        %v2021 = vld [vmem:[#allocation2 + $0x508] sm:$0xff]
        %v2022 = vld [vmem:[#allocation2 + $0x510] sm:$0xff]
        %v2023 = vld [vmem:[#allocation2 + $0x518] sm:$0xff]
        %v2024 = vld [vmem:[#allocation2 + $0x520] sm:$0xff]
        %v2025 = vld [vmem:[#allocation2 + $0x528] sm:$0xff]
        %v2026 = vld [vmem:[#allocation2 + $0x530] sm:$0xff]
        %v2027 = vld [vmem:[#allocation2 + $0x538] sm:$0xff]
        %v2028 = vld [vmem:[#allocation2 + $0x540] sm:$0xff]
        %v2029 = vld [vmem:[#allocation2 + $0x548] sm:$0xff]
        %v2030 = vld [vmem:[#allocation2 + $0x550] sm:$0xff]
        %v2031 = vld [vmem:[#allocation2 + $0x558] sm:$0xff]
        %v2032 = vld [vmem:[#allocation2 + $0x560] sm:$0xff]
        %v2033 = vld [vmem:[#allocation2 + $0x568] sm:$0xff]
        %v2034 = vld [vmem:[#allocation2 + $0x570] sm:$0xff]
        %v2035 = vld [vmem:[#allocation2 + $0x578] sm:$0xff]
        %v2036 = vld [vmem:[#allocation2 + $0x580] sm:$0xff]
        %v2037 = vld [vmem:[#allocation2 + $0x588] sm:$0xff]
        %v2038 = vld [vmem:[#allocation2 + $0x590] sm:$0xff]
        %v2039 = vld [vmem:[#allocation2 + $0x598] sm:$0xff]
        %v2040 = vld [vmem:[#allocation2 + $0x5a0] sm:$0xff]
        %v2041 = vld [vmem:[#allocation2 + $0x5a8] sm:$0xff]
        %v2042 = vld [vmem:[#allocation2 + $0x5b0] sm:$0xff]
        %v2043 = vld [vmem:[#allocation2 + $0x5b8] sm:$0xff]
        %v2044 = vld [vmem:[#allocation2 + $0x5c0] sm:$0xff]
        %v2045 = vld [vmem:[#allocation2 + $0x5c8] sm:$0xff]
        %v2046 = vld [vmem:[#allocation2 + $0x5d0] sm:$0xff]
        %v2047 = vld [vmem:[#allocation2 + $0x5d8] sm:$0xff]
        %v2048 = vld [vmem:[#allocation2 + $0x5e0] sm:$0xff]
        %v2049 = vld [vmem:[#allocation2 + $0x5e8] sm:$0xff]
        %v2050 = vld [vmem:[#allocation2 + $0x5f0] sm:$0xff]
        %v2051 = vld [vmem:[#allocation2 + $0x5f8] sm:$0xff]
        %v2052 = vld [vmem:[#allocation2 + $0x600] sm:$0xff]
        %v2053 = vld [vmem:[#allocation2 + $0x608] sm:$0xff]
        %v2054 = vld [vmem:[#allocation2 + $0x610] sm:$0xff]
        %v2055 = vld [vmem:[#allocation2 + $0x618] sm:$0xff]
        %v2056 = vld [vmem:[#allocation2 + $0x620] sm:$0xff]
        %v2057 = vld [vmem:[#allocation2 + $0x628] sm:$0xff]
        %v2058 = vld [vmem:[#allocation2 + $0x630] sm:$0xff]
        %v2059 = vld [vmem:[#allocation2 + $0x638] sm:$0xff]
        %v2060 = vld [vmem:[#allocation2 + $0x640] sm:$0xff]
        %v2061 = vld [vmem:[#allocation2 + $0x648] sm:$0xff]
        %v2062 = vld [vmem:[#allocation2 + $0x650] sm:$0xff]
        %v2063 = vld [vmem:[#allocation2 + $0x658] sm:$0xff]
        %v2064 = vld [vmem:[#allocation2 + $0x660] sm:$0xff]
        %v2065 = vld [vmem:[#allocation2 + $0x668] sm:$0xff]
        %v2066 = vld [vmem:[#allocation2 + $0x670] sm:$0xff]
        %v2067 = vld [vmem:[#allocation2 + $0x678] sm:$0xff]
        %v2068 = vld [vmem:[#allocation2 + $0x680] sm:$0xff]
        %v2069 = vld [vmem:[#allocation2 + $0x688] sm:$0xff]
        %v2070 = vld [vmem:[#allocation2 + $0x690] sm:$0xff]
        %v2071 = vld [vmem:[#allocation2 + $0x698] sm:$0xff]
        %v2072 = vld [vmem:[#allocation2 + $0x6a0] sm:$0xff]
        %v2073 = vld [vmem:[#allocation2 + $0x6a8] sm:$0xff]
        %v2074 = vld [vmem:[#allocation2 + $0x6b0] sm:$0xff]
        %v2075 = vld [vmem:[#allocation2 + $0x6b8] sm:$0xff]
        %v2076 = vld [vmem:[#allocation2 + $0x6c0] sm:$0xff]
        %v2077 = vld [vmem:[#allocation2 + $0x6c8] sm:$0xff]
        %v2078 = vld [vmem:[#allocation2 + $0x6d0] sm:$0xff]
        %v2079 = vld [vmem:[#allocation2 + $0x6d8] sm:$0xff]
        %v2080 = vld [vmem:[#allocation2 + $0x6e0] sm:$0xff]
        %v2081 = vld [vmem:[#allocation2 + $0x6e8] sm:$0xff]
        %v2082 = vld [vmem:[#allocation2 + $0x6f0] sm:$0xff]
        %v2083 = vld [vmem:[#allocation2 + $0x6f8] sm:$0xff]
        %v2084 = vld [vmem:[#allocation2 + $0x700] sm:$0xff]
        %v2085 = vld [vmem:[#allocation2 + $0x708] sm:$0xff]
        %v2086 = vld [vmem:[#allocation2 + $0x710] sm:$0xff]
        %v2087 = vld [vmem:[#allocation2 + $0x718] sm:$0xff]
        %v2088 = vld [vmem:[#allocation2 + $0x720] sm:$0xff]
        %v2089 = vld [vmem:[#allocation2 + $0x728] sm:$0xff]
        %v2090 = vld [vmem:[#allocation2 + $0x730] sm:$0xff]
        %v2091 = vld [vmem:[#allocation2 + $0x738] sm:$0xff]
        %v2092 = vld [vmem:[#allocation2 + $0x740] sm:$0xff]
        %v2093 = vld [vmem:[#allocation2 + $0x748] sm:$0xff]
        %v2094 = vld [vmem:[#allocation2 + $0x750] sm:$0xff]
        %v2095 = vld [vmem:[#allocation2 + $0x758] sm:$0xff]
        %v2096 = vld [vmem:[#allocation2 + $0x760] sm:$0xff]
        %v2097 = vld [vmem:[#allocation2 + $0x768] sm:$0xff]
        %v2098 = vld [vmem:[#allocation2 + $0x770] sm:$0xff]
        %v2099 = vld [vmem:[#allocation2 + $0x778] sm:$0xff]
        %v2100 = vld [vmem:[#allocation2 + $0x780] sm:$0xff]
        %v2101 = vld [vmem:[#allocation2 + $0x788] sm:$0xff]
        %v2102 = vld [vmem:[#allocation2 + $0x790] sm:$0xff]
        %v2103 = vld [vmem:[#allocation2 + $0x798] sm:$0xff]
        %v2104 = vld [vmem:[#allocation2 + $0x7a0] sm:$0xff]
        %v2105 = vld [vmem:[#allocation2 + $0x7a8] sm:$0xff]
        %v2106 = vld [vmem:[#allocation2 + $0x7b0] sm:$0xff]
        %v2107 = vld [vmem:[#allocation2 + $0x7b8] sm:$0xff]
        %v2108 = vld [vmem:[#allocation2 + $0x7c0] sm:$0xff]
        %v2109 = vld [vmem:[#allocation2 + $0x7c8] sm:$0xff]
        %v2110 = vld [vmem:[#allocation2 + $0x7d0] sm:$0xff]
        %v2111 = vld [vmem:[#allocation2 + $0x7d8] sm:$0xff]
        %v2112 = vld [vmem:[#allocation2 + $0x7e0] sm:$0xff]
        %v2113 = vld [vmem:[#allocation2 + $0x7e8] sm:$0xff]
        %v2114 = vld [vmem:[#allocation2 + $0x7f0] sm:$0xff]
        %v2115 = vld [vmem:[#allocation2 + $0x7f8] sm:$0xff]
        %v2116 = vlaneseq
        %v2117 = vshrl.u32 %v2116, 7
        %v2118 = vsub.s32 0, %v2117
        %v2119 = vrot.slane %v1856, %v2118
        %v2120 = vmul.f32 %v1860, %v2119
        %v2121 = vmul.f32 %v1861, %v2119
        %v2122 = vmul.f32 %v1862, %v2119
        %v2123 = vmul.f32 %v1863, %v2119
        %v2124 = vmul.f32 %v1864, %v2119
        %v2125 = vmul.f32 %v1865, %v2119
        %v2126 = vmul.f32 %v1866, %v2119
        %v2127 = vmul.f32 %v1867, %v2119
        %v2128 = vmul.f32 %v1868, %v2119
        %v2129 = vmul.f32 %v1869, %v2119
        %v2130 = vmul.f32 %v1870, %v2119
        %v2131 = vmul.f32 %v1871, %v2119
        %v2132 = vmul.f32 %v1872, %v2119
        %v2133 = vmul.f32 %v1873, %v2119
        %v2134 = vmul.f32 %v1874, %v2119
        %v2135 = vmul.f32 %v1875, %v2119
        %v2136 = vmul.f32 %v1876, %v2119
        %v2137 = vmul.f32 %v1877, %v2119
        %v2138 = vmul.f32 %v1878, %v2119
        %v2139 = vmul.f32 %v1879, %v2119
        %v2140 = vmul.f32 %v1880, %v2119
        %v2141 = vmul.f32 %v1881, %v2119
        %v2142 = vmul.f32 %v1882, %v2119
        %v2143 = vmul.f32 %v1883, %v2119
        %v2144 = vmul.f32 %v1884, %v2119
        %v2145 = vmul.f32 %v1885, %v2119
        %v2146 = vmul.f32 %v1886, %v2119
        %v2147 = vmul.f32 %v1887, %v2119
        %v2148 = vmul.f32 %v1888, %v2119
        %v2149 = vmul.f32 %v1889, %v2119
        %v2150 = vmul.f32 %v1890, %v2119
        %v2151 = vmul.f32 %v1891, %v2119
        %v2152 = vmul.f32 %v1892, %v2119
        %v2153 = vmul.f32 %v1893, %v2119
        %v2154 = vmul.f32 %v1894, %v2119
        %v2155 = vmul.f32 %v1895, %v2119
        %v2156 = vmul.f32 %v1896, %v2119
        %v2157 = vmul.f32 %v1897, %v2119
        %v2158 = vmul.f32 %v1898, %v2119
        %v2159 = vmul.f32 %v1899, %v2119
        %v2160 = vmul.f32 %v1900, %v2119
        %v2161 = vmul.f32 %v1901, %v2119
        %v2162 = vmul.f32 %v1902, %v2119
        %v2163 = vmul.f32 %v1903, %v2119
        %v2164 = vmul.f32 %v1904, %v2119
        %v2165 = vmul.f32 %v1905, %v2119
        %v2166 = vmul.f32 %v1906, %v2119
        %v2167 = vmul.f32 %v1907, %v2119
        %v2168 = vmul.f32 %v1908, %v2119
        %v2169 = vmul.f32 %v1909, %v2119
        %v2170 = vmul.f32 %v1910, %v2119
        %v2171 = vmul.f32 %v1911, %v2119
        %v2172 = vmul.f32 %v1912, %v2119
        %v2173 = vmul.f32 %v1913, %v2119
        %v2174 = vmul.f32 %v1914, %v2119
        %v2175 = vmul.f32 %v1915, %v2119
        %v2176 = vmul.f32 %v1916, %v2119
        %v2177 = vmul.f32 %v1917, %v2119
        %v2178 = vmul.f32 %v1918, %v2119
        %v2179 = vmul.f32 %v1919, %v2119
        %v2180 = vmul.f32 %v1920, %v2119
        %v2181 = vmul.f32 %v1921, %v2119
        %v2182 = vmul.f32 %v1922, %v2119
        %v2183 = vmul.f32 %v1923, %v2119
        %v2184 = vmul.f32 %v1924, %v2119
        %v2185 = vmul.f32 %v1925, %v2119
        %v2186 = vmul.f32 %v1926, %v2119
        %v2187 = vmul.f32 %v1927, %v2119
        %v2188 = vmul.f32 %v1928, %v2119
        %v2189 = vmul.f32 %v1929, %v2119
        %v2190 = vmul.f32 %v1930, %v2119
        %v2191 = vmul.f32 %v1931, %v2119
        %v2192 = vmul.f32 %v1932, %v2119
        %v2193 = vmul.f32 %v1933, %v2119
        %v2194 = vmul.f32 %v1934, %v2119
        %v2195 = vmul.f32 %v1935, %v2119
        %v2196 = vmul.f32 %v1936, %v2119
        %v2197 = vmul.f32 %v1937, %v2119
        %v2198 = vmul.f32 %v1938, %v2119
        %v2199 = vmul.f32 %v1939, %v2119
        %v2200 = vmul.f32 %v1940, %v2119
        %v2201 = vmul.f32 %v1941, %v2119
        %v2202 = vmul.f32 %v1942, %v2119
        %v2203 = vmul.f32 %v1943, %v2119
        %v2204 = vmul.f32 %v1944, %v2119
        %v2205 = vmul.f32 %v1945, %v2119
        %v2206 = vmul.f32 %v1946, %v2119
        %v2207 = vmul.f32 %v1947, %v2119
        %v2208 = vmul.f32 %v1948, %v2119
        %v2209 = vmul.f32 %v1949, %v2119
        %v2210 = vmul.f32 %v1950, %v2119
        %v2211 = vmul.f32 %v1951, %v2119
        %v2212 = vmul.f32 %v1952, %v2119
        %v2213 = vmul.f32 %v1953, %v2119
        %v2214 = vmul.f32 %v1954, %v2119
        %v2215 = vmul.f32 %v1955, %v2119
        %v2216 = vmul.f32 %v1956, %v2119
        %v2217 = vmul.f32 %v1957, %v2119
        %v2218 = vmul.f32 %v1958, %v2119
        %v2219 = vmul.f32 %v1959, %v2119
        %v2220 = vmul.f32 %v1960, %v2119
        %v2221 = vmul.f32 %v1961, %v2119
        %v2222 = vmul.f32 %v1962, %v2119
        %v2223 = vmul.f32 %v1963, %v2119
        %v2224 = vmul.f32 %v1964, %v2119
        %v2225 = vmul.f32 %v1965, %v2119
        %v2226 = vmul.f32 %v1966, %v2119
        %v2227 = vmul.f32 %v1967, %v2119
        %v2228 = vmul.f32 %v1968, %v2119
        %v2229 = vmul.f32 %v1969, %v2119
        %v2230 = vmul.f32 %v1970, %v2119
        %v2231 = vmul.f32 %v1971, %v2119
        %v2232 = vmul.f32 %v1972, %v2119
        %v2233 = vmul.f32 %v1973, %v2119
        %v2234 = vmul.f32 %v1974, %v2119
        %v2235 = vmul.f32 %v1975, %v2119
        %v2236 = vmul.f32 %v1976, %v2119
        %v2237 = vmul.f32 %v1977, %v2119
        %v2238 = vmul.f32 %v1978, %v2119
        %v2239 = vmul.f32 %v1979, %v2119
        %v2240 = vmul.f32 %v1980, %v2119
        %v2241 = vmul.f32 %v1981, %v2119
        %v2242 = vmul.f32 %v1982, %v2119
        %v2243 = vmul.f32 %v1983, %v2119
        %v2244 = vmul.f32 %v1984, %v2119
        %v2245 = vmul.f32 %v1985, %v2119
        %v2246 = vmul.f32 %v1986, %v2119
        %v2247 = vmul.f32 %v1987, %v2119
        %v2248 = vmul.f32 %v1988, %v2119
        %v2249 = vmul.f32 %v1989, %v2119
        %v2250 = vmul.f32 %v1990, %v2119
        %v2251 = vmul.f32 %v1991, %v2119
        %v2252 = vmul.f32 %v1992, %v2119
        %v2253 = vmul.f32 %v1993, %v2119
        %v2254 = vmul.f32 %v1994, %v2119
        %v2255 = vmul.f32 %v1995, %v2119
        %v2256 = vmul.f32 %v1996, %v2119
        %v2257 = vmul.f32 %v1997, %v2119
        %v2258 = vmul.f32 %v1998, %v2119
        %v2259 = vmul.f32 %v1999, %v2119
        %v2260 = vmul.f32 %v2000, %v2119
        %v2261 = vmul.f32 %v2001, %v2119
        %v2262 = vmul.f32 %v2002, %v2119
        %v2263 = vmul.f32 %v2003, %v2119
        %v2264 = vmul.f32 %v2004, %v2119
        %v2265 = vmul.f32 %v2005, %v2119
        %v2266 = vmul.f32 %v2006, %v2119
        %v2267 = vmul.f32 %v2007, %v2119
        %v2268 = vmul.f32 %v2008, %v2119
        %v2269 = vmul.f32 %v2009, %v2119
        %v2270 = vmul.f32 %v2010, %v2119
        %v2271 = vmul.f32 %v2011, %v2119
        %v2272 = vmul.f32 %v2012, %v2119
        %v2273 = vmul.f32 %v2013, %v2119
        %v2274 = vmul.f32 %v2014, %v2119
        %v2275 = vmul.f32 %v2015, %v2119
        %v2276 = vmul.f32 %v2016, %v2119
        %v2277 = vmul.f32 %v2017, %v2119
        %v2278 = vmul.f32 %v2018, %v2119
        %v2279 = vmul.f32 %v2019, %v2119
        %v2280 = vmul.f32 %v2020, %v2119
        %v2281 = vmul.f32 %v2021, %v2119
        %v2282 = vmul.f32 %v2022, %v2119
        %v2283 = vmul.f32 %v2023, %v2119
        %v2284 = vmul.f32 %v2024, %v2119
        %v2285 = vmul.f32 %v2025, %v2119
        %v2286 = vmul.f32 %v2026, %v2119
        %v2287 = vmul.f32 %v2027, %v2119
        %v2288 = vmul.f32 %v2028, %v2119
        %v2289 = vmul.f32 %v2029, %v2119
        %v2290 = vmul.f32 %v2030, %v2119
        %v2291 = vmul.f32 %v2031, %v2119
        %v2292 = vmul.f32 %v2032, %v2119
        %v2293 = vmul.f32 %v2033, %v2119
        %v2294 = vmul.f32 %v2034, %v2119
        %v2295 = vmul.f32 %v2035, %v2119
        %v2296 = vmul.f32 %v2036, %v2119
        %v2297 = vmul.f32 %v2037, %v2119
        %v2298 = vmul.f32 %v2038, %v2119
        %v2299 = vmul.f32 %v2039, %v2119
        %v2300 = vmul.f32 %v2040, %v2119
        %v2301 = vmul.f32 %v2041, %v2119
        %v2302 = vmul.f32 %v2042, %v2119
        %v2303 = vmul.f32 %v2043, %v2119
        %v2304 = vmul.f32 %v2044, %v2119
        %v2305 = vmul.f32 %v2045, %v2119
        %v2306 = vmul.f32 %v2046, %v2119
        %v2307 = vmul.f32 %v2047, %v2119
        %v2308 = vmul.f32 %v2048, %v2119
        %v2309 = vmul.f32 %v2049, %v2119
        %v2310 = vmul.f32 %v2050, %v2119
        %v2311 = vmul.f32 %v2051, %v2119
        %v2312 = vmul.f32 %v2052, %v2119
        %v2313 = vmul.f32 %v2053, %v2119
        %v2314 = vmul.f32 %v2054, %v2119
        %v2315 = vmul.f32 %v2055, %v2119
        %v2316 = vmul.f32 %v2056, %v2119
        %v2317 = vmul.f32 %v2057, %v2119
        %v2318 = vmul.f32 %v2058, %v2119
        %v2319 = vmul.f32 %v2059, %v2119
        %v2320 = vmul.f32 %v2060, %v2119
        %v2321 = vmul.f32 %v2061, %v2119
        %v2322 = vmul.f32 %v2062, %v2119
        %v2323 = vmul.f32 %v2063, %v2119
        %v2324 = vmul.f32 %v2064, %v2119
        %v2325 = vmul.f32 %v2065, %v2119
        %v2326 = vmul.f32 %v2066, %v2119
        %v2327 = vmul.f32 %v2067, %v2119
        %v2328 = vmul.f32 %v2068, %v2119
        %v2329 = vmul.f32 %v2069, %v2119
        %v2330 = vmul.f32 %v2070, %v2119
        %v2331 = vmul.f32 %v2071, %v2119
        %v2332 = vmul.f32 %v2072, %v2119
        %v2333 = vmul.f32 %v2073, %v2119
        %v2334 = vmul.f32 %v2074, %v2119
        %v2335 = vmul.f32 %v2075, %v2119
        %v2336 = vmul.f32 %v2076, %v2119
        %v2337 = vmul.f32 %v2077, %v2119
        %v2338 = vmul.f32 %v2078, %v2119
        %v2339 = vmul.f32 %v2079, %v2119
        %v2340 = vmul.f32 %v2080, %v2119
        %v2341 = vmul.f32 %v2081, %v2119
        %v2342 = vmul.f32 %v2082, %v2119
        %v2343 = vmul.f32 %v2083, %v2119
        %v2344 = vmul.f32 %v2084, %v2119
        %v2345 = vmul.f32 %v2085, %v2119
        %v2346 = vmul.f32 %v2086, %v2119
        %v2347 = vmul.f32 %v2087, %v2119
        %v2348 = vmul.f32 %v2088, %v2119
        %v2349 = vmul.f32 %v2089, %v2119
        %v2350 = vmul.f32 %v2090, %v2119
        %v2351 = vmul.f32 %v2091, %v2119
        %v2352 = vmul.f32 %v2092, %v2119
        %v2353 = vmul.f32 %v2093, %v2119
        %v2354 = vmul.f32 %v2094, %v2119
        %v2355 = vmul.f32 %v2095, %v2119
        %v2356 = vmul.f32 %v2096, %v2119
        %v2357 = vmul.f32 %v2097, %v2119
        %v2358 = vmul.f32 %v2098, %v2119
        %v2359 = vmul.f32 %v2099, %v2119
        %v2360 = vmul.f32 %v2100, %v2119
        %v2361 = vmul.f32 %v2101, %v2119
        %v2362 = vmul.f32 %v2102, %v2119
        %v2363 = vmul.f32 %v2103, %v2119
        %v2364 = vmul.f32 %v2104, %v2119
        %v2365 = vmul.f32 %v2105, %v2119
        %v2366 = vmul.f32 %v2106, %v2119
        %v2367 = vmul.f32 %v2107, %v2119
        %v2368 = vmul.f32 %v2108, %v2119
        %v2369 = vmul.f32 %v2109, %v2119
        %v2370 = vmul.f32 %v2110, %v2119
        %v2371 = vmul.f32 %v2111, %v2119
        %v2372 = vmul.f32 %v2112, %v2119
        %v2373 = vmul.f32 %v2113, %v2119
        %v2374 = vmul.f32 %v2114, %v2119
        %v2375 = vmul.f32 %v2115, %v2119
        %v2377 = vlaneseq
        %v2378 = vshrl.u32 %v2377, 7
        %v2379 = vsub.s32 0, %v2378
        %v2380 = vrot.slane %v1859, %v2379
        %v2382 = vadd.f32 %v2120, %v2380
        %v2383 = vadd.f32 %v2121, %v2380
        %v2384 = vadd.f32 %v2122, %v2380
        %v2385 = vadd.f32 %v2123, %v2380
        %v2386 = vadd.f32 %v2124, %v2380
        %v2387 = vadd.f32 %v2125, %v2380
        %v2388 = vadd.f32 %v2126, %v2380
        %v2389 = vadd.f32 %v2127, %v2380
        %v2390 = vadd.f32 %v2128, %v2380
        %v2391 = vadd.f32 %v2129, %v2380
        %v2392 = vadd.f32 %v2130, %v2380
        %v2393 = vadd.f32 %v2131, %v2380
        %v2394 = vadd.f32 %v2132, %v2380
        %v2395 = vadd.f32 %v2133, %v2380
        %v2396 = vadd.f32 %v2134, %v2380
        %v2397 = vadd.f32 %v2135, %v2380
        %v2398 = vadd.f32 %v2136, %v2380
        %v2399 = vadd.f32 %v2137, %v2380
        %v2400 = vadd.f32 %v2138, %v2380
        %v2401 = vadd.f32 %v2139, %v2380
        %v2402 = vadd.f32 %v2140, %v2380
        %v2403 = vadd.f32 %v2141, %v2380
        %v2404 = vadd.f32 %v2142, %v2380
        %v2405 = vadd.f32 %v2143, %v2380
        %v2406 = vadd.f32 %v2144, %v2380
        %v2407 = vadd.f32 %v2145, %v2380
        %v2408 = vadd.f32 %v2146, %v2380
        %v2409 = vadd.f32 %v2147, %v2380
        %v2410 = vadd.f32 %v2148, %v2380
        %v2411 = vadd.f32 %v2149, %v2380
        %v2412 = vadd.f32 %v2150, %v2380
        %v2413 = vadd.f32 %v2151, %v2380
        %v2414 = vadd.f32 %v2152, %v2380
        %v2415 = vadd.f32 %v2153, %v2380
        %v2416 = vadd.f32 %v2154, %v2380
        %v2417 = vadd.f32 %v2155, %v2380
        %v2418 = vadd.f32 %v2156, %v2380
        %v2419 = vadd.f32 %v2157, %v2380
        %v2420 = vadd.f32 %v2158, %v2380
        %v2421 = vadd.f32 %v2159, %v2380
        %v2422 = vadd.f32 %v2160, %v2380
        %v2423 = vadd.f32 %v2161, %v2380
        %v2424 = vadd.f32 %v2162, %v2380
        %v2425 = vadd.f32 %v2163, %v2380
        %v2426 = vadd.f32 %v2164, %v2380
        %v2427 = vadd.f32 %v2165, %v2380
        %v2428 = vadd.f32 %v2166, %v2380
        %v2429 = vadd.f32 %v2167, %v2380
        %v2430 = vadd.f32 %v2168, %v2380
        %v2431 = vadd.f32 %v2169, %v2380
        %v2432 = vadd.f32 %v2170, %v2380
        %v2433 = vadd.f32 %v2171, %v2380
        %v2434 = vadd.f32 %v2172, %v2380
        %v2435 = vadd.f32 %v2173, %v2380
        %v2436 = vadd.f32 %v2174, %v2380
        %v2437 = vadd.f32 %v2175, %v2380
        %v2438 = vadd.f32 %v2176, %v2380
        %v2439 = vadd.f32 %v2177, %v2380
        %v2440 = vadd.f32 %v2178, %v2380
        %v2441 = vadd.f32 %v2179, %v2380
        %v2442 = vadd.f32 %v2180, %v2380
        %v2443 = vadd.f32 %v2181, %v2380
        %v2444 = vadd.f32 %v2182, %v2380
        %v2445 = vadd.f32 %v2183, %v2380
        %v2446 = vadd.f32 %v2184, %v2380
        %v2447 = vadd.f32 %v2185, %v2380
        %v2448 = vadd.f32 %v2186, %v2380
        %v2449 = vadd.f32 %v2187, %v2380
        %v2450 = vadd.f32 %v2188, %v2380
        %v2451 = vadd.f32 %v2189, %v2380
        %v2452 = vadd.f32 %v2190, %v2380
        %v2453 = vadd.f32 %v2191, %v2380
        %v2454 = vadd.f32 %v2192, %v2380
        %v2455 = vadd.f32 %v2193, %v2380
        %v2456 = vadd.f32 %v2194, %v2380
        %v2457 = vadd.f32 %v2195, %v2380
        %v2458 = vadd.f32 %v2196, %v2380
        %v2459 = vadd.f32 %v2197, %v2380
        %v2460 = vadd.f32 %v2198, %v2380
        %v2461 = vadd.f32 %v2199, %v2380
        %v2462 = vadd.f32 %v2200, %v2380
        %v2463 = vadd.f32 %v2201, %v2380
        %v2464 = vadd.f32 %v2202, %v2380
        %v2465 = vadd.f32 %v2203, %v2380
        %v2466 = vadd.f32 %v2204, %v2380
        %v2467 = vadd.f32 %v2205, %v2380
        %v2468 = vadd.f32 %v2206, %v2380
        %v2469 = vadd.f32 %v2207, %v2380
        %v2470 = vadd.f32 %v2208, %v2380
        %v2471 = vadd.f32 %v2209, %v2380
        %v2472 = vadd.f32 %v2210, %v2380
        %v2473 = vadd.f32 %v2211, %v2380
        %v2474 = vadd.f32 %v2212, %v2380
        %v2475 = vadd.f32 %v2213, %v2380
        %v2476 = vadd.f32 %v2214, %v2380
        %v2477 = vadd.f32 %v2215, %v2380
        %v2478 = vadd.f32 %v2216, %v2380
        %v2479 = vadd.f32 %v2217, %v2380
        %v2480 = vadd.f32 %v2218, %v2380
        %v2481 = vadd.f32 %v2219, %v2380
        %v2482 = vadd.f32 %v2220, %v2380
        %v2483 = vadd.f32 %v2221, %v2380
        %v2484 = vadd.f32 %v2222, %v2380
        %v2485 = vadd.f32 %v2223, %v2380
        %v2486 = vadd.f32 %v2224, %v2380
        %v2487 = vadd.f32 %v2225, %v2380
        %v2488 = vadd.f32 %v2226, %v2380
        %v2489 = vadd.f32 %v2227, %v2380
        %v2490 = vadd.f32 %v2228, %v2380
        %v2491 = vadd.f32 %v2229, %v2380
        %v2492 = vadd.f32 %v2230, %v2380
        %v2493 = vadd.f32 %v2231, %v2380
        %v2494 = vadd.f32 %v2232, %v2380
        %v2495 = vadd.f32 %v2233, %v2380
        %v2496 = vadd.f32 %v2234, %v2380
        %v2497 = vadd.f32 %v2235, %v2380
        %v2498 = vadd.f32 %v2236, %v2380
        %v2499 = vadd.f32 %v2237, %v2380
        %v2500 = vadd.f32 %v2238, %v2380
        %v2501 = vadd.f32 %v2239, %v2380
        %v2502 = vadd.f32 %v2240, %v2380
        %v2503 = vadd.f32 %v2241, %v2380
        %v2504 = vadd.f32 %v2242, %v2380
        %v2505 = vadd.f32 %v2243, %v2380
        %v2506 = vadd.f32 %v2244, %v2380
        %v2507 = vadd.f32 %v2245, %v2380
        %v2508 = vadd.f32 %v2246, %v2380
        %v2509 = vadd.f32 %v2247, %v2380
        %v2510 = vadd.f32 %v2248, %v2380
        %v2511 = vadd.f32 %v2249, %v2380
        %v2512 = vadd.f32 %v2250, %v2380
        %v2513 = vadd.f32 %v2251, %v2380
        %v2514 = vadd.f32 %v2252, %v2380
        %v2515 = vadd.f32 %v2253, %v2380
        %v2516 = vadd.f32 %v2254, %v2380
        %v2517 = vadd.f32 %v2255, %v2380
        %v2518 = vadd.f32 %v2256, %v2380
        %v2519 = vadd.f32 %v2257, %v2380
        %v2520 = vadd.f32 %v2258, %v2380
        %v2521 = vadd.f32 %v2259, %v2380
        %v2522 = vadd.f32 %v2260, %v2380
        %v2523 = vadd.f32 %v2261, %v2380
        %v2524 = vadd.f32 %v2262, %v2380
        %v2525 = vadd.f32 %v2263, %v2380
        %v2526 = vadd.f32 %v2264, %v2380
        %v2527 = vadd.f32 %v2265, %v2380
        %v2528 = vadd.f32 %v2266, %v2380
        %v2529 = vadd.f32 %v2267, %v2380
        %v2530 = vadd.f32 %v2268, %v2380
        %v2531 = vadd.f32 %v2269, %v2380
        %v2532 = vadd.f32 %v2270, %v2380
        %v2533 = vadd.f32 %v2271, %v2380
        %v2534 = vadd.f32 %v2272, %v2380
        %v2535 = vadd.f32 %v2273, %v2380
        %v2536 = vadd.f32 %v2274, %v2380
        %v2537 = vadd.f32 %v2275, %v2380
        %v2538 = vadd.f32 %v2276, %v2380
        %v2539 = vadd.f32 %v2277, %v2380
        %v2540 = vadd.f32 %v2278, %v2380
        %v2541 = vadd.f32 %v2279, %v2380
        %v2542 = vadd.f32 %v2280, %v2380
        %v2543 = vadd.f32 %v2281, %v2380
        %v2544 = vadd.f32 %v2282, %v2380
        %v2545 = vadd.f32 %v2283, %v2380
        %v2546 = vadd.f32 %v2284, %v2380
        %v2547 = vadd.f32 %v2285, %v2380
        %v2548 = vadd.f32 %v2286, %v2380
        %v2549 = vadd.f32 %v2287, %v2380
        %v2550 = vadd.f32 %v2288, %v2380
        %v2551 = vadd.f32 %v2289, %v2380
        %v2552 = vadd.f32 %v2290, %v2380
        %v2553 = vadd.f32 %v2291, %v2380
        %v2554 = vadd.f32 %v2292, %v2380
        %v2555 = vadd.f32 %v2293, %v2380
        %v2556 = vadd.f32 %v2294, %v2380
        %v2557 = vadd.f32 %v2295, %v2380
        %v2558 = vadd.f32 %v2296, %v2380
        %v2559 = vadd.f32 %v2297, %v2380
        %v2560 = vadd.f32 %v2298, %v2380
        %v2561 = vadd.f32 %v2299, %v2380
        %v2562 = vadd.f32 %v2300, %v2380
        %v2563 = vadd.f32 %v2301, %v2380
        %v2564 = vadd.f32 %v2302, %v2380
        %v2565 = vadd.f32 %v2303, %v2380
        %v2566 = vadd.f32 %v2304, %v2380
        %v2567 = vadd.f32 %v2305, %v2380
        %v2568 = vadd.f32 %v2306, %v2380
        %v2569 = vadd.f32 %v2307, %v2380
        %v2570 = vadd.f32 %v2308, %v2380
        %v2571 = vadd.f32 %v2309, %v2380
        %v2572 = vadd.f32 %v2310, %v2380
        %v2573 = vadd.f32 %v2311, %v2380
        %v2574 = vadd.f32 %v2312, %v2380
        %v2575 = vadd.f32 %v2313, %v2380
        %v2576 = vadd.f32 %v2314, %v2380
        %v2577 = vadd.f32 %v2315, %v2380
        %v2578 = vadd.f32 %v2316, %v2380
        %v2579 = vadd.f32 %v2317, %v2380
        %v2580 = vadd.f32 %v2318, %v2380
        %v2581 = vadd.f32 %v2319, %v2380
        %v2582 = vadd.f32 %v2320, %v2380
        %v2583 = vadd.f32 %v2321, %v2380
        %v2584 = vadd.f32 %v2322, %v2380
        %v2585 = vadd.f32 %v2323, %v2380
        %v2586 = vadd.f32 %v2324, %v2380
        %v2587 = vadd.f32 %v2325, %v2380
        %v2588 = vadd.f32 %v2326, %v2380
        %v2589 = vadd.f32 %v2327, %v2380
        %v2590 = vadd.f32 %v2328, %v2380
        %v2591 = vadd.f32 %v2329, %v2380
        %v2592 = vadd.f32 %v2330, %v2380
        %v2593 = vadd.f32 %v2331, %v2380
        %v2594 = vadd.f32 %v2332, %v2380
        %v2595 = vadd.f32 %v2333, %v2380
        %v2596 = vadd.f32 %v2334, %v2380
        %v2597 = vadd.f32 %v2335, %v2380
        %v2598 = vadd.f32 %v2336, %v2380
        %v2599 = vadd.f32 %v2337, %v2380
        %v2600 = vadd.f32 %v2338, %v2380
        %v2601 = vadd.f32 %v2339, %v2380
        %v2602 = vadd.f32 %v2340, %v2380
        %v2603 = vadd.f32 %v2341, %v2380
        %v2604 = vadd.f32 %v2342, %v2380
        %v2605 = vadd.f32 %v2343, %v2380
        %v2606 = vadd.f32 %v2344, %v2380
        %v2607 = vadd.f32 %v2345, %v2380
        %v2608 = vadd.f32 %v2346, %v2380
        %v2609 = vadd.f32 %v2347, %v2380
        %v2610 = vadd.f32 %v2348, %v2380
        %v2611 = vadd.f32 %v2349, %v2380
        %v2612 = vadd.f32 %v2350, %v2380
        %v2613 = vadd.f32 %v2351, %v2380
        %v2614 = vadd.f32 %v2352, %v2380
        %v2615 = vadd.f32 %v2353, %v2380
        %v2616 = vadd.f32 %v2354, %v2380
        %v2617 = vadd.f32 %v2355, %v2380
        %v2618 = vadd.f32 %v2356, %v2380
        %v2619 = vadd.f32 %v2357, %v2380
        %v2620 = vadd.f32 %v2358, %v2380
        %v2621 = vadd.f32 %v2359, %v2380
        %v2622 = vadd.f32 %v2360, %v2380
        %v2623 = vadd.f32 %v2361, %v2380
        %v2624 = vadd.f32 %v2362, %v2380
        %v2625 = vadd.f32 %v2363, %v2380
        %v2626 = vadd.f32 %v2364, %v2380
        %v2627 = vadd.f32 %v2365, %v2380
        %v2628 = vadd.f32 %v2366, %v2380
        %v2629 = vadd.f32 %v2367, %v2380
        %v2630 = vadd.f32 %v2368, %v2380
        %v2631 = vadd.f32 %v2369, %v2380
        %v2632 = vadd.f32 %v2370, %v2380
        %v2633 = vadd.f32 %v2371, %v2380
        %v2634 = vadd.f32 %v2372, %v2380
        %v2635 = vadd.f32 %v2373, %v2380
        %v2636 = vadd.f32 %v2374, %v2380
        %v2637 = vadd.f32 %v2375, %v2380
        %vm2638 = vcmp.gt.f32.partialorder %v2382, 0.0
        %vm2639 = vcmp.gt.f32.partialorder %v2383, 0.0
        %vm2640 = vcmp.gt.f32.partialorder %v2384, 0.0
        %vm2641 = vcmp.gt.f32.partialorder %v2385, 0.0
        %vm2642 = vcmp.gt.f32.partialorder %v2386, 0.0
        %vm2643 = vcmp.gt.f32.partialorder %v2387, 0.0
        %vm2644 = vcmp.gt.f32.partialorder %v2388, 0.0
        %vm2645 = vcmp.gt.f32.partialorder %v2389, 0.0
        %vm2646 = vcmp.gt.f32.partialorder %v2390, 0.0
        %vm2647 = vcmp.gt.f32.partialorder %v2391, 0.0
        %vm2648 = vcmp.gt.f32.partialorder %v2392, 0.0
        %vm2649 = vcmp.gt.f32.partialorder %v2393, 0.0
        %vm2650 = vcmp.gt.f32.partialorder %v2394, 0.0
        %vm2651 = vcmp.gt.f32.partialorder %v2395, 0.0
        %vm2652 = vcmp.gt.f32.partialorder %v2396, 0.0
        %vm2653 = vcmp.gt.f32.partialorder %v2397, 0.0
        %vm2654 = vcmp.gt.f32.partialorder %v2398, 0.0
        %vm2655 = vcmp.gt.f32.partialorder %v2399, 0.0
        %vm2656 = vcmp.gt.f32.partialorder %v2400, 0.0
        %vm2657 = vcmp.gt.f32.partialorder %v2401, 0.0
        %vm2658 = vcmp.gt.f32.partialorder %v2402, 0.0
        %vm2659 = vcmp.gt.f32.partialorder %v2403, 0.0
        %vm2660 = vcmp.gt.f32.partialorder %v2404, 0.0
        %vm2661 = vcmp.gt.f32.partialorder %v2405, 0.0
        %vm2662 = vcmp.gt.f32.partialorder %v2406, 0.0
        %vm2663 = vcmp.gt.f32.partialorder %v2407, 0.0
        %vm2664 = vcmp.gt.f32.partialorder %v2408, 0.0
        %vm2665 = vcmp.gt.f32.partialorder %v2409, 0.0
        %vm2666 = vcmp.gt.f32.partialorder %v2410, 0.0
        %vm2667 = vcmp.gt.f32.partialorder %v2411, 0.0
        %vm2668 = vcmp.gt.f32.partialorder %v2412, 0.0
        %vm2669 = vcmp.gt.f32.partialorder %v2413, 0.0
        %vm2670 = vcmp.gt.f32.partialorder %v2414, 0.0
        %vm2671 = vcmp.gt.f32.partialorder %v2415, 0.0
        %vm2672 = vcmp.gt.f32.partialorder %v2416, 0.0
        %vm2673 = vcmp.gt.f32.partialorder %v2417, 0.0
        %vm2674 = vcmp.gt.f32.partialorder %v2418, 0.0
        %vm2675 = vcmp.gt.f32.partialorder %v2419, 0.0
        %vm2676 = vcmp.gt.f32.partialorder %v2420, 0.0
        %vm2677 = vcmp.gt.f32.partialorder %v2421, 0.0
        %vm2678 = vcmp.gt.f32.partialorder %v2422, 0.0
        %vm2679 = vcmp.gt.f32.partialorder %v2423, 0.0
        %vm2680 = vcmp.gt.f32.partialorder %v2424, 0.0
        %vm2681 = vcmp.gt.f32.partialorder %v2425, 0.0
        %vm2682 = vcmp.gt.f32.partialorder %v2426, 0.0
        %vm2683 = vcmp.gt.f32.partialorder %v2427, 0.0
        %vm2684 = vcmp.gt.f32.partialorder %v2428, 0.0
        %vm2685 = vcmp.gt.f32.partialorder %v2429, 0.0
        %vm2686 = vcmp.gt.f32.partialorder %v2430, 0.0
        %vm2687 = vcmp.gt.f32.partialorder %v2431, 0.0
        %vm2688 = vcmp.gt.f32.partialorder %v2432, 0.0
        %vm2689 = vcmp.gt.f32.partialorder %v2433, 0.0
        %vm2690 = vcmp.gt.f32.partialorder %v2434, 0.0
        %vm2691 = vcmp.gt.f32.partialorder %v2435, 0.0
        %vm2692 = vcmp.gt.f32.partialorder %v2436, 0.0
        %vm2693 = vcmp.gt.f32.partialorder %v2437, 0.0
        %vm2694 = vcmp.gt.f32.partialorder %v2438, 0.0
        %vm2695 = vcmp.gt.f32.partialorder %v2439, 0.0
        %vm2696 = vcmp.gt.f32.partialorder %v2440, 0.0
        %vm2697 = vcmp.gt.f32.partialorder %v2441, 0.0
        %vm2698 = vcmp.gt.f32.partialorder %v2442, 0.0
        %vm2699 = vcmp.gt.f32.partialorder %v2443, 0.0
        %vm2700 = vcmp.gt.f32.partialorder %v2444, 0.0
        %vm2701 = vcmp.gt.f32.partialorder %v2445, 0.0
        %vm2702 = vcmp.gt.f32.partialorder %v2446, 0.0
        %vm2703 = vcmp.gt.f32.partialorder %v2447, 0.0
        %vm2704 = vcmp.gt.f32.partialorder %v2448, 0.0
        %vm2705 = vcmp.gt.f32.partialorder %v2449, 0.0
        %vm2706 = vcmp.gt.f32.partialorder %v2450, 0.0
        %vm2707 = vcmp.gt.f32.partialorder %v2451, 0.0
        %vm2708 = vcmp.gt.f32.partialorder %v2452, 0.0
        %vm2709 = vcmp.gt.f32.partialorder %v2453, 0.0
        %vm2710 = vcmp.gt.f32.partialorder %v2454, 0.0
        %vm2711 = vcmp.gt.f32.partialorder %v2455, 0.0
        %vm2712 = vcmp.gt.f32.partialorder %v2456, 0.0
        %vm2713 = vcmp.gt.f32.partialorder %v2457, 0.0
        %vm2714 = vcmp.gt.f32.partialorder %v2458, 0.0
        %vm2715 = vcmp.gt.f32.partialorder %v2459, 0.0
        %vm2716 = vcmp.gt.f32.partialorder %v2460, 0.0
        %vm2717 = vcmp.gt.f32.partialorder %v2461, 0.0
        %vm2718 = vcmp.gt.f32.partialorder %v2462, 0.0
        %vm2719 = vcmp.gt.f32.partialorder %v2463, 0.0
        %vm2720 = vcmp.gt.f32.partialorder %v2464, 0.0
        %vm2721 = vcmp.gt.f32.partialorder %v2465, 0.0
        %vm2722 = vcmp.gt.f32.partialorder %v2466, 0.0
        %vm2723 = vcmp.gt.f32.partialorder %v2467, 0.0
        %vm2724 = vcmp.gt.f32.partialorder %v2468, 0.0
        %vm2725 = vcmp.gt.f32.partialorder %v2469, 0.0
        %vm2726 = vcmp.gt.f32.partialorder %v2470, 0.0
        %vm2727 = vcmp.gt.f32.partialorder %v2471, 0.0
        %vm2728 = vcmp.gt.f32.partialorder %v2472, 0.0
        %vm2729 = vcmp.gt.f32.partialorder %v2473, 0.0
        %vm2730 = vcmp.gt.f32.partialorder %v2474, 0.0
        %vm2731 = vcmp.gt.f32.partialorder %v2475, 0.0
        %vm2732 = vcmp.gt.f32.partialorder %v2476, 0.0
        %vm2733 = vcmp.gt.f32.partialorder %v2477, 0.0
        %vm2734 = vcmp.gt.f32.partialorder %v2478, 0.0
        %vm2735 = vcmp.gt.f32.partialorder %v2479, 0.0
        %vm2736 = vcmp.gt.f32.partialorder %v2480, 0.0
        %vm2737 = vcmp.gt.f32.partialorder %v2481, 0.0
        %vm2738 = vcmp.gt.f32.partialorder %v2482, 0.0
        %vm2739 = vcmp.gt.f32.partialorder %v2483, 0.0
        %vm2740 = vcmp.gt.f32.partialorder %v2484, 0.0
        %vm2741 = vcmp.gt.f32.partialorder %v2485, 0.0
        %vm2742 = vcmp.gt.f32.partialorder %v2486, 0.0
        %vm2743 = vcmp.gt.f32.partialorder %v2487, 0.0
        %vm2744 = vcmp.gt.f32.partialorder %v2488, 0.0
        %vm2745 = vcmp.gt.f32.partialorder %v2489, 0.0
        %vm2746 = vcmp.gt.f32.partialorder %v2490, 0.0
        %vm2747 = vcmp.gt.f32.partialorder %v2491, 0.0
        %vm2748 = vcmp.gt.f32.partialorder %v2492, 0.0
        %vm2749 = vcmp.gt.f32.partialorder %v2493, 0.0
        %vm2750 = vcmp.gt.f32.partialorder %v2494, 0.0
        %vm2751 = vcmp.gt.f32.partialorder %v2495, 0.0
        %vm2752 = vcmp.gt.f32.partialorder %v2496, 0.0
        %vm2753 = vcmp.gt.f32.partialorder %v2497, 0.0
        %vm2754 = vcmp.gt.f32.partialorder %v2498, 0.0
        %vm2755 = vcmp.gt.f32.partialorder %v2499, 0.0
        %vm2756 = vcmp.gt.f32.partialorder %v2500, 0.0
        %vm2757 = vcmp.gt.f32.partialorder %v2501, 0.0
        %vm2758 = vcmp.gt.f32.partialorder %v2502, 0.0
        %vm2759 = vcmp.gt.f32.partialorder %v2503, 0.0
        %vm2760 = vcmp.gt.f32.partialorder %v2504, 0.0
        %vm2761 = vcmp.gt.f32.partialorder %v2505, 0.0
        %vm2762 = vcmp.gt.f32.partialorder %v2506, 0.0
        %vm2763 = vcmp.gt.f32.partialorder %v2507, 0.0
        %vm2764 = vcmp.gt.f32.partialorder %v2508, 0.0
        %vm2765 = vcmp.gt.f32.partialorder %v2509, 0.0
        %vm2766 = vcmp.gt.f32.partialorder %v2510, 0.0
        %vm2767 = vcmp.gt.f32.partialorder %v2511, 0.0
        %vm2768 = vcmp.gt.f32.partialorder %v2512, 0.0
        %vm2769 = vcmp.gt.f32.partialorder %v2513, 0.0
        %vm2770 = vcmp.gt.f32.partialorder %v2514, 0.0
        %vm2771 = vcmp.gt.f32.partialorder %v2515, 0.0
        %vm2772 = vcmp.gt.f32.partialorder %v2516, 0.0
        %vm2773 = vcmp.gt.f32.partialorder %v2517, 0.0
        %vm2774 = vcmp.gt.f32.partialorder %v2518, 0.0
        %vm2775 = vcmp.gt.f32.partialorder %v2519, 0.0
        %vm2776 = vcmp.gt.f32.partialorder %v2520, 0.0
        %vm2777 = vcmp.gt.f32.partialorder %v2521, 0.0
        %vm2778 = vcmp.gt.f32.partialorder %v2522, 0.0
        %vm2779 = vcmp.gt.f32.partialorder %v2523, 0.0
        %vm2780 = vcmp.gt.f32.partialorder %v2524, 0.0
        %vm2781 = vcmp.gt.f32.partialorder %v2525, 0.0
        %vm2782 = vcmp.gt.f32.partialorder %v2526, 0.0
        %vm2783 = vcmp.gt.f32.partialorder %v2527, 0.0
        %vm2784 = vcmp.gt.f32.partialorder %v2528, 0.0
        %vm2785 = vcmp.gt.f32.partialorder %v2529, 0.0
        %vm2786 = vcmp.gt.f32.partialorder %v2530, 0.0
        %vm2787 = vcmp.gt.f32.partialorder %v2531, 0.0
        %vm2788 = vcmp.gt.f32.partialorder %v2532, 0.0
        %vm2789 = vcmp.gt.f32.partialorder %v2533, 0.0
        %vm2790 = vcmp.gt.f32.partialorder %v2534, 0.0
        %vm2791 = vcmp.gt.f32.partialorder %v2535, 0.0
        %vm2792 = vcmp.gt.f32.partialorder %v2536, 0.0
        %vm2793 = vcmp.gt.f32.partialorder %v2537, 0.0
        %vm2794 = vcmp.gt.f32.partialorder %v2538, 0.0
        %vm2795 = vcmp.gt.f32.partialorder %v2539, 0.0
        %vm2796 = vcmp.gt.f32.partialorder %v2540, 0.0
        %vm2797 = vcmp.gt.f32.partialorder %v2541, 0.0
        %vm2798 = vcmp.gt.f32.partialorder %v2542, 0.0
        %vm2799 = vcmp.gt.f32.partialorder %v2543, 0.0
        %vm2800 = vcmp.gt.f32.partialorder %v2544, 0.0
        %vm2801 = vcmp.gt.f32.partialorder %v2545, 0.0
        %vm2802 = vcmp.gt.f32.partialorder %v2546, 0.0
        %vm2803 = vcmp.gt.f32.partialorder %v2547, 0.0
        %vm2804 = vcmp.gt.f32.partialorder %v2548, 0.0
        %vm2805 = vcmp.gt.f32.partialorder %v2549, 0.0
        %vm2806 = vcmp.gt.f32.partialorder %v2550, 0.0
        %vm2807 = vcmp.gt.f32.partialorder %v2551, 0.0
        %vm2808 = vcmp.gt.f32.partialorder %v2552, 0.0
        %vm2809 = vcmp.gt.f32.partialorder %v2553, 0.0
        %vm2810 = vcmp.gt.f32.partialorder %v2554, 0.0
        %vm2811 = vcmp.gt.f32.partialorder %v2555, 0.0
        %vm2812 = vcmp.gt.f32.partialorder %v2556, 0.0
        %vm2813 = vcmp.gt.f32.partialorder %v2557, 0.0
        %vm2814 = vcmp.gt.f32.partialorder %v2558, 0.0
        %vm2815 = vcmp.gt.f32.partialorder %v2559, 0.0
        %vm2816 = vcmp.gt.f32.partialorder %v2560, 0.0
        %vm2817 = vcmp.gt.f32.partialorder %v2561, 0.0
        %vm2818 = vcmp.gt.f32.partialorder %v2562, 0.0
        %vm2819 = vcmp.gt.f32.partialorder %v2563, 0.0
        %vm2820 = vcmp.gt.f32.partialorder %v2564, 0.0
        %vm2821 = vcmp.gt.f32.partialorder %v2565, 0.0
        %vm2822 = vcmp.gt.f32.partialorder %v2566, 0.0
        %vm2823 = vcmp.gt.f32.partialorder %v2567, 0.0
        %vm2824 = vcmp.gt.f32.partialorder %v2568, 0.0
        %vm2825 = vcmp.gt.f32.partialorder %v2569, 0.0
        %vm2826 = vcmp.gt.f32.partialorder %v2570, 0.0
        %vm2827 = vcmp.gt.f32.partialorder %v2571, 0.0
        %vm2828 = vcmp.gt.f32.partialorder %v2572, 0.0
        %vm2829 = vcmp.gt.f32.partialorder %v2573, 0.0
        %vm2830 = vcmp.gt.f32.partialorder %v2574, 0.0
        %vm2831 = vcmp.gt.f32.partialorder %v2575, 0.0
        %vm2832 = vcmp.gt.f32.partialorder %v2576, 0.0
        %vm2833 = vcmp.gt.f32.partialorder %v2577, 0.0
        %vm2834 = vcmp.gt.f32.partialorder %v2578, 0.0
        %vm2835 = vcmp.gt.f32.partialorder %v2579, 0.0
        %vm2836 = vcmp.gt.f32.partialorder %v2580, 0.0
        %vm2837 = vcmp.gt.f32.partialorder %v2581, 0.0
        %vm2838 = vcmp.gt.f32.partialorder %v2582, 0.0
        %vm2839 = vcmp.gt.f32.partialorder %v2583, 0.0
        %vm2840 = vcmp.gt.f32.partialorder %v2584, 0.0
        %vm2841 = vcmp.gt.f32.partialorder %v2585, 0.0
        %vm2842 = vcmp.gt.f32.partialorder %v2586, 0.0
        %vm2843 = vcmp.gt.f32.partialorder %v2587, 0.0
        %vm2844 = vcmp.gt.f32.partialorder %v2588, 0.0
        %vm2845 = vcmp.gt.f32.partialorder %v2589, 0.0
        %vm2846 = vcmp.gt.f32.partialorder %v2590, 0.0
        %vm2847 = vcmp.gt.f32.partialorder %v2591, 0.0
        %vm2848 = vcmp.gt.f32.partialorder %v2592, 0.0
        %vm2849 = vcmp.gt.f32.partialorder %v2593, 0.0
        %vm2850 = vcmp.gt.f32.partialorder %v2594, 0.0
        %vm2851 = vcmp.gt.f32.partialorder %v2595, 0.0
        %vm2852 = vcmp.gt.f32.partialorder %v2596, 0.0
        %vm2853 = vcmp.gt.f32.partialorder %v2597, 0.0
        %vm2854 = vcmp.gt.f32.partialorder %v2598, 0.0
        %vm2855 = vcmp.gt.f32.partialorder %v2599, 0.0
        %vm2856 = vcmp.gt.f32.partialorder %v2600, 0.0
        %vm2857 = vcmp.gt.f32.partialorder %v2601, 0.0
        %vm2858 = vcmp.gt.f32.partialorder %v2602, 0.0
        %vm2859 = vcmp.gt.f32.partialorder %v2603, 0.0
        %vm2860 = vcmp.gt.f32.partialorder %v2604, 0.0
        %vm2861 = vcmp.gt.f32.partialorder %v2605, 0.0
        %vm2862 = vcmp.gt.f32.partialorder %v2606, 0.0
        %vm2863 = vcmp.gt.f32.partialorder %v2607, 0.0
        %vm2864 = vcmp.gt.f32.partialorder %v2608, 0.0
        %vm2865 = vcmp.gt.f32.partialorder %v2609, 0.0
        %vm2866 = vcmp.gt.f32.partialorder %v2610, 0.0
        %vm2867 = vcmp.gt.f32.partialorder %v2611, 0.0
        %vm2868 = vcmp.gt.f32.partialorder %v2612, 0.0
        %vm2869 = vcmp.gt.f32.partialorder %v2613, 0.0
        %vm2870 = vcmp.gt.f32.partialorder %v2614, 0.0
        %vm2871 = vcmp.gt.f32.partialorder %v2615, 0.0
        %vm2872 = vcmp.gt.f32.partialorder %v2616, 0.0
        %vm2873 = vcmp.gt.f32.partialorder %v2617, 0.0
        %vm2874 = vcmp.gt.f32.partialorder %v2618, 0.0
        %vm2875 = vcmp.gt.f32.partialorder %v2619, 0.0
        %vm2876 = vcmp.gt.f32.partialorder %v2620, 0.0
        %vm2877 = vcmp.gt.f32.partialorder %v2621, 0.0
        %vm2878 = vcmp.gt.f32.partialorder %v2622, 0.0
        %vm2879 = vcmp.gt.f32.partialorder %v2623, 0.0
        %vm2880 = vcmp.gt.f32.partialorder %v2624, 0.0
        %vm2881 = vcmp.gt.f32.partialorder %v2625, 0.0
        %vm2882 = vcmp.gt.f32.partialorder %v2626, 0.0
        %vm2883 = vcmp.gt.f32.partialorder %v2627, 0.0
        %vm2884 = vcmp.gt.f32.partialorder %v2628, 0.0
        %vm2885 = vcmp.gt.f32.partialorder %v2629, 0.0
        %vm2886 = vcmp.gt.f32.partialorder %v2630, 0.0
        %vm2887 = vcmp.gt.f32.partialorder %v2631, 0.0
        %vm2888 = vcmp.gt.f32.partialorder %v2632, 0.0
        %vm2889 = vcmp.gt.f32.partialorder %v2633, 0.0
        %vm2890 = vcmp.gt.f32.partialorder %v2634, 0.0
        %vm2891 = vcmp.gt.f32.partialorder %v2635, 0.0
        %vm2892 = vcmp.gt.f32.partialorder %v2636, 0.0
        %vm2893 = vcmp.gt.f32.partialorder %v2637, 0.0
        %v2894 = vmul.f32 %v2382, 0.2
        %v2895 = vmul.f32 %v2383, 0.2
        %v2896 = vmul.f32 %v2384, 0.2
        %v2897 = vmul.f32 %v2385, 0.2
        %v2898 = vmul.f32 %v2386, 0.2
        %v2899 = vmul.f32 %v2387, 0.2
        %v2900 = vmul.f32 %v2388, 0.2
        %v2901 = vmul.f32 %v2389, 0.2
        %v2902 = vmul.f32 %v2390, 0.2
        %v2903 = vmul.f32 %v2391, 0.2
        %v2904 = vmul.f32 %v2392, 0.2
        %v2905 = vmul.f32 %v2393, 0.2
        %v2906 = vmul.f32 %v2394, 0.2
        %v2907 = vmul.f32 %v2395, 0.2
        %v2908 = vmul.f32 %v2396, 0.2
        %v2909 = vmul.f32 %v2397, 0.2
        %v2910 = vmul.f32 %v2398, 0.2
        %v2911 = vmul.f32 %v2399, 0.2
        %v2912 = vmul.f32 %v2400, 0.2
        %v2913 = vmul.f32 %v2401, 0.2
        %v2914 = vmul.f32 %v2402, 0.2
        %v2915 = vmul.f32 %v2403, 0.2
        %v2916 = vmul.f32 %v2404, 0.2
        %v2917 = vmul.f32 %v2405, 0.2
        %v2918 = vmul.f32 %v2406, 0.2
        %v2919 = vmul.f32 %v2407, 0.2
        %v2920 = vmul.f32 %v2408, 0.2
        %v2921 = vmul.f32 %v2409, 0.2
        %v2922 = vmul.f32 %v2410, 0.2
        %v2923 = vmul.f32 %v2411, 0.2
        %v2924 = vmul.f32 %v2412, 0.2
        %v2925 = vmul.f32 %v2413, 0.2
        %v2926 = vmul.f32 %v2414, 0.2
        %v2927 = vmul.f32 %v2415, 0.2
        %v2928 = vmul.f32 %v2416, 0.2
        %v2929 = vmul.f32 %v2417, 0.2
        %v2930 = vmul.f32 %v2418, 0.2
        %v2931 = vmul.f32 %v2419, 0.2
        %v2932 = vmul.f32 %v2420, 0.2
        %v2933 = vmul.f32 %v2421, 0.2
        %v2934 = vmul.f32 %v2422, 0.2
        %v2935 = vmul.f32 %v2423, 0.2
        %v2936 = vmul.f32 %v2424, 0.2
        %v2937 = vmul.f32 %v2425, 0.2
        %v2938 = vmul.f32 %v2426, 0.2
        %v2939 = vmul.f32 %v2427, 0.2
        %v2940 = vmul.f32 %v2428, 0.2
        %v2941 = vmul.f32 %v2429, 0.2
        %v2942 = vmul.f32 %v2430, 0.2
        %v2943 = vmul.f32 %v2431, 0.2
        %v2944 = vmul.f32 %v2432, 0.2
        %v2945 = vmul.f32 %v2433, 0.2
        %v2946 = vmul.f32 %v2434, 0.2
        %v2947 = vmul.f32 %v2435, 0.2
        %v2948 = vmul.f32 %v2436, 0.2
        %v2949 = vmul.f32 %v2437, 0.2
        %v2950 = vmul.f32 %v2438, 0.2
        %v2951 = vmul.f32 %v2439, 0.2
        %v2952 = vmul.f32 %v2440, 0.2
        %v2953 = vmul.f32 %v2441, 0.2
        %v2954 = vmul.f32 %v2442, 0.2
        %v2955 = vmul.f32 %v2443, 0.2
        %v2956 = vmul.f32 %v2444, 0.2
        %v2957 = vmul.f32 %v2445, 0.2
        %v2958 = vmul.f32 %v2446, 0.2
        %v2959 = vmul.f32 %v2447, 0.2
        %v2960 = vmul.f32 %v2448, 0.2
        %v2961 = vmul.f32 %v2449, 0.2
        %v2962 = vmul.f32 %v2450, 0.2
        %v2963 = vmul.f32 %v2451, 0.2
        %v2964 = vmul.f32 %v2452, 0.2
        %v2965 = vmul.f32 %v2453, 0.2
        %v2966 = vmul.f32 %v2454, 0.2
        %v2967 = vmul.f32 %v2455, 0.2
        %v2968 = vmul.f32 %v2456, 0.2
        %v2969 = vmul.f32 %v2457, 0.2
        %v2970 = vmul.f32 %v2458, 0.2
        %v2971 = vmul.f32 %v2459, 0.2
        %v2972 = vmul.f32 %v2460, 0.2
        %v2973 = vmul.f32 %v2461, 0.2
        %v2974 = vmul.f32 %v2462, 0.2
        %v2975 = vmul.f32 %v2463, 0.2
        %v2976 = vmul.f32 %v2464, 0.2
        %v2977 = vmul.f32 %v2465, 0.2
        %v2978 = vmul.f32 %v2466, 0.2
        %v2979 = vmul.f32 %v2467, 0.2
        %v2980 = vmul.f32 %v2468, 0.2
        %v2981 = vmul.f32 %v2469, 0.2
        %v2982 = vmul.f32 %v2470, 0.2
        %v2983 = vmul.f32 %v2471, 0.2
        %v2984 = vmul.f32 %v2472, 0.2
        %v2985 = vmul.f32 %v2473, 0.2
        %v2986 = vmul.f32 %v2474, 0.2
        %v2987 = vmul.f32 %v2475, 0.2
        %v2988 = vmul.f32 %v2476, 0.2
        %v2989 = vmul.f32 %v2477, 0.2
        %v2990 = vmul.f32 %v2478, 0.2
        %v2991 = vmul.f32 %v2479, 0.2
        %v2992 = vmul.f32 %v2480, 0.2
        %v2993 = vmul.f32 %v2481, 0.2
        %v2994 = vmul.f32 %v2482, 0.2
        %v2995 = vmul.f32 %v2483, 0.2
        %v2996 = vmul.f32 %v2484, 0.2
        %v2997 = vmul.f32 %v2485, 0.2
        %v2998 = vmul.f32 %v2486, 0.2
        %v2999 = vmul.f32 %v2487, 0.2
        %v3000 = vmul.f32 %v2488, 0.2
        %v3001 = vmul.f32 %v2489, 0.2
        %v3002 = vmul.f32 %v2490, 0.2
        %v3003 = vmul.f32 %v2491, 0.2
        %v3004 = vmul.f32 %v2492, 0.2
        %v3005 = vmul.f32 %v2493, 0.2
        %v3006 = vmul.f32 %v2494, 0.2
        %v3007 = vmul.f32 %v2495, 0.2
        %v3008 = vmul.f32 %v2496, 0.2
        %v3009 = vmul.f32 %v2497, 0.2
        %v3010 = vmul.f32 %v2498, 0.2
        %v3011 = vmul.f32 %v2499, 0.2
        %v3012 = vmul.f32 %v2500, 0.2
        %v3013 = vmul.f32 %v2501, 0.2
        %v3014 = vmul.f32 %v2502, 0.2
        %v3015 = vmul.f32 %v2503, 0.2
        %v3016 = vmul.f32 %v2504, 0.2
        %v3017 = vmul.f32 %v2505, 0.2
        %v3018 = vmul.f32 %v2506, 0.2
        %v3019 = vmul.f32 %v2507, 0.2
        %v3020 = vmul.f32 %v2508, 0.2
        %v3021 = vmul.f32 %v2509, 0.2
        %v3022 = vmul.f32 %v2510, 0.2
        %v3023 = vmul.f32 %v2511, 0.2
        %v3024 = vmul.f32 %v2512, 0.2
        %v3025 = vmul.f32 %v2513, 0.2
        %v3026 = vmul.f32 %v2514, 0.2
        %v3027 = vmul.f32 %v2515, 0.2
        %v3028 = vmul.f32 %v2516, 0.2
        %v3029 = vmul.f32 %v2517, 0.2
        %v3030 = vmul.f32 %v2518, 0.2
        %v3031 = vmul.f32 %v2519, 0.2
        %v3032 = vmul.f32 %v2520, 0.2
        %v3033 = vmul.f32 %v2521, 0.2
        %v3034 = vmul.f32 %v2522, 0.2
        %v3035 = vmul.f32 %v2523, 0.2
        %v3036 = vmul.f32 %v2524, 0.2
        %v3037 = vmul.f32 %v2525, 0.2
        %v3038 = vmul.f32 %v2526, 0.2
        %v3039 = vmul.f32 %v2527, 0.2
        %v3040 = vmul.f32 %v2528, 0.2
        %v3041 = vmul.f32 %v2529, 0.2
        %v3042 = vmul.f32 %v2530, 0.2
        %v3043 = vmul.f32 %v2531, 0.2
        %v3044 = vmul.f32 %v2532, 0.2
        %v3045 = vmul.f32 %v2533, 0.2
        %v3046 = vmul.f32 %v2534, 0.2
        %v3047 = vmul.f32 %v2535, 0.2
        %v3048 = vmul.f32 %v2536, 0.2
        %v3049 = vmul.f32 %v2537, 0.2
        %v3050 = vmul.f32 %v2538, 0.2
        %v3051 = vmul.f32 %v2539, 0.2
        %v3052 = vmul.f32 %v2540, 0.2
        %v3053 = vmul.f32 %v2541, 0.2
        %v3054 = vmul.f32 %v2542, 0.2
        %v3055 = vmul.f32 %v2543, 0.2
        %v3056 = vmul.f32 %v2544, 0.2
        %v3057 = vmul.f32 %v2545, 0.2
        %v3058 = vmul.f32 %v2546, 0.2
        %v3059 = vmul.f32 %v2547, 0.2
        %v3060 = vmul.f32 %v2548, 0.2
        %v3061 = vmul.f32 %v2549, 0.2
        %v3062 = vmul.f32 %v2550, 0.2
        %v3063 = vmul.f32 %v2551, 0.2
        %v3064 = vmul.f32 %v2552, 0.2
        %v3065 = vmul.f32 %v2553, 0.2
        %v3066 = vmul.f32 %v2554, 0.2
        %v3067 = vmul.f32 %v2555, 0.2
        %v3068 = vmul.f32 %v2556, 0.2
        %v3069 = vmul.f32 %v2557, 0.2
        %v3070 = vmul.f32 %v2558, 0.2
        %v3071 = vmul.f32 %v2559, 0.2
        %v3072 = vmul.f32 %v2560, 0.2
        %v3073 = vmul.f32 %v2561, 0.2
        %v3074 = vmul.f32 %v2562, 0.2
        %v3075 = vmul.f32 %v2563, 0.2
        %v3076 = vmul.f32 %v2564, 0.2
        %v3077 = vmul.f32 %v2565, 0.2
        %v3078 = vmul.f32 %v2566, 0.2
        %v3079 = vmul.f32 %v2567, 0.2
        %v3080 = vmul.f32 %v2568, 0.2
        %v3081 = vmul.f32 %v2569, 0.2
        %v3082 = vmul.f32 %v2570, 0.2
        %v3083 = vmul.f32 %v2571, 0.2
        %v3084 = vmul.f32 %v2572, 0.2
        %v3085 = vmul.f32 %v2573, 0.2
        %v3086 = vmul.f32 %v2574, 0.2
        %v3087 = vmul.f32 %v2575, 0.2
        %v3088 = vmul.f32 %v2576, 0.2
        %v3089 = vmul.f32 %v2577, 0.2
        %v3090 = vmul.f32 %v2578, 0.2
        %v3091 = vmul.f32 %v2579, 0.2
        %v3092 = vmul.f32 %v2580, 0.2
        %v3093 = vmul.f32 %v2581, 0.2
        %v3094 = vmul.f32 %v2582, 0.2
        %v3095 = vmul.f32 %v2583, 0.2
        %v3096 = vmul.f32 %v2584, 0.2
        %v3097 = vmul.f32 %v2585, 0.2
        %v3098 = vmul.f32 %v2586, 0.2
        %v3099 = vmul.f32 %v2587, 0.2
        %v3100 = vmul.f32 %v2588, 0.2
        %v3101 = vmul.f32 %v2589, 0.2
        %v3102 = vmul.f32 %v2590, 0.2
        %v3103 = vmul.f32 %v2591, 0.2
        %v3104 = vmul.f32 %v2592, 0.2
        %v3105 = vmul.f32 %v2593, 0.2
        %v3106 = vmul.f32 %v2594, 0.2
        %v3107 = vmul.f32 %v2595, 0.2
        %v3108 = vmul.f32 %v2596, 0.2
        %v3109 = vmul.f32 %v2597, 0.2
        %v3110 = vmul.f32 %v2598, 0.2
        %v3111 = vmul.f32 %v2599, 0.2
        %v3112 = vmul.f32 %v2600, 0.2
        %v3113 = vmul.f32 %v2601, 0.2
        %v3114 = vmul.f32 %v2602, 0.2
        %v3115 = vmul.f32 %v2603, 0.2
        %v3116 = vmul.f32 %v2604, 0.2
        %v3117 = vmul.f32 %v2605, 0.2
        %v3118 = vmul.f32 %v2606, 0.2
        %v3119 = vmul.f32 %v2607, 0.2
        %v3120 = vmul.f32 %v2608, 0.2
        %v3121 = vmul.f32 %v2609, 0.2
        %v3122 = vmul.f32 %v2610, 0.2
        %v3123 = vmul.f32 %v2611, 0.2
        %v3124 = vmul.f32 %v2612, 0.2
        %v3125 = vmul.f32 %v2613, 0.2
        %v3126 = vmul.f32 %v2614, 0.2
        %v3127 = vmul.f32 %v2615, 0.2
        %v3128 = vmul.f32 %v2616, 0.2
        %v3129 = vmul.f32 %v2617, 0.2
        %v3130 = vmul.f32 %v2618, 0.2
        %v3131 = vmul.f32 %v2619, 0.2
        %v3132 = vmul.f32 %v2620, 0.2
        %v3133 = vmul.f32 %v2621, 0.2
        %v3134 = vmul.f32 %v2622, 0.2
        %v3135 = vmul.f32 %v2623, 0.2
        %v3136 = vmul.f32 %v2624, 0.2
        %v3137 = vmul.f32 %v2625, 0.2
        %v3138 = vmul.f32 %v2626, 0.2
        %v3139 = vmul.f32 %v2627, 0.2
        %v3140 = vmul.f32 %v2628, 0.2
        %v3141 = vmul.f32 %v2629, 0.2
        %v3142 = vmul.f32 %v2630, 0.2
        %v3143 = vmul.f32 %v2631, 0.2
        %v3144 = vmul.f32 %v2632, 0.2
        %v3145 = vmul.f32 %v2633, 0.2
        %v3146 = vmul.f32 %v2634, 0.2
        %v3147 = vmul.f32 %v2635, 0.2
        %v3148 = vmul.f32 %v2636, 0.2
        %v3149 = vmul.f32 %v2637, 0.2
        %v3150 = vsel %vm2638, %v2382, %v2894
        %v3151 = vsel %vm2639, %v2383, %v2895
        %v3152 = vsel %vm2640, %v2384, %v2896
        %v3153 = vsel %vm2641, %v2385, %v2897
        %v3154 = vsel %vm2642, %v2386, %v2898
        %v3155 = vsel %vm2643, %v2387, %v2899
        %v3156 = vsel %vm2644, %v2388, %v2900
        %v3157 = vsel %vm2645, %v2389, %v2901
        %v3158 = vsel %vm2646, %v2390, %v2902
        %v3159 = vsel %vm2647, %v2391, %v2903
        %v3160 = vsel %vm2648, %v2392, %v2904
        %v3161 = vsel %vm2649, %v2393, %v2905
        %v3162 = vsel %vm2650, %v2394, %v2906
        %v3163 = vsel %vm2651, %v2395, %v2907
        %v3164 = vsel %vm2652, %v2396, %v2908
        %v3165 = vsel %vm2653, %v2397, %v2909
        %v3166 = vsel %vm2654, %v2398, %v2910
        %v3167 = vsel %vm2655, %v2399, %v2911
        %v3168 = vsel %vm2656, %v2400, %v2912
        %v3169 = vsel %vm2657, %v2401, %v2913
        %v3170 = vsel %vm2658, %v2402, %v2914
        %v3171 = vsel %vm2659, %v2403, %v2915
        %v3172 = vsel %vm2660, %v2404, %v2916
        %v3173 = vsel %vm2661, %v2405, %v2917
        %v3174 = vsel %vm2662, %v2406, %v2918
        %v3175 = vsel %vm2663, %v2407, %v2919
        %v3176 = vsel %vm2664, %v2408, %v2920
        %v3177 = vsel %vm2665, %v2409, %v2921
        %v3178 = vsel %vm2666, %v2410, %v2922
        %v3179 = vsel %vm2667, %v2411, %v2923
        %v3180 = vsel %vm2668, %v2412, %v2924
        %v3181 = vsel %vm2669, %v2413, %v2925
        %v3182 = vsel %vm2670, %v2414, %v2926
        %v3183 = vsel %vm2671, %v2415, %v2927
        %v3184 = vsel %vm2672, %v2416, %v2928
        %v3185 = vsel %vm2673, %v2417, %v2929
        %v3186 = vsel %vm2674, %v2418, %v2930
        %v3187 = vsel %vm2675, %v2419, %v2931
        %v3188 = vsel %vm2676, %v2420, %v2932
        %v3189 = vsel %vm2677, %v2421, %v2933
        %v3190 = vsel %vm2678, %v2422, %v2934
        %v3191 = vsel %vm2679, %v2423, %v2935
        %v3192 = vsel %vm2680, %v2424, %v2936
        %v3193 = vsel %vm2681, %v2425, %v2937
        %v3194 = vsel %vm2682, %v2426, %v2938
        %v3195 = vsel %vm2683, %v2427, %v2939
        %v3196 = vsel %vm2684, %v2428, %v2940
        %v3197 = vsel %vm2685, %v2429, %v2941
        %v3198 = vsel %vm2686, %v2430, %v2942
        %v3199 = vsel %vm2687, %v2431, %v2943
        %v3200 = vsel %vm2688, %v2432, %v2944
        %v3201 = vsel %vm2689, %v2433, %v2945
        %v3202 = vsel %vm2690, %v2434, %v2946
        %v3203 = vsel %vm2691, %v2435, %v2947
        %v3204 = vsel %vm2692, %v2436, %v2948
        %v3205 = vsel %vm2693, %v2437, %v2949
        %v3206 = vsel %vm2694, %v2438, %v2950
        %v3207 = vsel %vm2695, %v2439, %v2951
        %v3208 = vsel %vm2696, %v2440, %v2952
        %v3209 = vsel %vm2697, %v2441, %v2953
        %v3210 = vsel %vm2698, %v2442, %v2954
        %v3211 = vsel %vm2699, %v2443, %v2955
        %v3212 = vsel %vm2700, %v2444, %v2956
        %v3213 = vsel %vm2701, %v2445, %v2957
        %v3214 = vsel %vm2702, %v2446, %v2958
        %v3215 = vsel %vm2703, %v2447, %v2959
        %v3216 = vsel %vm2704, %v2448, %v2960
        %v3217 = vsel %vm2705, %v2449, %v2961
        %v3218 = vsel %vm2706, %v2450, %v2962
        %v3219 = vsel %vm2707, %v2451, %v2963
        %v3220 = vsel %vm2708, %v2452, %v2964
        %v3221 = vsel %vm2709, %v2453, %v2965
        %v3222 = vsel %vm2710, %v2454, %v2966
        %v3223 = vsel %vm2711, %v2455, %v2967
        %v3224 = vsel %vm2712, %v2456, %v2968
        %v3225 = vsel %vm2713, %v2457, %v2969
        %v3226 = vsel %vm2714, %v2458, %v2970
        %v3227 = vsel %vm2715, %v2459, %v2971
        %v3228 = vsel %vm2716, %v2460, %v2972
        %v3229 = vsel %vm2717, %v2461, %v2973
        %v3230 = vsel %vm2718, %v2462, %v2974
        %v3231 = vsel %vm2719, %v2463, %v2975
        %v3232 = vsel %vm2720, %v2464, %v2976
        %v3233 = vsel %vm2721, %v2465, %v2977
        %v3234 = vsel %vm2722, %v2466, %v2978
        %v3235 = vsel %vm2723, %v2467, %v2979
        %v3236 = vsel %vm2724, %v2468, %v2980
        %v3237 = vsel %vm2725, %v2469, %v2981
        %v3238 = vsel %vm2726, %v2470, %v2982
        %v3239 = vsel %vm2727, %v2471, %v2983
        %v3240 = vsel %vm2728, %v2472, %v2984
        %v3241 = vsel %vm2729, %v2473, %v2985
        %v3242 = vsel %vm2730, %v2474, %v2986
        %v3243 = vsel %vm2731, %v2475, %v2987
        %v3244 = vsel %vm2732, %v2476, %v2988
        %v3245 = vsel %vm2733, %v2477, %v2989
        %v3246 = vsel %vm2734, %v2478, %v2990
        %v3247 = vsel %vm2735, %v2479, %v2991
        %v3248 = vsel %vm2736, %v2480, %v2992
        %v3249 = vsel %vm2737, %v2481, %v2993
        %v3250 = vsel %vm2738, %v2482, %v2994
        %v3251 = vsel %vm2739, %v2483, %v2995
        %v3252 = vsel %vm2740, %v2484, %v2996
        %v3253 = vsel %vm2741, %v2485, %v2997
        %v3254 = vsel %vm2742, %v2486, %v2998
        %v3255 = vsel %vm2743, %v2487, %v2999
        %v3256 = vsel %vm2744, %v2488, %v3000
        %v3257 = vsel %vm2745, %v2489, %v3001
        %v3258 = vsel %vm2746, %v2490, %v3002
        %v3259 = vsel %vm2747, %v2491, %v3003
        %v3260 = vsel %vm2748, %v2492, %v3004
        %v3261 = vsel %vm2749, %v2493, %v3005
        %v3262 = vsel %vm2750, %v2494, %v3006
        %v3263 = vsel %vm2751, %v2495, %v3007
        %v3264 = vsel %vm2752, %v2496, %v3008
        %v3265 = vsel %vm2753, %v2497, %v3009
        %v3266 = vsel %vm2754, %v2498, %v3010
        %v3267 = vsel %vm2755, %v2499, %v3011
        %v3268 = vsel %vm2756, %v2500, %v3012
        %v3269 = vsel %vm2757, %v2501, %v3013
        %v3270 = vsel %vm2758, %v2502, %v3014
        %v3271 = vsel %vm2759, %v2503, %v3015
        %v3272 = vsel %vm2760, %v2504, %v3016
        %v3273 = vsel %vm2761, %v2505, %v3017
        %v3274 = vsel %vm2762, %v2506, %v3018
        %v3275 = vsel %vm2763, %v2507, %v3019
        %v3276 = vsel %vm2764, %v2508, %v3020
        %v3277 = vsel %vm2765, %v2509, %v3021
        %v3278 = vsel %vm2766, %v2510, %v3022
        %v3279 = vsel %vm2767, %v2511, %v3023
        %v3280 = vsel %vm2768, %v2512, %v3024
        %v3281 = vsel %vm2769, %v2513, %v3025
        %v3282 = vsel %vm2770, %v2514, %v3026
        %v3283 = vsel %vm2771, %v2515, %v3027
        %v3284 = vsel %vm2772, %v2516, %v3028
        %v3285 = vsel %vm2773, %v2517, %v3029
        %v3286 = vsel %vm2774, %v2518, %v3030
        %v3287 = vsel %vm2775, %v2519, %v3031
        %v3288 = vsel %vm2776, %v2520, %v3032
        %v3289 = vsel %vm2777, %v2521, %v3033
        %v3290 = vsel %vm2778, %v2522, %v3034
        %v3291 = vsel %vm2779, %v2523, %v3035
        %v3292 = vsel %vm2780, %v2524, %v3036
        %v3293 = vsel %vm2781, %v2525, %v3037
        %v3294 = vsel %vm2782, %v2526, %v3038
        %v3295 = vsel %vm2783, %v2527, %v3039
        %v3296 = vsel %vm2784, %v2528, %v3040
        %v3297 = vsel %vm2785, %v2529, %v3041
        %v3298 = vsel %vm2786, %v2530, %v3042
        %v3299 = vsel %vm2787, %v2531, %v3043
        %v3300 = vsel %vm2788, %v2532, %v3044
        %v3301 = vsel %vm2789, %v2533, %v3045
        %v3302 = vsel %vm2790, %v2534, %v3046
        %v3303 = vsel %vm2791, %v2535, %v3047
        %v3304 = vsel %vm2792, %v2536, %v3048
        %v3305 = vsel %vm2793, %v2537, %v3049
        %v3306 = vsel %vm2794, %v2538, %v3050
        %v3307 = vsel %vm2795, %v2539, %v3051
        %v3308 = vsel %vm2796, %v2540, %v3052
        %v3309 = vsel %vm2797, %v2541, %v3053
        %v3310 = vsel %vm2798, %v2542, %v3054
        %v3311 = vsel %vm2799, %v2543, %v3055
        %v3312 = vsel %vm2800, %v2544, %v3056
        %v3313 = vsel %vm2801, %v2545, %v3057
        %v3314 = vsel %vm2802, %v2546, %v3058
        %v3315 = vsel %vm2803, %v2547, %v3059
        %v3316 = vsel %vm2804, %v2548, %v3060
        %v3317 = vsel %vm2805, %v2549, %v3061
        %v3318 = vsel %vm2806, %v2550, %v3062
        %v3319 = vsel %vm2807, %v2551, %v3063
        %v3320 = vsel %vm2808, %v2552, %v3064
        %v3321 = vsel %vm2809, %v2553, %v3065
        %v3322 = vsel %vm2810, %v2554, %v3066
        %v3323 = vsel %vm2811, %v2555, %v3067
        %v3324 = vsel %vm2812, %v2556, %v3068
        %v3325 = vsel %vm2813, %v2557, %v3069
        %v3326 = vsel %vm2814, %v2558, %v3070
        %v3327 = vsel %vm2815, %v2559, %v3071
        %v3328 = vsel %vm2816, %v2560, %v3072
        %v3329 = vsel %vm2817, %v2561, %v3073
        %v3330 = vsel %vm2818, %v2562, %v3074
        %v3331 = vsel %vm2819, %v2563, %v3075
        %v3332 = vsel %vm2820, %v2564, %v3076
        %v3333 = vsel %vm2821, %v2565, %v3077
        %v3334 = vsel %vm2822, %v2566, %v3078
        %v3335 = vsel %vm2823, %v2567, %v3079
        %v3336 = vsel %vm2824, %v2568, %v3080
        %v3337 = vsel %vm2825, %v2569, %v3081
        %v3338 = vsel %vm2826, %v2570, %v3082
        %v3339 = vsel %vm2827, %v2571, %v3083
        %v3340 = vsel %vm2828, %v2572, %v3084
        %v3341 = vsel %vm2829, %v2573, %v3085
        %v3342 = vsel %vm2830, %v2574, %v3086
        %v3343 = vsel %vm2831, %v2575, %v3087
        %v3344 = vsel %vm2832, %v2576, %v3088
        %v3345 = vsel %vm2833, %v2577, %v3089
        %v3346 = vsel %vm2834, %v2578, %v3090
        %v3347 = vsel %vm2835, %v2579, %v3091
        %v3348 = vsel %vm2836, %v2580, %v3092
        %v3349 = vsel %vm2837, %v2581, %v3093
        %v3350 = vsel %vm2838, %v2582, %v3094
        %v3351 = vsel %vm2839, %v2583, %v3095
        %v3352 = vsel %vm2840, %v2584, %v3096
        %v3353 = vsel %vm2841, %v2585, %v3097
        %v3354 = vsel %vm2842, %v2586, %v3098
        %v3355 = vsel %vm2843, %v2587, %v3099
        %v3356 = vsel %vm2844, %v2588, %v3100
        %v3357 = vsel %vm2845, %v2589, %v3101
        %v3358 = vsel %vm2846, %v2590, %v3102
        %v3359 = vsel %vm2847, %v2591, %v3103
        %v3360 = vsel %vm2848, %v2592, %v3104
        %v3361 = vsel %vm2849, %v2593, %v3105
        %v3362 = vsel %vm2850, %v2594, %v3106
        %v3363 = vsel %vm2851, %v2595, %v3107
        %v3364 = vsel %vm2852, %v2596, %v3108
        %v3365 = vsel %vm2853, %v2597, %v3109
        %v3366 = vsel %vm2854, %v2598, %v3110
        %v3367 = vsel %vm2855, %v2599, %v3111
        %v3368 = vsel %vm2856, %v2600, %v3112
        %v3369 = vsel %vm2857, %v2601, %v3113
        %v3370 = vsel %vm2858, %v2602, %v3114
        %v3371 = vsel %vm2859, %v2603, %v3115
        %v3372 = vsel %vm2860, %v2604, %v3116
        %v3373 = vsel %vm2861, %v2605, %v3117
        %v3374 = vsel %vm2862, %v2606, %v3118
        %v3375 = vsel %vm2863, %v2607, %v3119
        %v3376 = vsel %vm2864, %v2608, %v3120
        %v3377 = vsel %vm2865, %v2609, %v3121
        %v3378 = vsel %vm2866, %v2610, %v3122
        %v3379 = vsel %vm2867, %v2611, %v3123
        %v3380 = vsel %vm2868, %v2612, %v3124
        %v3381 = vsel %vm2869, %v2613, %v3125
        %v3382 = vsel %vm2870, %v2614, %v3126
        %v3383 = vsel %vm2871, %v2615, %v3127
        %v3384 = vsel %vm2872, %v2616, %v3128
        %v3385 = vsel %vm2873, %v2617, %v3129
        %v3386 = vsel %vm2874, %v2618, %v3130
        %v3387 = vsel %vm2875, %v2619, %v3131
        %v3388 = vsel %vm2876, %v2620, %v3132
        %v3389 = vsel %vm2877, %v2621, %v3133
        %v3390 = vsel %vm2878, %v2622, %v3134
        %v3391 = vsel %vm2879, %v2623, %v3135
        %v3392 = vsel %vm2880, %v2624, %v3136
        %v3393 = vsel %vm2881, %v2625, %v3137
        %v3394 = vsel %vm2882, %v2626, %v3138
        %v3395 = vsel %vm2883, %v2627, %v3139
        %v3396 = vsel %vm2884, %v2628, %v3140
        %v3397 = vsel %vm2885, %v2629, %v3141
        %v3398 = vsel %vm2886, %v2630, %v3142
        %v3399 = vsel %vm2887, %v2631, %v3143
        %v3400 = vsel %vm2888, %v2632, %v3144
        %v3401 = vsel %vm2889, %v2633, %v3145
        %v3402 = vsel %vm2890, %v2634, %v3146
        %v3403 = vsel %vm2891, %v2635, %v3147
        %v3404 = vsel %vm2892, %v2636, %v3148
        %v3405 = vsel %vm2893, %v2637, %v3149
        %v3406 = vpack.c.bf16 %v3151, %v3150
        %v3407 = vpack.c.bf16 %v3153, %v3152
        %v3408 = vpack.c.bf16 %v3155, %v3154
        %v3409 = vpack.c.bf16 %v3157, %v3156
        %v3410 = vpack.c.bf16 %v3159, %v3158
        %v3411 = vpack.c.bf16 %v3161, %v3160
        %v3412 = vpack.c.bf16 %v3163, %v3162
        %v3413 = vpack.c.bf16 %v3165, %v3164
        %v3414 = vpack.c.bf16 %v3167, %v3166
        %v3415 = vpack.c.bf16 %v3169, %v3168
        %v3416 = vpack.c.bf16 %v3171, %v3170
        %v3417 = vpack.c.bf16 %v3173, %v3172
        %v3418 = vpack.c.bf16 %v3175, %v3174
        %v3419 = vpack.c.bf16 %v3177, %v3176
        %v3420 = vpack.c.bf16 %v3179, %v3178
        %v3421 = vpack.c.bf16 %v3181, %v3180
        %v3422 = vpack.c.bf16 %v3183, %v3182
        %v3423 = vpack.c.bf16 %v3185, %v3184
        %v3424 = vpack.c.bf16 %v3187, %v3186
        %v3425 = vpack.c.bf16 %v3189, %v3188
        %v3426 = vpack.c.bf16 %v3191, %v3190
        %v3427 = vpack.c.bf16 %v3193, %v3192
        %v3428 = vpack.c.bf16 %v3195, %v3194
        %v3429 = vpack.c.bf16 %v3197, %v3196
        %v3430 = vpack.c.bf16 %v3199, %v3198
        %v3431 = vpack.c.bf16 %v3201, %v3200
        %v3432 = vpack.c.bf16 %v3203, %v3202
        %v3433 = vpack.c.bf16 %v3205, %v3204
        %v3434 = vpack.c.bf16 %v3207, %v3206
        %v3435 = vpack.c.bf16 %v3209, %v3208
        %v3436 = vpack.c.bf16 %v3211, %v3210
        %v3437 = vpack.c.bf16 %v3213, %v3212
        %v3438 = vpack.c.bf16 %v3215, %v3214
        %v3439 = vpack.c.bf16 %v3217, %v3216
        %v3440 = vpack.c.bf16 %v3219, %v3218
        %v3441 = vpack.c.bf16 %v3221, %v3220
        %v3442 = vpack.c.bf16 %v3223, %v3222
        %v3443 = vpack.c.bf16 %v3225, %v3224
        %v3444 = vpack.c.bf16 %v3227, %v3226
        %v3445 = vpack.c.bf16 %v3229, %v3228
        %v3446 = vpack.c.bf16 %v3231, %v3230
        %v3447 = vpack.c.bf16 %v3233, %v3232
        %v3448 = vpack.c.bf16 %v3235, %v3234
        %v3449 = vpack.c.bf16 %v3237, %v3236
        %v3450 = vpack.c.bf16 %v3239, %v3238
        %v3451 = vpack.c.bf16 %v3241, %v3240
        %v3452 = vpack.c.bf16 %v3243, %v3242
        %v3453 = vpack.c.bf16 %v3245, %v3244
        %v3454 = vpack.c.bf16 %v3247, %v3246
        %v3455 = vpack.c.bf16 %v3249, %v3248
        %v3456 = vpack.c.bf16 %v3251, %v3250
        %v3457 = vpack.c.bf16 %v3253, %v3252
        %v3458 = vpack.c.bf16 %v3255, %v3254
        %v3459 = vpack.c.bf16 %v3257, %v3256
        %v3460 = vpack.c.bf16 %v3259, %v3258
        %v3461 = vpack.c.bf16 %v3261, %v3260
        %v3462 = vpack.c.bf16 %v3263, %v3262
        %v3463 = vpack.c.bf16 %v3265, %v3264
        %v3464 = vpack.c.bf16 %v3267, %v3266
        %v3465 = vpack.c.bf16 %v3269, %v3268
        %v3466 = vpack.c.bf16 %v3271, %v3270
        %v3467 = vpack.c.bf16 %v3273, %v3272
        %v3468 = vpack.c.bf16 %v3275, %v3274
        %v3469 = vpack.c.bf16 %v3277, %v3276
        %v3470 = vpack.c.bf16 %v3279, %v3278
        %v3471 = vpack.c.bf16 %v3281, %v3280
        %v3472 = vpack.c.bf16 %v3283, %v3282
        %v3473 = vpack.c.bf16 %v3285, %v3284
        %v3474 = vpack.c.bf16 %v3287, %v3286
        %v3475 = vpack.c.bf16 %v3289, %v3288
        %v3476 = vpack.c.bf16 %v3291, %v3290
        %v3477 = vpack.c.bf16 %v3293, %v3292
        %v3478 = vpack.c.bf16 %v3295, %v3294
        %v3479 = vpack.c.bf16 %v3297, %v3296
        %v3480 = vpack.c.bf16 %v3299, %v3298
        %v3481 = vpack.c.bf16 %v3301, %v3300
        %v3482 = vpack.c.bf16 %v3303, %v3302
        %v3483 = vpack.c.bf16 %v3305, %v3304
        %v3484 = vpack.c.bf16 %v3307, %v3306
        %v3485 = vpack.c.bf16 %v3309, %v3308
        %v3486 = vpack.c.bf16 %v3311, %v3310
        %v3487 = vpack.c.bf16 %v3313, %v3312
        %v3488 = vpack.c.bf16 %v3315, %v3314
        %v3489 = vpack.c.bf16 %v3317, %v3316
        %v3490 = vpack.c.bf16 %v3319, %v3318
        %v3491 = vpack.c.bf16 %v3321, %v3320
        %v3492 = vpack.c.bf16 %v3323, %v3322
        %v3493 = vpack.c.bf16 %v3325, %v3324
        %v3494 = vpack.c.bf16 %v3327, %v3326
        %v3495 = vpack.c.bf16 %v3329, %v3328
        %v3496 = vpack.c.bf16 %v3331, %v3330
        %v3497 = vpack.c.bf16 %v3333, %v3332
        %v3498 = vpack.c.bf16 %v3335, %v3334
        %v3499 = vpack.c.bf16 %v3337, %v3336
        %v3500 = vpack.c.bf16 %v3339, %v3338
        %v3501 = vpack.c.bf16 %v3341, %v3340
        %v3502 = vpack.c.bf16 %v3343, %v3342
        %v3503 = vpack.c.bf16 %v3345, %v3344
        %v3504 = vpack.c.bf16 %v3347, %v3346
        %v3505 = vpack.c.bf16 %v3349, %v3348
        %v3506 = vpack.c.bf16 %v3351, %v3350
        %v3507 = vpack.c.bf16 %v3353, %v3352
        %v3508 = vpack.c.bf16 %v3355, %v3354
        %v3509 = vpack.c.bf16 %v3357, %v3356
        %v3510 = vpack.c.bf16 %v3359, %v3358
        %v3511 = vpack.c.bf16 %v3361, %v3360
        %v3512 = vpack.c.bf16 %v3363, %v3362
        %v3513 = vpack.c.bf16 %v3365, %v3364
        %v3514 = vpack.c.bf16 %v3367, %v3366
        %v3515 = vpack.c.bf16 %v3369, %v3368
        %v3516 = vpack.c.bf16 %v3371, %v3370
        %v3517 = vpack.c.bf16 %v3373, %v3372
        %v3518 = vpack.c.bf16 %v3375, %v3374
        %v3519 = vpack.c.bf16 %v3377, %v3376
        %v3520 = vpack.c.bf16 %v3379, %v3378
        %v3521 = vpack.c.bf16 %v3381, %v3380
        %v3522 = vpack.c.bf16 %v3383, %v3382
        %v3523 = vpack.c.bf16 %v3385, %v3384
        %v3524 = vpack.c.bf16 %v3387, %v3386
        %v3525 = vpack.c.bf16 %v3389, %v3388
        %v3526 = vpack.c.bf16 %v3391, %v3390
        %v3527 = vpack.c.bf16 %v3393, %v3392
        %v3528 = vpack.c.bf16 %v3395, %v3394
        %v3529 = vpack.c.bf16 %v3397, %v3396
        %v3530 = vpack.c.bf16 %v3399, %v3398
        %v3531 = vpack.c.bf16 %v3401, %v3400
        %v3532 = vpack.c.bf16 %v3403, %v3402
        %v3533 = vpack.c.bf16 %v3405, %v3404
        %v3662 = vunpack.c.l.b16 %v3406
        %v3663 = vunpack.c.h.b16 %v3406
        %v3664 = vunpack.c.l.b16 %v3407
        %v3665 = vunpack.c.h.b16 %v3407
        %v3666 = vunpack.c.l.b16 %v3408
        %v3667 = vunpack.c.h.b16 %v3408
        %v3668 = vunpack.c.l.b16 %v3409
        %v3669 = vunpack.c.h.b16 %v3409
        %v3670 = vunpack.c.l.b16 %v3410
        %v3671 = vunpack.c.h.b16 %v3410
        %v3672 = vunpack.c.l.b16 %v3411
        %v3673 = vunpack.c.h.b16 %v3411
        %v3674 = vunpack.c.l.b16 %v3412
        %v3675 = vunpack.c.h.b16 %v3412
        %v3676 = vunpack.c.l.b16 %v3413
        %v3677 = vunpack.c.h.b16 %v3413
        %v3678 = vunpack.c.l.b16 %v3414
        %v3679 = vunpack.c.h.b16 %v3414
        %v3680 = vunpack.c.l.b16 %v3415
        %v3681 = vunpack.c.h.b16 %v3415
        %v3682 = vunpack.c.l.b16 %v3416
        %v3683 = vunpack.c.h.b16 %v3416
        %v3684 = vunpack.c.l.b16 %v3417
        %v3685 = vunpack.c.h.b16 %v3417
        %v3686 = vunpack.c.l.b16 %v3418
        %v3687 = vunpack.c.h.b16 %v3418
        %v3688 = vunpack.c.l.b16 %v3419
        %v3689 = vunpack.c.h.b16 %v3419
        %v3690 = vunpack.c.l.b16 %v3420
        %v3691 = vunpack.c.h.b16 %v3420
        %v3692 = vunpack.c.l.b16 %v3421
        %v3693 = vunpack.c.h.b16 %v3421
        %v3694 = vunpack.c.l.b16 %v3422
        %v3695 = vunpack.c.h.b16 %v3422
        %v3696 = vunpack.c.l.b16 %v3423
        %v3697 = vunpack.c.h.b16 %v3423
        %v3698 = vunpack.c.l.b16 %v3424
        %v3699 = vunpack.c.h.b16 %v3424
        %v3700 = vunpack.c.l.b16 %v3425
        %v3701 = vunpack.c.h.b16 %v3425
        %v3702 = vunpack.c.l.b16 %v3426
        %v3703 = vunpack.c.h.b16 %v3426
        %v3704 = vunpack.c.l.b16 %v3427
        %v3705 = vunpack.c.h.b16 %v3427
        %v3706 = vunpack.c.l.b16 %v3428
        %v3707 = vunpack.c.h.b16 %v3428
        %v3708 = vunpack.c.l.b16 %v3429
        %v3709 = vunpack.c.h.b16 %v3429
        %v3710 = vunpack.c.l.b16 %v3430
        %v3711 = vunpack.c.h.b16 %v3430
        %v3712 = vunpack.c.l.b16 %v3431
        %v3713 = vunpack.c.h.b16 %v3431
        %v3714 = vunpack.c.l.b16 %v3432
        %v3715 = vunpack.c.h.b16 %v3432
        %v3716 = vunpack.c.l.b16 %v3433
        %v3717 = vunpack.c.h.b16 %v3433
        %v3718 = vunpack.c.l.b16 %v3434
        %v3719 = vunpack.c.h.b16 %v3434
        %v3720 = vunpack.c.l.b16 %v3435
        %v3721 = vunpack.c.h.b16 %v3435
        %v3722 = vunpack.c.l.b16 %v3436
        %v3723 = vunpack.c.h.b16 %v3436
        %v3724 = vunpack.c.l.b16 %v3437
        %v3725 = vunpack.c.h.b16 %v3437
        %v3726 = vunpack.c.l.b16 %v3438
        %v3727 = vunpack.c.h.b16 %v3438
        %v3728 = vunpack.c.l.b16 %v3439
        %v3729 = vunpack.c.h.b16 %v3439
        %v3730 = vunpack.c.l.b16 %v3440
        %v3731 = vunpack.c.h.b16 %v3440
        %v3732 = vunpack.c.l.b16 %v3441
        %v3733 = vunpack.c.h.b16 %v3441
        %v3734 = vunpack.c.l.b16 %v3442
        %v3735 = vunpack.c.h.b16 %v3442
        %v3736 = vunpack.c.l.b16 %v3443
        %v3737 = vunpack.c.h.b16 %v3443
        %v3738 = vunpack.c.l.b16 %v3444
        %v3739 = vunpack.c.h.b16 %v3444
        %v3740 = vunpack.c.l.b16 %v3445
        %v3741 = vunpack.c.h.b16 %v3445
        %v3742 = vunpack.c.l.b16 %v3446
        %v3743 = vunpack.c.h.b16 %v3446
        %v3744 = vunpack.c.l.b16 %v3447
        %v3745 = vunpack.c.h.b16 %v3447
        %v3746 = vunpack.c.l.b16 %v3448
        %v3747 = vunpack.c.h.b16 %v3448
        %v3748 = vunpack.c.l.b16 %v3449
        %v3749 = vunpack.c.h.b16 %v3449
        %v3750 = vunpack.c.l.b16 %v3450
        %v3751 = vunpack.c.h.b16 %v3450
        %v3752 = vunpack.c.l.b16 %v3451
        %v3753 = vunpack.c.h.b16 %v3451
        %v3754 = vunpack.c.l.b16 %v3452
        %v3755 = vunpack.c.h.b16 %v3452
        %v3756 = vunpack.c.l.b16 %v3453
        %v3757 = vunpack.c.h.b16 %v3453
        %v3758 = vunpack.c.l.b16 %v3454
        %v3759 = vunpack.c.h.b16 %v3454
        %v3760 = vunpack.c.l.b16 %v3455
        %v3761 = vunpack.c.h.b16 %v3455
        %v3762 = vunpack.c.l.b16 %v3456
        %v3763 = vunpack.c.h.b16 %v3456
        %v3764 = vunpack.c.l.b16 %v3457
        %v3765 = vunpack.c.h.b16 %v3457
        %v3766 = vunpack.c.l.b16 %v3458
        %v3767 = vunpack.c.h.b16 %v3458
        %v3768 = vunpack.c.l.b16 %v3459
        %v3769 = vunpack.c.h.b16 %v3459
        %v3770 = vunpack.c.l.b16 %v3460
        %v3771 = vunpack.c.h.b16 %v3460
        %v3772 = vunpack.c.l.b16 %v3461
        %v3773 = vunpack.c.h.b16 %v3461
        %v3774 = vunpack.c.l.b16 %v3462
        %v3775 = vunpack.c.h.b16 %v3462
        %v3776 = vunpack.c.l.b16 %v3463
        %v3777 = vunpack.c.h.b16 %v3463
        %v3778 = vunpack.c.l.b16 %v3464
        %v3779 = vunpack.c.h.b16 %v3464
        %v3780 = vunpack.c.l.b16 %v3465
        %v3781 = vunpack.c.h.b16 %v3465
        %v3782 = vunpack.c.l.b16 %v3466
        %v3783 = vunpack.c.h.b16 %v3466
        %v3784 = vunpack.c.l.b16 %v3467
        %v3785 = vunpack.c.h.b16 %v3467
        %v3786 = vunpack.c.l.b16 %v3468
        %v3787 = vunpack.c.h.b16 %v3468
        %v3788 = vunpack.c.l.b16 %v3469
        %v3789 = vunpack.c.h.b16 %v3469
        %v3790 = vunpack.c.l.b16 %v3470
        %v3791 = vunpack.c.h.b16 %v3470
        %v3792 = vunpack.c.l.b16 %v3471
        %v3793 = vunpack.c.h.b16 %v3471
        %v3794 = vunpack.c.l.b16 %v3472
        %v3795 = vunpack.c.h.b16 %v3472
        %v3796 = vunpack.c.l.b16 %v3473
        %v3797 = vunpack.c.h.b16 %v3473
        %v3798 = vunpack.c.l.b16 %v3474
        %v3799 = vunpack.c.h.b16 %v3474
        %v3800 = vunpack.c.l.b16 %v3475
        %v3801 = vunpack.c.h.b16 %v3475
        %v3802 = vunpack.c.l.b16 %v3476
        %v3803 = vunpack.c.h.b16 %v3476
        %v3804 = vunpack.c.l.b16 %v3477
        %v3805 = vunpack.c.h.b16 %v3477
        %v3806 = vunpack.c.l.b16 %v3478
        %v3807 = vunpack.c.h.b16 %v3478
        %v3808 = vunpack.c.l.b16 %v3479
        %v3809 = vunpack.c.h.b16 %v3479
        %v3810 = vunpack.c.l.b16 %v3480
        %v3811 = vunpack.c.h.b16 %v3480
        %v3812 = vunpack.c.l.b16 %v3481
        %v3813 = vunpack.c.h.b16 %v3481
        %v3814 = vunpack.c.l.b16 %v3482
        %v3815 = vunpack.c.h.b16 %v3482
        %v3816 = vunpack.c.l.b16 %v3483
        %v3817 = vunpack.c.h.b16 %v3483
        %v3818 = vunpack.c.l.b16 %v3484
        %v3819 = vunpack.c.h.b16 %v3484
        %v3820 = vunpack.c.l.b16 %v3485
        %v3821 = vunpack.c.h.b16 %v3485
        %v3822 = vunpack.c.l.b16 %v3486
        %v3823 = vunpack.c.h.b16 %v3486
        %v3824 = vunpack.c.l.b16 %v3487
        %v3825 = vunpack.c.h.b16 %v3487
        %v3826 = vunpack.c.l.b16 %v3488
        %v3827 = vunpack.c.h.b16 %v3488
        %v3828 = vunpack.c.l.b16 %v3489
        %v3829 = vunpack.c.h.b16 %v3489
        %v3830 = vunpack.c.l.b16 %v3490
        %v3831 = vunpack.c.h.b16 %v3490
        %v3832 = vunpack.c.l.b16 %v3491
        %v3833 = vunpack.c.h.b16 %v3491
        %v3834 = vunpack.c.l.b16 %v3492
        %v3835 = vunpack.c.h.b16 %v3492
        %v3836 = vunpack.c.l.b16 %v3493
        %v3837 = vunpack.c.h.b16 %v3493
        %v3838 = vunpack.c.l.b16 %v3494
        %v3839 = vunpack.c.h.b16 %v3494
        %v3840 = vunpack.c.l.b16 %v3495
        %v3841 = vunpack.c.h.b16 %v3495
        %v3842 = vunpack.c.l.b16 %v3496
        %v3843 = vunpack.c.h.b16 %v3496
        %v3844 = vunpack.c.l.b16 %v3497
        %v3845 = vunpack.c.h.b16 %v3497
        %v3846 = vunpack.c.l.b16 %v3498
        %v3847 = vunpack.c.h.b16 %v3498
        %v3848 = vunpack.c.l.b16 %v3499
        %v3849 = vunpack.c.h.b16 %v3499
        %v3850 = vunpack.c.l.b16 %v3500
        %v3851 = vunpack.c.h.b16 %v3500
        %v3852 = vunpack.c.l.b16 %v3501
        %v3853 = vunpack.c.h.b16 %v3501
        %v3854 = vunpack.c.l.b16 %v3502
        %v3855 = vunpack.c.h.b16 %v3502
        %v3856 = vunpack.c.l.b16 %v3503
        %v3857 = vunpack.c.h.b16 %v3503
        %v3858 = vunpack.c.l.b16 %v3504
        %v3859 = vunpack.c.h.b16 %v3504
        %v3860 = vunpack.c.l.b16 %v3505
        %v3861 = vunpack.c.h.b16 %v3505
        %v3862 = vunpack.c.l.b16 %v3506
        %v3863 = vunpack.c.h.b16 %v3506
        %v3864 = vunpack.c.l.b16 %v3507
        %v3865 = vunpack.c.h.b16 %v3507
        %v3866 = vunpack.c.l.b16 %v3508
        %v3867 = vunpack.c.h.b16 %v3508
        %v3868 = vunpack.c.l.b16 %v3509
        %v3869 = vunpack.c.h.b16 %v3509
        %v3870 = vunpack.c.l.b16 %v3510
        %v3871 = vunpack.c.h.b16 %v3510
        %v3872 = vunpack.c.l.b16 %v3511
        %v3873 = vunpack.c.h.b16 %v3511
        %v3874 = vunpack.c.l.b16 %v3512
        %v3875 = vunpack.c.h.b16 %v3512
        %v3876 = vunpack.c.l.b16 %v3513
        %v3877 = vunpack.c.h.b16 %v3513
        %v3878 = vunpack.c.l.b16 %v3514
        %v3879 = vunpack.c.h.b16 %v3514
        %v3880 = vunpack.c.l.b16 %v3515
        %v3881 = vunpack.c.h.b16 %v3515
        %v3882 = vunpack.c.l.b16 %v3516
        %v3883 = vunpack.c.h.b16 %v3516
        %v3884 = vunpack.c.l.b16 %v3517
        %v3885 = vunpack.c.h.b16 %v3517
        %v3886 = vunpack.c.l.b16 %v3518
        %v3887 = vunpack.c.h.b16 %v3518
        %v3888 = vunpack.c.l.b16 %v3519
        %v3889 = vunpack.c.h.b16 %v3519
        %v3890 = vunpack.c.l.b16 %v3520
        %v3891 = vunpack.c.h.b16 %v3520
        %v3892 = vunpack.c.l.b16 %v3521
        %v3893 = vunpack.c.h.b16 %v3521
        %v3894 = vunpack.c.l.b16 %v3522
        %v3895 = vunpack.c.h.b16 %v3522
        %v3896 = vunpack.c.l.b16 %v3523
        %v3897 = vunpack.c.h.b16 %v3523
        %v3898 = vunpack.c.l.b16 %v3524
        %v3899 = vunpack.c.h.b16 %v3524
        %v3900 = vunpack.c.l.b16 %v3525
        %v3901 = vunpack.c.h.b16 %v3525
        %v3902 = vunpack.c.l.b16 %v3526
        %v3903 = vunpack.c.h.b16 %v3526
        %v3904 = vunpack.c.l.b16 %v3527
        %v3905 = vunpack.c.h.b16 %v3527
        %v3906 = vunpack.c.l.b16 %v3528
        %v3907 = vunpack.c.h.b16 %v3528
        %v3908 = vunpack.c.l.b16 %v3529
        %v3909 = vunpack.c.h.b16 %v3529
        %v3910 = vunpack.c.l.b16 %v3530
        %v3911 = vunpack.c.h.b16 %v3530
        %v3912 = vunpack.c.l.b16 %v3531
        %v3913 = vunpack.c.h.b16 %v3531
        %v3914 = vunpack.c.l.b16 %v3532
        %v3915 = vunpack.c.h.b16 %v3532
        %v3916 = vunpack.c.l.b16 %v3533
        %v3917 = vunpack.c.h.b16 %v3533
        %v3918 = vpack.c.b16 %v3662, %v3662
        %v3919 = vpack.c.b16 %v3663, %v3663
        %v3920 = vpack.c.b16 %v3664, %v3664
        %v3921 = vpack.c.b16 %v3665, %v3665
        %v3922 = vpack.c.b16 %v3666, %v3666
        %v3923 = vpack.c.b16 %v3667, %v3667
        %v3924 = vpack.c.b16 %v3668, %v3668
        %v3925 = vpack.c.b16 %v3669, %v3669
        %v3926 = vpack.c.b16 %v3670, %v3670
        %v3927 = vpack.c.b16 %v3671, %v3671
        %v3928 = vpack.c.b16 %v3672, %v3672
        %v3929 = vpack.c.b16 %v3673, %v3673
        %v3930 = vpack.c.b16 %v3674, %v3674
        %v3931 = vpack.c.b16 %v3675, %v3675
        %v3932 = vpack.c.b16 %v3676, %v3676
        %v3933 = vpack.c.b16 %v3677, %v3677
        %v3934 = vpack.c.b16 %v3678, %v3678
        %v3935 = vpack.c.b16 %v3679, %v3679
        %v3936 = vpack.c.b16 %v3680, %v3680
        %v3937 = vpack.c.b16 %v3681, %v3681
        %v3938 = vpack.c.b16 %v3682, %v3682
        %v3939 = vpack.c.b16 %v3683, %v3683
        %v3940 = vpack.c.b16 %v3684, %v3684
        %v3941 = vpack.c.b16 %v3685, %v3685
        %v3942 = vpack.c.b16 %v3686, %v3686
        %v3943 = vpack.c.b16 %v3687, %v3687
        %v3944 = vpack.c.b16 %v3688, %v3688
        %v3945 = vpack.c.b16 %v3689, %v3689
        %v3946 = vpack.c.b16 %v3690, %v3690
        %v3947 = vpack.c.b16 %v3691, %v3691
        %v3948 = vpack.c.b16 %v3692, %v3692
        %v3949 = vpack.c.b16 %v3693, %v3693
        %v3950 = vpack.c.b16 %v3694, %v3694
        %v3951 = vpack.c.b16 %v3695, %v3695
        %v3952 = vpack.c.b16 %v3696, %v3696
        %v3953 = vpack.c.b16 %v3697, %v3697
        %v3954 = vpack.c.b16 %v3698, %v3698
        %v3955 = vpack.c.b16 %v3699, %v3699
        %v3956 = vpack.c.b16 %v3700, %v3700
        %v3957 = vpack.c.b16 %v3701, %v3701
        %v3958 = vpack.c.b16 %v3702, %v3702
        %v3959 = vpack.c.b16 %v3703, %v3703
        %v3960 = vpack.c.b16 %v3704, %v3704
        %v3961 = vpack.c.b16 %v3705, %v3705
        %v3962 = vpack.c.b16 %v3706, %v3706
        %v3963 = vpack.c.b16 %v3707, %v3707
        %v3964 = vpack.c.b16 %v3708, %v3708
        %v3965 = vpack.c.b16 %v3709, %v3709
        %v3966 = vpack.c.b16 %v3710, %v3710
        %v3967 = vpack.c.b16 %v3711, %v3711
        %v3968 = vpack.c.b16 %v3712, %v3712
        %v3969 = vpack.c.b16 %v3713, %v3713
        %v3970 = vpack.c.b16 %v3714, %v3714
        %v3971 = vpack.c.b16 %v3715, %v3715
        %v3972 = vpack.c.b16 %v3716, %v3716
        %v3973 = vpack.c.b16 %v3717, %v3717
        %v3974 = vpack.c.b16 %v3718, %v3718
        %v3975 = vpack.c.b16 %v3719, %v3719
        %v3976 = vpack.c.b16 %v3720, %v3720
        %v3977 = vpack.c.b16 %v3721, %v3721
        %v3978 = vpack.c.b16 %v3722, %v3722
        %v3979 = vpack.c.b16 %v3723, %v3723
        %v3980 = vpack.c.b16 %v3724, %v3724
        %v3981 = vpack.c.b16 %v3725, %v3725
        %v3982 = vpack.c.b16 %v3726, %v3726
        %v3983 = vpack.c.b16 %v3727, %v3727
        %v3984 = vpack.c.b16 %v3728, %v3728
        %v3985 = vpack.c.b16 %v3729, %v3729
        %v3986 = vpack.c.b16 %v3730, %v3730
        %v3987 = vpack.c.b16 %v3731, %v3731
        %v3988 = vpack.c.b16 %v3732, %v3732
        %v3989 = vpack.c.b16 %v3733, %v3733
        %v3990 = vpack.c.b16 %v3734, %v3734
        %v3991 = vpack.c.b16 %v3735, %v3735
        %v3992 = vpack.c.b16 %v3736, %v3736
        %v3993 = vpack.c.b16 %v3737, %v3737
        %v3994 = vpack.c.b16 %v3738, %v3738
        %v3995 = vpack.c.b16 %v3739, %v3739
        %v3996 = vpack.c.b16 %v3740, %v3740
        %v3997 = vpack.c.b16 %v3741, %v3741
        %v3998 = vpack.c.b16 %v3742, %v3742
        %v3999 = vpack.c.b16 %v3743, %v3743
        %v4000 = vpack.c.b16 %v3744, %v3744
        %v4001 = vpack.c.b16 %v3745, %v3745
        %v4002 = vpack.c.b16 %v3746, %v3746
        %v4003 = vpack.c.b16 %v3747, %v3747
        %v4004 = vpack.c.b16 %v3748, %v3748
        %v4005 = vpack.c.b16 %v3749, %v3749
        %v4006 = vpack.c.b16 %v3750, %v3750
        %v4007 = vpack.c.b16 %v3751, %v3751
        %v4008 = vpack.c.b16 %v3752, %v3752
        %v4009 = vpack.c.b16 %v3753, %v3753
        %v4010 = vpack.c.b16 %v3754, %v3754
        %v4011 = vpack.c.b16 %v3755, %v3755
        %v4012 = vpack.c.b16 %v3756, %v3756
        %v4013 = vpack.c.b16 %v3757, %v3757
        %v4014 = vpack.c.b16 %v3758, %v3758
        %v4015 = vpack.c.b16 %v3759, %v3759
        %v4016 = vpack.c.b16 %v3760, %v3760
        %v4017 = vpack.c.b16 %v3761, %v3761
        %v4018 = vpack.c.b16 %v3762, %v3762
        %v4019 = vpack.c.b16 %v3763, %v3763
        %v4020 = vpack.c.b16 %v3764, %v3764
        %v4021 = vpack.c.b16 %v3765, %v3765
        %v4022 = vpack.c.b16 %v3766, %v3766
        %v4023 = vpack.c.b16 %v3767, %v3767
        %v4024 = vpack.c.b16 %v3768, %v3768
        %v4025 = vpack.c.b16 %v3769, %v3769
        %v4026 = vpack.c.b16 %v3770, %v3770
        %v4027 = vpack.c.b16 %v3771, %v3771
        %v4028 = vpack.c.b16 %v3772, %v3772
        %v4029 = vpack.c.b16 %v3773, %v3773
        %v4030 = vpack.c.b16 %v3774, %v3774
        %v4031 = vpack.c.b16 %v3775, %v3775
        %v4032 = vpack.c.b16 %v3776, %v3776
        %v4033 = vpack.c.b16 %v3777, %v3777
        %v4034 = vpack.c.b16 %v3778, %v3778
        %v4035 = vpack.c.b16 %v3779, %v3779
        %v4036 = vpack.c.b16 %v3780, %v3780
        %v4037 = vpack.c.b16 %v3781, %v3781
        %v4038 = vpack.c.b16 %v3782, %v3782
        %v4039 = vpack.c.b16 %v3783, %v3783
        %v4040 = vpack.c.b16 %v3784, %v3784
        %v4041 = vpack.c.b16 %v3785, %v3785
        %v4042 = vpack.c.b16 %v3786, %v3786
        %v4043 = vpack.c.b16 %v3787, %v3787
        %v4044 = vpack.c.b16 %v3788, %v3788
        %v4045 = vpack.c.b16 %v3789, %v3789
        %v4046 = vpack.c.b16 %v3790, %v3790
        %v4047 = vpack.c.b16 %v3791, %v3791
        %v4048 = vpack.c.b16 %v3792, %v3792
        %v4049 = vpack.c.b16 %v3793, %v3793
        %v4050 = vpack.c.b16 %v3794, %v3794
        %v4051 = vpack.c.b16 %v3795, %v3795
        %v4052 = vpack.c.b16 %v3796, %v3796
        %v4053 = vpack.c.b16 %v3797, %v3797
        %v4054 = vpack.c.b16 %v3798, %v3798
        %v4055 = vpack.c.b16 %v3799, %v3799
        %v4056 = vpack.c.b16 %v3800, %v3800
        %v4057 = vpack.c.b16 %v3801, %v3801
        %v4058 = vpack.c.b16 %v3802, %v3802
        %v4059 = vpack.c.b16 %v3803, %v3803
        %v4060 = vpack.c.b16 %v3804, %v3804
        %v4061 = vpack.c.b16 %v3805, %v3805
        %v4062 = vpack.c.b16 %v3806, %v3806
        %v4063 = vpack.c.b16 %v3807, %v3807
        %v4064 = vpack.c.b16 %v3808, %v3808
        %v4065 = vpack.c.b16 %v3809, %v3809
        %v4066 = vpack.c.b16 %v3810, %v3810
        %v4067 = vpack.c.b16 %v3811, %v3811
        %v4068 = vpack.c.b16 %v3812, %v3812
        %v4069 = vpack.c.b16 %v3813, %v3813
        %v4070 = vpack.c.b16 %v3814, %v3814
        %v4071 = vpack.c.b16 %v3815, %v3815
        %v4072 = vpack.c.b16 %v3816, %v3816
        %v4073 = vpack.c.b16 %v3817, %v3817
        %v4074 = vpack.c.b16 %v3818, %v3818
        %v4075 = vpack.c.b16 %v3819, %v3819
        %v4076 = vpack.c.b16 %v3820, %v3820
        %v4077 = vpack.c.b16 %v3821, %v3821
        %v4078 = vpack.c.b16 %v3822, %v3822
        %v4079 = vpack.c.b16 %v3823, %v3823
        %v4080 = vpack.c.b16 %v3824, %v3824
        %v4081 = vpack.c.b16 %v3825, %v3825
        %v4082 = vpack.c.b16 %v3826, %v3826
        %v4083 = vpack.c.b16 %v3827, %v3827
        %v4084 = vpack.c.b16 %v3828, %v3828
        %v4085 = vpack.c.b16 %v3829, %v3829
        %v4086 = vpack.c.b16 %v3830, %v3830
        %v4087 = vpack.c.b16 %v3831, %v3831
        %v4088 = vpack.c.b16 %v3832, %v3832
        %v4089 = vpack.c.b16 %v3833, %v3833
        %v4090 = vpack.c.b16 %v3834, %v3834
        %v4091 = vpack.c.b16 %v3835, %v3835
        %v4092 = vpack.c.b16 %v3836, %v3836
        %v4093 = vpack.c.b16 %v3837, %v3837
        %v4094 = vpack.c.b16 %v3838, %v3838
        %v4095 = vpack.c.b16 %v3839, %v3839
        %v4096 = vpack.c.b16 %v3840, %v3840
        %v4097 = vpack.c.b16 %v3841, %v3841
        %v4098 = vpack.c.b16 %v3842, %v3842
        %v4099 = vpack.c.b16 %v3843, %v3843
        %v4100 = vpack.c.b16 %v3844, %v3844
        %v4101 = vpack.c.b16 %v3845, %v3845
        %v4102 = vpack.c.b16 %v3846, %v3846
        %v4103 = vpack.c.b16 %v3847, %v3847
        %v4104 = vpack.c.b16 %v3848, %v3848
        %v4105 = vpack.c.b16 %v3849, %v3849
        %v4106 = vpack.c.b16 %v3850, %v3850
        %v4107 = vpack.c.b16 %v3851, %v3851
        %v4108 = vpack.c.b16 %v3852, %v3852
        %v4109 = vpack.c.b16 %v3853, %v3853
        %v4110 = vpack.c.b16 %v3854, %v3854
        %v4111 = vpack.c.b16 %v3855, %v3855
        %v4112 = vpack.c.b16 %v3856, %v3856
        %v4113 = vpack.c.b16 %v3857, %v3857
        %v4114 = vpack.c.b16 %v3858, %v3858
        %v4115 = vpack.c.b16 %v3859, %v3859
        %v4116 = vpack.c.b16 %v3860, %v3860
        %v4117 = vpack.c.b16 %v3861, %v3861
        %v4118 = vpack.c.b16 %v3862, %v3862
        %v4119 = vpack.c.b16 %v3863, %v3863
        %v4120 = vpack.c.b16 %v3864, %v3864
        %v4121 = vpack.c.b16 %v3865, %v3865
        %v4122 = vpack.c.b16 %v3866, %v3866
        %v4123 = vpack.c.b16 %v3867, %v3867
        %v4124 = vpack.c.b16 %v3868, %v3868
        %v4125 = vpack.c.b16 %v3869, %v3869
        %v4126 = vpack.c.b16 %v3870, %v3870
        %v4127 = vpack.c.b16 %v3871, %v3871
        %v4128 = vpack.c.b16 %v3872, %v3872
        %v4129 = vpack.c.b16 %v3873, %v3873
        %v4130 = vpack.c.b16 %v3874, %v3874
        %v4131 = vpack.c.b16 %v3875, %v3875
        %v4132 = vpack.c.b16 %v3876, %v3876
        %v4133 = vpack.c.b16 %v3877, %v3877
        %v4134 = vpack.c.b16 %v3878, %v3878
        %v4135 = vpack.c.b16 %v3879, %v3879
        %v4136 = vpack.c.b16 %v3880, %v3880
        %v4137 = vpack.c.b16 %v3881, %v3881
        %v4138 = vpack.c.b16 %v3882, %v3882
        %v4139 = vpack.c.b16 %v3883, %v3883
        %v4140 = vpack.c.b16 %v3884, %v3884
        %v4141 = vpack.c.b16 %v3885, %v3885
        %v4142 = vpack.c.b16 %v3886, %v3886
        %v4143 = vpack.c.b16 %v3887, %v3887
        %v4144 = vpack.c.b16 %v3888, %v3888
        %v4145 = vpack.c.b16 %v3889, %v3889
        %v4146 = vpack.c.b16 %v3890, %v3890
        %v4147 = vpack.c.b16 %v3891, %v3891
        %v4148 = vpack.c.b16 %v3892, %v3892
        %v4149 = vpack.c.b16 %v3893, %v3893
        %v4150 = vpack.c.b16 %v3894, %v3894
        %v4151 = vpack.c.b16 %v3895, %v3895
        %v4152 = vpack.c.b16 %v3896, %v3896
        %v4153 = vpack.c.b16 %v3897, %v3897
        %v4154 = vpack.c.b16 %v3898, %v3898
        %v4155 = vpack.c.b16 %v3899, %v3899
        %v4156 = vpack.c.b16 %v3900, %v3900
        %v4157 = vpack.c.b16 %v3901, %v3901
        %v4158 = vpack.c.b16 %v3902, %v3902
        %v4159 = vpack.c.b16 %v3903, %v3903
        %v4160 = vpack.c.b16 %v3904, %v3904
        %v4161 = vpack.c.b16 %v3905, %v3905
        %v4162 = vpack.c.b16 %v3906, %v3906
        %v4163 = vpack.c.b16 %v3907, %v3907
        %v4164 = vpack.c.b16 %v3908, %v3908
        %v4165 = vpack.c.b16 %v3909, %v3909
        %v4166 = vpack.c.b16 %v3910, %v3910
        %v4167 = vpack.c.b16 %v3911, %v3911
        %v4168 = vpack.c.b16 %v3912, %v3912
        %v4169 = vpack.c.b16 %v3913, %v3913
        %v4170 = vpack.c.b16 %v3914, %v3914
        %v4171 = vpack.c.b16 %v3915, %v3915
        %v4172 = vpack.c.b16 %v3916, %v3916
        %v4173 = vpack.c.b16 %v3917, %v3917
        %4430 = vst [vmem:[%s4] sm:$0xf] %v3918
        %4431 = vst [vmem:[%s4 + $0x4] sm:$0xf] %v3919
        %4432 = vst [vmem:[%s4 + $0x8] sm:$0xf] %v3920
        %4433 = vst [vmem:[%s4 + $0xc] sm:$0xf] %v3921
        %4434 = vst [vmem:[%s4 + $0x10] sm:$0xf] %v3922
        %4435 = vst [vmem:[%s4 + $0x14] sm:$0xf] %v3923
        %4436 = vst [vmem:[%s4 + $0x18] sm:$0xf] %v3924
        %4437 = vst [vmem:[%s4 + $0x1c] sm:$0xf] %v3925
        %4438 = vst [vmem:[%s4 + $0x20] sm:$0xf] %v3926
        %4439 = vst [vmem:[%s4 + $0x24] sm:$0xf] %v3927
        %4440 = vst [vmem:[%s4 + $0x28] sm:$0xf] %v3928
        %4441 = vst [vmem:[%s4 + $0x2c] sm:$0xf] %v3929
        %4442 = vst [vmem:[%s4 + $0x30] sm:$0xf] %v3930
        %4443 = vst [vmem:[%s4 + $0x34] sm:$0xf] %v3931
        %4444 = vst [vmem:[%s4 + $0x38] sm:$0xf] %v3932
        %4445 = vst [vmem:[%s4 + $0x3c] sm:$0xf] %v3933
        %4446 = vst [vmem:[%s4 + $0x40] sm:$0xf] %v3934
        %4447 = vst [vmem:[%s4 + $0x44] sm:$0xf] %v3935
        %4448 = vst [vmem:[%s4 + $0x48] sm:$0xf] %v3936
        %4449 = vst [vmem:[%s4 + $0x4c] sm:$0xf] %v3937
        %4450 = vst [vmem:[%s4 + $0x50] sm:$0xf] %v3938
        %4451 = vst [vmem:[%s4 + $0x54] sm:$0xf] %v3939
        %4452 = vst [vmem:[%s4 + $0x58] sm:$0xf] %v3940
        %4453 = vst [vmem:[%s4 + $0x5c] sm:$0xf] %v3941
        %4454 = vst [vmem:[%s4 + $0x60] sm:$0xf] %v3942
        %4455 = vst [vmem:[%s4 + $0x64] sm:$0xf] %v3943
        %4456 = vst [vmem:[%s4 + $0x68] sm:$0xf] %v3944
        %4457 = vst [vmem:[%s4 + $0x6c] sm:$0xf] %v3945
        %4458 = vst [vmem:[%s4 + $0x70] sm:$0xf] %v3946
        %4459 = vst [vmem:[%s4 + $0x74] sm:$0xf] %v3947
        %4460 = vst [vmem:[%s4 + $0x78] sm:$0xf] %v3948
        %4461 = vst [vmem:[%s4 + $0x7c] sm:$0xf] %v3949
        %4462 = vst [vmem:[%s4 + $0x80] sm:$0xf] %v3950
        %4463 = vst [vmem:[%s4 + $0x84] sm:$0xf] %v3951
        %4464 = vst [vmem:[%s4 + $0x88] sm:$0xf] %v3952
        %4465 = vst [vmem:[%s4 + $0x8c] sm:$0xf] %v3953
        %4466 = vst [vmem:[%s4 + $0x90] sm:$0xf] %v3954
        %4467 = vst [vmem:[%s4 + $0x94] sm:$0xf] %v3955
        %4468 = vst [vmem:[%s4 + $0x98] sm:$0xf] %v3956
        %4469 = vst [vmem:[%s4 + $0x9c] sm:$0xf] %v3957
        %4470 = vst [vmem:[%s4 + $0xa0] sm:$0xf] %v3958
        %4471 = vst [vmem:[%s4 + $0xa4] sm:$0xf] %v3959
        %4472 = vst [vmem:[%s4 + $0xa8] sm:$0xf] %v3960
        %4473 = vst [vmem:[%s4 + $0xac] sm:$0xf] %v3961
        %4474 = vst [vmem:[%s4 + $0xb0] sm:$0xf] %v3962
        %4475 = vst [vmem:[%s4 + $0xb4] sm:$0xf] %v3963
        %4476 = vst [vmem:[%s4 + $0xb8] sm:$0xf] %v3964
        %4477 = vst [vmem:[%s4 + $0xbc] sm:$0xf] %v3965
        %4478 = vst [vmem:[%s4 + $0xc0] sm:$0xf] %v3966
        %4479 = vst [vmem:[%s4 + $0xc4] sm:$0xf] %v3967
        %4480 = vst [vmem:[%s4 + $0xc8] sm:$0xf] %v3968
        %4481 = vst [vmem:[%s4 + $0xcc] sm:$0xf] %v3969
        %4482 = vst [vmem:[%s4 + $0xd0] sm:$0xf] %v3970
        %4483 = vst [vmem:[%s4 + $0xd4] sm:$0xf] %v3971
        %4484 = vst [vmem:[%s4 + $0xd8] sm:$0xf] %v3972
        %4485 = vst [vmem:[%s4 + $0xdc] sm:$0xf] %v3973
        %4486 = vst [vmem:[%s4 + $0xe0] sm:$0xf] %v3974
        %4487 = vst [vmem:[%s4 + $0xe4] sm:$0xf] %v3975
        %4488 = vst [vmem:[%s4 + $0xe8] sm:$0xf] %v3976
        %4489 = vst [vmem:[%s4 + $0xec] sm:$0xf] %v3977
        %4490 = vst [vmem:[%s4 + $0xf0] sm:$0xf] %v3978
        %4491 = vst [vmem:[%s4 + $0xf4] sm:$0xf] %v3979
        %4492 = vst [vmem:[%s4 + $0xf8] sm:$0xf] %v3980
        %4493 = vst [vmem:[%s4 + $0xfc] sm:$0xf] %v3981
        %4494 = vst [vmem:[%s4 + $0x100] sm:$0xf] %v3982
        %4495 = vst [vmem:[%s4 + $0x104] sm:$0xf] %v3983
        %4496 = vst [vmem:[%s4 + $0x108] sm:$0xf] %v3984
        %4497 = vst [vmem:[%s4 + $0x10c] sm:$0xf] %v3985
        %4498 = vst [vmem:[%s4 + $0x110] sm:$0xf] %v3986
        %4499 = vst [vmem:[%s4 + $0x114] sm:$0xf] %v3987
        %4500 = vst [vmem:[%s4 + $0x118] sm:$0xf] %v3988
        %4501 = vst [vmem:[%s4 + $0x11c] sm:$0xf] %v3989
        %4502 = vst [vmem:[%s4 + $0x120] sm:$0xf] %v3990
        %4503 = vst [vmem:[%s4 + $0x124] sm:$0xf] %v3991
        %4504 = vst [vmem:[%s4 + $0x128] sm:$0xf] %v3992
        %4505 = vst [vmem:[%s4 + $0x12c] sm:$0xf] %v3993
        %4506 = vst [vmem:[%s4 + $0x130] sm:$0xf] %v3994
        %4507 = vst [vmem:[%s4 + $0x134] sm:$0xf] %v3995
        %4508 = vst [vmem:[%s4 + $0x138] sm:$0xf] %v3996
        %4509 = vst [vmem:[%s4 + $0x13c] sm:$0xf] %v3997
        %4510 = vst [vmem:[%s4 + $0x140] sm:$0xf] %v3998
        %4511 = vst [vmem:[%s4 + $0x144] sm:$0xf] %v3999
        %4512 = vst [vmem:[%s4 + $0x148] sm:$0xf] %v4000
        %4513 = vst [vmem:[%s4 + $0x14c] sm:$0xf] %v4001
        %4514 = vst [vmem:[%s4 + $0x150] sm:$0xf] %v4002
        %4515 = vst [vmem:[%s4 + $0x154] sm:$0xf] %v4003
        %4516 = vst [vmem:[%s4 + $0x158] sm:$0xf] %v4004
        %4517 = vst [vmem:[%s4 + $0x15c] sm:$0xf] %v4005
        %4518 = vst [vmem:[%s4 + $0x160] sm:$0xf] %v4006
        %4519 = vst [vmem:[%s4 + $0x164] sm:$0xf] %v4007
        %4520 = vst [vmem:[%s4 + $0x168] sm:$0xf] %v4008
        %4521 = vst [vmem:[%s4 + $0x16c] sm:$0xf] %v4009
        %4522 = vst [vmem:[%s4 + $0x170] sm:$0xf] %v4010
        %4523 = vst [vmem:[%s4 + $0x174] sm:$0xf] %v4011
        %4524 = vst [vmem:[%s4 + $0x178] sm:$0xf] %v4012
        %4525 = vst [vmem:[%s4 + $0x17c] sm:$0xf] %v4013
        %4526 = vst [vmem:[%s4 + $0x180] sm:$0xf] %v4014
        %4527 = vst [vmem:[%s4 + $0x184] sm:$0xf] %v4015
        %4528 = vst [vmem:[%s4 + $0x188] sm:$0xf] %v4016
        %4529 = vst [vmem:[%s4 + $0x18c] sm:$0xf] %v4017
        %4530 = vst [vmem:[%s4 + $0x190] sm:$0xf] %v4018
        %4531 = vst [vmem:[%s4 + $0x194] sm:$0xf] %v4019
        %4532 = vst [vmem:[%s4 + $0x198] sm:$0xf] %v4020
        %4533 = vst [vmem:[%s4 + $0x19c] sm:$0xf] %v4021
        %4534 = vst [vmem:[%s4 + $0x1a0] sm:$0xf] %v4022
        %4535 = vst [vmem:[%s4 + $0x1a4] sm:$0xf] %v4023
        %4536 = vst [vmem:[%s4 + $0x1a8] sm:$0xf] %v4024
        %4537 = vst [vmem:[%s4 + $0x1ac] sm:$0xf] %v4025
        %4538 = vst [vmem:[%s4 + $0x1b0] sm:$0xf] %v4026
        %4539 = vst [vmem:[%s4 + $0x1b4] sm:$0xf] %v4027
        %4540 = vst [vmem:[%s4 + $0x1b8] sm:$0xf] %v4028
        %4541 = vst [vmem:[%s4 + $0x1bc] sm:$0xf] %v4029
        %4542 = vst [vmem:[%s4 + $0x1c0] sm:$0xf] %v4030
        %4543 = vst [vmem:[%s4 + $0x1c4] sm:$0xf] %v4031
        %4544 = vst [vmem:[%s4 + $0x1c8] sm:$0xf] %v4032
        %4545 = vst [vmem:[%s4 + $0x1cc] sm:$0xf] %v4033
        %4546 = vst [vmem:[%s4 + $0x1d0] sm:$0xf] %v4034
        %4547 = vst [vmem:[%s4 + $0x1d4] sm:$0xf] %v4035
        %4548 = vst [vmem:[%s4 + $0x1d8] sm:$0xf] %v4036
        %4549 = vst [vmem:[%s4 + $0x1dc] sm:$0xf] %v4037
        %4550 = vst [vmem:[%s4 + $0x1e0] sm:$0xf] %v4038
        %4551 = vst [vmem:[%s4 + $0x1e4] sm:$0xf] %v4039
        %4552 = vst [vmem:[%s4 + $0x1e8] sm:$0xf] %v4040
        %4553 = vst [vmem:[%s4 + $0x1ec] sm:$0xf] %v4041
        %4554 = vst [vmem:[%s4 + $0x1f0] sm:$0xf] %v4042
        %4555 = vst [vmem:[%s4 + $0x1f4] sm:$0xf] %v4043
        %4556 = vst [vmem:[%s4 + $0x1f8] sm:$0xf] %v4044
        %4557 = vst [vmem:[%s4 + $0x1fc] sm:$0xf] %v4045
        %4558 = vst [vmem:[%s4 + $0x200] sm:$0xf] %v4046
        %4559 = vst [vmem:[%s4 + $0x204] sm:$0xf] %v4047
        %4560 = vst [vmem:[%s4 + $0x208] sm:$0xf] %v4048
        %4561 = vst [vmem:[%s4 + $0x20c] sm:$0xf] %v4049
        %4562 = vst [vmem:[%s4 + $0x210] sm:$0xf] %v4050
        %4563 = vst [vmem:[%s4 + $0x214] sm:$0xf] %v4051
        %4564 = vst [vmem:[%s4 + $0x218] sm:$0xf] %v4052
        %4565 = vst [vmem:[%s4 + $0x21c] sm:$0xf] %v4053
        %4566 = vst [vmem:[%s4 + $0x220] sm:$0xf] %v4054
        %4567 = vst [vmem:[%s4 + $0x224] sm:$0xf] %v4055
        %4568 = vst [vmem:[%s4 + $0x228] sm:$0xf] %v4056
        %4569 = vst [vmem:[%s4 + $0x22c] sm:$0xf] %v4057
        %4570 = vst [vmem:[%s4 + $0x230] sm:$0xf] %v4058
        %4571 = vst [vmem:[%s4 + $0x234] sm:$0xf] %v4059
        %4572 = vst [vmem:[%s4 + $0x238] sm:$0xf] %v4060
        %4573 = vst [vmem:[%s4 + $0x23c] sm:$0xf] %v4061
        %4574 = vst [vmem:[%s4 + $0x240] sm:$0xf] %v4062
        %4575 = vst [vmem:[%s4 + $0x244] sm:$0xf] %v4063
        %4576 = vst [vmem:[%s4 + $0x248] sm:$0xf] %v4064
        %4577 = vst [vmem:[%s4 + $0x24c] sm:$0xf] %v4065
        %4578 = vst [vmem:[%s4 + $0x250] sm:$0xf] %v4066
        %4579 = vst [vmem:[%s4 + $0x254] sm:$0xf] %v4067
        %4580 = vst [vmem:[%s4 + $0x258] sm:$0xf] %v4068
        %4581 = vst [vmem:[%s4 + $0x25c] sm:$0xf] %v4069
        %4582 = vst [vmem:[%s4 + $0x260] sm:$0xf] %v4070
        %4583 = vst [vmem:[%s4 + $0x264] sm:$0xf] %v4071
        %4584 = vst [vmem:[%s4 + $0x268] sm:$0xf] %v4072
        %4585 = vst [vmem:[%s4 + $0x26c] sm:$0xf] %v4073
        %4586 = vst [vmem:[%s4 + $0x270] sm:$0xf] %v4074
        %4587 = vst [vmem:[%s4 + $0x274] sm:$0xf] %v4075
        %4588 = vst [vmem:[%s4 + $0x278] sm:$0xf] %v4076
        %4589 = vst [vmem:[%s4 + $0x27c] sm:$0xf] %v4077
        %4590 = vst [vmem:[%s4 + $0x280] sm:$0xf] %v4078
        %4591 = vst [vmem:[%s4 + $0x284] sm:$0xf] %v4079
        %4592 = vst [vmem:[%s4 + $0x288] sm:$0xf] %v4080
        %4593 = vst [vmem:[%s4 + $0x28c] sm:$0xf] %v4081
        %4594 = vst [vmem:[%s4 + $0x290] sm:$0xf] %v4082
        %4595 = vst [vmem:[%s4 + $0x294] sm:$0xf] %v4083
        %4596 = vst [vmem:[%s4 + $0x298] sm:$0xf] %v4084
        %4597 = vst [vmem:[%s4 + $0x29c] sm:$0xf] %v4085
        %4598 = vst [vmem:[%s4 + $0x2a0] sm:$0xf] %v4086
        %4599 = vst [vmem:[%s4 + $0x2a4] sm:$0xf] %v4087
        %4600 = vst [vmem:[%s4 + $0x2a8] sm:$0xf] %v4088
        %4601 = vst [vmem:[%s4 + $0x2ac] sm:$0xf] %v4089
        %4602 = vst [vmem:[%s4 + $0x2b0] sm:$0xf] %v4090
        %4603 = vst [vmem:[%s4 + $0x2b4] sm:$0xf] %v4091
        %4604 = vst [vmem:[%s4 + $0x2b8] sm:$0xf] %v4092
        %4605 = vst [vmem:[%s4 + $0x2bc] sm:$0xf] %v4093
        %4606 = vst [vmem:[%s4 + $0x2c0] sm:$0xf] %v4094
        %4607 = vst [vmem:[%s4 + $0x2c4] sm:$0xf] %v4095
        %4608 = vst [vmem:[%s4 + $0x2c8] sm:$0xf] %v4096
        %4609 = vst [vmem:[%s4 + $0x2cc] sm:$0xf] %v4097
        %4610 = vst [vmem:[%s4 + $0x2d0] sm:$0xf] %v4098
        %4611 = vst [vmem:[%s4 + $0x2d4] sm:$0xf] %v4099
        %4612 = vst [vmem:[%s4 + $0x2d8] sm:$0xf] %v4100
        %4613 = vst [vmem:[%s4 + $0x2dc] sm:$0xf] %v4101
        %4614 = vst [vmem:[%s4 + $0x2e0] sm:$0xf] %v4102
        %4615 = vst [vmem:[%s4 + $0x2e4] sm:$0xf] %v4103
        %4616 = vst [vmem:[%s4 + $0x2e8] sm:$0xf] %v4104
        %4617 = vst [vmem:[%s4 + $0x2ec] sm:$0xf] %v4105
        %4618 = vst [vmem:[%s4 + $0x2f0] sm:$0xf] %v4106
        %4619 = vst [vmem:[%s4 + $0x2f4] sm:$0xf] %v4107
        %4620 = vst [vmem:[%s4 + $0x2f8] sm:$0xf] %v4108
        %4621 = vst [vmem:[%s4 + $0x2fc] sm:$0xf] %v4109
        %4622 = vst [vmem:[%s4 + $0x300] sm:$0xf] %v4110
        %4623 = vst [vmem:[%s4 + $0x304] sm:$0xf] %v4111
        %4624 = vst [vmem:[%s4 + $0x308] sm:$0xf] %v4112
        %4625 = vst [vmem:[%s4 + $0x30c] sm:$0xf] %v4113
        %4626 = vst [vmem:[%s4 + $0x310] sm:$0xf] %v4114
        %4627 = vst [vmem:[%s4 + $0x314] sm:$0xf] %v4115
        %4628 = vst [vmem:[%s4 + $0x318] sm:$0xf] %v4116
        %4629 = vst [vmem:[%s4 + $0x31c] sm:$0xf] %v4117
        %4630 = vst [vmem:[%s4 + $0x320] sm:$0xf] %v4118
        %4631 = vst [vmem:[%s4 + $0x324] sm:$0xf] %v4119
        %4632 = vst [vmem:[%s4 + $0x328] sm:$0xf] %v4120
        %4633 = vst [vmem:[%s4 + $0x32c] sm:$0xf] %v4121
        %4634 = vst [vmem:[%s4 + $0x330] sm:$0xf] %v4122
        %4635 = vst [vmem:[%s4 + $0x334] sm:$0xf] %v4123
        %4636 = vst [vmem:[%s4 + $0x338] sm:$0xf] %v4124
        %4637 = vst [vmem:[%s4 + $0x33c] sm:$0xf] %v4125
        %4638 = vst [vmem:[%s4 + $0x340] sm:$0xf] %v4126
        %4639 = vst [vmem:[%s4 + $0x344] sm:$0xf] %v4127
        %4640 = vst [vmem:[%s4 + $0x348] sm:$0xf] %v4128
        %4641 = vst [vmem:[%s4 + $0x34c] sm:$0xf] %v4129
        %4642 = vst [vmem:[%s4 + $0x350] sm:$0xf] %v4130
        %4643 = vst [vmem:[%s4 + $0x354] sm:$0xf] %v4131
        %4644 = vst [vmem:[%s4 + $0x358] sm:$0xf] %v4132
        %4645 = vst [vmem:[%s4 + $0x35c] sm:$0xf] %v4133
        %4646 = vst [vmem:[%s4 + $0x360] sm:$0xf] %v4134
        %4647 = vst [vmem:[%s4 + $0x364] sm:$0xf] %v4135
        %4648 = vst [vmem:[%s4 + $0x368] sm:$0xf] %v4136
        %4649 = vst [vmem:[%s4 + $0x36c] sm:$0xf] %v4137
        %4650 = vst [vmem:[%s4 + $0x370] sm:$0xf] %v4138
        %4651 = vst [vmem:[%s4 + $0x374] sm:$0xf] %v4139
        %4652 = vst [vmem:[%s4 + $0x378] sm:$0xf] %v4140
        %4653 = vst [vmem:[%s4 + $0x37c] sm:$0xf] %v4141
        %4654 = vst [vmem:[%s4 + $0x380] sm:$0xf] %v4142
        %4655 = vst [vmem:[%s4 + $0x384] sm:$0xf] %v4143
        %4656 = vst [vmem:[%s4 + $0x388] sm:$0xf] %v4144
        %4657 = vst [vmem:[%s4 + $0x38c] sm:$0xf] %v4145
        %4658 = vst [vmem:[%s4 + $0x390] sm:$0xf] %v4146
        %4659 = vst [vmem:[%s4 + $0x394] sm:$0xf] %v4147
        %4660 = vst [vmem:[%s4 + $0x398] sm:$0xf] %v4148
        %4661 = vst [vmem:[%s4 + $0x39c] sm:$0xf] %v4149
        %4662 = vst [vmem:[%s4 + $0x3a0] sm:$0xf] %v4150
        %4663 = vst [vmem:[%s4 + $0x3a4] sm:$0xf] %v4151
        %4664 = vst [vmem:[%s4 + $0x3a8] sm:$0xf] %v4152
        %4665 = vst [vmem:[%s4 + $0x3ac] sm:$0xf] %v4153
        %4666 = vst [vmem:[%s4 + $0x3b0] sm:$0xf] %v4154
        %4667 = vst [vmem:[%s4 + $0x3b4] sm:$0xf] %v4155
        %4668 = vst [vmem:[%s4 + $0x3b8] sm:$0xf] %v4156
        %4669 = vst [vmem:[%s4 + $0x3bc] sm:$0xf] %v4157
        %4670 = vst [vmem:[%s4 + $0x3c0] sm:$0xf] %v4158
        %4671 = vst [vmem:[%s4 + $0x3c4] sm:$0xf] %v4159
        %4672 = vst [vmem:[%s4 + $0x3c8] sm:$0xf] %v4160
        %4673 = vst [vmem:[%s4 + $0x3cc] sm:$0xf] %v4161
        %4674 = vst [vmem:[%s4 + $0x3d0] sm:$0xf] %v4162
        %4675 = vst [vmem:[%s4 + $0x3d4] sm:$0xf] %v4163
        %4676 = vst [vmem:[%s4 + $0x3d8] sm:$0xf] %v4164
        %4677 = vst [vmem:[%s4 + $0x3dc] sm:$0xf] %v4165
        %4678 = vst [vmem:[%s4 + $0x3e0] sm:$0xf] %v4166
        %4679 = vst [vmem:[%s4 + $0x3e4] sm:$0xf] %v4167
        %4680 = vst [vmem:[%s4 + $0x3e8] sm:$0xf] %v4168
        %4681 = vst [vmem:[%s4 + $0x3ec] sm:$0xf] %v4169
        %4682 = vst [vmem:[%s4 + $0x3f0] sm:$0xf] %v4170
        %4683 = vst [vmem:[%s4 + $0x3f4] sm:$0xf] %v4171
        %4684 = vst [vmem:[%s4 + $0x3f8] sm:$0xf] %v4172
        %4685 = vst [vmem:[%s4 + $0x3fc] sm:$0xf] %v4173
      $region44: #{generator_forward.8} parent=35 // pred_fallthru
        _
      // Predicated region
      $region45: #{generator_forward.8} parent=35 // pred_check
        %p4686 = pneg %p117
      $region46: #{generator_forward.8} parent=35 // pred_check_branch
        %4688 = sbr.rel (%p4686) target = $region48
      $region47: #{generator_forward.8} parent=35 // pred_region
        _
      $region48: #{generator_forward.8} parent=35 // pred_fallthru
        _
      // Predicated region
      $region49: #{generator_forward.8} parent=35 // pred_check
        %p4689 = pneg %p117
      $region50: #{generator_forward.8} parent=35 // pred_check_branch
        %4691 = sbr.rel (%p4689) target = $region52
      $region51: #{generator_forward.8} parent=35 // pred_region
        _
      $region52: #{generator_forward.8} parent=35 // pred_fallthru
        _
    $region36: #{generator_forward.8} parent=5 // pred_fallthru
      _
    %p4692 = scmp.le.s32.totalorder 2, %s10
    // Predicated region
    $region53: #{generator_forward.8} parent=5 // pred_check
      %p4693 = pneg %p4692
    $region54: #{generator_forward.8} parent=5 // pred_check_branch
      %4695 = sbr.rel (%p4693) target = $region56
    $region55: #{generator_forward.8} parent=5 // pred_region
      %s4696 = ssub.s32 %s10, 2
    $region56: #{generator_forward.8} parent=5 // pred_fallthru
      _
  $region6: #{generator_forward.8} parent=0 // loop_footer
    %s14 = sadd.s32 1, %s10
  $region7: #{generator_forward.8} parent=0 // loop_footer_branch
    %9 = sbr.rel target = $region3
  $region8: #{generator_forward.8} parent=0 // loop_exit
    _

// kernel: generator_forward.9
$region0: #{generator_forward.9}
  #allocation0 [shape = 'u32[]', space=smem, size = 0x4, offset = 0x4, fixed_abs, tag = 'smem constant byte address 0x4 - core index']
  #allocation1 [shape = 'u32[144,128]{1,0:T(1,128)}', space=vmem, size = 0x12000, scoped, tag = 'internal scratch']
  %s0 = inlined_call_operand.vmem [shape: bf16[8192,64], index: 0, kind: input, shape index: {}]
  %s1 = inlined_call_operand.vmem [shape: bf16[64,128], index: 1, kind: input, shape index: {}]
  %s2 = inlined_call_operand.vmem [shape: f32[8192,128], index: 2, kind: output, shape index: {}]
  %s3 = sld [smem:[#allocation0]]
  $region41: #{generator_forward.9} parent=0
    _
  %s5 = ssub.s32 1, %s3
  %s6 = scalar_select 0, %s5, %s3
  loop: start=0, step=1, limit=6
  $region2: #{generator_forward.9} parent=0 // loop_pre_header
    _
  $region3: #{generator_forward.9} parent=0 // loop_header
    %s8 = sphi 0, %s12
    %p9 = scmp.ge.s32.totalorder %s8, 6
    %s18 = sphi 0, %s20
    %s21 = sphi 0, %s18
    %s22 = sphi 0, %s21
    %s38 = sphi 0, %s22
    %s42 = sphi 0, %s42
    %s44 = sphi 0, %s42
    %s45 = sphi 0, %s44
    %s59 = sphi 0, %s45
    %s65 = sphi 0, %s67
    %s68 = sphi 0, %s65
    %s69 = sphi 0, %s68
    %s85 = sphi 0, %s69
  $region4: #{generator_forward.9} parent=0 // loop_header_branch
    %11 = sbr.rel (%p9) target = $region8
  $region5: #{generator_forward.9} parent=0 // loop_body
    %s13 = ssub.s32 %s8, 1
    %s14 = ssub.s32 %s8, 2
    %s15 = sadd.s32 %s8, 1
    %s16 = ssub.s32 %s8, %s15
    %p17 = scmp.eq.s32.totalorder %s16, 0
    %s19 = sadd.s32 %s18, 1
    %s20 = scalar_select %p17, %s18, %s19
    %p23 = pneg %p17
    %p24 = scmp.eq.s32.totalorder %s8, 3
    %p25 = por %p23, %p24
    %p26 = scmp.ne.s32.totalorder %s18, %s21
    %p27 = scmp.eq.s32.totalorder %s8, 0
    %p28 = por %p26, %p27
    %p29 = scmp.ne.s32.totalorder %s18, %s21
    %p30 = scmp.eq.s32.totalorder %s13, 3
    %p31 = por %p29, %p30
    %p32 = scmp.ne.s32.totalorder %s21, %s22
    %p33 = scmp.eq.s32.totalorder %s13, 0
    %p34 = por %p32, %p33
    %p35 = scmp.ne.s32.totalorder %s21, %s22
    %p36 = scmp.eq.s32.totalorder %s14, 3
    %p37 = por %p35, %p36
    %p39 = scmp.ne.s32.totalorder %s22, %s38
    %p40 = scmp.eq.s32.totalorder %s14, 0
    %p41 = por %p39, %p40
    %s43 = sadd.s32 %s42, 1
    %p46 = scmp.eq.s32.totalorder %s8, 3
    %p47 = scmp.ne.s32.totalorder %s42, %s44
    %p48 = scmp.eq.s32.totalorder %s8, 0
    %p49 = por %p47, %p48
    %p50 = scmp.ne.s32.totalorder %s42, %s44
    %p51 = scmp.eq.s32.totalorder %s13, 3
    %p52 = por %p50, %p51
    %p53 = scmp.ne.s32.totalorder %s44, %s45
    %p54 = scmp.eq.s32.totalorder %s13, 0
    %p55 = por %p53, %p54
    %p56 = scmp.ne.s32.totalorder %s44, %s45
    %p57 = scmp.eq.s32.totalorder %s14, 3
    %p58 = por %p56, %p57
    %p60 = scmp.ne.s32.totalorder %s45, %s59
    %p61 = scmp.eq.s32.totalorder %s14, 0
    %p62 = por %p60, %p61
    %s63 = ssub.s32 %s8, %s15
    %p64 = scmp.eq.s32.totalorder %s63, 0
    %s66 = sadd.s32 %s65, 1
    %s67 = scalar_select %p64, %s65, %s66
    %p70 = pneg %p64
    %p71 = scmp.eq.s32.totalorder %s8, 3
    %p72 = por %p70, %p71
    %p73 = scmp.ne.s32.totalorder %s65, %s68
    %p74 = scmp.eq.s32.totalorder %s8, 0
    %p75 = por %p73, %p74
    %p76 = scmp.ne.s32.totalorder %s65, %s68
    %p77 = scmp.eq.s32.totalorder %s13, 3
    %p78 = por %p76, %p77
    %p79 = scmp.ne.s32.totalorder %s68, %s69
    %p80 = scmp.eq.s32.totalorder %s13, 0
    %p81 = por %p79, %p80
    %p82 = scmp.ne.s32.totalorder %s68, %s69
    %p83 = scmp.eq.s32.totalorder %s14, 3
    %p84 = por %p82, %p83
    %p86 = scmp.ne.s32.totalorder %s69, %s85
    %p87 = scmp.eq.s32.totalorder %s14, 0
    %p88 = por %p86, %p87
    %p89 = scmp.le.s32.totalorder 1, %s8
    %p90 = scmp.lt.s32.totalorder %s8, 5
    %p91 = pnand %p89, %p90
    %p92 = pneg %p91
    // Predicated region
    $region9: #{generator_forward.9} parent=5 // pred_check
      _
    $region10: #{generator_forward.9} parent=5 // pred_check_branch
      %94 = sbr.rel (%p91) target = $region12
    $region11: #{generator_forward.9} parent=5 // pred_region
      %s95 = ssub.s32 %s8, 1
      // Predicated region
      $region13: #{generator_forward.9} parent=11 // pred_check
        %p96 = pneg %p55
      $region14: #{generator_forward.9} parent=11 // pred_check_branch
        %98 = sbr.rel (%p96) target = $region16
      $region15: #{generator_forward.9} parent=11 // pred_region
        _
      $region16: #{generator_forward.9} parent=11 // pred_fallthru
        _
    $region12: #{generator_forward.9} parent=5 // pred_fallthru
      _
    %p99 = scmp.lt.s32.totalorder %s8, 4
    // Predicated region
    $region17: #{generator_forward.9} parent=5 // pred_check
      %p100 = pneg %p99
    $region18: #{generator_forward.9} parent=5 // pred_check_branch
      %102 = sbr.rel (%p100) target = $region20
    $region19: #{generator_forward.9} parent=5 // pred_region
      // Predicated region
      $region21: #{generator_forward.9} parent=19 // pred_check
        %p103 = pneg %p28
      $region22: #{generator_forward.9} parent=19 // pred_check_branch
        %105 = sbr.rel (%p103) target = $region24
      $region23: #{generator_forward.9} parent=19 // pred_region
        %s106 = smul.u32 256, %s8
        %p107 = scmp.lt.s32.totalorder %s106, 1023
        %s108 = scalar_select %p107, %s106, 1023
        %s109 = smul.addr %s108, 4
        %s110 = scalar_lea.vmem %s0, %s109
        %s111 = smul.u32 256, %s8
      $region24: #{generator_forward.9} parent=19 // pred_fallthru
        _
    $region20: #{generator_forward.9} parent=5 // pred_fallthru
      _
    %p112 = scmp.le.s32.totalorder 1, %s8
    %p113 = scmp.lt.s32.totalorder %s8, 5
    %p114 = pnand %p112, %p113
    %p115 = pneg %p114
    // Predicated region
    $region25: #{generator_forward.9} parent=5 // pred_check
      _
    $region26: #{generator_forward.9} parent=5 // pred_check_branch
      %117 = sbr.rel (%p114) target = $region28
    $region27: #{generator_forward.9} parent=5 // pred_region
      %s118 = ssub.s32 %s8, 1
      %s119 = smul.u32 256, %s13
      %p120 = scmp.lt.s32.totalorder %s119, 1023
      %s121 = scalar_select %p120, %s119, 1023
      %s122 = smul.addr %s121, 4
      %s123 = scalar_lea.vmem %s0, %s122
      %p124 = pneg %p34
      %p125 = pneg %p31
      %p126 = pneg %p55
      %p127 = pneg %p52
      %p128 = pneg %p81
      %p129 = pneg %p78
      %s130 = smul.u32 256, %s13
      %p131 = scmp.lt.s32.totalorder %s130, 1023
      %s132 = scalar_select %p131, %s130, 1023
      %s133 = smul.addr %s132, 8
      %s134 = scalar_lea.vmem %s2, %s133
      %s135 = smul.u32 256, %s13
      %p136 = scmp.lt.s32.totalorder %s135, 1023
      %s137 = scalar_select %p136, %s135, 1023
      %s138 = smul.addr %s137, 4
      %s139 = scalar_lea.vmem %s0, %s138
      %s140 = smul.u32 256, %s13
      %s141 = smul.u32 256, %s13
      %p142 = scmp.lt.s32.totalorder %s141, 1023
      %s143 = scalar_select %p142, %s141, 1023
      %s144 = smul.addr %s143, 8
      %s145 = scalar_lea.vmem %s2, %s144
      %s146 = smul.u32 256, %s13
      %v148 = vld [vmem:[%s139] sm:$0xf]
      %v149 = vld [vmem:[%s139 + $0x4] sm:$0xf]
      %v150 = vld [vmem:[%s139 + $0x8] sm:$0xf]
      %v151 = vld [vmem:[%s139 + $0xc] sm:$0xf]
      %v152 = vld [vmem:[%s139 + $0x10] sm:$0xf]
      %v153 = vld [vmem:[%s139 + $0x14] sm:$0xf]
      %v154 = vld [vmem:[%s139 + $0x18] sm:$0xf]
      %v155 = vld [vmem:[%s139 + $0x1c] sm:$0xf]
      %v156 = vld [vmem:[%s139 + $0x20] sm:$0xf]
      %v157 = vld [vmem:[%s139 + $0x24] sm:$0xf]
      %v158 = vld [vmem:[%s139 + $0x28] sm:$0xf]
      %v159 = vld [vmem:[%s139 + $0x2c] sm:$0xf]
      %v160 = vld [vmem:[%s139 + $0x30] sm:$0xf]
      %v161 = vld [vmem:[%s139 + $0x34] sm:$0xf]
      %v162 = vld [vmem:[%s139 + $0x38] sm:$0xf]
      %v163 = vld [vmem:[%s139 + $0x3c] sm:$0xf]
      %v164 = vld [vmem:[%s139 + $0x40] sm:$0xf]
      %v165 = vld [vmem:[%s139 + $0x44] sm:$0xf]
      %v166 = vld [vmem:[%s139 + $0x48] sm:$0xf]
      %v167 = vld [vmem:[%s139 + $0x4c] sm:$0xf]
      %v168 = vld [vmem:[%s139 + $0x50] sm:$0xf]
      %v169 = vld [vmem:[%s139 + $0x54] sm:$0xf]
      %v170 = vld [vmem:[%s139 + $0x58] sm:$0xf]
      %v171 = vld [vmem:[%s139 + $0x5c] sm:$0xf]
      %v172 = vld [vmem:[%s139 + $0x60] sm:$0xf]
      %v173 = vld [vmem:[%s139 + $0x64] sm:$0xf]
      %v174 = vld [vmem:[%s139 + $0x68] sm:$0xf]
      %v175 = vld [vmem:[%s139 + $0x6c] sm:$0xf]
      %v176 = vld [vmem:[%s139 + $0x70] sm:$0xf]
      %v177 = vld [vmem:[%s139 + $0x74] sm:$0xf]
      %v178 = vld [vmem:[%s139 + $0x78] sm:$0xf]
      %v179 = vld [vmem:[%s139 + $0x7c] sm:$0xf]
      %v180 = vld [vmem:[%s139 + $0x80] sm:$0xf]
      %v181 = vld [vmem:[%s139 + $0x84] sm:$0xf]
      %v182 = vld [vmem:[%s139 + $0x88] sm:$0xf]
      %v183 = vld [vmem:[%s139 + $0x8c] sm:$0xf]
      %v184 = vld [vmem:[%s139 + $0x90] sm:$0xf]
      %v185 = vld [vmem:[%s139 + $0x94] sm:$0xf]
      %v186 = vld [vmem:[%s139 + $0x98] sm:$0xf]
      %v187 = vld [vmem:[%s139 + $0x9c] sm:$0xf]
      %v188 = vld [vmem:[%s139 + $0xa0] sm:$0xf]
      %v189 = vld [vmem:[%s139 + $0xa4] sm:$0xf]
      %v190 = vld [vmem:[%s139 + $0xa8] sm:$0xf]
      %v191 = vld [vmem:[%s139 + $0xac] sm:$0xf]
      %v192 = vld [vmem:[%s139 + $0xb0] sm:$0xf]
      %v193 = vld [vmem:[%s139 + $0xb4] sm:$0xf]
      %v194 = vld [vmem:[%s139 + $0xb8] sm:$0xf]
      %v195 = vld [vmem:[%s139 + $0xbc] sm:$0xf]
      %v196 = vld [vmem:[%s139 + $0xc0] sm:$0xf]
      %v197 = vld [vmem:[%s139 + $0xc4] sm:$0xf]
      %v198 = vld [vmem:[%s139 + $0xc8] sm:$0xf]
      %v199 = vld [vmem:[%s139 + $0xcc] sm:$0xf]
      %v200 = vld [vmem:[%s139 + $0xd0] sm:$0xf]
      %v201 = vld [vmem:[%s139 + $0xd4] sm:$0xf]
      %v202 = vld [vmem:[%s139 + $0xd8] sm:$0xf]
      %v203 = vld [vmem:[%s139 + $0xdc] sm:$0xf]
      %v204 = vld [vmem:[%s139 + $0xe0] sm:$0xf]
      %v205 = vld [vmem:[%s139 + $0xe4] sm:$0xf]
      %v206 = vld [vmem:[%s139 + $0xe8] sm:$0xf]
      %v207 = vld [vmem:[%s139 + $0xec] sm:$0xf]
      %v208 = vld [vmem:[%s139 + $0xf0] sm:$0xf]
      %v209 = vld [vmem:[%s139 + $0xf4] sm:$0xf]
      %v210 = vld [vmem:[%s139 + $0xf8] sm:$0xf]
      %v211 = vld [vmem:[%s139 + $0xfc] sm:$0xf]
      %v212 = vld [vmem:[%s139 + $0x100] sm:$0xf]
      %v213 = vld [vmem:[%s139 + $0x104] sm:$0xf]
      %v214 = vld [vmem:[%s139 + $0x108] sm:$0xf]
      %v215 = vld [vmem:[%s139 + $0x10c] sm:$0xf]
      %v216 = vld [vmem:[%s139 + $0x110] sm:$0xf]
      %v217 = vld [vmem:[%s139 + $0x114] sm:$0xf]
      %v218 = vld [vmem:[%s139 + $0x118] sm:$0xf]
      %v219 = vld [vmem:[%s139 + $0x11c] sm:$0xf]
      %v220 = vld [vmem:[%s139 + $0x120] sm:$0xf]
      %v221 = vld [vmem:[%s139 + $0x124] sm:$0xf]
      %v222 = vld [vmem:[%s139 + $0x128] sm:$0xf]
      %v223 = vld [vmem:[%s139 + $0x12c] sm:$0xf]
      %v224 = vld [vmem:[%s139 + $0x130] sm:$0xf]
      %v225 = vld [vmem:[%s139 + $0x134] sm:$0xf]
      %v226 = vld [vmem:[%s139 + $0x138] sm:$0xf]
      %v227 = vld [vmem:[%s139 + $0x13c] sm:$0xf]
      %v228 = vld [vmem:[%s139 + $0x140] sm:$0xf]
      %v229 = vld [vmem:[%s139 + $0x144] sm:$0xf]
      %v230 = vld [vmem:[%s139 + $0x148] sm:$0xf]
      %v231 = vld [vmem:[%s139 + $0x14c] sm:$0xf]
      %v232 = vld [vmem:[%s139 + $0x150] sm:$0xf]
      %v233 = vld [vmem:[%s139 + $0x154] sm:$0xf]
      %v234 = vld [vmem:[%s139 + $0x158] sm:$0xf]
      %v235 = vld [vmem:[%s139 + $0x15c] sm:$0xf]
      %v236 = vld [vmem:[%s139 + $0x160] sm:$0xf]
      %v237 = vld [vmem:[%s139 + $0x164] sm:$0xf]
      %v238 = vld [vmem:[%s139 + $0x168] sm:$0xf]
      %v239 = vld [vmem:[%s139 + $0x16c] sm:$0xf]
      %v240 = vld [vmem:[%s139 + $0x170] sm:$0xf]
      %v241 = vld [vmem:[%s139 + $0x174] sm:$0xf]
      %v242 = vld [vmem:[%s139 + $0x178] sm:$0xf]
      %v243 = vld [vmem:[%s139 + $0x17c] sm:$0xf]
      %v244 = vld [vmem:[%s139 + $0x180] sm:$0xf]
      %v245 = vld [vmem:[%s139 + $0x184] sm:$0xf]
      %v246 = vld [vmem:[%s139 + $0x188] sm:$0xf]
      %v247 = vld [vmem:[%s139 + $0x18c] sm:$0xf]
      %v248 = vld [vmem:[%s139 + $0x190] sm:$0xf]
      %v249 = vld [vmem:[%s139 + $0x194] sm:$0xf]
      %v250 = vld [vmem:[%s139 + $0x198] sm:$0xf]
      %v251 = vld [vmem:[%s139 + $0x19c] sm:$0xf]
      %v252 = vld [vmem:[%s139 + $0x1a0] sm:$0xf]
      %v253 = vld [vmem:[%s139 + $0x1a4] sm:$0xf]
      %v254 = vld [vmem:[%s139 + $0x1a8] sm:$0xf]
      %v255 = vld [vmem:[%s139 + $0x1ac] sm:$0xf]
      %v256 = vld [vmem:[%s139 + $0x1b0] sm:$0xf]
      %v257 = vld [vmem:[%s139 + $0x1b4] sm:$0xf]
      %v258 = vld [vmem:[%s139 + $0x1b8] sm:$0xf]
      %v259 = vld [vmem:[%s139 + $0x1bc] sm:$0xf]
      %v260 = vld [vmem:[%s139 + $0x1c0] sm:$0xf]
      %v261 = vld [vmem:[%s139 + $0x1c4] sm:$0xf]
      %v262 = vld [vmem:[%s139 + $0x1c8] sm:$0xf]
      %v263 = vld [vmem:[%s139 + $0x1cc] sm:$0xf]
      %v264 = vld [vmem:[%s139 + $0x1d0] sm:$0xf]
      %v265 = vld [vmem:[%s139 + $0x1d4] sm:$0xf]
      %v266 = vld [vmem:[%s139 + $0x1d8] sm:$0xf]
      %v267 = vld [vmem:[%s139 + $0x1dc] sm:$0xf]
      %v268 = vld [vmem:[%s139 + $0x1e0] sm:$0xf]
      %v269 = vld [vmem:[%s139 + $0x1e4] sm:$0xf]
      %v270 = vld [vmem:[%s139 + $0x1e8] sm:$0xf]
      %v271 = vld [vmem:[%s139 + $0x1ec] sm:$0xf]
      %v272 = vld [vmem:[%s139 + $0x1f0] sm:$0xf]
      %v273 = vld [vmem:[%s139 + $0x1f4] sm:$0xf]
      %v274 = vld [vmem:[%s139 + $0x1f8] sm:$0xf]
      %v275 = vld [vmem:[%s139 + $0x1fc] sm:$0xf]
      %v276 = vld [vmem:[%s139 + $0x200] sm:$0xf]
      %v277 = vld [vmem:[%s139 + $0x204] sm:$0xf]
      %v278 = vld [vmem:[%s139 + $0x208] sm:$0xf]
      %v279 = vld [vmem:[%s139 + $0x20c] sm:$0xf]
      %v280 = vld [vmem:[%s139 + $0x210] sm:$0xf]
      %v281 = vld [vmem:[%s139 + $0x214] sm:$0xf]
      %v282 = vld [vmem:[%s139 + $0x218] sm:$0xf]
      %v283 = vld [vmem:[%s139 + $0x21c] sm:$0xf]
      %v284 = vld [vmem:[%s139 + $0x220] sm:$0xf]
      %v285 = vld [vmem:[%s139 + $0x224] sm:$0xf]
      %v286 = vld [vmem:[%s139 + $0x228] sm:$0xf]
      %v287 = vld [vmem:[%s139 + $0x22c] sm:$0xf]
      %v288 = vld [vmem:[%s139 + $0x230] sm:$0xf]
      %v289 = vld [vmem:[%s139 + $0x234] sm:$0xf]
      %v290 = vld [vmem:[%s139 + $0x238] sm:$0xf]
      %v291 = vld [vmem:[%s139 + $0x23c] sm:$0xf]
      %v292 = vld [vmem:[%s139 + $0x240] sm:$0xf]
      %v293 = vld [vmem:[%s139 + $0x244] sm:$0xf]
      %v294 = vld [vmem:[%s139 + $0x248] sm:$0xf]
      %v295 = vld [vmem:[%s139 + $0x24c] sm:$0xf]
      %v296 = vld [vmem:[%s139 + $0x250] sm:$0xf]
      %v297 = vld [vmem:[%s139 + $0x254] sm:$0xf]
      %v298 = vld [vmem:[%s139 + $0x258] sm:$0xf]
      %v299 = vld [vmem:[%s139 + $0x25c] sm:$0xf]
      %v300 = vld [vmem:[%s139 + $0x260] sm:$0xf]
      %v301 = vld [vmem:[%s139 + $0x264] sm:$0xf]
      %v302 = vld [vmem:[%s139 + $0x268] sm:$0xf]
      %v303 = vld [vmem:[%s139 + $0x26c] sm:$0xf]
      %v304 = vld [vmem:[%s139 + $0x270] sm:$0xf]
      %v305 = vld [vmem:[%s139 + $0x274] sm:$0xf]
      %v306 = vld [vmem:[%s139 + $0x278] sm:$0xf]
      %v307 = vld [vmem:[%s139 + $0x27c] sm:$0xf]
      %v308 = vld [vmem:[%s139 + $0x280] sm:$0xf]
      %v309 = vld [vmem:[%s139 + $0x284] sm:$0xf]
      %v310 = vld [vmem:[%s139 + $0x288] sm:$0xf]
      %v311 = vld [vmem:[%s139 + $0x28c] sm:$0xf]
      %v312 = vld [vmem:[%s139 + $0x290] sm:$0xf]
      %v313 = vld [vmem:[%s139 + $0x294] sm:$0xf]
      %v314 = vld [vmem:[%s139 + $0x298] sm:$0xf]
      %v315 = vld [vmem:[%s139 + $0x29c] sm:$0xf]
      %v316 = vld [vmem:[%s139 + $0x2a0] sm:$0xf]
      %v317 = vld [vmem:[%s139 + $0x2a4] sm:$0xf]
      %v318 = vld [vmem:[%s139 + $0x2a8] sm:$0xf]
      %v319 = vld [vmem:[%s139 + $0x2ac] sm:$0xf]
      %v320 = vld [vmem:[%s139 + $0x2b0] sm:$0xf]
      %v321 = vld [vmem:[%s139 + $0x2b4] sm:$0xf]
      %v322 = vld [vmem:[%s139 + $0x2b8] sm:$0xf]
      %v323 = vld [vmem:[%s139 + $0x2bc] sm:$0xf]
      %v324 = vld [vmem:[%s139 + $0x2c0] sm:$0xf]
      %v325 = vld [vmem:[%s139 + $0x2c4] sm:$0xf]
      %v326 = vld [vmem:[%s139 + $0x2c8] sm:$0xf]
      %v327 = vld [vmem:[%s139 + $0x2cc] sm:$0xf]
      %v328 = vld [vmem:[%s139 + $0x2d0] sm:$0xf]
      %v329 = vld [vmem:[%s139 + $0x2d4] sm:$0xf]
      %v330 = vld [vmem:[%s139 + $0x2d8] sm:$0xf]
      %v331 = vld [vmem:[%s139 + $0x2dc] sm:$0xf]
      %v332 = vld [vmem:[%s139 + $0x2e0] sm:$0xf]
      %v333 = vld [vmem:[%s139 + $0x2e4] sm:$0xf]
      %v334 = vld [vmem:[%s139 + $0x2e8] sm:$0xf]
      %v335 = vld [vmem:[%s139 + $0x2ec] sm:$0xf]
      %v336 = vld [vmem:[%s139 + $0x2f0] sm:$0xf]
      %v337 = vld [vmem:[%s139 + $0x2f4] sm:$0xf]
      %v338 = vld [vmem:[%s139 + $0x2f8] sm:$0xf]
      %v339 = vld [vmem:[%s139 + $0x2fc] sm:$0xf]
      %v340 = vld [vmem:[%s139 + $0x300] sm:$0xf]
      %v341 = vld [vmem:[%s139 + $0x304] sm:$0xf]
      %v342 = vld [vmem:[%s139 + $0x308] sm:$0xf]
      %v343 = vld [vmem:[%s139 + $0x30c] sm:$0xf]
      %v344 = vld [vmem:[%s139 + $0x310] sm:$0xf]
      %v345 = vld [vmem:[%s139 + $0x314] sm:$0xf]
      %v346 = vld [vmem:[%s139 + $0x318] sm:$0xf]
      %v347 = vld [vmem:[%s139 + $0x31c] sm:$0xf]
      %v348 = vld [vmem:[%s139 + $0x320] sm:$0xf]
      %v349 = vld [vmem:[%s139 + $0x324] sm:$0xf]
      %v350 = vld [vmem:[%s139 + $0x328] sm:$0xf]
      %v351 = vld [vmem:[%s139 + $0x32c] sm:$0xf]
      %v352 = vld [vmem:[%s139 + $0x330] sm:$0xf]
      %v353 = vld [vmem:[%s139 + $0x334] sm:$0xf]
      %v354 = vld [vmem:[%s139 + $0x338] sm:$0xf]
      %v355 = vld [vmem:[%s139 + $0x33c] sm:$0xf]
      %v356 = vld [vmem:[%s139 + $0x340] sm:$0xf]
      %v357 = vld [vmem:[%s139 + $0x344] sm:$0xf]
      %v358 = vld [vmem:[%s139 + $0x348] sm:$0xf]
      %v359 = vld [vmem:[%s139 + $0x34c] sm:$0xf]
      %v360 = vld [vmem:[%s139 + $0x350] sm:$0xf]
      %v361 = vld [vmem:[%s139 + $0x354] sm:$0xf]
      %v362 = vld [vmem:[%s139 + $0x358] sm:$0xf]
      %v363 = vld [vmem:[%s139 + $0x35c] sm:$0xf]
      %v364 = vld [vmem:[%s139 + $0x360] sm:$0xf]
      %v365 = vld [vmem:[%s139 + $0x364] sm:$0xf]
      %v366 = vld [vmem:[%s139 + $0x368] sm:$0xf]
      %v367 = vld [vmem:[%s139 + $0x36c] sm:$0xf]
      %v368 = vld [vmem:[%s139 + $0x370] sm:$0xf]
      %v369 = vld [vmem:[%s139 + $0x374] sm:$0xf]
      %v370 = vld [vmem:[%s139 + $0x378] sm:$0xf]
      %v371 = vld [vmem:[%s139 + $0x37c] sm:$0xf]
      %v372 = vld [vmem:[%s139 + $0x380] sm:$0xf]
      %v373 = vld [vmem:[%s139 + $0x384] sm:$0xf]
      %v374 = vld [vmem:[%s139 + $0x388] sm:$0xf]
      %v375 = vld [vmem:[%s139 + $0x38c] sm:$0xf]
      %v376 = vld [vmem:[%s139 + $0x390] sm:$0xf]
      %v377 = vld [vmem:[%s139 + $0x394] sm:$0xf]
      %v378 = vld [vmem:[%s139 + $0x398] sm:$0xf]
      %v379 = vld [vmem:[%s139 + $0x39c] sm:$0xf]
      %v380 = vld [vmem:[%s139 + $0x3a0] sm:$0xf]
      %v381 = vld [vmem:[%s139 + $0x3a4] sm:$0xf]
      %v382 = vld [vmem:[%s139 + $0x3a8] sm:$0xf]
      %v383 = vld [vmem:[%s139 + $0x3ac] sm:$0xf]
      %v384 = vld [vmem:[%s139 + $0x3b0] sm:$0xf]
      %v385 = vld [vmem:[%s139 + $0x3b4] sm:$0xf]
      %v386 = vld [vmem:[%s139 + $0x3b8] sm:$0xf]
      %v387 = vld [vmem:[%s139 + $0x3bc] sm:$0xf]
      %v388 = vld [vmem:[%s139 + $0x3c0] sm:$0xf]
      %v389 = vld [vmem:[%s139 + $0x3c4] sm:$0xf]
      %v390 = vld [vmem:[%s139 + $0x3c8] sm:$0xf]
      %v391 = vld [vmem:[%s139 + $0x3cc] sm:$0xf]
      %v392 = vld [vmem:[%s139 + $0x3d0] sm:$0xf]
      %v393 = vld [vmem:[%s139 + $0x3d4] sm:$0xf]
      %v394 = vld [vmem:[%s139 + $0x3d8] sm:$0xf]
      %v395 = vld [vmem:[%s139 + $0x3dc] sm:$0xf]
      %v396 = vld [vmem:[%s139 + $0x3e0] sm:$0xf]
      %v397 = vld [vmem:[%s139 + $0x3e4] sm:$0xf]
      %v398 = vld [vmem:[%s139 + $0x3e8] sm:$0xf]
      %v399 = vld [vmem:[%s139 + $0x3ec] sm:$0xf]
      %v400 = vld [vmem:[%s139 + $0x3f0] sm:$0xf]
      %v401 = vld [vmem:[%s139 + $0x3f4] sm:$0xf]
      %v402 = vld [vmem:[%s139 + $0x3f8] sm:$0xf]
      %v403 = vld [vmem:[%s139 + $0x3fc] sm:$0xf]
      %v404 = vld [vmem:[%s1] sm:$0xf]
      %v405 = vld [vmem:[%s1 + $0x4] sm:$0xf]
      %v406 = vld [vmem:[%s1 + $0x8] sm:$0xf]
      %v407 = vld [vmem:[%s1 + $0xc] sm:$0xf]
      %v408 = vld [vmem:[%s1 + $0x10] sm:$0xf]
      %v409 = vld [vmem:[%s1 + $0x14] sm:$0xf]
      %v410 = vld [vmem:[%s1 + $0x18] sm:$0xf]
      %v411 = vld [vmem:[%s1 + $0x1c] sm:$0xf]
      %v668 = vunpack.c.l.b16 %v148
      %v669 = vunpack.c.l.b16 %v149
      %v670 = vunpack.c.l.b16 %v150
      %v671 = vunpack.c.l.b16 %v151
      %v672 = vunpack.c.l.b16 %v152
      %v673 = vunpack.c.l.b16 %v153
      %v674 = vunpack.c.l.b16 %v154
      %v675 = vunpack.c.l.b16 %v155
      %v676 = vunpack.c.l.b16 %v156
      %v677 = vunpack.c.l.b16 %v157
      %v678 = vunpack.c.l.b16 %v158
      %v679 = vunpack.c.l.b16 %v159
      %v680 = vunpack.c.l.b16 %v160
      %v681 = vunpack.c.l.b16 %v161
      %v682 = vunpack.c.l.b16 %v162
      %v683 = vunpack.c.l.b16 %v163
      %v684 = vunpack.c.l.b16 %v164
      %v685 = vunpack.c.l.b16 %v165
      %v686 = vunpack.c.l.b16 %v166
      %v687 = vunpack.c.l.b16 %v167
      %v688 = vunpack.c.l.b16 %v168
      %v689 = vunpack.c.l.b16 %v169
      %v690 = vunpack.c.l.b16 %v170
      %v691 = vunpack.c.l.b16 %v171
      %v692 = vunpack.c.l.b16 %v172
      %v693 = vunpack.c.l.b16 %v173
      %v694 = vunpack.c.l.b16 %v174
      %v695 = vunpack.c.l.b16 %v175
      %v696 = vunpack.c.l.b16 %v176
      %v697 = vunpack.c.l.b16 %v177
      %v698 = vunpack.c.l.b16 %v178
      %v699 = vunpack.c.l.b16 %v179
      %v700 = vunpack.c.l.b16 %v180
      %v701 = vunpack.c.l.b16 %v181
      %v702 = vunpack.c.l.b16 %v182
      %v703 = vunpack.c.l.b16 %v183
      %v704 = vunpack.c.l.b16 %v184
      %v705 = vunpack.c.l.b16 %v185
      %v706 = vunpack.c.l.b16 %v186
      %v707 = vunpack.c.l.b16 %v187
      %v708 = vunpack.c.l.b16 %v188
      %v709 = vunpack.c.l.b16 %v189
      %v710 = vunpack.c.l.b16 %v190
      %v711 = vunpack.c.l.b16 %v191
      %v712 = vunpack.c.l.b16 %v192
      %v713 = vunpack.c.l.b16 %v193
      %v714 = vunpack.c.l.b16 %v194
      %v715 = vunpack.c.l.b16 %v195
      %v716 = vunpack.c.l.b16 %v196
      %v717 = vunpack.c.l.b16 %v197
      %v718 = vunpack.c.l.b16 %v198
      %v719 = vunpack.c.l.b16 %v199
      %v720 = vunpack.c.l.b16 %v200
      %v721 = vunpack.c.l.b16 %v201
      %v722 = vunpack.c.l.b16 %v202
      %v723 = vunpack.c.l.b16 %v203
      %v724 = vunpack.c.l.b16 %v204
      %v725 = vunpack.c.l.b16 %v205
      %v726 = vunpack.c.l.b16 %v206
      %v727 = vunpack.c.l.b16 %v207
      %v728 = vunpack.c.l.b16 %v208
      %v729 = vunpack.c.l.b16 %v209
      %v730 = vunpack.c.l.b16 %v210
      %v731 = vunpack.c.l.b16 %v211
      %v732 = vunpack.c.l.b16 %v212
      %v733 = vunpack.c.l.b16 %v213
      %v734 = vunpack.c.l.b16 %v214
      %v735 = vunpack.c.l.b16 %v215
      %v736 = vunpack.c.l.b16 %v216
      %v737 = vunpack.c.l.b16 %v217
      %v738 = vunpack.c.l.b16 %v218
      %v739 = vunpack.c.l.b16 %v219
      %v740 = vunpack.c.l.b16 %v220
      %v741 = vunpack.c.l.b16 %v221
      %v742 = vunpack.c.l.b16 %v222
      %v743 = vunpack.c.l.b16 %v223
      %v744 = vunpack.c.l.b16 %v224
      %v745 = vunpack.c.l.b16 %v225
      %v746 = vunpack.c.l.b16 %v226
      %v747 = vunpack.c.l.b16 %v227
      %v748 = vunpack.c.l.b16 %v228
      %v749 = vunpack.c.l.b16 %v229
      %v750 = vunpack.c.l.b16 %v230
      %v751 = vunpack.c.l.b16 %v231
      %v752 = vunpack.c.l.b16 %v232
      %v753 = vunpack.c.l.b16 %v233
      %v754 = vunpack.c.l.b16 %v234
      %v755 = vunpack.c.l.b16 %v235
      %v756 = vunpack.c.l.b16 %v236
      %v757 = vunpack.c.l.b16 %v237
      %v758 = vunpack.c.l.b16 %v238
      %v759 = vunpack.c.l.b16 %v239
      %v760 = vunpack.c.l.b16 %v240
      %v761 = vunpack.c.l.b16 %v241
      %v762 = vunpack.c.l.b16 %v242
      %v763 = vunpack.c.l.b16 %v243
      %v764 = vunpack.c.l.b16 %v244
      %v765 = vunpack.c.l.b16 %v245
      %v766 = vunpack.c.l.b16 %v246
      %v767 = vunpack.c.l.b16 %v247
      %v768 = vunpack.c.l.b16 %v248
      %v769 = vunpack.c.l.b16 %v249
      %v770 = vunpack.c.l.b16 %v250
      %v771 = vunpack.c.l.b16 %v251
      %v772 = vunpack.c.l.b16 %v252
      %v773 = vunpack.c.l.b16 %v253
      %v774 = vunpack.c.l.b16 %v254
      %v775 = vunpack.c.l.b16 %v255
      %v776 = vunpack.c.l.b16 %v256
      %v777 = vunpack.c.l.b16 %v257
      %v778 = vunpack.c.l.b16 %v258
      %v779 = vunpack.c.l.b16 %v259
      %v780 = vunpack.c.l.b16 %v260
      %v781 = vunpack.c.l.b16 %v261
      %v782 = vunpack.c.l.b16 %v262
      %v783 = vunpack.c.l.b16 %v263
      %v784 = vunpack.c.l.b16 %v264
      %v785 = vunpack.c.l.b16 %v265
      %v786 = vunpack.c.l.b16 %v266
      %v787 = vunpack.c.l.b16 %v267
      %v788 = vunpack.c.l.b16 %v268
      %v789 = vunpack.c.l.b16 %v269
      %v790 = vunpack.c.l.b16 %v270
      %v791 = vunpack.c.l.b16 %v271
      %v792 = vunpack.c.l.b16 %v272
      %v793 = vunpack.c.l.b16 %v273
      %v794 = vunpack.c.l.b16 %v274
      %v795 = vunpack.c.l.b16 %v275
      %v796 = vunpack.c.l.b16 %v276
      %v797 = vunpack.c.l.b16 %v277
      %v798 = vunpack.c.l.b16 %v278
      %v799 = vunpack.c.l.b16 %v279
      %v800 = vunpack.c.l.b16 %v280
      %v801 = vunpack.c.l.b16 %v281
      %v802 = vunpack.c.l.b16 %v282
      %v803 = vunpack.c.l.b16 %v283
      %v804 = vunpack.c.l.b16 %v284
      %v805 = vunpack.c.l.b16 %v285
      %v806 = vunpack.c.l.b16 %v286
      %v807 = vunpack.c.l.b16 %v287
      %v808 = vunpack.c.l.b16 %v288
      %v809 = vunpack.c.l.b16 %v289
      %v810 = vunpack.c.l.b16 %v290
      %v811 = vunpack.c.l.b16 %v291
      %v812 = vunpack.c.l.b16 %v292
      %v813 = vunpack.c.l.b16 %v293
      %v814 = vunpack.c.l.b16 %v294
      %v815 = vunpack.c.l.b16 %v295
      %v816 = vunpack.c.l.b16 %v296
      %v817 = vunpack.c.l.b16 %v297
      %v818 = vunpack.c.l.b16 %v298
      %v819 = vunpack.c.l.b16 %v299
      %v820 = vunpack.c.l.b16 %v300
      %v821 = vunpack.c.l.b16 %v301
      %v822 = vunpack.c.l.b16 %v302
      %v823 = vunpack.c.l.b16 %v303
      %v824 = vunpack.c.l.b16 %v304
      %v825 = vunpack.c.l.b16 %v305
      %v826 = vunpack.c.l.b16 %v306
      %v827 = vunpack.c.l.b16 %v307
      %v828 = vunpack.c.l.b16 %v308
      %v829 = vunpack.c.l.b16 %v309
      %v830 = vunpack.c.l.b16 %v310
      %v831 = vunpack.c.l.b16 %v311
      %v832 = vunpack.c.l.b16 %v312
      %v833 = vunpack.c.l.b16 %v313
      %v834 = vunpack.c.l.b16 %v314
      %v835 = vunpack.c.l.b16 %v315
      %v836 = vunpack.c.l.b16 %v316
      %v837 = vunpack.c.l.b16 %v317
      %v838 = vunpack.c.l.b16 %v318
      %v839 = vunpack.c.l.b16 %v319
      %v840 = vunpack.c.l.b16 %v320
      %v841 = vunpack.c.l.b16 %v321
      %v842 = vunpack.c.l.b16 %v322
      %v843 = vunpack.c.l.b16 %v323
      %v844 = vunpack.c.l.b16 %v324
      %v845 = vunpack.c.l.b16 %v325
      %v846 = vunpack.c.l.b16 %v326
      %v847 = vunpack.c.l.b16 %v327
      %v848 = vunpack.c.l.b16 %v328
      %v849 = vunpack.c.l.b16 %v329
      %v850 = vunpack.c.l.b16 %v330
      %v851 = vunpack.c.l.b16 %v331
      %v852 = vunpack.c.l.b16 %v332
      %v853 = vunpack.c.l.b16 %v333
      %v854 = vunpack.c.l.b16 %v334
      %v855 = vunpack.c.l.b16 %v335
      %v856 = vunpack.c.l.b16 %v336
      %v857 = vunpack.c.l.b16 %v337
      %v858 = vunpack.c.l.b16 %v338
      %v859 = vunpack.c.l.b16 %v339
      %v860 = vunpack.c.l.b16 %v340
      %v861 = vunpack.c.l.b16 %v341
      %v862 = vunpack.c.l.b16 %v342
      %v863 = vunpack.c.l.b16 %v343
      %v864 = vunpack.c.l.b16 %v344
      %v865 = vunpack.c.l.b16 %v345
      %v866 = vunpack.c.l.b16 %v346
      %v867 = vunpack.c.l.b16 %v347
      %v868 = vunpack.c.l.b16 %v348
      %v869 = vunpack.c.l.b16 %v349
      %v870 = vunpack.c.l.b16 %v350
      %v871 = vunpack.c.l.b16 %v351
      %v872 = vunpack.c.l.b16 %v352
      %v873 = vunpack.c.l.b16 %v353
      %v874 = vunpack.c.l.b16 %v354
      %v875 = vunpack.c.l.b16 %v355
      %v876 = vunpack.c.l.b16 %v356
      %v877 = vunpack.c.l.b16 %v357
      %v878 = vunpack.c.l.b16 %v358
      %v879 = vunpack.c.l.b16 %v359
      %v880 = vunpack.c.l.b16 %v360
      %v881 = vunpack.c.l.b16 %v361
      %v882 = vunpack.c.l.b16 %v362
      %v883 = vunpack.c.l.b16 %v363
      %v884 = vunpack.c.l.b16 %v364
      %v885 = vunpack.c.l.b16 %v365
      %v886 = vunpack.c.l.b16 %v366
      %v887 = vunpack.c.l.b16 %v367
      %v888 = vunpack.c.l.b16 %v368
      %v889 = vunpack.c.l.b16 %v369
      %v890 = vunpack.c.l.b16 %v370
      %v891 = vunpack.c.l.b16 %v371
      %v892 = vunpack.c.l.b16 %v372
      %v893 = vunpack.c.l.b16 %v373
      %v894 = vunpack.c.l.b16 %v374
      %v895 = vunpack.c.l.b16 %v375
      %v896 = vunpack.c.l.b16 %v376
      %v897 = vunpack.c.l.b16 %v377
      %v898 = vunpack.c.l.b16 %v378
      %v899 = vunpack.c.l.b16 %v379
      %v900 = vunpack.c.l.b16 %v380
      %v901 = vunpack.c.l.b16 %v381
      %v902 = vunpack.c.l.b16 %v382
      %v903 = vunpack.c.l.b16 %v383
      %v904 = vunpack.c.l.b16 %v384
      %v905 = vunpack.c.l.b16 %v385
      %v906 = vunpack.c.l.b16 %v386
      %v907 = vunpack.c.l.b16 %v387
      %v908 = vunpack.c.l.b16 %v388
      %v909 = vunpack.c.l.b16 %v389
      %v910 = vunpack.c.l.b16 %v390
      %v911 = vunpack.c.l.b16 %v391
      %v912 = vunpack.c.l.b16 %v392
      %v913 = vunpack.c.l.b16 %v393
      %v914 = vunpack.c.l.b16 %v394
      %v915 = vunpack.c.l.b16 %v395
      %v916 = vunpack.c.l.b16 %v396
      %v917 = vunpack.c.l.b16 %v397
      %v918 = vunpack.c.l.b16 %v398
      %v919 = vunpack.c.l.b16 %v399
      %v920 = vunpack.c.l.b16 %v400
      %v921 = vunpack.c.l.b16 %v401
      %v922 = vunpack.c.l.b16 %v402
      %v923 = vunpack.c.l.b16 %v403
      %v924 = vpack.c.b16 %v669, %v668
      %v925 = vpack.c.b16 %v671, %v670
      %v926 = vpack.c.b16 %v673, %v672
      %v927 = vpack.c.b16 %v675, %v674
      %v928 = vpack.c.b16 %v677, %v676
      %v929 = vpack.c.b16 %v679, %v678
      %v930 = vpack.c.b16 %v681, %v680
      %v931 = vpack.c.b16 %v683, %v682
      %v932 = vpack.c.b16 %v685, %v684
      %v933 = vpack.c.b16 %v687, %v686
      %v934 = vpack.c.b16 %v689, %v688
      %v935 = vpack.c.b16 %v691, %v690
      %v936 = vpack.c.b16 %v693, %v692
      %v937 = vpack.c.b16 %v695, %v694
      %v938 = vpack.c.b16 %v697, %v696
      %v939 = vpack.c.b16 %v699, %v698
      %v940 = vpack.c.b16 %v701, %v700
      %v941 = vpack.c.b16 %v703, %v702
      %v942 = vpack.c.b16 %v705, %v704
      %v943 = vpack.c.b16 %v707, %v706
      %v944 = vpack.c.b16 %v709, %v708
      %v945 = vpack.c.b16 %v711, %v710
      %v946 = vpack.c.b16 %v713, %v712
      %v947 = vpack.c.b16 %v715, %v714
      %v948 = vpack.c.b16 %v717, %v716
      %v949 = vpack.c.b16 %v719, %v718
      %v950 = vpack.c.b16 %v721, %v720
      %v951 = vpack.c.b16 %v723, %v722
      %v952 = vpack.c.b16 %v725, %v724
      %v953 = vpack.c.b16 %v727, %v726
      %v954 = vpack.c.b16 %v729, %v728
      %v955 = vpack.c.b16 %v731, %v730
      %v956 = vpack.c.b16 %v733, %v732
      %v957 = vpack.c.b16 %v735, %v734
      %v958 = vpack.c.b16 %v737, %v736
      %v959 = vpack.c.b16 %v739, %v738
      %v960 = vpack.c.b16 %v741, %v740
      %v961 = vpack.c.b16 %v743, %v742
      %v962 = vpack.c.b16 %v745, %v744
      %v963 = vpack.c.b16 %v747, %v746
      %v964 = vpack.c.b16 %v749, %v748
      %v965 = vpack.c.b16 %v751, %v750
      %v966 = vpack.c.b16 %v753, %v752
      %v967 = vpack.c.b16 %v755, %v754
      %v968 = vpack.c.b16 %v757, %v756
      %v969 = vpack.c.b16 %v759, %v758
      %v970 = vpack.c.b16 %v761, %v760
      %v971 = vpack.c.b16 %v763, %v762
      %v972 = vpack.c.b16 %v765, %v764
      %v973 = vpack.c.b16 %v767, %v766
      %v974 = vpack.c.b16 %v769, %v768
      %v975 = vpack.c.b16 %v771, %v770
      %v976 = vpack.c.b16 %v773, %v772
      %v977 = vpack.c.b16 %v775, %v774
      %v978 = vpack.c.b16 %v777, %v776
      %v979 = vpack.c.b16 %v779, %v778
      %v980 = vpack.c.b16 %v781, %v780
      %v981 = vpack.c.b16 %v783, %v782
      %v982 = vpack.c.b16 %v785, %v784
      %v983 = vpack.c.b16 %v787, %v786
      %v984 = vpack.c.b16 %v789, %v788
      %v985 = vpack.c.b16 %v791, %v790
      %v986 = vpack.c.b16 %v793, %v792
      %v987 = vpack.c.b16 %v795, %v794
      %v988 = vpack.c.b16 %v797, %v796
      %v989 = vpack.c.b16 %v799, %v798
      %v990 = vpack.c.b16 %v801, %v800
      %v991 = vpack.c.b16 %v803, %v802
      %v992 = vpack.c.b16 %v805, %v804
      %v993 = vpack.c.b16 %v807, %v806
      %v994 = vpack.c.b16 %v809, %v808
      %v995 = vpack.c.b16 %v811, %v810
      %v996 = vpack.c.b16 %v813, %v812
      %v997 = vpack.c.b16 %v815, %v814
      %v998 = vpack.c.b16 %v817, %v816
      %v999 = vpack.c.b16 %v819, %v818
      %v1000 = vpack.c.b16 %v821, %v820
      %v1001 = vpack.c.b16 %v823, %v822
      %v1002 = vpack.c.b16 %v825, %v824
      %v1003 = vpack.c.b16 %v827, %v826
      %v1004 = vpack.c.b16 %v829, %v828
      %v1005 = vpack.c.b16 %v831, %v830
      %v1006 = vpack.c.b16 %v833, %v832
      %v1007 = vpack.c.b16 %v835, %v834
      %v1008 = vpack.c.b16 %v837, %v836
      %v1009 = vpack.c.b16 %v839, %v838
      %v1010 = vpack.c.b16 %v841, %v840
      %v1011 = vpack.c.b16 %v843, %v842
      %v1012 = vpack.c.b16 %v845, %v844
      %v1013 = vpack.c.b16 %v847, %v846
      %v1014 = vpack.c.b16 %v849, %v848
      %v1015 = vpack.c.b16 %v851, %v850
      %v1016 = vpack.c.b16 %v853, %v852
      %v1017 = vpack.c.b16 %v855, %v854
      %v1018 = vpack.c.b16 %v857, %v856
      %v1019 = vpack.c.b16 %v859, %v858
      %v1020 = vpack.c.b16 %v861, %v860
      %v1021 = vpack.c.b16 %v863, %v862
      %v1022 = vpack.c.b16 %v865, %v864
      %v1023 = vpack.c.b16 %v867, %v866
      %v1024 = vpack.c.b16 %v869, %v868
      %v1025 = vpack.c.b16 %v871, %v870
      %v1026 = vpack.c.b16 %v873, %v872
      %v1027 = vpack.c.b16 %v875, %v874
      %v1028 = vpack.c.b16 %v877, %v876
      %v1029 = vpack.c.b16 %v879, %v878
      %v1030 = vpack.c.b16 %v881, %v880
      %v1031 = vpack.c.b16 %v883, %v882
      %v1032 = vpack.c.b16 %v885, %v884
      %v1033 = vpack.c.b16 %v887, %v886
      %v1034 = vpack.c.b16 %v889, %v888
      %v1035 = vpack.c.b16 %v891, %v890
      %v1036 = vpack.c.b16 %v893, %v892
      %v1037 = vpack.c.b16 %v895, %v894
      %v1038 = vpack.c.b16 %v897, %v896
      %v1039 = vpack.c.b16 %v899, %v898
      %v1040 = vpack.c.b16 %v901, %v900
      %v1041 = vpack.c.b16 %v903, %v902
      %v1042 = vpack.c.b16 %v905, %v904
      %v1043 = vpack.c.b16 %v907, %v906
      %v1044 = vpack.c.b16 %v909, %v908
      %v1045 = vpack.c.b16 %v911, %v910
      %v1046 = vpack.c.b16 %v913, %v912
      %v1047 = vpack.c.b16 %v915, %v914
      %v1048 = vpack.c.b16 %v917, %v916
      %v1049 = vpack.c.b16 %v919, %v918
      %v1050 = vpack.c.b16 %v921, %v920
      %v1051 = vpack.c.b16 %v923, %v922
      %v1060 = vunpack.c.l.b16 %v404
      %v1061 = vunpack.c.l.b16 %v405
      %v1062 = vunpack.c.l.b16 %v406
      %v1063 = vunpack.c.l.b16 %v407
      %v1064 = vunpack.c.l.b16 %v408
      %v1065 = vunpack.c.l.b16 %v409
      %v1066 = vunpack.c.l.b16 %v410
      %v1067 = vunpack.c.l.b16 %v411
      %v1068 = vpack.c.b16 %v1061, %v1060
      %v1069 = vpack.c.b16 %v1063, %v1062
      %v1070 = vpack.c.b16 %v1065, %v1064
      %v1071 = vpack.c.b16 %v1067, %v1066
      %vm1076 = vcmask 523264
      %v1078 = vsel %vm1076, %v924, 0
      %v1081 = vsel %vm1076, %v925, 0
      %v1084 = vsel %vm1076, %v926, 0
      %v1087 = vsel %vm1076, %v927, 0
      %v1090 = vsel %vm1076, %v928, 0
      %v1093 = vsel %vm1076, %v929, 0
      %v1096 = vsel %vm1076, %v930, 0
      %v1099 = vsel %vm1076, %v931, 0
      %v1102 = vsel %vm1076, %v932, 0
      %v1105 = vsel %vm1076, %v933, 0
      %v1108 = vsel %vm1076, %v934, 0
      %v1111 = vsel %vm1076, %v935, 0
      %v1114 = vsel %vm1076, %v936, 0
      %v1117 = vsel %vm1076, %v937, 0
      %v1120 = vsel %vm1076, %v938, 0
      %v1123 = vsel %vm1076, %v939, 0
      %v1126 = vsel %vm1076, %v940, 0
      %v1129 = vsel %vm1076, %v941, 0
      %v1132 = vsel %vm1076, %v942, 0
      %v1135 = vsel %vm1076, %v943, 0
      %v1138 = vsel %vm1076, %v944, 0
      %v1141 = vsel %vm1076, %v945, 0
      %v1144 = vsel %vm1076, %v946, 0
      %v1147 = vsel %vm1076, %v947, 0
      %v1150 = vsel %vm1076, %v948, 0
      %v1153 = vsel %vm1076, %v949, 0
      %v1156 = vsel %vm1076, %v950, 0
      %v1159 = vsel %vm1076, %v951, 0
      %v1162 = vsel %vm1076, %v952, 0
      %v1165 = vsel %vm1076, %v953, 0
      %v1168 = vsel %vm1076, %v954, 0
      %v1171 = vsel %vm1076, %v955, 0
      %v1174 = vsel %vm1076, %v956, 0
      %v1177 = vsel %vm1076, %v957, 0
      %v1180 = vsel %vm1076, %v958, 0
      %v1183 = vsel %vm1076, %v959, 0
      %v1186 = vsel %vm1076, %v960, 0
      %v1189 = vsel %vm1076, %v961, 0
      %v1192 = vsel %vm1076, %v962, 0
      %v1195 = vsel %vm1076, %v963, 0
      %v1198 = vsel %vm1076, %v964, 0
      %v1201 = vsel %vm1076, %v965, 0
      %v1204 = vsel %vm1076, %v966, 0
      %v1207 = vsel %vm1076, %v967, 0
      %v1210 = vsel %vm1076, %v968, 0
      %v1213 = vsel %vm1076, %v969, 0
      %v1216 = vsel %vm1076, %v970, 0
      %v1219 = vsel %vm1076, %v971, 0
      %v1222 = vsel %vm1076, %v972, 0
      %v1225 = vsel %vm1076, %v973, 0
      %v1228 = vsel %vm1076, %v974, 0
      %v1231 = vsel %vm1076, %v975, 0
      %v1234 = vsel %vm1076, %v976, 0
      %v1237 = vsel %vm1076, %v977, 0
      %v1240 = vsel %vm1076, %v978, 0
      %v1243 = vsel %vm1076, %v979, 0
      %v1246 = vsel %vm1076, %v980, 0
      %v1249 = vsel %vm1076, %v981, 0
      %v1252 = vsel %vm1076, %v982, 0
      %v1255 = vsel %vm1076, %v983, 0
      %v1258 = vsel %vm1076, %v984, 0
      %v1261 = vsel %vm1076, %v985, 0
      %v1264 = vsel %vm1076, %v986, 0
      %v1267 = vsel %vm1076, %v987, 0
      %v1270 = vsel %vm1076, %v988, 0
      %v1273 = vsel %vm1076, %v989, 0
      %v1276 = vsel %vm1076, %v990, 0
      %v1279 = vsel %vm1076, %v991, 0
      %v1282 = vsel %vm1076, %v992, 0
      %v1285 = vsel %vm1076, %v993, 0
      %v1288 = vsel %vm1076, %v994, 0
      %v1291 = vsel %vm1076, %v995, 0
      %v1294 = vsel %vm1076, %v996, 0
      %v1297 = vsel %vm1076, %v997, 0
      %v1300 = vsel %vm1076, %v998, 0
      %v1303 = vsel %vm1076, %v999, 0
      %v1306 = vsel %vm1076, %v1000, 0
      %v1309 = vsel %vm1076, %v1001, 0
      %v1312 = vsel %vm1076, %v1002, 0
      %v1315 = vsel %vm1076, %v1003, 0
      %v1318 = vsel %vm1076, %v1004, 0
      %v1321 = vsel %vm1076, %v1005, 0
      %v1324 = vsel %vm1076, %v1006, 0
      %v1327 = vsel %vm1076, %v1007, 0
      %v1330 = vsel %vm1076, %v1008, 0
      %v1333 = vsel %vm1076, %v1009, 0
      %v1336 = vsel %vm1076, %v1010, 0
      %v1339 = vsel %vm1076, %v1011, 0
      %v1342 = vsel %vm1076, %v1012, 0
      %v1345 = vsel %vm1076, %v1013, 0
      %v1348 = vsel %vm1076, %v1014, 0
      %v1351 = vsel %vm1076, %v1015, 0
      %v1354 = vsel %vm1076, %v1016, 0
      %v1357 = vsel %vm1076, %v1017, 0
      %v1360 = vsel %vm1076, %v1018, 0
      %v1363 = vsel %vm1076, %v1019, 0
      %v1366 = vsel %vm1076, %v1020, 0
      %v1369 = vsel %vm1076, %v1021, 0
      %v1372 = vsel %vm1076, %v1022, 0
      %v1375 = vsel %vm1076, %v1023, 0
      %v1378 = vsel %vm1076, %v1024, 0
      %v1381 = vsel %vm1076, %v1025, 0
      %v1384 = vsel %vm1076, %v1026, 0
      %v1387 = vsel %vm1076, %v1027, 0
      %v1390 = vsel %vm1076, %v1028, 0
      %v1393 = vsel %vm1076, %v1029, 0
      %v1396 = vsel %vm1076, %v1030, 0
      %v1399 = vsel %vm1076, %v1031, 0
      %v1402 = vsel %vm1076, %v1032, 0
      %v1405 = vsel %vm1076, %v1033, 0
      %v1408 = vsel %vm1076, %v1034, 0
      %v1411 = vsel %vm1076, %v1035, 0
      %v1414 = vsel %vm1076, %v1036, 0
      %v1417 = vsel %vm1076, %v1037, 0
      %v1420 = vsel %vm1076, %v1038, 0
      %v1423 = vsel %vm1076, %v1039, 0
      %v1426 = vsel %vm1076, %v1040, 0
      %v1429 = vsel %vm1076, %v1041, 0
      %v1432 = vsel %vm1076, %v1042, 0
      %v1435 = vsel %vm1076, %v1043, 0
      %v1438 = vsel %vm1076, %v1044, 0
      %v1441 = vsel %vm1076, %v1045, 0
      %v1444 = vsel %vm1076, %v1046, 0
      %v1447 = vsel %vm1076, %v1047, 0
      %v1450 = vsel %vm1076, %v1048, 0
      %v1453 = vsel %vm1076, %v1049, 0
      %v1456 = vsel %vm1076, %v1050, 0
      %v1459 = vsel %vm1076, %v1051, 0
      %1461 = vmatprep.subr.bf16.mxu0 0
      %1462 = vmatpush1.bf16.msra.mxu0 %v1068
      %1463 = vmatprep.subr.bf16.mxu0 0
      %1464 = vmatpush1.bf16.msra.mxu0 %v1069
      %1465 = vmatprep.subr.bf16.mxu0 0
      %1466 = vmatpush1.bf16.msra.mxu0 %v1070
      %1467 = vmatprep.subr.bf16.mxu0 0
      %1468 = vmatpush1.bf16.msra.mxu0 %v1071
      %1469 = vmatprep.subr.bf16.mxu0 0
      %1470 = vmatpush1.bf16.msra.mxu0 0
      %1471 = vmatprep.subr.bf16.mxu0 0
      %1472 = vmatpush1.bf16.msra.mxu0 0
      %1473 = vmatprep.subr.bf16.mxu0 0
      %1474 = vmatpush1.bf16.msra.mxu0 0
      %1475 = vmatprep.subr.bf16.mxu0 0
      %1476 = vmatpush1.bf16.msra.mxu0 0
      %1477 = vmatprep.subr.bf16.mxu0 0
      %1478 = vmatpush1.bf16.msra.mxu0 0
      %1479 = vmatprep.subr.bf16.mxu0 0
      %1480 = vmatpush1.bf16.msra.mxu0 0
      %1481 = vmatprep.subr.bf16.mxu0 0
      %1482 = vmatpush1.bf16.msra.mxu0 0
      %1483 = vmatprep.subr.bf16.mxu0 0
      %1484 = vmatpush1.bf16.msra.mxu0 0
      %1485 = vmatprep.subr.bf16.mxu0 0
      %1486 = vmatpush1.bf16.msra.mxu0 0
      %1487 = vmatprep.subr.bf16.mxu0 0
      %1488 = vmatpush1.bf16.msra.mxu0 0
      %1489 = vmatprep.subr.bf16.mxu0 0
      %1490 = vmatpush1.bf16.msra.mxu0 0
      %1491 = vmatprep.subr.bf16.mxu0 0
      %1492 = vmatpush1.bf16.msra.mxu0 0
      %1493 = vmatprep.mubr.bf16.mxu0 0
      %1494 = vmatmul.mubr.bf16.gmra.mrb[0].mxu0 %v1078
      %v1495 = vpop.f32.mrb[0].mxu0
      %v1496 = vadd.f32 0.0, %v1495
      %v1497 = vpop.f32.mrb[0].mxu0
      %v1498 = vpop.f32.mrb[0].mxu0
      %v1499 = vadd.f32 0.0, %v1498
      %v1500 = vpop.f32.mrb[0].mxu0
      %1501 = vmatprep.mubr.bf16.mxu0 0
      %1502 = vmatmul.mubr.bf16.gmra.mrb[0].mxu0 %v1081
      %v1503 = vpop.f32.mrb[0].mxu0
      %v1504 = vadd.f32 0.0, %v1503
      %v1505 = vpop.f32.mrb[0].mxu0
      %v1506 = vpop.f32.mrb[0].mxu0
      %v1507 = vadd.f32 0.0, %v1506
      %v1508 = vpop.f32.mrb[0].mxu0
      %1509 = vmatprep.mubr.bf16.mxu0 0
      %1510 = vmatmul.mubr.bf16.gmra.mrb[0].mxu0 %v1084
      %v1511 = vpop.f32.mrb[0].mxu0
      %v1512 = vadd.f32 0.0, %v1511
      %v1513 = vpop.f32.mrb[0].mxu0
      %v1514 = vpop.f32.mrb[0].mxu0
      %v1515 = vadd.f32 0.0, %v1514
      %v1516 = vpop.f32.mrb[0].mxu0
      %1517 = vmatprep.mubr.bf16.mxu0 0
      %1518 = vmatmul.mubr.bf16.gmra.mrb[0].mxu0 %v1087
      %v1519 = vpop.f32.mrb[0].mxu0
      %v1520 = vadd.f32 0.0, %v1519
      %v1521 = vpop.f32.mrb[0].mxu0
      %v1522 = vpop.f32.mrb[0].mxu0
      %v1523 = vadd.f32 0.0, %v1522
      %v1524 = vpop.f32.mrb[0].mxu0
      %1525 = vmatprep.mubr.bf16.mxu0 0
      %1526 = vmatmul.mubr.bf16.gmra.mrb[0].mxu0 %v1090
      %v1527 = vpop.f32.mrb[0].mxu0
      %v1528 = vadd.f32 0.0, %v1527
      %v1529 = vpop.f32.mrb[0].mxu0
      %v1530 = vpop.f32.mrb[0].mxu0
      %v1531 = vadd.f32 0.0, %v1530
      %v1532 = vpop.f32.mrb[0].mxu0
      %1533 = vmatprep.mubr.bf16.mxu0 0
      %1534 = vmatmul.mubr.bf16.gmra.mrb[0].mxu0 %v1093
      %v1535 = vpop.f32.mrb[0].mxu0
      %v1536 = vadd.f32 0.0, %v1535
      %v1537 = vpop.f32.mrb[0].mxu0
      %v1538 = vpop.f32.mrb[0].mxu0
      %v1539 = vadd.f32 0.0, %v1538
      %v1540 = vpop.f32.mrb[0].mxu0
      %1541 = vmatprep.mubr.bf16.mxu0 0
      %1542 = vmatmul.mubr.bf16.gmra.mrb[0].mxu0 %v1096
      %v1543 = vpop.f32.mrb[0].mxu0
      %v1544 = vadd.f32 0.0, %v1543
      %v1545 = vpop.f32.mrb[0].mxu0
      %v1546 = vpop.f32.mrb[0].mxu0
      %v1547 = vadd.f32 0.0, %v1546
      %v1548 = vpop.f32.mrb[0].mxu0
      %1549 = vmatprep.mubr.bf16.mxu0 0
      %1550 = vmatmul.mubr.bf16.gmra.mrb[0].mxu0 %v1099
      %v1551 = vpop.f32.mrb[0].mxu0
      %v1552 = vadd.f32 0.0, %v1551
      %v1553 = vpop.f32.mrb[0].mxu0
      %v1554 = vpop.f32.mrb[0].mxu0
      %v1555 = vadd.f32 0.0, %v1554
      %v1556 = vpop.f32.mrb[0].mxu0
      %1557 = vmatprep.mubr.bf16.mxu0 0
      %1558 = vmatmul.mubr.bf16.gmra.mrb[0].mxu0 %v1102
      %v1559 = vpop.f32.mrb[0].mxu0
      %v1560 = vadd.f32 0.0, %v1559
      %v1561 = vpop.f32.mrb[0].mxu0
      %v1562 = vpop.f32.mrb[0].mxu0
      %v1563 = vadd.f32 0.0, %v1562
      %v1564 = vpop.f32.mrb[0].mxu0
      %1565 = vmatprep.mubr.bf16.mxu0 0
      %1566 = vmatmul.mubr.bf16.gmra.mrb[0].mxu0 %v1105
      %v1567 = vpop.f32.mrb[0].mxu0
      %v1568 = vadd.f32 0.0, %v1567
      %v1569 = vpop.f32.mrb[0].mxu0
      %v1570 = vpop.f32.mrb[0].mxu0
      %v1571 = vadd.f32 0.0, %v1570
      %v1572 = vpop.f32.mrb[0].mxu0
      %1573 = vmatprep.mubr.bf16.mxu0 0
      %1574 = vmatmul.mubr.bf16.gmra.mrb[0].mxu0 %v1108
      %v1575 = vpop.f32.mrb[0].mxu0
      %v1576 = vadd.f32 0.0, %v1575
      %v1577 = vpop.f32.mrb[0].mxu0
      %v1578 = vpop.f32.mrb[0].mxu0
      %v1579 = vadd.f32 0.0, %v1578
      %v1580 = vpop.f32.mrb[0].mxu0
      %1581 = vmatprep.mubr.bf16.mxu0 0
      %1582 = vmatmul.mubr.bf16.gmra.mrb[0].mxu0 %v1111
      %v1583 = vpop.f32.mrb[0].mxu0
      %v1584 = vadd.f32 0.0, %v1583
      %v1585 = vpop.f32.mrb[0].mxu0
      %v1586 = vpop.f32.mrb[0].mxu0
      %v1587 = vadd.f32 0.0, %v1586
      %v1588 = vpop.f32.mrb[0].mxu0
      %1589 = vmatprep.mubr.bf16.mxu0 0
      %1590 = vmatmul.mubr.bf16.gmra.mrb[0].mxu0 %v1114
      %v1591 = vpop.f32.mrb[0].mxu0
      %v1592 = vadd.f32 0.0, %v1591
      %v1593 = vpop.f32.mrb[0].mxu0
      %v1594 = vpop.f32.mrb[0].mxu0
      %v1595 = vadd.f32 0.0, %v1594
      %v1596 = vpop.f32.mrb[0].mxu0
      %1597 = vmatprep.mubr.bf16.mxu0 0
      %1598 = vmatmul.mubr.bf16.gmra.mrb[0].mxu0 %v1117
      %v1599 = vpop.f32.mrb[0].mxu0
      %v1600 = vadd.f32 0.0, %v1599
      %v1601 = vpop.f32.mrb[0].mxu0
      %v1602 = vpop.f32.mrb[0].mxu0
      %v1603 = vadd.f32 0.0, %v1602
      %v1604 = vpop.f32.mrb[0].mxu0
      %1605 = vmatprep.mubr.bf16.mxu0 0
      %1606 = vmatmul.mubr.bf16.gmra.mrb[0].mxu0 %v1120
      %v1607 = vpop.f32.mrb[0].mxu0
      %v1608 = vadd.f32 0.0, %v1607
      %v1609 = vpop.f32.mrb[0].mxu0
      %v1610 = vpop.f32.mrb[0].mxu0
      %v1611 = vadd.f32 0.0, %v1610
      %v1612 = vpop.f32.mrb[0].mxu0
      %1613 = vmatprep.mubr.bf16.mxu0 0
      %1614 = vmatmul.mubr.bf16.gmra.mrb[0].mxu0 %v1123
      %v1615 = vpop.f32.mrb[0].mxu0
      %v1616 = vadd.f32 0.0, %v1615
      %v1617 = vpop.f32.mrb[0].mxu0
      %v1618 = vpop.f32.mrb[0].mxu0
      %v1619 = vadd.f32 0.0, %v1618
      %v1620 = vpop.f32.mrb[0].mxu0
      %1621 = vmatprep.mubr.bf16.mxu0 0
      %1622 = vmatmul.mubr.bf16.gmra.mrb[0].mxu0 %v1126
      %v1623 = vpop.f32.mrb[0].mxu0
      %v1624 = vadd.f32 0.0, %v1623
      %v1625 = vpop.f32.mrb[0].mxu0
      %v1626 = vpop.f32.mrb[0].mxu0
      %v1627 = vadd.f32 0.0, %v1626
      %v1628 = vpop.f32.mrb[0].mxu0
      %1629 = vmatprep.mubr.bf16.mxu0 0
      %1630 = vmatmul.mubr.bf16.gmra.mrb[0].mxu0 %v1129
      %v1631 = vpop.f32.mrb[0].mxu0
      %v1632 = vadd.f32 0.0, %v1631
      %v1633 = vpop.f32.mrb[0].mxu0
      %v1634 = vpop.f32.mrb[0].mxu0
      %v1635 = vadd.f32 0.0, %v1634
      %v1636 = vpop.f32.mrb[0].mxu0
      %1637 = vmatprep.mubr.bf16.mxu0 0
      %1638 = vmatmul.mubr.bf16.gmra.mrb[0].mxu0 %v1132
      %v1639 = vpop.f32.mrb[0].mxu0
      %v1640 = vadd.f32 0.0, %v1639
      %v1641 = vpop.f32.mrb[0].mxu0
      %v1642 = vpop.f32.mrb[0].mxu0
      %v1643 = vadd.f32 0.0, %v1642
      %v1644 = vpop.f32.mrb[0].mxu0
      %1645 = vmatprep.mubr.bf16.mxu0 0
      %1646 = vmatmul.mubr.bf16.gmra.mrb[0].mxu0 %v1135
      %v1647 = vpop.f32.mrb[0].mxu0
      %v1648 = vadd.f32 0.0, %v1647
      %v1649 = vpop.f32.mrb[0].mxu0
      %v1650 = vpop.f32.mrb[0].mxu0
      %v1651 = vadd.f32 0.0, %v1650
      %v1652 = vpop.f32.mrb[0].mxu0
      %1653 = vmatprep.mubr.bf16.mxu0 0
      %1654 = vmatmul.mubr.bf16.gmra.mrb[0].mxu0 %v1138
      %v1655 = vpop.f32.mrb[0].mxu0
      %v1656 = vadd.f32 0.0, %v1655
      %v1657 = vpop.f32.mrb[0].mxu0
      %v1658 = vpop.f32.mrb[0].mxu0
      %v1659 = vadd.f32 0.0, %v1658
      %v1660 = vpop.f32.mrb[0].mxu0
      %1661 = vmatprep.mubr.bf16.mxu0 0
      %1662 = vmatmul.mubr.bf16.gmra.mrb[0].mxu0 %v1141
      %v1663 = vpop.f32.mrb[0].mxu0
      %v1664 = vadd.f32 0.0, %v1663
      %v1665 = vpop.f32.mrb[0].mxu0
      %v1666 = vpop.f32.mrb[0].mxu0
      %v1667 = vadd.f32 0.0, %v1666
      %v1668 = vpop.f32.mrb[0].mxu0
      %1669 = vmatprep.mubr.bf16.mxu0 0
      %1670 = vmatmul.mubr.bf16.gmra.mrb[0].mxu0 %v1144
      %v1671 = vpop.f32.mrb[0].mxu0
      %v1672 = vadd.f32 0.0, %v1671
      %v1673 = vpop.f32.mrb[0].mxu0
      %v1674 = vpop.f32.mrb[0].mxu0
      %v1675 = vadd.f32 0.0, %v1674
      %v1676 = vpop.f32.mrb[0].mxu0
      %1677 = vmatprep.mubr.bf16.mxu0 0
      %1678 = vmatmul.mubr.bf16.gmra.mrb[0].mxu0 %v1147
      %v1679 = vpop.f32.mrb[0].mxu0
      %v1680 = vadd.f32 0.0, %v1679
      %v1681 = vpop.f32.mrb[0].mxu0
      %v1682 = vpop.f32.mrb[0].mxu0
      %v1683 = vadd.f32 0.0, %v1682
      %v1684 = vpop.f32.mrb[0].mxu0
      %1685 = vmatprep.mubr.bf16.mxu0 0
      %1686 = vmatmul.mubr.bf16.gmra.mrb[0].mxu0 %v1150
      %v1687 = vpop.f32.mrb[0].mxu0
      %v1688 = vadd.f32 0.0, %v1687
      %v1689 = vpop.f32.mrb[0].mxu0
      %v1690 = vpop.f32.mrb[0].mxu0
      %v1691 = vadd.f32 0.0, %v1690
      %v1692 = vpop.f32.mrb[0].mxu0
      %1693 = vmatprep.mubr.bf16.mxu0 0
      %1694 = vmatmul.mubr.bf16.gmra.mrb[0].mxu0 %v1153
      %v1695 = vpop.f32.mrb[0].mxu0
      %v1696 = vadd.f32 0.0, %v1695
      %v1697 = vpop.f32.mrb[0].mxu0
      %v1698 = vpop.f32.mrb[0].mxu0
      %v1699 = vadd.f32 0.0, %v1698
      %v1700 = vpop.f32.mrb[0].mxu0
      %1701 = vmatprep.mubr.bf16.mxu0 0
      %1702 = vmatmul.mubr.bf16.gmra.mrb[0].mxu0 %v1156
      %v1703 = vpop.f32.mrb[0].mxu0
      %v1704 = vadd.f32 0.0, %v1703
      %v1705 = vpop.f32.mrb[0].mxu0
      %v1706 = vpop.f32.mrb[0].mxu0
      %v1707 = vadd.f32 0.0, %v1706
      %v1708 = vpop.f32.mrb[0].mxu0
      %1709 = vmatprep.mubr.bf16.mxu0 0
      %1710 = vmatmul.mubr.bf16.gmra.mrb[0].mxu0 %v1159
      %v1711 = vpop.f32.mrb[0].mxu0
      %v1712 = vadd.f32 0.0, %v1711
      %v1713 = vpop.f32.mrb[0].mxu0
      %v1714 = vpop.f32.mrb[0].mxu0
      %v1715 = vadd.f32 0.0, %v1714
      %v1716 = vpop.f32.mrb[0].mxu0
      %1717 = vmatprep.mubr.bf16.mxu0 0
      %1718 = vmatmul.mubr.bf16.gmra.mrb[0].mxu0 %v1162
      %v1719 = vpop.f32.mrb[0].mxu0
      %v1720 = vadd.f32 0.0, %v1719
      %v1721 = vpop.f32.mrb[0].mxu0
      %v1722 = vpop.f32.mrb[0].mxu0
      %v1723 = vadd.f32 0.0, %v1722
      %v1724 = vpop.f32.mrb[0].mxu0
      %1725 = vmatprep.mubr.bf16.mxu0 0
      %1726 = vmatmul.mubr.bf16.gmra.mrb[0].mxu0 %v1165
      %v1727 = vpop.f32.mrb[0].mxu0
      %v1728 = vadd.f32 0.0, %v1727
      %v1729 = vpop.f32.mrb[0].mxu0
      %v1730 = vpop.f32.mrb[0].mxu0
      %v1731 = vadd.f32 0.0, %v1730
      %v1732 = vpop.f32.mrb[0].mxu0
      %1733 = vmatprep.mubr.bf16.mxu0 0
      %1734 = vmatmul.mubr.bf16.gmra.mrb[0].mxu0 %v1168
      %v1735 = vpop.f32.mrb[0].mxu0
      %v1736 = vadd.f32 0.0, %v1735
      %v1737 = vpop.f32.mrb[0].mxu0
      %v1738 = vpop.f32.mrb[0].mxu0
      %v1739 = vadd.f32 0.0, %v1738
      %v1740 = vpop.f32.mrb[0].mxu0
      %1741 = vmatprep.mubr.bf16.mxu0 0
      %1742 = vmatmul.mubr.bf16.gmra.mrb[0].mxu0 %v1171
      %v1743 = vpop.f32.mrb[0].mxu0
      %v1744 = vadd.f32 0.0, %v1743
      %v1745 = vpop.f32.mrb[0].mxu0
      %v1746 = vpop.f32.mrb[0].mxu0
      %v1747 = vadd.f32 0.0, %v1746
      %v1748 = vpop.f32.mrb[0].mxu0
      %1749 = vmatprep.mubr.bf16.mxu0 0
      %1750 = vmatmul.mubr.bf16.gmra.mrb[0].mxu0 %v1174
      %v1751 = vpop.f32.mrb[0].mxu0
      %v1752 = vadd.f32 0.0, %v1751
      %v1753 = vpop.f32.mrb[0].mxu0
      %v1754 = vpop.f32.mrb[0].mxu0
      %v1755 = vadd.f32 0.0, %v1754
      %v1756 = vpop.f32.mrb[0].mxu0
      %1757 = vmatprep.mubr.bf16.mxu0 0
      %1758 = vmatmul.mubr.bf16.gmra.mrb[0].mxu0 %v1177
      %v1759 = vpop.f32.mrb[0].mxu0
      %v1760 = vadd.f32 0.0, %v1759
      %v1761 = vpop.f32.mrb[0].mxu0
      %v1762 = vpop.f32.mrb[0].mxu0
      %v1763 = vadd.f32 0.0, %v1762
      %v1764 = vpop.f32.mrb[0].mxu0
      %1765 = vmatprep.mubr.bf16.mxu0 0
      %1766 = vmatmul.mubr.bf16.gmra.mrb[0].mxu0 %v1180
      %v1767 = vpop.f32.mrb[0].mxu0
      %v1768 = vadd.f32 0.0, %v1767
      %v1769 = vpop.f32.mrb[0].mxu0
      %v1770 = vpop.f32.mrb[0].mxu0
      %v1771 = vadd.f32 0.0, %v1770
      %v1772 = vpop.f32.mrb[0].mxu0
      %1773 = vmatprep.mubr.bf16.mxu0 0
      %1774 = vmatmul.mubr.bf16.gmra.mrb[0].mxu0 %v1183
      %v1775 = vpop.f32.mrb[0].mxu0
      %v1776 = vadd.f32 0.0, %v1775
      %v1777 = vpop.f32.mrb[0].mxu0
      %v1778 = vpop.f32.mrb[0].mxu0
      %v1779 = vadd.f32 0.0, %v1778
      %v1780 = vpop.f32.mrb[0].mxu0
      %1781 = vmatprep.mubr.bf16.mxu0 0
      %1782 = vmatmul.mubr.bf16.gmra.mrb[0].mxu0 %v1186
      %v1783 = vpop.f32.mrb[0].mxu0
      %v1784 = vadd.f32 0.0, %v1783
      %v1785 = vpop.f32.mrb[0].mxu0
      %v1786 = vpop.f32.mrb[0].mxu0
      %v1787 = vadd.f32 0.0, %v1786
      %v1788 = vpop.f32.mrb[0].mxu0
      %1789 = vmatprep.mubr.bf16.mxu0 0
      %1790 = vmatmul.mubr.bf16.gmra.mrb[0].mxu0 %v1189
      %v1791 = vpop.f32.mrb[0].mxu0
      %v1792 = vadd.f32 0.0, %v1791
      %v1793 = vpop.f32.mrb[0].mxu0
      %v1794 = vpop.f32.mrb[0].mxu0
      %v1795 = vadd.f32 0.0, %v1794
      %v1796 = vpop.f32.mrb[0].mxu0
      %1797 = vmatprep.mubr.bf16.mxu0 0
      %1798 = vmatmul.mubr.bf16.gmra.mrb[0].mxu0 %v1192
      %v1799 = vpop.f32.mrb[0].mxu0
      %v1800 = vadd.f32 0.0, %v1799
      %v1801 = vpop.f32.mrb[0].mxu0
      %v1802 = vpop.f32.mrb[0].mxu0
      %v1803 = vadd.f32 0.0, %v1802
      %v1804 = vpop.f32.mrb[0].mxu0
      %1805 = vmatprep.mubr.bf16.mxu0 0
      %1806 = vmatmul.mubr.bf16.gmra.mrb[0].mxu0 %v1195
      %v1807 = vpop.f32.mrb[0].mxu0
      %v1808 = vadd.f32 0.0, %v1807
      %v1809 = vpop.f32.mrb[0].mxu0
      %v1810 = vpop.f32.mrb[0].mxu0
      %v1811 = vadd.f32 0.0, %v1810
      %v1812 = vpop.f32.mrb[0].mxu0
      %1813 = vmatprep.mubr.bf16.mxu0 0
      %1814 = vmatmul.mubr.bf16.gmra.mrb[0].mxu0 %v1198
      %v1815 = vpop.f32.mrb[0].mxu0
      %v1816 = vadd.f32 0.0, %v1815
      %v1817 = vpop.f32.mrb[0].mxu0
      %v1818 = vpop.f32.mrb[0].mxu0
      %v1819 = vadd.f32 0.0, %v1818
      %v1820 = vpop.f32.mrb[0].mxu0
      %1821 = vmatprep.mubr.bf16.mxu0 0
      %1822 = vmatmul.mubr.bf16.gmra.mrb[0].mxu0 %v1201
      %v1823 = vpop.f32.mrb[0].mxu0
      %v1824 = vadd.f32 0.0, %v1823
      %v1825 = vpop.f32.mrb[0].mxu0
      %v1826 = vpop.f32.mrb[0].mxu0
      %v1827 = vadd.f32 0.0, %v1826
      %v1828 = vpop.f32.mrb[0].mxu0
      %1829 = vmatprep.mubr.bf16.mxu0 0
      %1830 = vmatmul.mubr.bf16.gmra.mrb[0].mxu0 %v1204
      %v1831 = vpop.f32.mrb[0].mxu0
      %v1832 = vadd.f32 0.0, %v1831
      %v1833 = vpop.f32.mrb[0].mxu0
      %v1834 = vpop.f32.mrb[0].mxu0
      %v1835 = vadd.f32 0.0, %v1834
      %v1836 = vpop.f32.mrb[0].mxu0
      %1837 = vmatprep.mubr.bf16.mxu0 0
      %1838 = vmatmul.mubr.bf16.gmra.mrb[0].mxu0 %v1207
      %v1839 = vpop.f32.mrb[0].mxu0
      %v1840 = vadd.f32 0.0, %v1839
      %v1841 = vpop.f32.mrb[0].mxu0
      %v1842 = vpop.f32.mrb[0].mxu0
      %v1843 = vadd.f32 0.0, %v1842
      %v1844 = vpop.f32.mrb[0].mxu0
      %1845 = vmatprep.mubr.bf16.mxu0 0
      %1846 = vmatmul.mubr.bf16.gmra.mrb[0].mxu0 %v1210
      %v1847 = vpop.f32.mrb[0].mxu0
      %v1848 = vadd.f32 0.0, %v1847
      %v1849 = vpop.f32.mrb[0].mxu0
      %v1850 = vpop.f32.mrb[0].mxu0
      %v1851 = vadd.f32 0.0, %v1850
      %v1852 = vpop.f32.mrb[0].mxu0
      %1853 = vmatprep.mubr.bf16.mxu0 0
      %1854 = vmatmul.mubr.bf16.gmra.mrb[0].mxu0 %v1213
      %v1855 = vpop.f32.mrb[0].mxu0
      %v1856 = vadd.f32 0.0, %v1855
      %v1857 = vpop.f32.mrb[0].mxu0
      %v1858 = vpop.f32.mrb[0].mxu0
      %v1859 = vadd.f32 0.0, %v1858
      %v1860 = vpop.f32.mrb[0].mxu0
      %1861 = vmatprep.mubr.bf16.mxu0 0
      %1862 = vmatmul.mubr.bf16.gmra.mrb[0].mxu0 %v1216
      %v1863 = vpop.f32.mrb[0].mxu0
      %v1864 = vadd.f32 0.0, %v1863
      %v1865 = vpop.f32.mrb[0].mxu0
      %v1866 = vpop.f32.mrb[0].mxu0
      %v1867 = vadd.f32 0.0, %v1866
      %v1868 = vpop.f32.mrb[0].mxu0
      %1869 = vmatprep.mubr.bf16.mxu0 0
      %1870 = vmatmul.mubr.bf16.gmra.mrb[0].mxu0 %v1219
      %v1871 = vpop.f32.mrb[0].mxu0
      %v1872 = vadd.f32 0.0, %v1871
      %v1873 = vpop.f32.mrb[0].mxu0
      %v1874 = vpop.f32.mrb[0].mxu0
      %v1875 = vadd.f32 0.0, %v1874
      %v1876 = vpop.f32.mrb[0].mxu0
      %1877 = vmatprep.mubr.bf16.mxu0 0
      %1878 = vmatmul.mubr.bf16.gmra.mrb[0].mxu0 %v1222
      %v1879 = vpop.f32.mrb[0].mxu0
      %v1880 = vadd.f32 0.0, %v1879
      %v1881 = vpop.f32.mrb[0].mxu0
      %v1882 = vpop.f32.mrb[0].mxu0
      %v1883 = vadd.f32 0.0, %v1882
      %v1884 = vpop.f32.mrb[0].mxu0
      %1885 = vmatprep.mubr.bf16.mxu0 0
      %1886 = vmatmul.mubr.bf16.gmra.mrb[0].mxu0 %v1225
      %v1887 = vpop.f32.mrb[0].mxu0
      %v1888 = vadd.f32 0.0, %v1887
      %v1889 = vpop.f32.mrb[0].mxu0
      %v1890 = vpop.f32.mrb[0].mxu0
      %v1891 = vadd.f32 0.0, %v1890
      %v1892 = vpop.f32.mrb[0].mxu0
      %1893 = vmatprep.mubr.bf16.mxu0 0
      %1894 = vmatmul.mubr.bf16.gmra.mrb[0].mxu0 %v1228
      %v1895 = vpop.f32.mrb[0].mxu0
      %v1896 = vadd.f32 0.0, %v1895
      %v1897 = vpop.f32.mrb[0].mxu0
      %v1898 = vpop.f32.mrb[0].mxu0
      %v1899 = vadd.f32 0.0, %v1898
      %v1900 = vpop.f32.mrb[0].mxu0
      %1901 = vmatprep.mubr.bf16.mxu0 0
      %1902 = vmatmul.mubr.bf16.gmra.mrb[0].mxu0 %v1231
      %v1903 = vpop.f32.mrb[0].mxu0
      %v1904 = vadd.f32 0.0, %v1903
      %v1905 = vpop.f32.mrb[0].mxu0
      %v1906 = vpop.f32.mrb[0].mxu0
      %v1907 = vadd.f32 0.0, %v1906
      %v1908 = vpop.f32.mrb[0].mxu0
      %1909 = vmatprep.mubr.bf16.mxu0 0
      %1910 = vmatmul.mubr.bf16.gmra.mrb[0].mxu0 %v1234
      %v1911 = vpop.f32.mrb[0].mxu0
      %v1912 = vadd.f32 0.0, %v1911
      %v1913 = vpop.f32.mrb[0].mxu0
      %v1914 = vpop.f32.mrb[0].mxu0
      %v1915 = vadd.f32 0.0, %v1914
      %v1916 = vpop.f32.mrb[0].mxu0
      %1917 = vmatprep.mubr.bf16.mxu0 0
      %1918 = vmatmul.mubr.bf16.gmra.mrb[0].mxu0 %v1237
      %v1919 = vpop.f32.mrb[0].mxu0
      %v1920 = vadd.f32 0.0, %v1919
      %v1921 = vpop.f32.mrb[0].mxu0
      %v1922 = vpop.f32.mrb[0].mxu0
      %v1923 = vadd.f32 0.0, %v1922
      %v1924 = vpop.f32.mrb[0].mxu0
      %1925 = vmatprep.mubr.bf16.mxu0 0
      %1926 = vmatmul.mubr.bf16.gmra.mrb[0].mxu0 %v1240
      %v1927 = vpop.f32.mrb[0].mxu0
      %v1928 = vadd.f32 0.0, %v1927
      %v1929 = vpop.f32.mrb[0].mxu0
      %v1930 = vpop.f32.mrb[0].mxu0
      %v1931 = vadd.f32 0.0, %v1930
      %v1932 = vpop.f32.mrb[0].mxu0
      %1933 = vmatprep.mubr.bf16.mxu0 0
      %1934 = vmatmul.mubr.bf16.gmra.mrb[0].mxu0 %v1243
      %v1935 = vpop.f32.mrb[0].mxu0
      %v1936 = vadd.f32 0.0, %v1935
      %v1937 = vpop.f32.mrb[0].mxu0
      %v1938 = vpop.f32.mrb[0].mxu0
      %v1939 = vadd.f32 0.0, %v1938
      %v1940 = vpop.f32.mrb[0].mxu0
      %1941 = vmatprep.mubr.bf16.mxu0 0
      %1942 = vmatmul.mubr.bf16.gmra.mrb[0].mxu0 %v1246
      %v1943 = vpop.f32.mrb[0].mxu0
      %v1944 = vadd.f32 0.0, %v1943
      %v1945 = vpop.f32.mrb[0].mxu0
      %v1946 = vpop.f32.mrb[0].mxu0
      %v1947 = vadd.f32 0.0, %v1946
      %v1948 = vpop.f32.mrb[0].mxu0
      %1949 = vmatprep.mubr.bf16.mxu0 0
      %1950 = vmatmul.mubr.bf16.gmra.mrb[0].mxu0 %v1249
      %v1951 = vpop.f32.mrb[0].mxu0
      %v1952 = vadd.f32 0.0, %v1951
      %v1953 = vpop.f32.mrb[0].mxu0
      %v1954 = vpop.f32.mrb[0].mxu0
      %v1955 = vadd.f32 0.0, %v1954
      %v1956 = vpop.f32.mrb[0].mxu0
      %1957 = vmatprep.mubr.bf16.mxu0 0
      %1958 = vmatmul.mubr.bf16.gmra.mrb[0].mxu0 %v1252
      %v1959 = vpop.f32.mrb[0].mxu0
      %v1960 = vadd.f32 0.0, %v1959
      %v1961 = vpop.f32.mrb[0].mxu0
      %v1962 = vpop.f32.mrb[0].mxu0
      %v1963 = vadd.f32 0.0, %v1962
      %v1964 = vpop.f32.mrb[0].mxu0
      %1965 = vmatprep.mubr.bf16.mxu0 0
      %1966 = vmatmul.mubr.bf16.gmra.mrb[0].mxu0 %v1255
      %v1967 = vpop.f32.mrb[0].mxu0
      %v1968 = vadd.f32 0.0, %v1967
      %v1969 = vpop.f32.mrb[0].mxu0
      %v1970 = vpop.f32.mrb[0].mxu0
      %v1971 = vadd.f32 0.0, %v1970
      %v1972 = vpop.f32.mrb[0].mxu0
      %1973 = vmatprep.mubr.bf16.mxu0 0
      %1974 = vmatmul.mubr.bf16.gmra.mrb[0].mxu0 %v1258
      %v1975 = vpop.f32.mrb[0].mxu0
      %v1976 = vadd.f32 0.0, %v1975
      %v1977 = vpop.f32.mrb[0].mxu0
      %v1978 = vpop.f32.mrb[0].mxu0
      %v1979 = vadd.f32 0.0, %v1978
      %v1980 = vpop.f32.mrb[0].mxu0
      %1981 = vmatprep.mubr.bf16.mxu0 0
      %1982 = vmatmul.mubr.bf16.gmra.mrb[0].mxu0 %v1261
      %v1983 = vpop.f32.mrb[0].mxu0
      %v1984 = vadd.f32 0.0, %v1983
      %v1985 = vpop.f32.mrb[0].mxu0
      %v1986 = vpop.f32.mrb[0].mxu0
      %v1987 = vadd.f32 0.0, %v1986
      %v1988 = vpop.f32.mrb[0].mxu0
      %1989 = vmatprep.mubr.bf16.mxu0 0
      %1990 = vmatmul.mubr.bf16.gmra.mrb[0].mxu0 %v1264
      %v1991 = vpop.f32.mrb[0].mxu0
      %v1992 = vadd.f32 0.0, %v1991
      %v1993 = vpop.f32.mrb[0].mxu0
      %v1994 = vpop.f32.mrb[0].mxu0
      %v1995 = vadd.f32 0.0, %v1994
      %v1996 = vpop.f32.mrb[0].mxu0
      %1997 = vmatprep.mubr.bf16.mxu0 0
      %1998 = vmatmul.mubr.bf16.gmra.mrb[0].mxu0 %v1267
      %v1999 = vpop.f32.mrb[0].mxu0
      %v2000 = vadd.f32 0.0, %v1999
      %v2001 = vpop.f32.mrb[0].mxu0
      %v2002 = vpop.f32.mrb[0].mxu0
      %v2003 = vadd.f32 0.0, %v2002
      %v2004 = vpop.f32.mrb[0].mxu0
      %2005 = vmatprep.mubr.bf16.mxu0 0
      %2006 = vmatmul.mubr.bf16.gmra.mrb[0].mxu0 %v1270
      %v2007 = vpop.f32.mrb[0].mxu0
      %v2008 = vadd.f32 0.0, %v2007
      %v2009 = vpop.f32.mrb[0].mxu0
      %v2010 = vpop.f32.mrb[0].mxu0
      %v2011 = vadd.f32 0.0, %v2010
      %v2012 = vpop.f32.mrb[0].mxu0
      %2013 = vmatprep.mubr.bf16.mxu0 0
      %2014 = vmatmul.mubr.bf16.gmra.mrb[0].mxu0 %v1273
      %v2015 = vpop.f32.mrb[0].mxu0
      %v2016 = vadd.f32 0.0, %v2015
      %v2017 = vpop.f32.mrb[0].mxu0
      %v2018 = vpop.f32.mrb[0].mxu0
      %v2019 = vadd.f32 0.0, %v2018
      %v2020 = vpop.f32.mrb[0].mxu0
      %2021 = vmatprep.mubr.bf16.mxu0 0
      %2022 = vmatmul.mubr.bf16.gmra.mrb[0].mxu0 %v1276
      %v2023 = vpop.f32.mrb[0].mxu0
      %v2024 = vadd.f32 0.0, %v2023
      %v2025 = vpop.f32.mrb[0].mxu0
      %v2026 = vpop.f32.mrb[0].mxu0
      %v2027 = vadd.f32 0.0, %v2026
      %v2028 = vpop.f32.mrb[0].mxu0
      %2029 = vmatprep.mubr.bf16.mxu0 0
      %2030 = vmatmul.mubr.bf16.gmra.mrb[0].mxu0 %v1279
      %v2031 = vpop.f32.mrb[0].mxu0
      %v2032 = vadd.f32 0.0, %v2031
      %v2033 = vpop.f32.mrb[0].mxu0
      %v2034 = vpop.f32.mrb[0].mxu0
      %v2035 = vadd.f32 0.0, %v2034
      %v2036 = vpop.f32.mrb[0].mxu0
      %2037 = vmatprep.mubr.bf16.mxu0 0
      %2038 = vmatmul.mubr.bf16.gmra.mrb[0].mxu0 %v1282
      %v2039 = vpop.f32.mrb[0].mxu0
      %v2040 = vadd.f32 0.0, %v2039
      %v2041 = vpop.f32.mrb[0].mxu0
      %v2042 = vpop.f32.mrb[0].mxu0
      %v2043 = vadd.f32 0.0, %v2042
      %v2044 = vpop.f32.mrb[0].mxu0
      %2045 = vmatprep.mubr.bf16.mxu0 0
      %2046 = vmatmul.mubr.bf16.gmra.mrb[0].mxu0 %v1285
      %v2047 = vpop.f32.mrb[0].mxu0
      %v2048 = vadd.f32 0.0, %v2047
      %v2049 = vpop.f32.mrb[0].mxu0
      %v2050 = vpop.f32.mrb[0].mxu0
      %v2051 = vadd.f32 0.0, %v2050
      %v2052 = vpop.f32.mrb[0].mxu0
      %2053 = vmatprep.mubr.bf16.mxu0 0
      %2054 = vmatmul.mubr.bf16.gmra.mrb[0].mxu0 %v1288
      %v2055 = vpop.f32.mrb[0].mxu0
      %v2056 = vadd.f32 0.0, %v2055
      %v2057 = vpop.f32.mrb[0].mxu0
      %v2058 = vpop.f32.mrb[0].mxu0
      %v2059 = vadd.f32 0.0, %v2058
      %v2060 = vpop.f32.mrb[0].mxu0
      %2061 = vmatprep.mubr.bf16.mxu0 0
      %2062 = vmatmul.mubr.bf16.gmra.mrb[0].mxu0 %v1291
      %v2063 = vpop.f32.mrb[0].mxu0
      %v2064 = vadd.f32 0.0, %v2063
      %v2065 = vpop.f32.mrb[0].mxu0
      %v2066 = vpop.f32.mrb[0].mxu0
      %v2067 = vadd.f32 0.0, %v2066
      %v2068 = vpop.f32.mrb[0].mxu0
      %2069 = vmatprep.mubr.bf16.mxu0 0
      %2070 = vmatmul.mubr.bf16.gmra.mrb[0].mxu0 %v1294
      %v2071 = vpop.f32.mrb[0].mxu0
      %v2072 = vadd.f32 0.0, %v2071
      %v2073 = vpop.f32.mrb[0].mxu0
      %v2074 = vpop.f32.mrb[0].mxu0
      %v2075 = vadd.f32 0.0, %v2074
      %v2076 = vpop.f32.mrb[0].mxu0
      %2077 = vmatprep.mubr.bf16.mxu0 0
      %2078 = vmatmul.mubr.bf16.gmra.mrb[0].mxu0 %v1297
      %v2079 = vpop.f32.mrb[0].mxu0
      %v2080 = vadd.f32 0.0, %v2079
      %v2081 = vpop.f32.mrb[0].mxu0
      %v2082 = vpop.f32.mrb[0].mxu0
      %v2083 = vadd.f32 0.0, %v2082
      %v2084 = vpop.f32.mrb[0].mxu0
      %2085 = vmatprep.mubr.bf16.mxu0 0
      %2086 = vmatmul.mubr.bf16.gmra.mrb[0].mxu0 %v1300
      %v2087 = vpop.f32.mrb[0].mxu0
      %v2088 = vadd.f32 0.0, %v2087
      %v2089 = vpop.f32.mrb[0].mxu0
      %v2090 = vpop.f32.mrb[0].mxu0
      %v2091 = vadd.f32 0.0, %v2090
      %v2092 = vpop.f32.mrb[0].mxu0
      %2093 = vmatprep.mubr.bf16.mxu0 0
      %2094 = vmatmul.mubr.bf16.gmra.mrb[0].mxu0 %v1303
      %v2095 = vpop.f32.mrb[0].mxu0
      %v2096 = vadd.f32 0.0, %v2095
      %v2097 = vpop.f32.mrb[0].mxu0
      %v2098 = vpop.f32.mrb[0].mxu0
      %v2099 = vadd.f32 0.0, %v2098
      %v2100 = vpop.f32.mrb[0].mxu0
      %2101 = vmatprep.mubr.bf16.mxu0 0
      %2102 = vmatmul.mubr.bf16.gmra.mrb[0].mxu0 %v1306
      %v2103 = vpop.f32.mrb[0].mxu0
      %v2104 = vadd.f32 0.0, %v2103
      %v2105 = vpop.f32.mrb[0].mxu0
      %v2106 = vpop.f32.mrb[0].mxu0
      %v2107 = vadd.f32 0.0, %v2106
      %v2108 = vpop.f32.mrb[0].mxu0
      %2109 = vmatprep.mubr.bf16.mxu0 0
      %2110 = vmatmul.mubr.bf16.gmra.mrb[0].mxu0 %v1309
      %v2111 = vpop.f32.mrb[0].mxu0
      %v2112 = vadd.f32 0.0, %v2111
      %v2113 = vpop.f32.mrb[0].mxu0
      %v2114 = vpop.f32.mrb[0].mxu0
      %v2115 = vadd.f32 0.0, %v2114
      %v2116 = vpop.f32.mrb[0].mxu0
      %2117 = vmatprep.mubr.bf16.mxu0 0
      %2118 = vmatmul.mubr.bf16.gmra.mrb[0].mxu0 %v1312
      %v2119 = vpop.f32.mrb[0].mxu0
      %v2120 = vadd.f32 0.0, %v2119
      %v2121 = vpop.f32.mrb[0].mxu0
      %v2122 = vpop.f32.mrb[0].mxu0
      %v2123 = vadd.f32 0.0, %v2122
      %v2124 = vpop.f32.mrb[0].mxu0
      %2125 = vmatprep.mubr.bf16.mxu0 0
      %2126 = vmatmul.mubr.bf16.gmra.mrb[0].mxu0 %v1315
      %v2127 = vpop.f32.mrb[0].mxu0
      %v2128 = vadd.f32 0.0, %v2127
      %v2129 = vpop.f32.mrb[0].mxu0
      %v2130 = vpop.f32.mrb[0].mxu0
      %v2131 = vadd.f32 0.0, %v2130
      %v2132 = vpop.f32.mrb[0].mxu0
      %2133 = vmatprep.mubr.bf16.mxu0 0
      %2134 = vmatmul.mubr.bf16.gmra.mrb[0].mxu0 %v1318
      %v2135 = vpop.f32.mrb[0].mxu0
      %v2136 = vadd.f32 0.0, %v2135
      %v2137 = vpop.f32.mrb[0].mxu0
      %v2138 = vpop.f32.mrb[0].mxu0
      %v2139 = vadd.f32 0.0, %v2138
      %v2140 = vpop.f32.mrb[0].mxu0
      %2141 = vmatprep.mubr.bf16.mxu0 0
      %2142 = vmatmul.mubr.bf16.gmra.mrb[0].mxu0 %v1321
      %v2143 = vpop.f32.mrb[0].mxu0
      %v2144 = vadd.f32 0.0, %v2143
      %v2145 = vpop.f32.mrb[0].mxu0
      %v2146 = vpop.f32.mrb[0].mxu0
      %v2147 = vadd.f32 0.0, %v2146
      %v2148 = vpop.f32.mrb[0].mxu0
      %2149 = vmatprep.mubr.bf16.mxu0 0
      %2150 = vmatmul.mubr.bf16.gmra.mrb[0].mxu0 %v1324
      %v2151 = vpop.f32.mrb[0].mxu0
      %v2152 = vadd.f32 0.0, %v2151
      %v2153 = vpop.f32.mrb[0].mxu0
      %v2154 = vpop.f32.mrb[0].mxu0
      %v2155 = vadd.f32 0.0, %v2154
      %v2156 = vpop.f32.mrb[0].mxu0
      %2157 = vmatprep.mubr.bf16.mxu0 0
      %2158 = vmatmul.mubr.bf16.gmra.mrb[0].mxu0 %v1327
      %v2159 = vpop.f32.mrb[0].mxu0
      %v2160 = vadd.f32 0.0, %v2159
      %v2161 = vpop.f32.mrb[0].mxu0
      %v2162 = vpop.f32.mrb[0].mxu0
      %v2163 = vadd.f32 0.0, %v2162
      %v2164 = vpop.f32.mrb[0].mxu0
      %2165 = vmatprep.mubr.bf16.mxu0 0
      %2166 = vmatmul.mubr.bf16.gmra.mrb[0].mxu0 %v1330
      %v2167 = vpop.f32.mrb[0].mxu0
      %v2168 = vadd.f32 0.0, %v2167
      %v2169 = vpop.f32.mrb[0].mxu0
      %v2170 = vpop.f32.mrb[0].mxu0
      %v2171 = vadd.f32 0.0, %v2170
      %v2172 = vpop.f32.mrb[0].mxu0
      %2173 = vmatprep.mubr.bf16.mxu0 0
      %2174 = vmatmul.mubr.bf16.gmra.mrb[0].mxu0 %v1333
      %v2175 = vpop.f32.mrb[0].mxu0
      %v2176 = vadd.f32 0.0, %v2175
      %v2177 = vpop.f32.mrb[0].mxu0
      %v2178 = vpop.f32.mrb[0].mxu0
      %v2179 = vadd.f32 0.0, %v2178
      %v2180 = vpop.f32.mrb[0].mxu0
      %2181 = vmatprep.mubr.bf16.mxu0 0
      %2182 = vmatmul.mubr.bf16.gmra.mrb[0].mxu0 %v1336
      %v2183 = vpop.f32.mrb[0].mxu0
      %v2184 = vadd.f32 0.0, %v2183
      %v2185 = vpop.f32.mrb[0].mxu0
      %v2186 = vpop.f32.mrb[0].mxu0
      %v2187 = vadd.f32 0.0, %v2186
      %v2188 = vpop.f32.mrb[0].mxu0
      %2189 = vmatprep.mubr.bf16.mxu0 0
      %2190 = vmatmul.mubr.bf16.gmra.mrb[0].mxu0 %v1339
      %v2191 = vpop.f32.mrb[0].mxu0
      %v2192 = vadd.f32 0.0, %v2191
      %v2193 = vpop.f32.mrb[0].mxu0
      %v2194 = vpop.f32.mrb[0].mxu0
      %v2195 = vadd.f32 0.0, %v2194
      %v2196 = vpop.f32.mrb[0].mxu0
      %2197 = vmatprep.mubr.bf16.mxu0 0
      %2198 = vmatmul.mubr.bf16.gmra.mrb[0].mxu0 %v1342
      %v2199 = vpop.f32.mrb[0].mxu0
      %v2200 = vadd.f32 0.0, %v2199
      %v2201 = vpop.f32.mrb[0].mxu0
      %v2202 = vpop.f32.mrb[0].mxu0
      %v2203 = vadd.f32 0.0, %v2202
      %v2204 = vpop.f32.mrb[0].mxu0
      %2205 = vmatprep.mubr.bf16.mxu0 0
      %2206 = vmatmul.mubr.bf16.gmra.mrb[0].mxu0 %v1345
      %v2207 = vpop.f32.mrb[0].mxu0
      %v2208 = vadd.f32 0.0, %v2207
      %v2209 = vpop.f32.mrb[0].mxu0
      %v2210 = vpop.f32.mrb[0].mxu0
      %v2211 = vadd.f32 0.0, %v2210
      %v2212 = vpop.f32.mrb[0].mxu0
      %2213 = vmatprep.mubr.bf16.mxu0 0
      %2214 = vmatmul.mubr.bf16.gmra.mrb[0].mxu0 %v1348
      %v2215 = vpop.f32.mrb[0].mxu0
      %v2216 = vadd.f32 0.0, %v2215
      %v2217 = vpop.f32.mrb[0].mxu0
      %v2218 = vpop.f32.mrb[0].mxu0
      %v2219 = vadd.f32 0.0, %v2218
      %v2220 = vpop.f32.mrb[0].mxu0
      %2221 = vmatprep.mubr.bf16.mxu0 0
      %2222 = vmatmul.mubr.bf16.gmra.mrb[0].mxu0 %v1351
      %v2223 = vpop.f32.mrb[0].mxu0
      %v2224 = vadd.f32 0.0, %v2223
      %v2225 = vpop.f32.mrb[0].mxu0
      %v2226 = vpop.f32.mrb[0].mxu0
      %v2227 = vadd.f32 0.0, %v2226
      %v2228 = vpop.f32.mrb[0].mxu0
      %2229 = vmatprep.mubr.bf16.mxu0 0
      %2230 = vmatmul.mubr.bf16.gmra.mrb[0].mxu0 %v1354
      %v2231 = vpop.f32.mrb[0].mxu0
      %v2232 = vadd.f32 0.0, %v2231
      %v2233 = vpop.f32.mrb[0].mxu0
      %v2234 = vpop.f32.mrb[0].mxu0
      %v2235 = vadd.f32 0.0, %v2234
      %v2236 = vpop.f32.mrb[0].mxu0
      %2237 = vmatprep.mubr.bf16.mxu0 0
      %2238 = vmatmul.mubr.bf16.gmra.mrb[0].mxu0 %v1357
      %v2239 = vpop.f32.mrb[0].mxu0
      %v2240 = vadd.f32 0.0, %v2239
      %v2241 = vpop.f32.mrb[0].mxu0
      %v2242 = vpop.f32.mrb[0].mxu0
      %v2243 = vadd.f32 0.0, %v2242
      %v2244 = vpop.f32.mrb[0].mxu0
      %2245 = vmatprep.mubr.bf16.mxu0 0
      %2246 = vmatmul.mubr.bf16.gmra.mrb[0].mxu0 %v1360
      %v2247 = vpop.f32.mrb[0].mxu0
      %v2248 = vadd.f32 0.0, %v2247
      %v2249 = vpop.f32.mrb[0].mxu0
      %v2250 = vpop.f32.mrb[0].mxu0
      %v2251 = vadd.f32 0.0, %v2250
      %v2252 = vpop.f32.mrb[0].mxu0
      %2253 = vmatprep.mubr.bf16.mxu0 0
      %2254 = vmatmul.mubr.bf16.gmra.mrb[0].mxu0 %v1363
      %v2255 = vpop.f32.mrb[0].mxu0
      %v2256 = vadd.f32 0.0, %v2255
      %v2257 = vpop.f32.mrb[0].mxu0
      %v2258 = vpop.f32.mrb[0].mxu0
      %v2259 = vadd.f32 0.0, %v2258
      %v2260 = vpop.f32.mrb[0].mxu0
      %2261 = vmatprep.mubr.bf16.mxu0 0
      %2262 = vmatmul.mubr.bf16.gmra.mrb[0].mxu0 %v1366
      %v2263 = vpop.f32.mrb[0].mxu0
      %v2264 = vadd.f32 0.0, %v2263
      %v2265 = vpop.f32.mrb[0].mxu0
      %v2266 = vpop.f32.mrb[0].mxu0
      %v2267 = vadd.f32 0.0, %v2266
      %v2268 = vpop.f32.mrb[0].mxu0
      %2269 = vmatprep.mubr.bf16.mxu0 0
      %2270 = vmatmul.mubr.bf16.gmra.mrb[0].mxu0 %v1369
      %v2271 = vpop.f32.mrb[0].mxu0
      %v2272 = vadd.f32 0.0, %v2271
      %v2273 = vpop.f32.mrb[0].mxu0
      %v2274 = vpop.f32.mrb[0].mxu0
      %v2275 = vadd.f32 0.0, %v2274
      %v2276 = vpop.f32.mrb[0].mxu0
      %2277 = vmatprep.mubr.bf16.mxu0 0
      %2278 = vmatmul.mubr.bf16.gmra.mrb[0].mxu0 %v1372
      %v2279 = vpop.f32.mrb[0].mxu0
      %v2280 = vadd.f32 0.0, %v2279
      %v2281 = vpop.f32.mrb[0].mxu0
      %v2282 = vpop.f32.mrb[0].mxu0
      %v2283 = vadd.f32 0.0, %v2282
      %v2284 = vpop.f32.mrb[0].mxu0
      %2285 = vmatprep.mubr.bf16.mxu0 0
      %2286 = vmatmul.mubr.bf16.gmra.mrb[0].mxu0 %v1375
      %v2287 = vpop.f32.mrb[0].mxu0
      %v2288 = vadd.f32 0.0, %v2287
      %v2289 = vpop.f32.mrb[0].mxu0
      %v2290 = vpop.f32.mrb[0].mxu0
      %v2291 = vadd.f32 0.0, %v2290
      %v2292 = vpop.f32.mrb[0].mxu0
      %2293 = vmatprep.mubr.bf16.mxu0 0
      %2294 = vmatmul.mubr.bf16.gmra.mrb[0].mxu0 %v1378
      %v2295 = vpop.f32.mrb[0].mxu0
      %v2296 = vadd.f32 0.0, %v2295
      %v2297 = vpop.f32.mrb[0].mxu0
      %v2298 = vpop.f32.mrb[0].mxu0
      %v2299 = vadd.f32 0.0, %v2298
      %v2300 = vpop.f32.mrb[0].mxu0
      %2301 = vmatprep.mubr.bf16.mxu0 0
      %2302 = vmatmul.mubr.bf16.gmra.mrb[0].mxu0 %v1381
      %v2303 = vpop.f32.mrb[0].mxu0
      %v2304 = vadd.f32 0.0, %v2303
      %v2305 = vpop.f32.mrb[0].mxu0
      %v2306 = vpop.f32.mrb[0].mxu0
      %v2307 = vadd.f32 0.0, %v2306
      %v2308 = vpop.f32.mrb[0].mxu0
      %2309 = vmatprep.mubr.bf16.mxu0 0
      %2310 = vmatmul.mubr.bf16.gmra.mrb[0].mxu0 %v1384
      %v2311 = vpop.f32.mrb[0].mxu0
      %v2312 = vadd.f32 0.0, %v2311
      %v2313 = vpop.f32.mrb[0].mxu0
      %v2314 = vpop.f32.mrb[0].mxu0
      %v2315 = vadd.f32 0.0, %v2314
      %v2316 = vpop.f32.mrb[0].mxu0
      %2317 = vmatprep.mubr.bf16.mxu0 0
      %2318 = vmatmul.mubr.bf16.gmra.mrb[0].mxu0 %v1387
      %v2319 = vpop.f32.mrb[0].mxu0
      %v2320 = vadd.f32 0.0, %v2319
      %v2321 = vpop.f32.mrb[0].mxu0
      %v2322 = vpop.f32.mrb[0].mxu0
      %v2323 = vadd.f32 0.0, %v2322
      %v2324 = vpop.f32.mrb[0].mxu0
      %2325 = vmatprep.mubr.bf16.mxu0 0
      %2326 = vmatmul.mubr.bf16.gmra.mrb[0].mxu0 %v1390
      %v2327 = vpop.f32.mrb[0].mxu0
      %v2328 = vadd.f32 0.0, %v2327
      %v2329 = vpop.f32.mrb[0].mxu0
      %v2330 = vpop.f32.mrb[0].mxu0
      %v2331 = vadd.f32 0.0, %v2330
      %v2332 = vpop.f32.mrb[0].mxu0
      %2333 = vmatprep.mubr.bf16.mxu0 0
      %2334 = vmatmul.mubr.bf16.gmra.mrb[0].mxu0 %v1393
      %v2335 = vpop.f32.mrb[0].mxu0
      %v2336 = vadd.f32 0.0, %v2335
      %v2337 = vpop.f32.mrb[0].mxu0
      %v2338 = vpop.f32.mrb[0].mxu0
      %v2339 = vadd.f32 0.0, %v2338
      %v2340 = vpop.f32.mrb[0].mxu0
      %2341 = vmatprep.mubr.bf16.mxu0 0
      %2342 = vmatmul.mubr.bf16.gmra.mrb[0].mxu0 %v1396
      %v2343 = vpop.f32.mrb[0].mxu0
      %v2344 = vadd.f32 0.0, %v2343
      %v2345 = vpop.f32.mrb[0].mxu0
      %v2346 = vpop.f32.mrb[0].mxu0
      %v2347 = vadd.f32 0.0, %v2346
      %v2348 = vpop.f32.mrb[0].mxu0
      %2349 = vmatprep.mubr.bf16.mxu0 0
      %2350 = vmatmul.mubr.bf16.gmra.mrb[0].mxu0 %v1399
      %v2351 = vpop.f32.mrb[0].mxu0
      %v2352 = vadd.f32 0.0, %v2351
      %v2353 = vpop.f32.mrb[0].mxu0
      %v2354 = vpop.f32.mrb[0].mxu0
      %v2355 = vadd.f32 0.0, %v2354
      %v2356 = vpop.f32.mrb[0].mxu0
      %2357 = vmatprep.mubr.bf16.mxu0 0
      %2358 = vmatmul.mubr.bf16.gmra.mrb[0].mxu0 %v1402
      %v2359 = vpop.f32.mrb[0].mxu0
      %v2360 = vadd.f32 0.0, %v2359
      %v2361 = vpop.f32.mrb[0].mxu0
      %v2362 = vpop.f32.mrb[0].mxu0
      %v2363 = vadd.f32 0.0, %v2362
      %v2364 = vpop.f32.mrb[0].mxu0
      %2365 = vmatprep.mubr.bf16.mxu0 0
      %2366 = vmatmul.mubr.bf16.gmra.mrb[0].mxu0 %v1405
      %v2367 = vpop.f32.mrb[0].mxu0
      %v2368 = vadd.f32 0.0, %v2367
      %v2369 = vpop.f32.mrb[0].mxu0
      %v2370 = vpop.f32.mrb[0].mxu0
      %v2371 = vadd.f32 0.0, %v2370
      %v2372 = vpop.f32.mrb[0].mxu0
      %2373 = vmatprep.mubr.bf16.mxu0 0
      %2374 = vmatmul.mubr.bf16.gmra.mrb[0].mxu0 %v1408
      %v2375 = vpop.f32.mrb[0].mxu0
      %v2376 = vadd.f32 0.0, %v2375
      %v2377 = vpop.f32.mrb[0].mxu0
      %v2378 = vpop.f32.mrb[0].mxu0
      %v2379 = vadd.f32 0.0, %v2378
      %v2380 = vpop.f32.mrb[0].mxu0
      %2381 = vmatprep.mubr.bf16.mxu0 0
      %2382 = vmatmul.mubr.bf16.gmra.mrb[0].mxu0 %v1411
      %v2383 = vpop.f32.mrb[0].mxu0
      %v2384 = vadd.f32 0.0, %v2383
      %v2385 = vpop.f32.mrb[0].mxu0
      %v2386 = vpop.f32.mrb[0].mxu0
      %v2387 = vadd.f32 0.0, %v2386
      %v2388 = vpop.f32.mrb[0].mxu0
      %2389 = vmatprep.mubr.bf16.mxu0 0
      %2390 = vmatmul.mubr.bf16.gmra.mrb[0].mxu0 %v1414
      %v2391 = vpop.f32.mrb[0].mxu0
      %v2392 = vadd.f32 0.0, %v2391
      %v2393 = vpop.f32.mrb[0].mxu0
      %v2394 = vpop.f32.mrb[0].mxu0
      %v2395 = vadd.f32 0.0, %v2394
      %v2396 = vpop.f32.mrb[0].mxu0
      %2397 = vmatprep.mubr.bf16.mxu0 0
      %2398 = vmatmul.mubr.bf16.gmra.mrb[0].mxu0 %v1417
      %v2399 = vpop.f32.mrb[0].mxu0
      %v2400 = vadd.f32 0.0, %v2399
      %v2401 = vpop.f32.mrb[0].mxu0
      %v2402 = vpop.f32.mrb[0].mxu0
      %v2403 = vadd.f32 0.0, %v2402
      %v2404 = vpop.f32.mrb[0].mxu0
      %2405 = vmatprep.mubr.bf16.mxu0 0
      %2406 = vmatmul.mubr.bf16.gmra.mrb[0].mxu0 %v1420
      %v2407 = vpop.f32.mrb[0].mxu0
      %v2408 = vadd.f32 0.0, %v2407
      %v2409 = vpop.f32.mrb[0].mxu0
      %v2410 = vpop.f32.mrb[0].mxu0
      %v2411 = vadd.f32 0.0, %v2410
      %v2412 = vpop.f32.mrb[0].mxu0
      %2413 = vmatprep.mubr.bf16.mxu0 0
      %2414 = vmatmul.mubr.bf16.gmra.mrb[0].mxu0 %v1423
      %v2415 = vpop.f32.mrb[0].mxu0
      %v2416 = vadd.f32 0.0, %v2415
      %v2417 = vpop.f32.mrb[0].mxu0
      %v2418 = vpop.f32.mrb[0].mxu0
      %v2419 = vadd.f32 0.0, %v2418
      %v2420 = vpop.f32.mrb[0].mxu0
      %2421 = vmatprep.mubr.bf16.mxu0 0
      %2422 = vmatmul.mubr.bf16.gmra.mrb[0].mxu0 %v1426
      %v2423 = vpop.f32.mrb[0].mxu0
      %v2424 = vadd.f32 0.0, %v2423
      %v2425 = vpop.f32.mrb[0].mxu0
      %v2426 = vpop.f32.mrb[0].mxu0
      %v2427 = vadd.f32 0.0, %v2426
      %v2428 = vpop.f32.mrb[0].mxu0
      %2429 = vmatprep.mubr.bf16.mxu0 0
      %2430 = vmatmul.mubr.bf16.gmra.mrb[0].mxu0 %v1429
      %v2431 = vpop.f32.mrb[0].mxu0
      %v2432 = vadd.f32 0.0, %v2431
      %v2433 = vpop.f32.mrb[0].mxu0
      %v2434 = vpop.f32.mrb[0].mxu0
      %v2435 = vadd.f32 0.0, %v2434
      %v2436 = vpop.f32.mrb[0].mxu0
      %2437 = vmatprep.mubr.bf16.mxu0 0
      %2438 = vmatmul.mubr.bf16.gmra.mrb[0].mxu0 %v1432
      %v2439 = vpop.f32.mrb[0].mxu0
      %v2440 = vadd.f32 0.0, %v2439
      %v2441 = vpop.f32.mrb[0].mxu0
      %v2442 = vpop.f32.mrb[0].mxu0
      %v2443 = vadd.f32 0.0, %v2442
      %v2444 = vpop.f32.mrb[0].mxu0
      %2445 = vmatprep.mubr.bf16.mxu0 0
      %2446 = vmatmul.mubr.bf16.gmra.mrb[0].mxu0 %v1435
      %v2447 = vpop.f32.mrb[0].mxu0
      %v2448 = vadd.f32 0.0, %v2447
      %v2449 = vpop.f32.mrb[0].mxu0
      %v2450 = vpop.f32.mrb[0].mxu0
      %v2451 = vadd.f32 0.0, %v2450
      %v2452 = vpop.f32.mrb[0].mxu0
      %2453 = vmatprep.mubr.bf16.mxu0 0
      %2454 = vmatmul.mubr.bf16.gmra.mrb[0].mxu0 %v1438
      %v2455 = vpop.f32.mrb[0].mxu0
      %v2456 = vadd.f32 0.0, %v2455
      %v2457 = vpop.f32.mrb[0].mxu0
      %v2458 = vpop.f32.mrb[0].mxu0
      %v2459 = vadd.f32 0.0, %v2458
      %v2460 = vpop.f32.mrb[0].mxu0
      %2461 = vmatprep.mubr.bf16.mxu0 0
      %2462 = vmatmul.mubr.bf16.gmra.mrb[0].mxu0 %v1441
      %v2463 = vpop.f32.mrb[0].mxu0
      %v2464 = vadd.f32 0.0, %v2463
      %v2465 = vpop.f32.mrb[0].mxu0
      %v2466 = vpop.f32.mrb[0].mxu0
      %v2467 = vadd.f32 0.0, %v2466
      %v2468 = vpop.f32.mrb[0].mxu0
      %2469 = vmatprep.mubr.bf16.mxu0 0
      %2470 = vmatmul.mubr.bf16.gmra.mrb[0].mxu0 %v1444
      %v2471 = vpop.f32.mrb[0].mxu0
      %v2472 = vadd.f32 0.0, %v2471
      %v2473 = vpop.f32.mrb[0].mxu0
      %v2474 = vpop.f32.mrb[0].mxu0
      %v2475 = vadd.f32 0.0, %v2474
      %v2476 = vpop.f32.mrb[0].mxu0
      %2477 = vmatprep.mubr.bf16.mxu0 0
      %2478 = vmatmul.mubr.bf16.gmra.mrb[0].mxu0 %v1447
      %v2479 = vpop.f32.mrb[0].mxu0
      %v2480 = vadd.f32 0.0, %v2479
      %v2481 = vpop.f32.mrb[0].mxu0
      %v2482 = vpop.f32.mrb[0].mxu0
      %v2483 = vadd.f32 0.0, %v2482
      %v2484 = vpop.f32.mrb[0].mxu0
      %2485 = vmatprep.mubr.bf16.mxu0 0
      %2486 = vmatmul.mubr.bf16.gmra.mrb[0].mxu0 %v1450
      %v2487 = vpop.f32.mrb[0].mxu0
      %v2488 = vadd.f32 0.0, %v2487
      %v2489 = vpop.f32.mrb[0].mxu0
      %v2490 = vpop.f32.mrb[0].mxu0
      %v2491 = vadd.f32 0.0, %v2490
      %v2492 = vpop.f32.mrb[0].mxu0
      %2493 = vmatprep.mubr.bf16.mxu0 0
      %2494 = vmatmul.mubr.bf16.gmra.mrb[0].mxu0 %v1453
      %v2495 = vpop.f32.mrb[0].mxu0
      %v2496 = vadd.f32 0.0, %v2495
      %v2497 = vpop.f32.mrb[0].mxu0
      %v2498 = vpop.f32.mrb[0].mxu0
      %v2499 = vadd.f32 0.0, %v2498
      %v2500 = vpop.f32.mrb[0].mxu0
      %2501 = vmatprep.mubr.bf16.mxu0 0
      %2502 = vmatmul.mubr.bf16.gmra.mrb[0].mxu0 %v1456
      %v2503 = vpop.f32.mrb[0].mxu0
      %v2504 = vadd.f32 0.0, %v2503
      %v2505 = vpop.f32.mrb[0].mxu0
      %v2506 = vpop.f32.mrb[0].mxu0
      %v2507 = vadd.f32 0.0, %v2506
      %v2508 = vpop.f32.mrb[0].mxu0
      %2509 = vmatprep.mubr.bf16.mxu0 0
      %2510 = vmatmul.mubr.bf16.gmra.mrb[0].mxu0 %v1459
      %v2511 = vpop.f32.mrb[0].mxu0
      %v2512 = vadd.f32 0.0, %v2511
      %v2513 = vpop.f32.mrb[0].mxu0
      %v2514 = vpop.f32.mrb[0].mxu0
      %v2515 = vadd.f32 0.0, %v2514
      %v2516 = vpop.f32.mrb[0].mxu0
      %2517 = vdwg.mxu0
      %v2518 = vtanh.pop %v1496
      %v2519 = vtanh.pop %v1499
      %v2520 = vtanh.pop %v1504
      %v2521 = vtanh.pop %v1507
      %v2522 = vtanh.pop %v1512
      %v2523 = vtanh.pop %v1515
      %v2524 = vtanh.pop %v1520
      %v2525 = vtanh.pop %v1523
      %v2526 = vtanh.pop %v1528
      %v2527 = vtanh.pop %v1531
      %v2528 = vtanh.pop %v1536
      %v2529 = vtanh.pop %v1539
      %v2530 = vtanh.pop %v1544
      %v2531 = vtanh.pop %v1547
      %v2532 = vtanh.pop %v1552
      %v2533 = vtanh.pop %v1555
      %v2534 = vtanh.pop %v1560
      %v2535 = vtanh.pop %v1563
      %v2536 = vtanh.pop %v1568
      %v2537 = vtanh.pop %v1571
      %v2538 = vtanh.pop %v1576
      %v2539 = vtanh.pop %v1579
      %v2540 = vtanh.pop %v1584
      %v2541 = vtanh.pop %v1587
      %v2542 = vtanh.pop %v1592
      %v2543 = vtanh.pop %v1595
      %v2544 = vtanh.pop %v1600
      %v2545 = vtanh.pop %v1603
      %v2546 = vtanh.pop %v1608
      %v2547 = vtanh.pop %v1611
      %v2548 = vtanh.pop %v1616
      %v2549 = vtanh.pop %v1619
      %v2550 = vtanh.pop %v1624
      %v2551 = vtanh.pop %v1627
      %v2552 = vtanh.pop %v1632
      %v2553 = vtanh.pop %v1635
      %v2554 = vtanh.pop %v1640
      %v2555 = vtanh.pop %v1643
      %v2556 = vtanh.pop %v1648
      %v2557 = vtanh.pop %v1651
      %v2558 = vtanh.pop %v1656
      %v2559 = vtanh.pop %v1659
      %v2560 = vtanh.pop %v1664
      %v2561 = vtanh.pop %v1667
      %v2562 = vtanh.pop %v1672
      %v2563 = vtanh.pop %v1675
      %v2564 = vtanh.pop %v1680
      %v2565 = vtanh.pop %v1683
      %v2566 = vtanh.pop %v1688
      %v2567 = vtanh.pop %v1691
      %v2568 = vtanh.pop %v1696
      %v2569 = vtanh.pop %v1699
      %v2570 = vtanh.pop %v1704
      %v2571 = vtanh.pop %v1707
      %v2572 = vtanh.pop %v1712
      %v2573 = vtanh.pop %v1715
      %v2574 = vtanh.pop %v1720
      %v2575 = vtanh.pop %v1723
      %v2576 = vtanh.pop %v1728
      %v2577 = vtanh.pop %v1731
      %v2578 = vtanh.pop %v1736
      %v2579 = vtanh.pop %v1739
      %v2580 = vtanh.pop %v1744
      %v2581 = vtanh.pop %v1747
      %v2582 = vtanh.pop %v1752
      %v2583 = vtanh.pop %v1755
      %v2584 = vtanh.pop %v1760
      %v2585 = vtanh.pop %v1763
      %v2586 = vtanh.pop %v1768
      %v2587 = vtanh.pop %v1771
      %v2588 = vtanh.pop %v1776
      %v2589 = vtanh.pop %v1779
      %v2590 = vtanh.pop %v1784
      %v2591 = vtanh.pop %v1787
      %v2592 = vtanh.pop %v1792
      %v2593 = vtanh.pop %v1795
      %v2594 = vtanh.pop %v1800
      %v2595 = vtanh.pop %v1803
      %v2596 = vtanh.pop %v1808
      %v2597 = vtanh.pop %v1811
      %v2598 = vtanh.pop %v1816
      %v2599 = vtanh.pop %v1819
      %v2600 = vtanh.pop %v1824
      %v2601 = vtanh.pop %v1827
      %v2602 = vtanh.pop %v1832
      %v2603 = vtanh.pop %v1835
      %v2604 = vtanh.pop %v1840
      %v2605 = vtanh.pop %v1843
      %v2606 = vtanh.pop %v1848
      %v2607 = vtanh.pop %v1851
      %v2608 = vtanh.pop %v1856
      %v2609 = vtanh.pop %v1859
      %v2610 = vtanh.pop %v1864
      %v2611 = vtanh.pop %v1867
      %v2612 = vtanh.pop %v1872
      %v2613 = vtanh.pop %v1875
      %v2614 = vtanh.pop %v1880
      %v2615 = vtanh.pop %v1883
      %v2616 = vtanh.pop %v1888
      %v2617 = vtanh.pop %v1891
      %v2618 = vtanh.pop %v1896
      %v2619 = vtanh.pop %v1899
      %v2620 = vtanh.pop %v1904
      %v2621 = vtanh.pop %v1907
      %v2622 = vtanh.pop %v1912
      %v2623 = vtanh.pop %v1915
      %v2624 = vtanh.pop %v1920
      %v2625 = vtanh.pop %v1923
      %v2626 = vtanh.pop %v1928
      %v2627 = vtanh.pop %v1931
      %v2628 = vtanh.pop %v1936
      %v2629 = vtanh.pop %v1939
      %v2630 = vtanh.pop %v1944
      %v2631 = vtanh.pop %v1947
      %v2632 = vtanh.pop %v1952
      %v2633 = vtanh.pop %v1955
      %v2634 = vtanh.pop %v1960
      %v2635 = vtanh.pop %v1963
      %v2636 = vtanh.pop %v1968
      %v2637 = vtanh.pop %v1971
      %v2638 = vtanh.pop %v1976
      %v2639 = vtanh.pop %v1979
      %v2640 = vtanh.pop %v1984
      %v2641 = vtanh.pop %v1987
      %v2642 = vtanh.pop %v1992
      %v2643 = vtanh.pop %v1995
      %v2644 = vtanh.pop %v2000
      %v2645 = vtanh.pop %v2003
      %v2646 = vtanh.pop %v2008
      %v2647 = vtanh.pop %v2011
      %v2648 = vtanh.pop %v2016
      %v2649 = vtanh.pop %v2019
      %v2650 = vtanh.pop %v2024
      %v2651 = vtanh.pop %v2027
      %v2652 = vtanh.pop %v2032
      %v2653 = vtanh.pop %v2035
      %v2654 = vtanh.pop %v2040
      %v2655 = vtanh.pop %v2043
      %v2656 = vtanh.pop %v2048
      %v2657 = vtanh.pop %v2051
      %v2658 = vtanh.pop %v2056
      %v2659 = vtanh.pop %v2059
      %v2660 = vtanh.pop %v2064
      %v2661 = vtanh.pop %v2067
      %v2662 = vtanh.pop %v2072
      %v2663 = vtanh.pop %v2075
      %v2664 = vtanh.pop %v2080
      %v2665 = vtanh.pop %v2083
      %v2666 = vtanh.pop %v2088
      %v2667 = vtanh.pop %v2091
      %v2668 = vtanh.pop %v2096
      %v2669 = vtanh.pop %v2099
      %v2670 = vtanh.pop %v2104
      %v2671 = vtanh.pop %v2107
      %v2672 = vtanh.pop %v2112
      %v2673 = vtanh.pop %v2115
      %v2674 = vtanh.pop %v2120
      %v2675 = vtanh.pop %v2123
      %v2676 = vtanh.pop %v2128
      %v2677 = vtanh.pop %v2131
      %v2678 = vtanh.pop %v2136
      %v2679 = vtanh.pop %v2139
      %v2680 = vtanh.pop %v2144
      %v2681 = vtanh.pop %v2147
      %v2682 = vtanh.pop %v2152
      %v2683 = vtanh.pop %v2155
      %v2684 = vtanh.pop %v2160
      %v2685 = vtanh.pop %v2163
      %v2686 = vtanh.pop %v2168
      %v2687 = vtanh.pop %v2171
      %v2688 = vtanh.pop %v2176
      %v2689 = vtanh.pop %v2179
      %v2690 = vtanh.pop %v2184
      %v2691 = vtanh.pop %v2187
      %v2692 = vtanh.pop %v2192
      %v2693 = vtanh.pop %v2195
      %v2694 = vtanh.pop %v2200
      %v2695 = vtanh.pop %v2203
      %v2696 = vtanh.pop %v2208
      %v2697 = vtanh.pop %v2211
      %v2698 = vtanh.pop %v2216
      %v2699 = vtanh.pop %v2219
      %v2700 = vtanh.pop %v2224
      %v2701 = vtanh.pop %v2227
      %v2702 = vtanh.pop %v2232
      %v2703 = vtanh.pop %v2235
      %v2704 = vtanh.pop %v2240
      %v2705 = vtanh.pop %v2243
      %v2706 = vtanh.pop %v2248
      %v2707 = vtanh.pop %v2251
      %v2708 = vtanh.pop %v2256
      %v2709 = vtanh.pop %v2259
      %v2710 = vtanh.pop %v2264
      %v2711 = vtanh.pop %v2267
      %v2712 = vtanh.pop %v2272
      %v2713 = vtanh.pop %v2275
      %v2714 = vtanh.pop %v2280
      %v2715 = vtanh.pop %v2283
      %v2716 = vtanh.pop %v2288
      %v2717 = vtanh.pop %v2291
      %v2718 = vtanh.pop %v2296
      %v2719 = vtanh.pop %v2299
      %v2720 = vtanh.pop %v2304
      %v2721 = vtanh.pop %v2307
      %v2722 = vtanh.pop %v2312
      %v2723 = vtanh.pop %v2315
      %v2724 = vtanh.pop %v2320
      %v2725 = vtanh.pop %v2323
      %v2726 = vtanh.pop %v2328
      %v2727 = vtanh.pop %v2331
      %v2728 = vtanh.pop %v2336
      %v2729 = vtanh.pop %v2339
      %v2730 = vtanh.pop %v2344
      %v2731 = vtanh.pop %v2347
      %v2732 = vtanh.pop %v2352
      %v2733 = vtanh.pop %v2355
      %v2734 = vtanh.pop %v2360
      %v2735 = vtanh.pop %v2363
      %v2736 = vtanh.pop %v2368
      %v2737 = vtanh.pop %v2371
      %v2738 = vtanh.pop %v2376
      %v2739 = vtanh.pop %v2379
      %v2740 = vtanh.pop %v2384
      %v2741 = vtanh.pop %v2387
      %v2742 = vtanh.pop %v2392
      %v2743 = vtanh.pop %v2395
      %v2744 = vtanh.pop %v2400
      %v2745 = vtanh.pop %v2403
      %v2746 = vtanh.pop %v2408
      %v2747 = vtanh.pop %v2411
      %v2748 = vtanh.pop %v2416
      %v2749 = vtanh.pop %v2419
      %v2750 = vtanh.pop %v2424
      %v2751 = vtanh.pop %v2427
      %v2752 = vtanh.pop %v2432
      %v2753 = vtanh.pop %v2435
      %v2754 = vtanh.pop %v2440
      %v2755 = vtanh.pop %v2443
      %v2756 = vtanh.pop %v2448
      %v2757 = vtanh.pop %v2451
      %v2758 = vtanh.pop %v2456
      %v2759 = vtanh.pop %v2459
      %v2760 = vtanh.pop %v2464
      %v2761 = vtanh.pop %v2467
      %v2762 = vtanh.pop %v2472
      %v2763 = vtanh.pop %v2475
      %v2764 = vtanh.pop %v2480
      %v2765 = vtanh.pop %v2483
      %v2766 = vtanh.pop %v2488
      %v2767 = vtanh.pop %v2491
      %v2768 = vtanh.pop %v2496
      %v2769 = vtanh.pop %v2499
      %v2770 = vtanh.pop %v2504
      %v2771 = vtanh.pop %v2507
      %v2772 = vtanh.pop %v2512
      %v2773 = vtanh.pop %v2515
      %2774 = vst [vmem:[%s145] sm:$0xff] %v2518
      %2775 = vst [vmem:[%s145 + $0x8] sm:$0xff] %v2519
      %2776 = vst [vmem:[%s145 + $0x10] sm:$0xff] %v2520
      %2777 = vst [vmem:[%s145 + $0x18] sm:$0xff] %v2521
      %2778 = vst [vmem:[%s145 + $0x20] sm:$0xff] %v2522
      %2779 = vst [vmem:[%s145 + $0x28] sm:$0xff] %v2523
      %2780 = vst [vmem:[%s145 + $0x30] sm:$0xff] %v2524
      %2781 = vst [vmem:[%s145 + $0x38] sm:$0xff] %v2525
      %2782 = vst [vmem:[%s145 + $0x40] sm:$0xff] %v2526
      %2783 = vst [vmem:[%s145 + $0x48] sm:$0xff] %v2527
      %2784 = vst [vmem:[%s145 + $0x50] sm:$0xff] %v2528
      %2785 = vst [vmem:[%s145 + $0x58] sm:$0xff] %v2529
      %2786 = vst [vmem:[%s145 + $0x60] sm:$0xff] %v2530
      %2787 = vst [vmem:[%s145 + $0x68] sm:$0xff] %v2531
      %2788 = vst [vmem:[%s145 + $0x70] sm:$0xff] %v2532
      %2789 = vst [vmem:[%s145 + $0x78] sm:$0xff] %v2533
      %2790 = vst [vmem:[%s145 + $0x80] sm:$0xff] %v2534
      %2791 = vst [vmem:[%s145 + $0x88] sm:$0xff] %v2535
      %2792 = vst [vmem:[%s145 + $0x90] sm:$0xff] %v2536
      %2793 = vst [vmem:[%s145 + $0x98] sm:$0xff] %v2537
      %2794 = vst [vmem:[%s145 + $0xa0] sm:$0xff] %v2538
      %2795 = vst [vmem:[%s145 + $0xa8] sm:$0xff] %v2539
      %2796 = vst [vmem:[%s145 + $0xb0] sm:$0xff] %v2540
      %2797 = vst [vmem:[%s145 + $0xb8] sm:$0xff] %v2541
      %2798 = vst [vmem:[%s145 + $0xc0] sm:$0xff] %v2542
      %2799 = vst [vmem:[%s145 + $0xc8] sm:$0xff] %v2543
      %2800 = vst [vmem:[%s145 + $0xd0] sm:$0xff] %v2544
      %2801 = vst [vmem:[%s145 + $0xd8] sm:$0xff] %v2545
      %2802 = vst [vmem:[%s145 + $0xe0] sm:$0xff] %v2546
      %2803 = vst [vmem:[%s145 + $0xe8] sm:$0xff] %v2547
      %2804 = vst [vmem:[%s145 + $0xf0] sm:$0xff] %v2548
      %2805 = vst [vmem:[%s145 + $0xf8] sm:$0xff] %v2549
      %2806 = vst [vmem:[%s145 + $0x100] sm:$0xff] %v2550
      %2807 = vst [vmem:[%s145 + $0x108] sm:$0xff] %v2551
      %2808 = vst [vmem:[%s145 + $0x110] sm:$0xff] %v2552
      %2809 = vst [vmem:[%s145 + $0x118] sm:$0xff] %v2553
      %2810 = vst [vmem:[%s145 + $0x120] sm:$0xff] %v2554
      %2811 = vst [vmem:[%s145 + $0x128] sm:$0xff] %v2555
      %2812 = vst [vmem:[%s145 + $0x130] sm:$0xff] %v2556
      %2813 = vst [vmem:[%s145 + $0x138] sm:$0xff] %v2557
      %2814 = vst [vmem:[%s145 + $0x140] sm:$0xff] %v2558
      %2815 = vst [vmem:[%s145 + $0x148] sm:$0xff] %v2559
      %2816 = vst [vmem:[%s145 + $0x150] sm:$0xff] %v2560
      %2817 = vst [vmem:[%s145 + $0x158] sm:$0xff] %v2561
      %2818 = vst [vmem:[%s145 + $0x160] sm:$0xff] %v2562
      %2819 = vst [vmem:[%s145 + $0x168] sm:$0xff] %v2563
      %2820 = vst [vmem:[%s145 + $0x170] sm:$0xff] %v2564
      %2821 = vst [vmem:[%s145 + $0x178] sm:$0xff] %v2565
      %2822 = vst [vmem:[%s145 + $0x180] sm:$0xff] %v2566
      %2823 = vst [vmem:[%s145 + $0x188] sm:$0xff] %v2567
      %2824 = vst [vmem:[%s145 + $0x190] sm:$0xff] %v2568
      %2825 = vst [vmem:[%s145 + $0x198] sm:$0xff] %v2569
      %2826 = vst [vmem:[%s145 + $0x1a0] sm:$0xff] %v2570
      %2827 = vst [vmem:[%s145 + $0x1a8] sm:$0xff] %v2571
      %2828 = vst [vmem:[%s145 + $0x1b0] sm:$0xff] %v2572
      %2829 = vst [vmem:[%s145 + $0x1b8] sm:$0xff] %v2573
      %2830 = vst [vmem:[%s145 + $0x1c0] sm:$0xff] %v2574
      %2831 = vst [vmem:[%s145 + $0x1c8] sm:$0xff] %v2575
      %2832 = vst [vmem:[%s145 + $0x1d0] sm:$0xff] %v2576
      %2833 = vst [vmem:[%s145 + $0x1d8] sm:$0xff] %v2577
      %2834 = vst [vmem:[%s145 + $0x1e0] sm:$0xff] %v2578
      %2835 = vst [vmem:[%s145 + $0x1e8] sm:$0xff] %v2579
      %2836 = vst [vmem:[%s145 + $0x1f0] sm:$0xff] %v2580
      %2837 = vst [vmem:[%s145 + $0x1f8] sm:$0xff] %v2581
      %2838 = vst [vmem:[%s145 + $0x200] sm:$0xff] %v2582
      %2839 = vst [vmem:[%s145 + $0x208] sm:$0xff] %v2583
      %2840 = vst [vmem:[%s145 + $0x210] sm:$0xff] %v2584
      %2841 = vst [vmem:[%s145 + $0x218] sm:$0xff] %v2585
      %2842 = vst [vmem:[%s145 + $0x220] sm:$0xff] %v2586
      %2843 = vst [vmem:[%s145 + $0x228] sm:$0xff] %v2587
      %2844 = vst [vmem:[%s145 + $0x230] sm:$0xff] %v2588
      %2845 = vst [vmem:[%s145 + $0x238] sm:$0xff] %v2589
      %2846 = vst [vmem:[%s145 + $0x240] sm:$0xff] %v2590
      %2847 = vst [vmem:[%s145 + $0x248] sm:$0xff] %v2591
      %2848 = vst [vmem:[%s145 + $0x250] sm:$0xff] %v2592
      %2849 = vst [vmem:[%s145 + $0x258] sm:$0xff] %v2593
      %2850 = vst [vmem:[%s145 + $0x260] sm:$0xff] %v2594
      %2851 = vst [vmem:[%s145 + $0x268] sm:$0xff] %v2595
      %2852 = vst [vmem:[%s145 + $0x270] sm:$0xff] %v2596
      %2853 = vst [vmem:[%s145 + $0x278] sm:$0xff] %v2597
      %2854 = vst [vmem:[%s145 + $0x280] sm:$0xff] %v2598
      %2855 = vst [vmem:[%s145 + $0x288] sm:$0xff] %v2599
      %2856 = vst [vmem:[%s145 + $0x290] sm:$0xff] %v2600
      %2857 = vst [vmem:[%s145 + $0x298] sm:$0xff] %v2601
      %2858 = vst [vmem:[%s145 + $0x2a0] sm:$0xff] %v2602
      %2859 = vst [vmem:[%s145 + $0x2a8] sm:$0xff] %v2603
      %2860 = vst [vmem:[%s145 + $0x2b0] sm:$0xff] %v2604
      %2861 = vst [vmem:[%s145 + $0x2b8] sm:$0xff] %v2605
      %2862 = vst [vmem:[%s145 + $0x2c0] sm:$0xff] %v2606
      %2863 = vst [vmem:[%s145 + $0x2c8] sm:$0xff] %v2607
      %2864 = vst [vmem:[%s145 + $0x2d0] sm:$0xff] %v2608
      %2865 = vst [vmem:[%s145 + $0x2d8] sm:$0xff] %v2609
      %2866 = vst [vmem:[%s145 + $0x2e0] sm:$0xff] %v2610
      %2867 = vst [vmem:[%s145 + $0x2e8] sm:$0xff] %v2611
      %2868 = vst [vmem:[%s145 + $0x2f0] sm:$0xff] %v2612
      %2869 = vst [vmem:[%s145 + $0x2f8] sm:$0xff] %v2613
      %2870 = vst [vmem:[%s145 + $0x300] sm:$0xff] %v2614
      %2871 = vst [vmem:[%s145 + $0x308] sm:$0xff] %v2615
      %2872 = vst [vmem:[%s145 + $0x310] sm:$0xff] %v2616
      %2873 = vst [vmem:[%s145 + $0x318] sm:$0xff] %v2617
      %2874 = vst [vmem:[%s145 + $0x320] sm:$0xff] %v2618
      %2875 = vst [vmem:[%s145 + $0x328] sm:$0xff] %v2619
      %2876 = vst [vmem:[%s145 + $0x330] sm:$0xff] %v2620
      %2877 = vst [vmem:[%s145 + $0x338] sm:$0xff] %v2621
      %2878 = vst [vmem:[%s145 + $0x340] sm:$0xff] %v2622
      %2879 = vst [vmem:[%s145 + $0x348] sm:$0xff] %v2623
      %2880 = vst [vmem:[%s145 + $0x350] sm:$0xff] %v2624
      %2881 = vst [vmem:[%s145 + $0x358] sm:$0xff] %v2625
      %2882 = vst [vmem:[%s145 + $0x360] sm:$0xff] %v2626
      %2883 = vst [vmem:[%s145 + $0x368] sm:$0xff] %v2627
      %2884 = vst [vmem:[%s145 + $0x370] sm:$0xff] %v2628
      %2885 = vst [vmem:[%s145 + $0x378] sm:$0xff] %v2629
      %2886 = vst [vmem:[%s145 + $0x380] sm:$0xff] %v2630
      %2887 = vst [vmem:[%s145 + $0x388] sm:$0xff] %v2631
      %2888 = vst [vmem:[%s145 + $0x390] sm:$0xff] %v2632
      %2889 = vst [vmem:[%s145 + $0x398] sm:$0xff] %v2633
      %2890 = vst [vmem:[%s145 + $0x3a0] sm:$0xff] %v2634
      %2891 = vst [vmem:[%s145 + $0x3a8] sm:$0xff] %v2635
      %2892 = vst [vmem:[%s145 + $0x3b0] sm:$0xff] %v2636
      %2893 = vst [vmem:[%s145 + $0x3b8] sm:$0xff] %v2637
      %2894 = vst [vmem:[%s145 + $0x3c0] sm:$0xff] %v2638
      %2895 = vst [vmem:[%s145 + $0x3c8] sm:$0xff] %v2639
      %2896 = vst [vmem:[%s145 + $0x3d0] sm:$0xff] %v2640
      %2897 = vst [vmem:[%s145 + $0x3d8] sm:$0xff] %v2641
      %2898 = vst [vmem:[%s145 + $0x3e0] sm:$0xff] %v2642
      %2899 = vst [vmem:[%s145 + $0x3e8] sm:$0xff] %v2643
      %2900 = vst [vmem:[%s145 + $0x3f0] sm:$0xff] %v2644
      %2901 = vst [vmem:[%s145 + $0x3f8] sm:$0xff] %v2645
      %2902 = vst [vmem:[%s145 + $0x400] sm:$0xff] %v2646
      %2903 = vst [vmem:[%s145 + $0x408] sm:$0xff] %v2647
      %2904 = vst [vmem:[%s145 + $0x410] sm:$0xff] %v2648
      %2905 = vst [vmem:[%s145 + $0x418] sm:$0xff] %v2649
      %2906 = vst [vmem:[%s145 + $0x420] sm:$0xff] %v2650
      %2907 = vst [vmem:[%s145 + $0x428] sm:$0xff] %v2651
      %2908 = vst [vmem:[%s145 + $0x430] sm:$0xff] %v2652
      %2909 = vst [vmem:[%s145 + $0x438] sm:$0xff] %v2653
      %2910 = vst [vmem:[%s145 + $0x440] sm:$0xff] %v2654
      %2911 = vst [vmem:[%s145 + $0x448] sm:$0xff] %v2655
      %2912 = vst [vmem:[%s145 + $0x450] sm:$0xff] %v2656
      %2913 = vst [vmem:[%s145 + $0x458] sm:$0xff] %v2657
      %2914 = vst [vmem:[%s145 + $0x460] sm:$0xff] %v2658
      %2915 = vst [vmem:[%s145 + $0x468] sm:$0xff] %v2659
      %2916 = vst [vmem:[%s145 + $0x470] sm:$0xff] %v2660
      %2917 = vst [vmem:[%s145 + $0x478] sm:$0xff] %v2661
      %2918 = vst [vmem:[%s145 + $0x480] sm:$0xff] %v2662
      %2919 = vst [vmem:[%s145 + $0x488] sm:$0xff] %v2663
      %2920 = vst [vmem:[%s145 + $0x490] sm:$0xff] %v2664
      %2921 = vst [vmem:[%s145 + $0x498] sm:$0xff] %v2665
      %2922 = vst [vmem:[%s145 + $0x4a0] sm:$0xff] %v2666
      %2923 = vst [vmem:[%s145 + $0x4a8] sm:$0xff] %v2667
      %2924 = vst [vmem:[%s145 + $0x4b0] sm:$0xff] %v2668
      %2925 = vst [vmem:[%s145 + $0x4b8] sm:$0xff] %v2669
      %2926 = vst [vmem:[%s145 + $0x4c0] sm:$0xff] %v2670
      %2927 = vst [vmem:[%s145 + $0x4c8] sm:$0xff] %v2671
      %2928 = vst [vmem:[%s145 + $0x4d0] sm:$0xff] %v2672
      %2929 = vst [vmem:[%s145 + $0x4d8] sm:$0xff] %v2673
      %2930 = vst [vmem:[%s145 + $0x4e0] sm:$0xff] %v2674
      %2931 = vst [vmem:[%s145 + $0x4e8] sm:$0xff] %v2675
      %2932 = vst [vmem:[%s145 + $0x4f0] sm:$0xff] %v2676
      %2933 = vst [vmem:[%s145 + $0x4f8] sm:$0xff] %v2677
      %2934 = vst [vmem:[%s145 + $0x500] sm:$0xff] %v2678
      %2935 = vst [vmem:[%s145 + $0x508] sm:$0xff] %v2679
      %2936 = vst [vmem:[%s145 + $0x510] sm:$0xff] %v2680
      %2937 = vst [vmem:[%s145 + $0x518] sm:$0xff] %v2681
      %2938 = vst [vmem:[%s145 + $0x520] sm:$0xff] %v2682
      %2939 = vst [vmem:[%s145 + $0x528] sm:$0xff] %v2683
      %2940 = vst [vmem:[%s145 + $0x530] sm:$0xff] %v2684
      %2941 = vst [vmem:[%s145 + $0x538] sm:$0xff] %v2685
      %2942 = vst [vmem:[%s145 + $0x540] sm:$0xff] %v2686
      %2943 = vst [vmem:[%s145 + $0x548] sm:$0xff] %v2687
      %2944 = vst [vmem:[%s145 + $0x550] sm:$0xff] %v2688
      %2945 = vst [vmem:[%s145 + $0x558] sm:$0xff] %v2689
      %2946 = vst [vmem:[%s145 + $0x560] sm:$0xff] %v2690
      %2947 = vst [vmem:[%s145 + $0x568] sm:$0xff] %v2691
      %2948 = vst [vmem:[%s145 + $0x570] sm:$0xff] %v2692
      %2949 = vst [vmem:[%s145 + $0x578] sm:$0xff] %v2693
      %2950 = vst [vmem:[%s145 + $0x580] sm:$0xff] %v2694
      %2951 = vst [vmem:[%s145 + $0x588] sm:$0xff] %v2695
      %2952 = vst [vmem:[%s145 + $0x590] sm:$0xff] %v2696
      %2953 = vst [vmem:[%s145 + $0x598] sm:$0xff] %v2697
      %2954 = vst [vmem:[%s145 + $0x5a0] sm:$0xff] %v2698
      %2955 = vst [vmem:[%s145 + $0x5a8] sm:$0xff] %v2699
      %2956 = vst [vmem:[%s145 + $0x5b0] sm:$0xff] %v2700
      %2957 = vst [vmem:[%s145 + $0x5b8] sm:$0xff] %v2701
      %2958 = vst [vmem:[%s145 + $0x5c0] sm:$0xff] %v2702
      %2959 = vst [vmem:[%s145 + $0x5c8] sm:$0xff] %v2703
      %2960 = vst [vmem:[%s145 + $0x5d0] sm:$0xff] %v2704
      %2961 = vst [vmem:[%s145 + $0x5d8] sm:$0xff] %v2705
      %2962 = vst [vmem:[%s145 + $0x5e0] sm:$0xff] %v2706
      %2963 = vst [vmem:[%s145 + $0x5e8] sm:$0xff] %v2707
      %2964 = vst [vmem:[%s145 + $0x5f0] sm:$0xff] %v2708
      %2965 = vst [vmem:[%s145 + $0x5f8] sm:$0xff] %v2709
      %2966 = vst [vmem:[%s145 + $0x600] sm:$0xff] %v2710
      %2967 = vst [vmem:[%s145 + $0x608] sm:$0xff] %v2711
      %2968 = vst [vmem:[%s145 + $0x610] sm:$0xff] %v2712
      %2969 = vst [vmem:[%s145 + $0x618] sm:$0xff] %v2713
      %2970 = vst [vmem:[%s145 + $0x620] sm:$0xff] %v2714
      %2971 = vst [vmem:[%s145 + $0x628] sm:$0xff] %v2715
      %2972 = vst [vmem:[%s145 + $0x630] sm:$0xff] %v2716
      %2973 = vst [vmem:[%s145 + $0x638] sm:$0xff] %v2717
      %2974 = vst [vmem:[%s145 + $0x640] sm:$0xff] %v2718
      %2975 = vst [vmem:[%s145 + $0x648] sm:$0xff] %v2719
      %2976 = vst [vmem:[%s145 + $0x650] sm:$0xff] %v2720
      %2977 = vst [vmem:[%s145 + $0x658] sm:$0xff] %v2721
      %2978 = vst [vmem:[%s145 + $0x660] sm:$0xff] %v2722
      %2979 = vst [vmem:[%s145 + $0x668] sm:$0xff] %v2723
      %2980 = vst [vmem:[%s145 + $0x670] sm:$0xff] %v2724
      %2981 = vst [vmem:[%s145 + $0x678] sm:$0xff] %v2725
      %2982 = vst [vmem:[%s145 + $0x680] sm:$0xff] %v2726
      %2983 = vst [vmem:[%s145 + $0x688] sm:$0xff] %v2727
      %2984 = vst [vmem:[%s145 + $0x690] sm:$0xff] %v2728
      %2985 = vst [vmem:[%s145 + $0x698] sm:$0xff] %v2729
      %2986 = vst [vmem:[%s145 + $0x6a0] sm:$0xff] %v2730
      %2987 = vst [vmem:[%s145 + $0x6a8] sm:$0xff] %v2731
      %2988 = vst [vmem:[%s145 + $0x6b0] sm:$0xff] %v2732
      %2989 = vst [vmem:[%s145 + $0x6b8] sm:$0xff] %v2733
      %2990 = vst [vmem:[%s145 + $0x6c0] sm:$0xff] %v2734
      %2991 = vst [vmem:[%s145 + $0x6c8] sm:$0xff] %v2735
      %2992 = vst [vmem:[%s145 + $0x6d0] sm:$0xff] %v2736
      %2993 = vst [vmem:[%s145 + $0x6d8] sm:$0xff] %v2737
      %2994 = vst [vmem:[%s145 + $0x6e0] sm:$0xff] %v2738
      %2995 = vst [vmem:[%s145 + $0x6e8] sm:$0xff] %v2739
      %2996 = vst [vmem:[%s145 + $0x6f0] sm:$0xff] %v2740
      %2997 = vst [vmem:[%s145 + $0x6f8] sm:$0xff] %v2741
      %2998 = vst [vmem:[%s145 + $0x700] sm:$0xff] %v2742
      %2999 = vst [vmem:[%s145 + $0x708] sm:$0xff] %v2743
      %3000 = vst [vmem:[%s145 + $0x710] sm:$0xff] %v2744
      %3001 = vst [vmem:[%s145 + $0x718] sm:$0xff] %v2745
      %3002 = vst [vmem:[%s145 + $0x720] sm:$0xff] %v2746
      %3003 = vst [vmem:[%s145 + $0x728] sm:$0xff] %v2747
      %3004 = vst [vmem:[%s145 + $0x730] sm:$0xff] %v2748
      %3005 = vst [vmem:[%s145 + $0x738] sm:$0xff] %v2749
      %3006 = vst [vmem:[%s145 + $0x740] sm:$0xff] %v2750
      %3007 = vst [vmem:[%s145 + $0x748] sm:$0xff] %v2751
      %3008 = vst [vmem:[%s145 + $0x750] sm:$0xff] %v2752
      %3009 = vst [vmem:[%s145 + $0x758] sm:$0xff] %v2753
      %3010 = vst [vmem:[%s145 + $0x760] sm:$0xff] %v2754
      %3011 = vst [vmem:[%s145 + $0x768] sm:$0xff] %v2755
      %3012 = vst [vmem:[%s145 + $0x770] sm:$0xff] %v2756
      %3013 = vst [vmem:[%s145 + $0x778] sm:$0xff] %v2757
      %3014 = vst [vmem:[%s145 + $0x780] sm:$0xff] %v2758
      %3015 = vst [vmem:[%s145 + $0x788] sm:$0xff] %v2759
      %3016 = vst [vmem:[%s145 + $0x790] sm:$0xff] %v2760
      %3017 = vst [vmem:[%s145 + $0x798] sm:$0xff] %v2761
      %3018 = vst [vmem:[%s145 + $0x7a0] sm:$0xff] %v2762
      %3019 = vst [vmem:[%s145 + $0x7a8] sm:$0xff] %v2763
      %3020 = vst [vmem:[%s145 + $0x7b0] sm:$0xff] %v2764
      %3021 = vst [vmem:[%s145 + $0x7b8] sm:$0xff] %v2765
      %3022 = vst [vmem:[%s145 + $0x7c0] sm:$0xff] %v2766
      %3023 = vst [vmem:[%s145 + $0x7c8] sm:$0xff] %v2767
      %3024 = vst [vmem:[%s145 + $0x7d0] sm:$0xff] %v2768
      %3025 = vst [vmem:[%s145 + $0x7d8] sm:$0xff] %v2769
      %3026 = vst [vmem:[%s145 + $0x7e0] sm:$0xff] %v2770
      %3027 = vst [vmem:[%s145 + $0x7e8] sm:$0xff] %v2771
      %3028 = vst [vmem:[%s145 + $0x7f0] sm:$0xff] %v2772
      %3029 = vst [vmem:[%s145 + $0x7f8] sm:$0xff] %v2773
      %s3030 = smul.u32 256, %s13
      %p3031 = scmp.lt.s32.totalorder %s3030, 1023
      %s3032 = scalar_select %p3031, %s3030, 1023
      %s3033 = smul.addr %s3032, 8
      %s3034 = scalar_lea.vmem %s2, %s3033
      // Predicated region
      $region29: #{generator_forward.9} parent=27 // pred_check
        %p3035 = pneg %p78
      $region30: #{generator_forward.9} parent=27 // pred_check_branch
        %3037 = sbr.rel (%p3035) target = $region32
      $region31: #{generator_forward.9} parent=27 // pred_region
        %s3038 = smul.u32 256, %s13
      $region32: #{generator_forward.9} parent=27 // pred_fallthru
        _
    $region28: #{generator_forward.9} parent=5 // pred_fallthru
      _
    %p3039 = scmp.le.s32.totalorder 2, %s8
    // Predicated region
    $region33: #{generator_forward.9} parent=5 // pred_check
      %p3040 = pneg %p3039
    $region34: #{generator_forward.9} parent=5 // pred_check_branch
      %3042 = sbr.rel (%p3040) target = $region36
    $region35: #{generator_forward.9} parent=5 // pred_region
      %s3043 = ssub.s32 %s8, 2
      // Predicated region
      $region37: #{generator_forward.9} parent=35 // pred_check
        %p3044 = pneg %p84
      $region38: #{generator_forward.9} parent=35 // pred_check_branch
        %3046 = sbr.rel (%p3044) target = $region40
      $region39: #{generator_forward.9} parent=35 // pred_region
        %s3047 = smul.u32 256, %s14
        %p3048 = scmp.lt.s32.totalorder %s3047, 1023
        %s3049 = scalar_select %p3048, %s3047, 1023
        %s3050 = smul.addr %s3049, 8
        %s3051 = scalar_lea.vmem %s2, %s3050
      $region40: #{generator_forward.9} parent=35 // pred_fallthru
        _
    $region36: #{generator_forward.9} parent=5 // pred_fallthru
      _
  $region6: #{generator_forward.9} parent=0 // loop_footer
    %s12 = sadd.s32 1, %s8
  $region7: #{generator_forward.9} parent=0 // loop_footer_branch
    %7 = sbr.rel target = $region3
  $region8: #{generator_forward.9} parent=0 // loop_exit
    _

</llo_original>
